<compile_context>
chip_gen: v6e
topology: v6e:2x2x1
jax: 0.10.0
libtpu: 0.0.40
codegen_flags: <defaults>
</compile_context>

<pallas_src>
import jax
import jax.numpy as jnp
from jax import lax
from jax.experimental import pallas as pl
from jax.experimental.pallas import tpu as pltpu


def bottleneck_kernel(x_ref, w1_ref, b1_ref, w2_ref, b2_ref, w3_ref, b3_ref,
                      out_ref, pad_ref):
    # x_ref  : (B, H, W*Cin)            f32  lane-dense activations (batch block)
    # w1_ref : (W*Cin, W*width)         bf16 block-diag 1x1 conv, BN1 folded
    # w2_ref : (3, (W+2)*width, W*width) bf16 banded 3x3 conv (one band per ky), BN2 folded
    # w3_ref : (W*width, W*Cout)        bf16 block-diag 1x1 conv, BN3 folded
    # b*_ref : (1, W*channels)          f32  folded BN biases, tiled over W
    # pad_ref: (B, H+2, (W+2)*width)    bf16 scratch: padded conv2 input
    B, H, WC = x_ref.shape
    Q = w1_ref.shape[1]            # W * width
    P = w2_ref.shape[1]            # (W + 2) * width
    width = (P - Q) // 2
    M = B * H

    # --- conv1 (1x1) + bn1 + relu: block-diagonal matmul, lane-dense out ----
    xb = x_ref[...].reshape(M, WC).astype(jnp.bfloat16)
    h1 = jnp.dot(xb, w1_ref[...], preferred_element_type=jnp.float32)
    h1 = jnp.maximum(h1 + b1_ref[...], 0.0)

    # --- build padded conv2 input (bf16): zero only the 1-px halo, then write
    #     the interior once (single bf16 cast).  Scratch is per-core and
    #     persists across grid steps, so the halo is zeroed every step. -------
    zrow = jnp.zeros((B, 1, P), jnp.bfloat16)
    zcol = jnp.zeros((B, H + 2, width), jnp.bfloat16)
    pad_ref[:, 0:1, :] = zrow
    pad_ref[:, H + 1:H + 2, :] = zrow
    pad_ref[:, :, 0:width] = zcol
    pad_ref[:, :, width + Q:width + Q + width] = zcol
    pad_ref[:, 1:H + 1, width:width + Q] = (
        h1.astype(jnp.bfloat16).reshape(B, H, Q))

    # --- conv2 (3x3, stride=1, pad=1) + bn2 + relu:
    #     three lane-dense banded matmuls, one per ky (kx handled inside the
    #     banded weight), accumulated in f32. ---------------------------------
    acc = jnp.dot(pad_ref[:, 0:H, :].reshape(M, P), w2_ref[0],
                  preferred_element_type=jnp.float32)
    acc += jnp.dot(pad_ref[:, 1:H + 1, :].reshape(M, P), w2_ref[1],
                   preferred_element_type=jnp.float32)
    acc += jnp.dot(pad_ref[:, 2:H + 2, :].reshape(M, P), w2_ref[2],
                   preferred_element_type=jnp.float32)
    h2 = jnp.maximum(acc + b2_ref[...], 0.0)

    # --- conv3 (1x1) + bn3 + residual + relu --------------------------------
    h3 = jnp.dot(h2.astype(jnp.bfloat16), w3_ref[...],
                 preferred_element_type=jnp.float32)
    # Re-read the residual here (x_ref is VMEM-resident) instead of holding it
    # live across the three matmuls.
    out = jnp.maximum(h3 + b3_ref[...] + x_ref[...].reshape(M, WC), 0.0)
    out_ref[...] = out.reshape(B, H, WC)


def bottleneck_pallas(x_nhwc, p, b_blk=None):
    N, H, W, Cin = x_nhwc.shape
    w1, w2, w3 = p["w1"], p["w2"], p["w3"]
    width = w1.shape[1]
    Cout = w3.shape[1]
    assert Cin == Cout, "identity residual requires Cin == Cout (no downsample)"

    if b_blk is None:
        b_blk = N                      # whole batch per step at small N
    assert N % b_blk == 0

    Q = W * width                      # lane-dense hidden width
    P = (W + 2) * width                # padded row width
    WCin = W * Cin
    WCout = W * Cout

    # Fold BN scale into the conv weights (f32).
    w1f = w1 * p["s1"]                                    # (Cin, width)
    w2f = w2 * p["s2"][None, None]                        # (3,3,width,width)
    w3f = w3 * p["s3"]                                    # (width, Cout)

    # Expand to lane-dense block-diagonal / banded matmul weights (bf16).
    eyeW = jnp.eye(W, dtype=jnp.float32)
    w1b = jnp.kron(eyeW, w1f).astype(jnp.bfloat16)        # (W*Cin, W*width)
    w3b = jnp.kron(eyeW, w3f).astype(jnp.bfloat16)        # (W*width, W*Cout)
    w2_bands = []
    for ky in range(3):
        band = sum(jnp.kron(jnp.eye(W + 2, W, k=-kx, dtype=jnp.float32),
                            w2f[ky, kx]) for kx in range(3))
        w2_bands.append(band)
    w2b = jnp.stack(w2_bands).astype(jnp.bfloat16)        # (3, P, Q)

    # Folded BN biases, tiled over the W lane blocks.
    b1t = jnp.tile(p["b1"], (1, W))                       # (1, W*width)
    b2t = jnp.tile(p["b2"], (1, W))                       # (1, W*width)
    b3t = jnp.tile(p["b3"], (1, W))                       # (1, W*Cout)

    # Lane-dense activation layout (free reshape in HBM).
    x_ld = x_nhwc.reshape(N, H, WCin)

    out = pl.pallas_call(
        bottleneck_kernel,
        out_shape=jax.ShapeDtypeStruct((N, H, WCout), jnp.float32),
        grid_spec=pltpu.PrefetchScalarGridSpec(
            num_scalar_prefetch=0,
            grid=(N // b_blk,),
            in_specs=[
                pl.BlockSpec((b_blk, H, WCin), lambda n: (n, 0, 0)),  # activations
                pl.BlockSpec((WCin, Q), lambda n: (0, 0)),            # w1 (resident)
                pl.BlockSpec((1, Q), lambda n: (0, 0)),               # b1
                pl.BlockSpec((3, P, Q), lambda n: (0, 0, 0)),         # w2 bands (resident)
                pl.BlockSpec((1, Q), lambda n: (0, 0)),               # b2
                pl.BlockSpec((Q, WCout), lambda n: (0, 0)),           # w3 (resident)
                pl.BlockSpec((1, WCout), lambda n: (0, 0)),           # b3
            ],
            out_specs=pl.BlockSpec((b_blk, H, WCout), lambda n: (n, 0, 0)),
            scratch_shapes=[pltpu.VMEM((b_blk, H + 2, P), jnp.bfloat16)],
        ),
        compiler_params=pltpu.CompilerParams(
            dimension_semantics=("parallel",)),
    )(x_ld, w1b, b1t, w2b, b2t, w3b, b3t)
    return out.reshape(N, H, W, Cout)


# ----------------------------- reference (pure JAX, f32) --------------------
def bottleneck_ref(x_nhwc, p):
    dn = ("NHWC", "HWIO", "NHWC")
    w1 = p["w1"].reshape(1, 1, *p["w1"].shape)
    w3 = p["w3"].reshape(1, 1, *p["w3"].shape)

    h = lax.conv_general_dilated(x_nhwc, w1, (1, 1), "VALID",
                                 dimension_numbers=dn)
    h = jnp.maximum(h * p["s1"] + p["b1"], 0.0)
    h = lax.conv_general_dilated(h, p["w2"], (1, 1), [(1, 1), (1, 1)],
                                 dimension_numbers=dn)
    h = jnp.maximum(h * p["s2"] + p["b2"], 0.0)
    h = lax.conv_general_dilated(h, w3, (1, 1), "VALID",
                                 dimension_numbers=dn)
    h = h * p["s3"] + p["b3"]
    return jnp.maximum(h + x_nhwc, 0.0)


def fold_bn(gamma, beta, mean, var, eps=1e-5):
    scale = gamma / jnp.sqrt(var + eps)
    bias = beta - mean * scale
    return scale[None, :], bias[None, :]


def make_params(key, inplanes, planes, groups=1, base_width=64):
    expansion = 4
    width = int(planes * (base_width / 64.0)) * groups
    cout = planes * expansion
    ks = jax.random.split(key, 12)

    def bn(k, c):
        k0, k1, k2, k3 = jax.random.split(k, 4)
        gamma = jax.random.uniform(k0, (c,), jnp.float32, 0.5, 1.5)
        beta = 0.1 * jax.random.normal(k1, (c,), jnp.float32)
        mean = 0.1 * jax.random.normal(k2, (c,), jnp.float32)
        var = jax.random.uniform(k3, (c,), jnp.float32, 0.5, 1.5)
        return fold_bn(gamma, beta, mean, var)

    w1 = 0.1 * jax.random.normal(ks[0], (inplanes, width), jnp.float32)
    w2 = 0.1 * jax.random.normal(ks[1], (3, 3, width, width), jnp.float32)
    w3 = 0.1 * jax.random.normal(ks[2], (width, cout), jnp.float32)
    s1, b1 = bn(ks[3], width)
    s2, b2 = bn(ks[4], width)
    s3, b3 = bn(ks[5], cout)
    return dict(w1=w1, s1=s1, b1=b1, w2=w2, s2=s2, b2=b2, w3=w3, s3=s3, b3=b3)


if __name__ == "__main__":
    key = jax.random.PRNGKey(0)
    kx, kp = jax.random.split(key)

    # Bottleneck(inplanes=128, planes=32): width=32, out channels = 32*4 = 128.
    N, C, H, W = 2, 128, 16, 16
    x_nchw = jax.random.normal(kx, (N, C, H, W), jnp.float32)
    params = make_params(kp, inplanes=C, planes=32)

    x_nhwc = jnp.transpose(x_nchw, (0, 2, 3, 1))        # NCHW -> NHWC
    out_nhwc = bottleneck_pallas(x_nhwc, params)
    out_nchw = jnp.transpose(out_nhwc, (0, 3, 1, 2))    # NHWC -> NCHW
    jax.block_until_ready(out_nchw)

    ref = jnp.transpose(bottleneck_ref(x_nhwc, params), (0, 3, 1, 2))
    assert out_nchw.shape == (N, C, H, W)
    # bf16 matmul inputs (f32 accumulation) vs. a pure-f32 reference: allow
    # ~1% relative error on the output scale.
    err = float(jnp.max(jnp.abs(out_nchw - ref)) /
                (jnp.max(jnp.abs(ref)) + 1e-6))
    assert err < 3e-2, err

    print("KERNEL_OK")
</pallas_src>

<mosaic_0001>
module attributes {stable_mosaic.version = 11 : i64} {
  func.func @bottleneck_kernel(%arg0: i32, %arg1: memref<2x16x2048xf32, #tpu.memory_space<vmem>>, %arg2: memref<2048x512xbf16, #tpu.memory_space<vmem>>, %arg3: memref<1x512xf32, #tpu.memory_space<vmem>>, %arg4: memref<3x576x512xbf16, #tpu.memory_space<vmem>>, %arg5: memref<1x512xf32, #tpu.memory_space<vmem>>, %arg6: memref<512x2048xbf16, #tpu.memory_space<vmem>>, %arg7: memref<1x2048xf32, #tpu.memory_space<vmem>>, %arg8: memref<2x16x2048xf32, #tpu.memory_space<vmem>>, %arg9: memref<2x18x576xbf16, #tpu.memory_space<vmem>>) attributes {dimension_semantics = [#tpu.dimension_semantics<parallel>], iteration_bounds = array<i64: 1>, scalar_prefetch = 0 : i64, scratch_operands = 1 : i64, tpu.core_type = #tpu.core_type<tc>, window_params = [{transform_indices = @transform_0, window_bounds = array<i64: 2, 16, 2048>}, {pipeline_mode = #tpu.pipeline_mode<synchronous>, transform_indices = @transform_1, window_bounds = array<i64: 2048, 512>}, {pipeline_mode = #tpu.pipeline_mode<synchronous>, transform_indices = @transform_2, window_bounds = array<i64: 1, 512>}, {pipeline_mode = #tpu.pipeline_mode<synchronous>, transform_indices = @transform_3, window_bounds = array<i64: 3, 576, 512>}, {pipeline_mode = #tpu.pipeline_mode<synchronous>, transform_indices = @transform_4, window_bounds = array<i64: 1, 512>}, {pipeline_mode = #tpu.pipeline_mode<synchronous>, transform_indices = @transform_5, window_bounds = array<i64: 512, 2048>}, {pipeline_mode = #tpu.pipeline_mode<synchronous>, transform_indices = @transform_6, window_bounds = array<i64: 1, 2048>}, {transform_indices = @transform_7, window_bounds = array<i64: 2, 16, 2048>}]} {
    %c0 = arith.constant 0 : index
    %c0_0 = arith.constant 0 : index
    %c0_1 = arith.constant 0 : index
    %0 = vector.load %arg1[%c0, %c0_0, %c0_1] : memref<2x16x2048xf32, #tpu.memory_space<vmem>>, vector<2x16x2048xf32>
    %1 = vector.shape_cast %0 : vector<2x16x2048xf32> to vector<32x2048xf32>
    %2 = arith.truncf %1 : vector<32x2048xf32> to vector<32x2048xbf16>
    %c0_2 = arith.constant 0 : index
    %c0_3 = arith.constant 0 : index
    %3 = vector.load %arg2[%c0_2, %c0_3] : memref<2048x512xbf16, #tpu.memory_space<vmem>>, vector<2048x512xbf16>
    %cst = arith.constant dense<0.000000e+00> : vector<32x512xf32>
    %4 = tpu.matmul %2, %3, %cst {dimension_numbers = #tpu.dot_dimension_numbers<[1], [0], [0], [1], [0, 0, 1, 1], [], []>} : vector<32x2048xbf16>, vector<2048x512xbf16>, vector<32x512xf32> -> vector<32x512xf32>
    %c0_4 = arith.constant 0 : index
    %c0_5 = arith.constant 0 : index
    %5 = vector.load %arg3[%c0_4, %c0_5] : memref<1x512xf32, #tpu.memory_space<vmem>>, vector<1x512xf32>
    %6 = vector.broadcast %5 : vector<1x512xf32> to vector<32x512xf32>
    %7 = arith.addf %4, %6 : vector<32x512xf32>
    %cst_6 = arith.constant 0.000000e+00 : f32
    %8 = vector.broadcast %cst_6 : f32 to vector<32x512xf32>
    %9 = arith.maximumf %7, %8 : vector<32x512xf32>
    %cst_7 = arith.constant 0.000000e+00 : bf16
    %10 = vector.broadcast %cst_7 : bf16 to vector<2x1x576xbf16>
    %cst_8 = arith.constant 0.000000e+00 : bf16
    %11 = vector.broadcast %cst_8 : bf16 to vector<2x18x32xbf16>
    %c0_9 = arith.constant 0 : index
    %c0_10 = arith.constant 0 : index
    %c0_11 = arith.constant 0 : index
    %12 = vector.load %arg9[%c0_9, %c0_10, %c0_11] : memref<2x18x576xbf16, #tpu.memory_space<vmem>>, vector<2x1x576xbf16>
    tpu.vector_store %arg9[%c0_9, %c0_10, %c0_11], %10 {strides = array<i32>} : memref<2x18x576xbf16, #tpu.memory_space<vmem>>, vector<2x1x576xbf16>,
    %c0_12 = arith.constant 0 : index
    %c17 = arith.constant 17 : index
    %c0_13 = arith.constant 0 : index
    %13 = vector.load %arg9[%c0_12, %c17, %c0_13] : memref<2x18x576xbf16, #tpu.memory_space<vmem>>, vector<2x1x576xbf16>
    tpu.vector_store %arg9[%c0_12, %c17, %c0_13], %10 {strides = array<i32>} : memref<2x18x576xbf16, #tpu.memory_space<vmem>>, vector<2x1x576xbf16>,
    %c0_14 = arith.constant 0 : index
    %c0_15 = arith.constant 0 : index
    %c0_16 = arith.constant 0 : index
    %14 = vector.load %arg9[%c0_14, %c0_15, %c0_16] : memref<2x18x576xbf16, #tpu.memory_space<vmem>>, vector<2x18x32xbf16>
    tpu.vector_store %arg9[%c0_14, %c0_15, %c0_16], %11 {strides = array<i32>} : memref<2x18x576xbf16, #tpu.memory_space<vmem>>, vector<2x18x32xbf16>,
    %c0_17 = arith.constant 0 : index
    %c0_18 = arith.constant 0 : index
    %c544 = arith.constant 544 : index
    %15 = vector.load %arg9[%c0_17, %c0_18, %c544] : memref<2x18x576xbf16, #tpu.memory_space<vmem>>, vector<2x18x32xbf16>
    tpu.vector_store %arg9[%c0_17, %c0_18, %c544], %11 {strides = array<i32>} : memref<2x18x576xbf16, #tpu.memory_space<vmem>>, vector<2x18x32xbf16>,
    %16 = arith.truncf %9 : vector<32x512xf32> to vector<32x512xbf16>
    %17 = vector.shape_cast %16 : vector<32x512xbf16> to vector<2x16x512xbf16>
    %c0_19 = arith.constant 0 : index
    %c1 = arith.constant 1 : index
    %c32 = arith.constant 32 : index
    %18 = vector.load %arg9[%c0_19, %c1, %c32] : memref<2x18x576xbf16, #tpu.memory_space<vmem>>, vector<2x16x512xbf16>
    tpu.vector_store %arg9[%c0_19, %c1, %c32], %17 {strides = array<i32>} : memref<2x18x576xbf16, #tpu.memory_space<vmem>>, vector<2x16x512xbf16>,
    %c0_20 = arith.constant 0 : index
    %c0_21 = arith.constant 0 : index
    %c0_22 = arith.constant 0 : index
    %19 = vector.load %arg9[%c0_20, %c0_21, %c0_22] : memref<2x18x576xbf16, #tpu.memory_space<vmem>>, vector<2x16x576xbf16>
    %20 = vector.shape_cast %19 : vector<2x16x576xbf16> to vector<32x576xbf16>
    %c0_23 = arith.constant 0 : index
    %c0_24 = arith.constant 0 : index
    %c0_25 = arith.constant 0 : index
    %21 = vector.load %arg4[%c0_23, %c0_24, %c0_25] : memref<3x576x512xbf16, #tpu.memory_space<vmem>>, vector<1x576x512xbf16>
    %22 = vector.shape_cast %21 : vector<1x576x512xbf16> to vector<576x512xbf16>
    %cst_26 = arith.constant dense<0.000000e+00> : vector<32x512xf32>
    %23 = tpu.matmul %20, %22, %cst_26 {dimension_numbers = #tpu.dot_dimension_numbers<[1], [0], [0], [1], [0, 0, 1, 1], [], []>} : vector<32x576xbf16>, vector<576x512xbf16>, vector<32x512xf32> -> vector<32x512xf32>
    %c0_27 = arith.constant 0 : index
    %c1_28 = arith.constant 1 : index
    %c0_29 = arith.constant 0 : index
    %24 = vector.load %arg9[%c0_27, %c1_28, %c0_29] : memref<2x18x576xbf16, #tpu.memory_space<vmem>>, vector<2x16x576xbf16>
    %25 = vector.shape_cast %24 : vector<2x16x576xbf16> to vector<32x576xbf16>
    %c1_30 = arith.constant 1 : index
    %c0_31 = arith.constant 0 : index
    %c0_32 = arith.constant 0 : index
    %26 = vector.load %arg4[%c1_30, %c0_31, %c0_32] : memref<3x576x512xbf16, #tpu.memory_space<vmem>>, vector<1x576x512xbf16>
    %27 = vector.shape_cast %26 : vector<1x576x512xbf16> to vector<576x512xbf16>
    %cst_33 = arith.constant dense<0.000000e+00> : vector<32x512xf32>
    %28 = tpu.matmul %25, %27, %cst_33 {dimension_numbers = #tpu.dot_dimension_numbers<[1], [0], [0], [1], [0, 0, 1, 1], [], []>} : vector<32x576xbf16>, vector<576x512xbf16>, vector<32x512xf32> -> vector<32x512xf32>
    %29 = arith.addf %23, %28 : vector<32x512xf32>
    %c0_34 = arith.constant 0 : index
    %c2 = arith.constant 2 : index
    %c0_35 = arith.constant 0 : index
    %30 = vector.load %arg9[%c0_34, %c2, %c0_35] : memref<2x18x576xbf16, #tpu.memory_space<vmem>>, vector<2x16x576xbf16>
    %31 = vector.shape_cast %30 : vector<2x16x576xbf16> to vector<32x576xbf16>
    %c2_36 = arith.constant 2 : index
    %c0_37 = arith.constant 0 : index
    %c0_38 = arith.constant 0 : index
    %32 = vector.load %arg4[%c2_36, %c0_37, %c0_38] : memref<3x576x512xbf16, #tpu.memory_space<vmem>>, vector<1x576x512xbf16>
    %33 = vector.shape_cast %32 : vector<1x576x512xbf16> to vector<576x512xbf16>
    %cst_39 = arith.constant dense<0.000000e+00> : vector<32x512xf32>
    %34 = tpu.matmul %31, %33, %cst_39 {dimension_numbers = #tpu.dot_dimension_numbers<[1], [0], [0], [1], [0, 0, 1, 1], [], []>} : vector<32x576xbf16>, vector<576x512xbf16>, vector<32x512xf32> -> vector<32x512xf32>
    %35 = arith.addf %29, %34 : vector<32x512xf32>
    %c0_40 = arith.constant 0 : index
    %c0_41 = arith.constant 0 : index
    %36 = vector.load %arg5[%c0_40, %c0_41] : memref<1x512xf32, #tpu.memory_space<vmem>>, vector<1x512xf32>
    %37 = vector.broadcast %36 : vector<1x512xf32> to vector<32x512xf32>
    %38 = arith.addf %35, %37 : vector<32x512xf32>
    %cst_42 = arith.constant 0.000000e+00 : f32
    %39 = vector.broadcast %cst_42 : f32 to vector<32x512xf32>
    %40 = arith.maximumf %38, %39 : vector<32x512xf32>
    %41 = arith.truncf %40 : vector<32x512xf32> to vector<32x512xbf16>
    %c0_43 = arith.constant 0 : index
    %c0_44 = arith.constant 0 : index
    %42 = vector.load %arg6[%c0_43, %c0_44] : memref<512x2048xbf16, #tpu.memory_space<vmem>>, vector<512x2048xbf16>
    %cst_45 = arith.constant dense<0.000000e+00> : vector<32x2048xf32>
    %43 = tpu.matmul %41, %42, %cst_45 {dimension_numbers = #tpu.dot_dimension_numbers<[1], [0], [0], [1], [0, 0, 1, 1], [], []>} : vector<32x512xbf16>, vector<512x2048xbf16>, vector<32x2048xf32> -> vector<32x2048xf32>
    %c0_46 = arith.constant 0 : index
    %c0_47 = arith.constant 0 : index
    %44 = vector.load %arg7[%c0_46, %c0_47] : memref<1x2048xf32, #tpu.memory_space<vmem>>, vector<1x2048xf32>
    %45 = vector.broadcast %44 : vector<1x2048xf32> to vector<32x2048xf32>
    %46 = arith.addf %43, %45 : vector<32x2048xf32>
    %c0_48 = arith.constant 0 : index
    %c0_49 = arith.constant 0 : index
    %c0_50 = arith.constant 0 : index
    %47 = vector.load %arg1[%c0_48, %c0_49, %c0_50] : memref<2x16x2048xf32, #tpu.memory_space<vmem>>, vector<2x16x2048xf32>
    %48 = vector.shape_cast %47 : vector<2x16x2048xf32> to vector<32x2048xf32>
    %49 = arith.addf %46, %48 : vector<32x2048xf32>
    %cst_51 = arith.constant 0.000000e+00 : f32
    %50 = vector.broadcast %cst_51 : f32 to vector<32x2048xf32>
    %51 = arith.maximumf %49, %50 : vector<32x2048xf32>
    %52 = vector.shape_cast %51 : vector<32x2048xf32> to vector<2x16x2048xf32>
    %c0_52 = arith.constant 0 : index
    %c0_53 = arith.constant 0 : index
    %c0_54 = arith.constant 0 : index
    %53 = vector.load %arg8[%c0_52, %c0_53, %c0_54] : memref<2x16x2048xf32, #tpu.memory_space<vmem>>, vector<2x16x2048xf32>
    tpu.vector_store %arg8[%c0_52, %c0_53, %c0_54], %52 {strides = array<i32>} : memref<2x16x2048xf32, #tpu.memory_space<vmem>>, vector<2x16x2048xf32>,
    return
  }
  func.func @transform_0(%arg0: i32) -> (i32, i32, i32) {
    %c0_i32 = arith.constant 0 : i32
    %c0_i32_0 = arith.constant 0 : i32
    %c0_i32_1 = arith.constant 0 : i32
    return %arg0, %c0_i32, %c0_i32_0 : i32, i32, i32
  }
  func.func @transform_1(%arg0: i32) -> (i32, i32) {
    %c0_i32 = arith.constant 0 : i32
    %c0_i32_0 = arith.constant 0 : i32
    %c0_i32_1 = arith.constant 0 : i32
    return %c0_i32, %c0_i32_0 : i32, i32
  }
  func.func @transform_2(%arg0: i32) -> (i32, i32) {
    %c0_i32 = arith.constant 0 : i32
    %c0_i32_0 = arith.constant 0 : i32
    %c0_i32_1 = arith.constant 0 : i32
    return %c0_i32, %c0_i32_0 : i32, i32
  }
  func.func @transform_3(%arg0: i32) -> (i32, i32, i32) {
    %c0_i32 = arith.constant 0 : i32
    %c0_i32_0 = arith.constant 0 : i32
    %c0_i32_1 = arith.constant 0 : i32
    %c0_i32_2 = arith.constant 0 : i32
    return %c0_i32, %c0_i32_0, %c0_i32_1 : i32, i32, i32
  }
  func.func @transform_4(%arg0: i32) -> (i32, i32) {
    %c0_i32 = arith.constant 0 : i32
    %c0_i32_0 = arith.constant 0 : i32
    %c0_i32_1 = arith.constant 0 : i32
    return %c0_i32, %c0_i32_0 : i32, i32
  }
  func.func @transform_5(%arg0: i32) -> (i32, i32) {
    %c0_i32 = arith.constant 0 : i32
    %c0_i32_0 = arith.constant 0 : i32
    %c0_i32_1 = arith.constant 0 : i32
    return %c0_i32, %c0_i32_0 : i32, i32
  }
  func.func @transform_6(%arg0: i32) -> (i32, i32) {
    %c0_i32 = arith.constant 0 : i32
    %c0_i32_0 = arith.constant 0 : i32
    %c0_i32_1 = arith.constant 0 : i32
    return %c0_i32, %c0_i32_0 : i32, i32
  }
  func.func @transform_7(%arg0: i32) -> (i32, i32, i32) {
    %c0_i32 = arith.constant 0 : i32
    %c0_i32_0 = arith.constant 0 : i32
    %c0_i32_1 = arith.constant 0 : i32
    return %arg0, %c0_i32, %c0_i32_0 : i32, i32, i32
  }
}

</mosaic_0001>

<llo_original>
// kernel: tpu_custom_call.1
$region0: #{tpu_custom_call.1}
  #allocation0 [shape = 'u32[]', space=smem, size = 0x4, offset = 0x4, fixed_abs, tag = 'smem constant byte address 0x4 - core index']
  #allocation1 [shape = 'u32[144,128]{1,0:T(1,128)}', space=vmem, size = 0x12000, scoped, tag = 'internal scratch']
  #allocation2 [shape = 'bf16[2,18,576]{2,1,0:T(8,128)(2,1)}', space=vmem, size = 0xf000, scoped, tag = 'scratch operand']
  %s0 = inlined_call_operand.hbm [shape: f32[2,16,2048], index: 0, kind: input, shape index: {}]
  %s1 = inlined_call_operand.hbm [shape: bf16[2048,512], index: 1, kind: input, shape index: {}]
  %s2 = inlined_call_operand.hbm [shape: f32[1,512], index: 2, kind: input, shape index: {}]
  %s3 = inlined_call_operand.hbm [shape: bf16[3,576,512], index: 3, kind: input, shape index: {}]
  %s4 = inlined_call_operand.hbm [shape: f32[1,512], index: 4, kind: input, shape index: {}]
  %s5 = inlined_call_operand.hbm [shape: bf16[512,2048], index: 5, kind: input, shape index: {}]
  %s6 = inlined_call_operand.hbm [shape: f32[1,2048], index: 6, kind: input, shape index: {}]
  %s7 = inlined_call_operand.hbm [shape: f32[2,16,2048], index: 7, kind: output, shape index: {}]
  %s8 = sld [smem:[#allocation0]]
  $region66: #{tpu_custom_call.1} parent=0
    _
  %s10 = ssub.s32 1, %s8
  %s11 = scalar_select 0, %s10, %s8
  $region1: #{tpu_custom_call.1} parent=0
    #allocation3 [shape = 'u8[262144]{0}', space=vmem, size = 0x40000, scoped, tag = 'input window, operand 0, single buffered']
    #allocation4 [shape = 's32[1]{0}', space=sflag, size = 0x4, scoped, tag = 'scoped memory for tpu_custom_call.1']
    #allocation5 [shape = 's32[1]{0}', space=sflag, size = 0x4, scoped, tag = 'scoped memory for tpu_custom_call.1']
    #allocation6 [shape = 'u8[2097152]{0}', space=vmem, size = 0x200000, scoped, tag = 'input window, operand 1, single buffered']
    #allocation7 [shape = 's32[1]{0}', space=sflag, size = 0x4, scoped, tag = 'scoped memory for tpu_custom_call.1']
    #allocation8 [shape = 'u8[2048]{0}', space=vmem, size = 0x800, scoped, tag = 'input window, operand 2, single buffered']
    #allocation9 [shape = 'u8[1769472]{0}', space=vmem, size = 0x1b0000, scoped, tag = 'input window, operand 3, single buffered']
    #allocation10 [shape = 's32[1]{0}', space=sflag, size = 0x4, scoped, tag = 'scoped memory for tpu_custom_call.1']
    #allocation11 [shape = 'u8[2048]{0}', space=vmem, size = 0x800, scoped, tag = 'input window, operand 4, single buffered']
    #allocation12 [shape = 'u8[2097152]{0}', space=vmem, size = 0x200000, scoped, tag = 'input window, operand 5, single buffered']
    #allocation13 [shape = 's32[1]{0}', space=sflag, size = 0x4, scoped, tag = 'scoped memory for tpu_custom_call.1']
    #allocation14 [shape = 'u8[8192]{0}', space=vmem, size = 0x2000, scoped, tag = 'input window, operand 6, single buffered']
    #allocation15 [shape = 'u8[262144]{0}', space=vmem, size = 0x40000, scoped, tag = 'output window, operand 0, single buffered']
    %12 = vsyncpa [#allocation4], 0
    %13 = vsyncpa [#allocation7], 0
    %14 = vsyncpa [#allocation10], 0
    %15 = vsyncpa [#allocation13], 0
    %16 = vsyncpa [#allocation5], 0
    // Predicated region
    $region2: #{tpu_custom_call.1} parent=1 // pred_check
      _
    $region3: #{tpu_custom_call.1} parent=1 // pred_check_branch
      %18 = sbr.rel (0) target = $region5
    $region4: #{tpu_custom_call.1} parent=1 // pred_region
      %s20 = ssub.s32 8192, 8192
      %21 = vsyncadd [#allocation4], %s20
      %s22 = sshll.u32 [#allocation3], 4
      %s23 = int_to_ptr.vmem [resolvable:$true] %s22
      %28 = dma.hbm_to_vmem [thread:$0]  %s0, 8192, %s23, [#allocation4], 2048, 2048, 128
    $region5: #{tpu_custom_call.1} parent=1 // pred_fallthru
      _
    // Predicated region
    $region6: #{tpu_custom_call.1} parent=1 // pred_check
      _
    $region7: #{tpu_custom_call.1} parent=1 // pred_check_branch
      %30 = sbr.rel (0) target = $region9
    $region8: #{tpu_custom_call.1} parent=1 // pred_region
      %s32 = ssub.s32 65536, 65536
      %33 = vsyncadd [#allocation7], %s32
      %s34 = sshll.u32 [#allocation6], 4
      %s35 = int_to_ptr.vmem [resolvable:$true] %s34
      %40 = dma.hbm_to_vmem [thread:$0]  %s1, 65536, %s35, [#allocation7], 256, 256, 16
    $region9: #{tpu_custom_call.1} parent=1 // pred_fallthru
      _
    // Predicated region
    $region10: #{tpu_custom_call.1} parent=1 // pred_check
      _
    $region11: #{tpu_custom_call.1} parent=1 // pred_check_branch
      %42 = sbr.rel (0) target = $region13
    $region12: #{tpu_custom_call.1} parent=1 // pred_region
      %s44 = ssub.s32 64, 64
      %45 = vsyncadd [#allocation7], %s44
      %s47 = sshll.u32 [#allocation8], 4
      %s48 = int_to_ptr.vmem [resolvable:$true] %s47
      %50 = dma.hbm_to_vmem [thread:$0]  %s2, 64, %s48, [#allocation7]
    $region13: #{tpu_custom_call.1} parent=1 // pred_fallthru
      _
    // Predicated region
    $region14: #{tpu_custom_call.1} parent=1 // pred_check
      _
    $region15: #{tpu_custom_call.1} parent=1 // pred_check_branch
      %52 = sbr.rel (0) target = $region17
    $region16: #{tpu_custom_call.1} parent=1 // pred_region
      %s54 = ssub.s32 55296, 55296
      %55 = vsyncadd [#allocation10], %s54
      %s56 = sshll.u32 [#allocation9], 4
      %s57 = int_to_ptr.vmem [resolvable:$true] %s56
      %62 = dma.hbm_to_vmem [thread:$0]  %s3, 55296, %s57, [#allocation10], 256, 256, 16
    $region17: #{tpu_custom_call.1} parent=1 // pred_fallthru
      _
    // Predicated region
    $region18: #{tpu_custom_call.1} parent=1 // pred_check
      _
    $region19: #{tpu_custom_call.1} parent=1 // pred_check_branch
      %64 = sbr.rel (0) target = $region21
    $region20: #{tpu_custom_call.1} parent=1 // pred_region
      %s66 = ssub.s32 64, 64
      %67 = vsyncadd [#allocation10], %s66
      %s69 = sshll.u32 [#allocation11], 4
      %s70 = int_to_ptr.vmem [resolvable:$true] %s69
      %72 = dma.hbm_to_vmem [thread:$0]  %s4, 64, %s70, [#allocation10]
    $region21: #{tpu_custom_call.1} parent=1 // pred_fallthru
      _
    // Predicated region
    $region22: #{tpu_custom_call.1} parent=1 // pred_check
      _
    $region23: #{tpu_custom_call.1} parent=1 // pred_check_branch
      %74 = sbr.rel (0) target = $region25
    $region24: #{tpu_custom_call.1} parent=1 // pred_region
      %s76 = ssub.s32 65536, 65536
      %77 = vsyncadd [#allocation13], %s76
      %s78 = sshll.u32 [#allocation12], 4
      %s79 = int_to_ptr.vmem [resolvable:$true] %s78
      %84 = dma.hbm_to_vmem [thread:$0]  %s5, 65536, %s79, [#allocation13], 1024, 1024, 64
    $region25: #{tpu_custom_call.1} parent=1 // pred_fallthru
      _
    // Predicated region
    $region26: #{tpu_custom_call.1} parent=1 // pred_check
      _
    $region27: #{tpu_custom_call.1} parent=1 // pred_check_branch
      %86 = sbr.rel (0) target = $region29
    $region28: #{tpu_custom_call.1} parent=1 // pred_region
      %s88 = ssub.s32 256, 256
      %89 = vsyncadd [#allocation13], %s88
      %s91 = sshll.u32 [#allocation14], 4
      %s92 = int_to_ptr.vmem [resolvable:$true] %s91
      %94 = dma.hbm_to_vmem [thread:$0]  %s6, 256, %s92, [#allocation13]
    $region29: #{tpu_custom_call.1} parent=1 // pred_fallthru
      _
    // Predicated region
    $region30: #{tpu_custom_call.1} parent=1 // pred_check
      _
    $region31: #{tpu_custom_call.1} parent=1 // pred_check_branch
      %96 = sbr.rel (0) target = $region33
    $region32: #{tpu_custom_call.1} parent=1 // pred_region
      %97 = dma.done [#allocation4], 8192
    $region33: #{tpu_custom_call.1} parent=1 // pred_fallthru
      _
    // Predicated region
    $region34: #{tpu_custom_call.1} parent=1 // pred_check
      _
    $region35: #{tpu_custom_call.1} parent=1 // pred_check_branch
      %99 = sbr.rel (0) target = $region37
    $region36: #{tpu_custom_call.1} parent=1 // pred_region
      %100 = dma.done [#allocation7], 65536
    $region37: #{tpu_custom_call.1} parent=1 // pred_fallthru
      _
    // Predicated region
    $region38: #{tpu_custom_call.1} parent=1 // pred_check
      _
    $region39: #{tpu_custom_call.1} parent=1 // pred_check_branch
      %102 = sbr.rel (0) target = $region41
    $region40: #{tpu_custom_call.1} parent=1 // pred_region
      %103 = dma.done [#allocation7], 64
    $region41: #{tpu_custom_call.1} parent=1 // pred_fallthru
      _
    // Predicated region
    $region42: #{tpu_custom_call.1} parent=1 // pred_check
      _
    $region43: #{tpu_custom_call.1} parent=1 // pred_check_branch
      %105 = sbr.rel (0) target = $region45
    $region44: #{tpu_custom_call.1} parent=1 // pred_region
      %106 = dma.done [#allocation10], 55296
    $region45: #{tpu_custom_call.1} parent=1 // pred_fallthru
      _
    // Predicated region
    $region46: #{tpu_custom_call.1} parent=1 // pred_check
      _
    $region47: #{tpu_custom_call.1} parent=1 // pred_check_branch
      %108 = sbr.rel (0) target = $region49
    $region48: #{tpu_custom_call.1} parent=1 // pred_region
      %109 = dma.done [#allocation10], 64
    $region49: #{tpu_custom_call.1} parent=1 // pred_fallthru
      _
    // Predicated region
    $region50: #{tpu_custom_call.1} parent=1 // pred_check
      _
    $region51: #{tpu_custom_call.1} parent=1 // pred_check_branch
      %111 = sbr.rel (0) target = $region53
    $region52: #{tpu_custom_call.1} parent=1 // pred_region
      %112 = dma.done [#allocation13], 65536
    $region53: #{tpu_custom_call.1} parent=1 // pred_fallthru
      _
    // Predicated region
    $region54: #{tpu_custom_call.1} parent=1 // pred_check
      _
    $region55: #{tpu_custom_call.1} parent=1 // pred_check_branch
      %114 = sbr.rel (0) target = $region57
    $region56: #{tpu_custom_call.1} parent=1 // pred_region
      %115 = dma.done [#allocation13], 256
    $region57: #{tpu_custom_call.1} parent=1 // pred_fallthru
      _
    %v117 = vld [vmem:[#allocation3] sm:$0xff]
    %v118 = vld [vmem:[#allocation3 + $0x8] sm:$0xff]
    %v119 = vld [vmem:[#allocation3 + $0x10] sm:$0xff]
    %v120 = vld [vmem:[#allocation3 + $0x18] sm:$0xff]
    %v121 = vld [vmem:[#allocation3 + $0x20] sm:$0xff]
    %v122 = vld [vmem:[#allocation3 + $0x28] sm:$0xff]
    %v123 = vld [vmem:[#allocation3 + $0x30] sm:$0xff]
    %v124 = vld [vmem:[#allocation3 + $0x38] sm:$0xff]
    %v125 = vld [vmem:[#allocation3 + $0x40] sm:$0xff]
    %v126 = vld [vmem:[#allocation3 + $0x48] sm:$0xff]
    %v127 = vld [vmem:[#allocation3 + $0x50] sm:$0xff]
    %v128 = vld [vmem:[#allocation3 + $0x58] sm:$0xff]
    %v129 = vld [vmem:[#allocation3 + $0x60] sm:$0xff]
    %v130 = vld [vmem:[#allocation3 + $0x68] sm:$0xff]
    %v131 = vld [vmem:[#allocation3 + $0x70] sm:$0xff]
    %v132 = vld [vmem:[#allocation3 + $0x78] sm:$0xff]
    %v133 = vld [vmem:[#allocation3 + $0x80] sm:$0xff]
    %v134 = vld [vmem:[#allocation3 + $0x88] sm:$0xff]
    %v135 = vld [vmem:[#allocation3 + $0x90] sm:$0xff]
    %v136 = vld [vmem:[#allocation3 + $0x98] sm:$0xff]
    %v137 = vld [vmem:[#allocation3 + $0xa0] sm:$0xff]
    %v138 = vld [vmem:[#allocation3 + $0xa8] sm:$0xff]
    %v139 = vld [vmem:[#allocation3 + $0xb0] sm:$0xff]
    %v140 = vld [vmem:[#allocation3 + $0xb8] sm:$0xff]
    %v141 = vld [vmem:[#allocation3 + $0xc0] sm:$0xff]
    %v142 = vld [vmem:[#allocation3 + $0xc8] sm:$0xff]
    %v143 = vld [vmem:[#allocation3 + $0xd0] sm:$0xff]
    %v144 = vld [vmem:[#allocation3 + $0xd8] sm:$0xff]
    %v145 = vld [vmem:[#allocation3 + $0xe0] sm:$0xff]
    %v146 = vld [vmem:[#allocation3 + $0xe8] sm:$0xff]
    %v147 = vld [vmem:[#allocation3 + $0xf0] sm:$0xff]
    %v148 = vld [vmem:[#allocation3 + $0xf8] sm:$0xff]
    %v149 = vld [vmem:[#allocation3 + $0x100] sm:$0xff]
    %v150 = vld [vmem:[#allocation3 + $0x108] sm:$0xff]
    %v151 = vld [vmem:[#allocation3 + $0x110] sm:$0xff]
    %v152 = vld [vmem:[#allocation3 + $0x118] sm:$0xff]
    %v153 = vld [vmem:[#allocation3 + $0x120] sm:$0xff]
    %v154 = vld [vmem:[#allocation3 + $0x128] sm:$0xff]
    %v155 = vld [vmem:[#allocation3 + $0x130] sm:$0xff]
    %v156 = vld [vmem:[#allocation3 + $0x138] sm:$0xff]
    %v157 = vld [vmem:[#allocation3 + $0x140] sm:$0xff]
    %v158 = vld [vmem:[#allocation3 + $0x148] sm:$0xff]
    %v159 = vld [vmem:[#allocation3 + $0x150] sm:$0xff]
    %v160 = vld [vmem:[#allocation3 + $0x158] sm:$0xff]
    %v161 = vld [vmem:[#allocation3 + $0x160] sm:$0xff]
    %v162 = vld [vmem:[#allocation3 + $0x168] sm:$0xff]
    %v163 = vld [vmem:[#allocation3 + $0x170] sm:$0xff]
    %v164 = vld [vmem:[#allocation3 + $0x178] sm:$0xff]
    %v165 = vld [vmem:[#allocation3 + $0x180] sm:$0xff]
    %v166 = vld [vmem:[#allocation3 + $0x188] sm:$0xff]
    %v167 = vld [vmem:[#allocation3 + $0x190] sm:$0xff]
    %v168 = vld [vmem:[#allocation3 + $0x198] sm:$0xff]
    %v169 = vld [vmem:[#allocation3 + $0x1a0] sm:$0xff]
    %v170 = vld [vmem:[#allocation3 + $0x1a8] sm:$0xff]
    %v171 = vld [vmem:[#allocation3 + $0x1b0] sm:$0xff]
    %v172 = vld [vmem:[#allocation3 + $0x1b8] sm:$0xff]
    %v173 = vld [vmem:[#allocation3 + $0x1c0] sm:$0xff]
    %v174 = vld [vmem:[#allocation3 + $0x1c8] sm:$0xff]
    %v175 = vld [vmem:[#allocation3 + $0x1d0] sm:$0xff]
    %v176 = vld [vmem:[#allocation3 + $0x1d8] sm:$0xff]
    %v177 = vld [vmem:[#allocation3 + $0x1e0] sm:$0xff]
    %v178 = vld [vmem:[#allocation3 + $0x1e8] sm:$0xff]
    %v179 = vld [vmem:[#allocation3 + $0x1f0] sm:$0xff]
    %v180 = vld [vmem:[#allocation3 + $0x1f8] sm:$0xff]
    %v181 = vpack.c.bf16 %v133, %v117
    %v182 = vpack.c.bf16 %v134, %v118
    %v183 = vpack.c.bf16 %v135, %v119
    %v184 = vpack.c.bf16 %v136, %v120
    %v185 = vpack.c.bf16 %v137, %v121
    %v186 = vpack.c.bf16 %v138, %v122
    %v187 = vpack.c.bf16 %v139, %v123
    %v188 = vpack.c.bf16 %v140, %v124
    %v189 = vpack.c.bf16 %v141, %v125
    %v190 = vpack.c.bf16 %v142, %v126
    %v191 = vpack.c.bf16 %v143, %v127
    %v192 = vpack.c.bf16 %v144, %v128
    %v193 = vpack.c.bf16 %v145, %v129
    %v194 = vpack.c.bf16 %v146, %v130
    %v195 = vpack.c.bf16 %v147, %v131
    %v196 = vpack.c.bf16 %v148, %v132
    %v197 = vpack.c.bf16 %v165, %v149
    %v198 = vpack.c.bf16 %v166, %v150
    %v199 = vpack.c.bf16 %v167, %v151
    %v200 = vpack.c.bf16 %v168, %v152
    %v201 = vpack.c.bf16 %v169, %v153
    %v202 = vpack.c.bf16 %v170, %v154
    %v203 = vpack.c.bf16 %v171, %v155
    %v204 = vpack.c.bf16 %v172, %v156
    %v205 = vpack.c.bf16 %v173, %v157
    %v206 = vpack.c.bf16 %v174, %v158
    %v207 = vpack.c.bf16 %v175, %v159
    %v208 = vpack.c.bf16 %v176, %v160
    %v209 = vpack.c.bf16 %v177, %v161
    %v210 = vpack.c.bf16 %v178, %v162
    %v211 = vpack.c.bf16 %v179, %v163
    %v212 = vpack.c.bf16 %v180, %v164
    %v213 = vld [vmem:[#allocation6] sm:$0xff]
    %v214 = vld [vmem:[#allocation6 + $0x8] sm:$0xff]
    %v215 = vld [vmem:[#allocation6 + $0x10] sm:$0xff]
    %v216 = vld [vmem:[#allocation6 + $0x18] sm:$0xff]
    %v217 = vld [vmem:[#allocation6 + $0x20] sm:$0xff]
    %v218 = vld [vmem:[#allocation6 + $0x28] sm:$0xff]
    %v219 = vld [vmem:[#allocation6 + $0x30] sm:$0xff]
    %v220 = vld [vmem:[#allocation6 + $0x38] sm:$0xff]
    %v221 = vld [vmem:[#allocation6 + $0x40] sm:$0xff]
    %v222 = vld [vmem:[#allocation6 + $0x48] sm:$0xff]
    %v223 = vld [vmem:[#allocation6 + $0x50] sm:$0xff]
    %v224 = vld [vmem:[#allocation6 + $0x58] sm:$0xff]
    %v225 = vld [vmem:[#allocation6 + $0x60] sm:$0xff]
    %v226 = vld [vmem:[#allocation6 + $0x68] sm:$0xff]
    %v227 = vld [vmem:[#allocation6 + $0x70] sm:$0xff]
    %v228 = vld [vmem:[#allocation6 + $0x78] sm:$0xff]
    %v229 = vld [vmem:[#allocation6 + $0x80] sm:$0xff]
    %v230 = vld [vmem:[#allocation6 + $0x88] sm:$0xff]
    %v231 = vld [vmem:[#allocation6 + $0x90] sm:$0xff]
    %v232 = vld [vmem:[#allocation6 + $0x98] sm:$0xff]
    %v233 = vld [vmem:[#allocation6 + $0xa0] sm:$0xff]
    %v234 = vld [vmem:[#allocation6 + $0xa8] sm:$0xff]
    %v235 = vld [vmem:[#allocation6 + $0xb0] sm:$0xff]
    %v236 = vld [vmem:[#allocation6 + $0xb8] sm:$0xff]
    %v237 = vld [vmem:[#allocation6 + $0xc0] sm:$0xff]
    %v238 = vld [vmem:[#allocation6 + $0xc8] sm:$0xff]
    %v239 = vld [vmem:[#allocation6 + $0xd0] sm:$0xff]
    %v240 = vld [vmem:[#allocation6 + $0xd8] sm:$0xff]
    %v241 = vld [vmem:[#allocation6 + $0xe0] sm:$0xff]
    %v242 = vld [vmem:[#allocation6 + $0xe8] sm:$0xff]
    %v243 = vld [vmem:[#allocation6 + $0xf0] sm:$0xff]
    %v244 = vld [vmem:[#allocation6 + $0xf8] sm:$0xff]
    %v245 = vld [vmem:[#allocation6 + $0x100] sm:$0xff]
    %v246 = vld [vmem:[#allocation6 + $0x108] sm:$0xff]
    %v247 = vld [vmem:[#allocation6 + $0x110] sm:$0xff]
    %v248 = vld [vmem:[#allocation6 + $0x118] sm:$0xff]
    %v249 = vld [vmem:[#allocation6 + $0x120] sm:$0xff]
    %v250 = vld [vmem:[#allocation6 + $0x128] sm:$0xff]
    %v251 = vld [vmem:[#allocation6 + $0x130] sm:$0xff]
    %v252 = vld [vmem:[#allocation6 + $0x138] sm:$0xff]
    %v253 = vld [vmem:[#allocation6 + $0x140] sm:$0xff]
    %v254 = vld [vmem:[#allocation6 + $0x148] sm:$0xff]
    %v255 = vld [vmem:[#allocation6 + $0x150] sm:$0xff]
    %v256 = vld [vmem:[#allocation6 + $0x158] sm:$0xff]
    %v257 = vld [vmem:[#allocation6 + $0x160] sm:$0xff]
    %v258 = vld [vmem:[#allocation6 + $0x168] sm:$0xff]
    %v259 = vld [vmem:[#allocation6 + $0x170] sm:$0xff]
    %v260 = vld [vmem:[#allocation6 + $0x178] sm:$0xff]
    %v261 = vld [vmem:[#allocation6 + $0x180] sm:$0xff]
    %v262 = vld [vmem:[#allocation6 + $0x188] sm:$0xff]
    %v263 = vld [vmem:[#allocation6 + $0x190] sm:$0xff]
    %v264 = vld [vmem:[#allocation6 + $0x198] sm:$0xff]
    %v265 = vld [vmem:[#allocation6 + $0x1a0] sm:$0xff]
    %v266 = vld [vmem:[#allocation6 + $0x1a8] sm:$0xff]
    %v267 = vld [vmem:[#allocation6 + $0x1b0] sm:$0xff]
    %v268 = vld [vmem:[#allocation6 + $0x1b8] sm:$0xff]
    %v269 = vld [vmem:[#allocation6 + $0x1c0] sm:$0xff]
    %v270 = vld [vmem:[#allocation6 + $0x1c8] sm:$0xff]
    %v271 = vld [vmem:[#allocation6 + $0x1d0] sm:$0xff]
    %v272 = vld [vmem:[#allocation6 + $0x1d8] sm:$0xff]
    %v273 = vld [vmem:[#allocation6 + $0x1e0] sm:$0xff]
    %v274 = vld [vmem:[#allocation6 + $0x1e8] sm:$0xff]
    %v275 = vld [vmem:[#allocation6 + $0x1f0] sm:$0xff]
    %v276 = vld [vmem:[#allocation6 + $0x1f8] sm:$0xff]
    %v277 = vld [vmem:[#allocation6 + $0x200] sm:$0xff]
    %v278 = vld [vmem:[#allocation6 + $0x208] sm:$0xff]
    %v279 = vld [vmem:[#allocation6 + $0x210] sm:$0xff]
    %v280 = vld [vmem:[#allocation6 + $0x218] sm:$0xff]
    %v281 = vld [vmem:[#allocation6 + $0x220] sm:$0xff]
    %v282 = vld [vmem:[#allocation6 + $0x228] sm:$0xff]
    %v283 = vld [vmem:[#allocation6 + $0x230] sm:$0xff]
    %v284 = vld [vmem:[#allocation6 + $0x238] sm:$0xff]
    %v285 = vld [vmem:[#allocation6 + $0x240] sm:$0xff]
    %v286 = vld [vmem:[#allocation6 + $0x248] sm:$0xff]
    %v287 = vld [vmem:[#allocation6 + $0x250] sm:$0xff]
    %v288 = vld [vmem:[#allocation6 + $0x258] sm:$0xff]
    %v289 = vld [vmem:[#allocation6 + $0x260] sm:$0xff]
    %v290 = vld [vmem:[#allocation6 + $0x268] sm:$0xff]
    %v291 = vld [vmem:[#allocation6 + $0x270] sm:$0xff]
    %v292 = vld [vmem:[#allocation6 + $0x278] sm:$0xff]
    %v293 = vld [vmem:[#allocation6 + $0x280] sm:$0xff]
    %v294 = vld [vmem:[#allocation6 + $0x288] sm:$0xff]
    %v295 = vld [vmem:[#allocation6 + $0x290] sm:$0xff]
    %v296 = vld [vmem:[#allocation6 + $0x298] sm:$0xff]
    %v297 = vld [vmem:[#allocation6 + $0x2a0] sm:$0xff]
    %v298 = vld [vmem:[#allocation6 + $0x2a8] sm:$0xff]
    %v299 = vld [vmem:[#allocation6 + $0x2b0] sm:$0xff]
    %v300 = vld [vmem:[#allocation6 + $0x2b8] sm:$0xff]
    %v301 = vld [vmem:[#allocation6 + $0x2c0] sm:$0xff]
    %v302 = vld [vmem:[#allocation6 + $0x2c8] sm:$0xff]
    %v303 = vld [vmem:[#allocation6 + $0x2d0] sm:$0xff]
    %v304 = vld [vmem:[#allocation6 + $0x2d8] sm:$0xff]
    %v305 = vld [vmem:[#allocation6 + $0x2e0] sm:$0xff]
    %v306 = vld [vmem:[#allocation6 + $0x2e8] sm:$0xff]
    %v307 = vld [vmem:[#allocation6 + $0x2f0] sm:$0xff]
    %v308 = vld [vmem:[#allocation6 + $0x2f8] sm:$0xff]
    %v309 = vld [vmem:[#allocation6 + $0x300] sm:$0xff]
    %v310 = vld [vmem:[#allocation6 + $0x308] sm:$0xff]
    %v311 = vld [vmem:[#allocation6 + $0x310] sm:$0xff]
    %v312 = vld [vmem:[#allocation6 + $0x318] sm:$0xff]
    %v313 = vld [vmem:[#allocation6 + $0x320] sm:$0xff]
    %v314 = vld [vmem:[#allocation6 + $0x328] sm:$0xff]
    %v315 = vld [vmem:[#allocation6 + $0x330] sm:$0xff]
    %v316 = vld [vmem:[#allocation6 + $0x338] sm:$0xff]
    %v317 = vld [vmem:[#allocation6 + $0x340] sm:$0xff]
    %v318 = vld [vmem:[#allocation6 + $0x348] sm:$0xff]
    %v319 = vld [vmem:[#allocation6 + $0x350] sm:$0xff]
    %v320 = vld [vmem:[#allocation6 + $0x358] sm:$0xff]
    %v321 = vld [vmem:[#allocation6 + $0x360] sm:$0xff]
    %v322 = vld [vmem:[#allocation6 + $0x368] sm:$0xff]
    %v323 = vld [vmem:[#allocation6 + $0x370] sm:$0xff]
    %v324 = vld [vmem:[#allocation6 + $0x378] sm:$0xff]
    %v325 = vld [vmem:[#allocation6 + $0x380] sm:$0xff]
    %v326 = vld [vmem:[#allocation6 + $0x388] sm:$0xff]
    %v327 = vld [vmem:[#allocation6 + $0x390] sm:$0xff]
    %v328 = vld [vmem:[#allocation6 + $0x398] sm:$0xff]
    %v329 = vld [vmem:[#allocation6 + $0x3a0] sm:$0xff]
    %v330 = vld [vmem:[#allocation6 + $0x3a8] sm:$0xff]
    %v331 = vld [vmem:[#allocation6 + $0x3b0] sm:$0xff]
    %v332 = vld [vmem:[#allocation6 + $0x3b8] sm:$0xff]
    %v333 = vld [vmem:[#allocation6 + $0x3c0] sm:$0xff]
    %v334 = vld [vmem:[#allocation6 + $0x3c8] sm:$0xff]
    %v335 = vld [vmem:[#allocation6 + $0x3d0] sm:$0xff]
    %v336 = vld [vmem:[#allocation6 + $0x3d8] sm:$0xff]
    %v337 = vld [vmem:[#allocation6 + $0x3e0] sm:$0xff]
    %v338 = vld [vmem:[#allocation6 + $0x3e8] sm:$0xff]
    %v339 = vld [vmem:[#allocation6 + $0x3f0] sm:$0xff]
    %v340 = vld [vmem:[#allocation6 + $0x3f8] sm:$0xff]
    %v341 = vld [vmem:[#allocation6 + $0x400] sm:$0xff]
    %v342 = vld [vmem:[#allocation6 + $0x408] sm:$0xff]
    %v343 = vld [vmem:[#allocation6 + $0x410] sm:$0xff]
    %v344 = vld [vmem:[#allocation6 + $0x418] sm:$0xff]
    %v345 = vld [vmem:[#allocation6 + $0x420] sm:$0xff]
    %v346 = vld [vmem:[#allocation6 + $0x428] sm:$0xff]
    %v347 = vld [vmem:[#allocation6 + $0x430] sm:$0xff]
    %v348 = vld [vmem:[#allocation6 + $0x438] sm:$0xff]
    %v349 = vld [vmem:[#allocation6 + $0x440] sm:$0xff]
    %v350 = vld [vmem:[#allocation6 + $0x448] sm:$0xff]
    %v351 = vld [vmem:[#allocation6 + $0x450] sm:$0xff]
    %v352 = vld [vmem:[#allocation6 + $0x458] sm:$0xff]
    %v353 = vld [vmem:[#allocation6 + $0x460] sm:$0xff]
    %v354 = vld [vmem:[#allocation6 + $0x468] sm:$0xff]
    %v355 = vld [vmem:[#allocation6 + $0x470] sm:$0xff]
    %v356 = vld [vmem:[#allocation6 + $0x478] sm:$0xff]
    %v357 = vld [vmem:[#allocation6 + $0x480] sm:$0xff]
    %v358 = vld [vmem:[#allocation6 + $0x488] sm:$0xff]
    %v359 = vld [vmem:[#allocation6 + $0x490] sm:$0xff]
    %v360 = vld [vmem:[#allocation6 + $0x498] sm:$0xff]
    %v361 = vld [vmem:[#allocation6 + $0x4a0] sm:$0xff]
    %v362 = vld [vmem:[#allocation6 + $0x4a8] sm:$0xff]
    %v363 = vld [vmem:[#allocation6 + $0x4b0] sm:$0xff]
    %v364 = vld [vmem:[#allocation6 + $0x4b8] sm:$0xff]
    %v365 = vld [vmem:[#allocation6 + $0x4c0] sm:$0xff]
    %v366 = vld [vmem:[#allocation6 + $0x4c8] sm:$0xff]
    %v367 = vld [vmem:[#allocation6 + $0x4d0] sm:$0xff]
    %v368 = vld [vmem:[#allocation6 + $0x4d8] sm:$0xff]
    %v369 = vld [vmem:[#allocation6 + $0x4e0] sm:$0xff]
    %v370 = vld [vmem:[#allocation6 + $0x4e8] sm:$0xff]
    %v371 = vld [vmem:[#allocation6 + $0x4f0] sm:$0xff]
    %v372 = vld [vmem:[#allocation6 + $0x4f8] sm:$0xff]
    %v373 = vld [vmem:[#allocation6 + $0x500] sm:$0xff]
    %v374 = vld [vmem:[#allocation6 + $0x508] sm:$0xff]
    %v375 = vld [vmem:[#allocation6 + $0x510] sm:$0xff]
    %v376 = vld [vmem:[#allocation6 + $0x518] sm:$0xff]
    %v377 = vld [vmem:[#allocation6 + $0x520] sm:$0xff]
    %v378 = vld [vmem:[#allocation6 + $0x528] sm:$0xff]
    %v379 = vld [vmem:[#allocation6 + $0x530] sm:$0xff]
    %v380 = vld [vmem:[#allocation6 + $0x538] sm:$0xff]
    %v381 = vld [vmem:[#allocation6 + $0x540] sm:$0xff]
    %v382 = vld [vmem:[#allocation6 + $0x548] sm:$0xff]
    %v383 = vld [vmem:[#allocation6 + $0x550] sm:$0xff]
    %v384 = vld [vmem:[#allocation6 + $0x558] sm:$0xff]
    %v385 = vld [vmem:[#allocation6 + $0x560] sm:$0xff]
    %v386 = vld [vmem:[#allocation6 + $0x568] sm:$0xff]
    %v387 = vld [vmem:[#allocation6 + $0x570] sm:$0xff]
    %v388 = vld [vmem:[#allocation6 + $0x578] sm:$0xff]
    %v389 = vld [vmem:[#allocation6 + $0x580] sm:$0xff]
    %v390 = vld [vmem:[#allocation6 + $0x588] sm:$0xff]
    %v391 = vld [vmem:[#allocation6 + $0x590] sm:$0xff]
    %v392 = vld [vmem:[#allocation6 + $0x598] sm:$0xff]
    %v393 = vld [vmem:[#allocation6 + $0x5a0] sm:$0xff]
    %v394 = vld [vmem:[#allocation6 + $0x5a8] sm:$0xff]
    %v395 = vld [vmem:[#allocation6 + $0x5b0] sm:$0xff]
    %v396 = vld [vmem:[#allocation6 + $0x5b8] sm:$0xff]
    %v397 = vld [vmem:[#allocation6 + $0x5c0] sm:$0xff]
    %v398 = vld [vmem:[#allocation6 + $0x5c8] sm:$0xff]
    %v399 = vld [vmem:[#allocation6 + $0x5d0] sm:$0xff]
    %v400 = vld [vmem:[#allocation6 + $0x5d8] sm:$0xff]
    %v401 = vld [vmem:[#allocation6 + $0x5e0] sm:$0xff]
    %v402 = vld [vmem:[#allocation6 + $0x5e8] sm:$0xff]
    %v403 = vld [vmem:[#allocation6 + $0x5f0] sm:$0xff]
    %v404 = vld [vmem:[#allocation6 + $0x5f8] sm:$0xff]
    %v405 = vld [vmem:[#allocation6 + $0x600] sm:$0xff]
    %v406 = vld [vmem:[#allocation6 + $0x608] sm:$0xff]
    %v407 = vld [vmem:[#allocation6 + $0x610] sm:$0xff]
    %v408 = vld [vmem:[#allocation6 + $0x618] sm:$0xff]
    %v409 = vld [vmem:[#allocation6 + $0x620] sm:$0xff]
    %v410 = vld [vmem:[#allocation6 + $0x628] sm:$0xff]
    %v411 = vld [vmem:[#allocation6 + $0x630] sm:$0xff]
    %v412 = vld [vmem:[#allocation6 + $0x638] sm:$0xff]
    %v413 = vld [vmem:[#allocation6 + $0x640] sm:$0xff]
    %v414 = vld [vmem:[#allocation6 + $0x648] sm:$0xff]
    %v415 = vld [vmem:[#allocation6 + $0x650] sm:$0xff]
    %v416 = vld [vmem:[#allocation6 + $0x658] sm:$0xff]
    %v417 = vld [vmem:[#allocation6 + $0x660] sm:$0xff]
    %v418 = vld [vmem:[#allocation6 + $0x668] sm:$0xff]
    %v419 = vld [vmem:[#allocation6 + $0x670] sm:$0xff]
    %v420 = vld [vmem:[#allocation6 + $0x678] sm:$0xff]
    %v421 = vld [vmem:[#allocation6 + $0x680] sm:$0xff]
    %v422 = vld [vmem:[#allocation6 + $0x688] sm:$0xff]
    %v423 = vld [vmem:[#allocation6 + $0x690] sm:$0xff]
    %v424 = vld [vmem:[#allocation6 + $0x698] sm:$0xff]
    %v425 = vld [vmem:[#allocation6 + $0x6a0] sm:$0xff]
    %v426 = vld [vmem:[#allocation6 + $0x6a8] sm:$0xff]
    %v427 = vld [vmem:[#allocation6 + $0x6b0] sm:$0xff]
    %v428 = vld [vmem:[#allocation6 + $0x6b8] sm:$0xff]
    %v429 = vld [vmem:[#allocation6 + $0x6c0] sm:$0xff]
    %v430 = vld [vmem:[#allocation6 + $0x6c8] sm:$0xff]
    %v431 = vld [vmem:[#allocation6 + $0x6d0] sm:$0xff]
    %v432 = vld [vmem:[#allocation6 + $0x6d8] sm:$0xff]
    %v433 = vld [vmem:[#allocation6 + $0x6e0] sm:$0xff]
    %v434 = vld [vmem:[#allocation6 + $0x6e8] sm:$0xff]
    %v435 = vld [vmem:[#allocation6 + $0x6f0] sm:$0xff]
    %v436 = vld [vmem:[#allocation6 + $0x6f8] sm:$0xff]
    %v437 = vld [vmem:[#allocation6 + $0x700] sm:$0xff]
    %v438 = vld [vmem:[#allocation6 + $0x708] sm:$0xff]
    %v439 = vld [vmem:[#allocation6 + $0x710] sm:$0xff]
    %v440 = vld [vmem:[#allocation6 + $0x718] sm:$0xff]
    %v441 = vld [vmem:[#allocation6 + $0x720] sm:$0xff]
    %v442 = vld [vmem:[#allocation6 + $0x728] sm:$0xff]
    %v443 = vld [vmem:[#allocation6 + $0x730] sm:$0xff]
    %v444 = vld [vmem:[#allocation6 + $0x738] sm:$0xff]
    %v445 = vld [vmem:[#allocation6 + $0x740] sm:$0xff]
    %v446 = vld [vmem:[#allocation6 + $0x748] sm:$0xff]
    %v447 = vld [vmem:[#allocation6 + $0x750] sm:$0xff]
    %v448 = vld [vmem:[#allocation6 + $0x758] sm:$0xff]
    %v449 = vld [vmem:[#allocation6 + $0x760] sm:$0xff]
    %v450 = vld [vmem:[#allocation6 + $0x768] sm:$0xff]
    %v451 = vld [vmem:[#allocation6 + $0x770] sm:$0xff]
    %v452 = vld [vmem:[#allocation6 + $0x778] sm:$0xff]
    %v453 = vld [vmem:[#allocation6 + $0x780] sm:$0xff]
    %v454 = vld [vmem:[#allocation6 + $0x788] sm:$0xff]
    %v455 = vld [vmem:[#allocation6 + $0x790] sm:$0xff]
    %v456 = vld [vmem:[#allocation6 + $0x798] sm:$0xff]
    %v457 = vld [vmem:[#allocation6 + $0x7a0] sm:$0xff]
    %v458 = vld [vmem:[#allocation6 + $0x7a8] sm:$0xff]
    %v459 = vld [vmem:[#allocation6 + $0x7b0] sm:$0xff]
    %v460 = vld [vmem:[#allocation6 + $0x7b8] sm:$0xff]
    %v461 = vld [vmem:[#allocation6 + $0x7c0] sm:$0xff]
    %v462 = vld [vmem:[#allocation6 + $0x7c8] sm:$0xff]
    %v463 = vld [vmem:[#allocation6 + $0x7d0] sm:$0xff]
    %v464 = vld [vmem:[#allocation6 + $0x7d8] sm:$0xff]
    %v465 = vld [vmem:[#allocation6 + $0x7e0] sm:$0xff]
    %v466 = vld [vmem:[#allocation6 + $0x7e8] sm:$0xff]
    %v467 = vld [vmem:[#allocation6 + $0x7f0] sm:$0xff]
    %v468 = vld [vmem:[#allocation6 + $0x7f8] sm:$0xff]
    %v469 = vld [vmem:[#allocation6 + $0x800] sm:$0xff]
    %v470 = vld [vmem:[#allocation6 + $0x808] sm:$0xff]
    %v471 = vld [vmem:[#allocation6 + $0x810] sm:$0xff]
    %v472 = vld [vmem:[#allocation6 + $0x818] sm:$0xff]
    %v473 = vld [vmem:[#allocation6 + $0x820] sm:$0xff]
    %v474 = vld [vmem:[#allocation6 + $0x828] sm:$0xff]
    %v475 = vld [vmem:[#allocation6 + $0x830] sm:$0xff]
    %v476 = vld [vmem:[#allocation6 + $0x838] sm:$0xff]
    %v477 = vld [vmem:[#allocation6 + $0x840] sm:$0xff]
    %v478 = vld [vmem:[#allocation6 + $0x848] sm:$0xff]
    %v479 = vld [vmem:[#allocation6 + $0x850] sm:$0xff]
    %v480 = vld [vmem:[#allocation6 + $0x858] sm:$0xff]
    %v481 = vld [vmem:[#allocation6 + $0x860] sm:$0xff]
    %v482 = vld [vmem:[#allocation6 + $0x868] sm:$0xff]
    %v483 = vld [vmem:[#allocation6 + $0x870] sm:$0xff]
    %v484 = vld [vmem:[#allocation6 + $0x878] sm:$0xff]
    %v485 = vld [vmem:[#allocation6 + $0x880] sm:$0xff]
    %v486 = vld [vmem:[#allocation6 + $0x888] sm:$0xff]
    %v487 = vld [vmem:[#allocation6 + $0x890] sm:$0xff]
    %v488 = vld [vmem:[#allocation6 + $0x898] sm:$0xff]
    %v489 = vld [vmem:[#allocation6 + $0x8a0] sm:$0xff]
    %v490 = vld [vmem:[#allocation6 + $0x8a8] sm:$0xff]
    %v491 = vld [vmem:[#allocation6 + $0x8b0] sm:$0xff]
    %v492 = vld [vmem:[#allocation6 + $0x8b8] sm:$0xff]
    %v493 = vld [vmem:[#allocation6 + $0x8c0] sm:$0xff]
    %v494 = vld [vmem:[#allocation6 + $0x8c8] sm:$0xff]
    %v495 = vld [vmem:[#allocation6 + $0x8d0] sm:$0xff]
    %v496 = vld [vmem:[#allocation6 + $0x8d8] sm:$0xff]
    %v497 = vld [vmem:[#allocation6 + $0x8e0] sm:$0xff]
    %v498 = vld [vmem:[#allocation6 + $0x8e8] sm:$0xff]
    %v499 = vld [vmem:[#allocation6 + $0x8f0] sm:$0xff]
    %v500 = vld [vmem:[#allocation6 + $0x8f8] sm:$0xff]
    %v501 = vld [vmem:[#allocation6 + $0x900] sm:$0xff]
    %v502 = vld [vmem:[#allocation6 + $0x908] sm:$0xff]
    %v503 = vld [vmem:[#allocation6 + $0x910] sm:$0xff]
    %v504 = vld [vmem:[#allocation6 + $0x918] sm:$0xff]
    %v505 = vld [vmem:[#allocation6 + $0x920] sm:$0xff]
    %v506 = vld [vmem:[#allocation6 + $0x928] sm:$0xff]
    %v507 = vld [vmem:[#allocation6 + $0x930] sm:$0xff]
    %v508 = vld [vmem:[#allocation6 + $0x938] sm:$0xff]
    %v509 = vld [vmem:[#allocation6 + $0x940] sm:$0xff]
    %v510 = vld [vmem:[#allocation6 + $0x948] sm:$0xff]
    %v511 = vld [vmem:[#allocation6 + $0x950] sm:$0xff]
    %v512 = vld [vmem:[#allocation6 + $0x958] sm:$0xff]
    %v513 = vld [vmem:[#allocation6 + $0x960] sm:$0xff]
    %v514 = vld [vmem:[#allocation6 + $0x968] sm:$0xff]
    %v515 = vld [vmem:[#allocation6 + $0x970] sm:$0xff]
    %v516 = vld [vmem:[#allocation6 + $0x978] sm:$0xff]
    %v517 = vld [vmem:[#allocation6 + $0x980] sm:$0xff]
    %v518 = vld [vmem:[#allocation6 + $0x988] sm:$0xff]
    %v519 = vld [vmem:[#allocation6 + $0x990] sm:$0xff]
    %v520 = vld [vmem:[#allocation6 + $0x998] sm:$0xff]
    %v521 = vld [vmem:[#allocation6 + $0x9a0] sm:$0xff]
    %v522 = vld [vmem:[#allocation6 + $0x9a8] sm:$0xff]
    %v523 = vld [vmem:[#allocation6 + $0x9b0] sm:$0xff]
    %v524 = vld [vmem:[#allocation6 + $0x9b8] sm:$0xff]
    %v525 = vld [vmem:[#allocation6 + $0x9c0] sm:$0xff]
    %v526 = vld [vmem:[#allocation6 + $0x9c8] sm:$0xff]
    %v527 = vld [vmem:[#allocation6 + $0x9d0] sm:$0xff]
    %v528 = vld [vmem:[#allocation6 + $0x9d8] sm:$0xff]
    %v529 = vld [vmem:[#allocation6 + $0x9e0] sm:$0xff]
    %v530 = vld [vmem:[#allocation6 + $0x9e8] sm:$0xff]
    %v531 = vld [vmem:[#allocation6 + $0x9f0] sm:$0xff]
    %v532 = vld [vmem:[#allocation6 + $0x9f8] sm:$0xff]
    %v533 = vld [vmem:[#allocation6 + $0xa00] sm:$0xff]
    %v534 = vld [vmem:[#allocation6 + $0xa08] sm:$0xff]
    %v535 = vld [vmem:[#allocation6 + $0xa10] sm:$0xff]
    %v536 = vld [vmem:[#allocation6 + $0xa18] sm:$0xff]
    %v537 = vld [vmem:[#allocation6 + $0xa20] sm:$0xff]
    %v538 = vld [vmem:[#allocation6 + $0xa28] sm:$0xff]
    %v539 = vld [vmem:[#allocation6 + $0xa30] sm:$0xff]
    %v540 = vld [vmem:[#allocation6 + $0xa38] sm:$0xff]
    %v541 = vld [vmem:[#allocation6 + $0xa40] sm:$0xff]
    %v542 = vld [vmem:[#allocation6 + $0xa48] sm:$0xff]
    %v543 = vld [vmem:[#allocation6 + $0xa50] sm:$0xff]
    %v544 = vld [vmem:[#allocation6 + $0xa58] sm:$0xff]
    %v545 = vld [vmem:[#allocation6 + $0xa60] sm:$0xff]
    %v546 = vld [vmem:[#allocation6 + $0xa68] sm:$0xff]
    %v547 = vld [vmem:[#allocation6 + $0xa70] sm:$0xff]
    %v548 = vld [vmem:[#allocation6 + $0xa78] sm:$0xff]
    %v549 = vld [vmem:[#allocation6 + $0xa80] sm:$0xff]
    %v550 = vld [vmem:[#allocation6 + $0xa88] sm:$0xff]
    %v551 = vld [vmem:[#allocation6 + $0xa90] sm:$0xff]
    %v552 = vld [vmem:[#allocation6 + $0xa98] sm:$0xff]
    %v553 = vld [vmem:[#allocation6 + $0xaa0] sm:$0xff]
    %v554 = vld [vmem:[#allocation6 + $0xaa8] sm:$0xff]
    %v555 = vld [vmem:[#allocation6 + $0xab0] sm:$0xff]
    %v556 = vld [vmem:[#allocation6 + $0xab8] sm:$0xff]
    %v557 = vld [vmem:[#allocation6 + $0xac0] sm:$0xff]
    %v558 = vld [vmem:[#allocation6 + $0xac8] sm:$0xff]
    %v559 = vld [vmem:[#allocation6 + $0xad0] sm:$0xff]
    %v560 = vld [vmem:[#allocation6 + $0xad8] sm:$0xff]
    %v561 = vld [vmem:[#allocation6 + $0xae0] sm:$0xff]
    %v562 = vld [vmem:[#allocation6 + $0xae8] sm:$0xff]
    %v563 = vld [vmem:[#allocation6 + $0xaf0] sm:$0xff]
    %v564 = vld [vmem:[#allocation6 + $0xaf8] sm:$0xff]
    %v565 = vld [vmem:[#allocation6 + $0xb00] sm:$0xff]
    %v566 = vld [vmem:[#allocation6 + $0xb08] sm:$0xff]
    %v567 = vld [vmem:[#allocation6 + $0xb10] sm:$0xff]
    %v568 = vld [vmem:[#allocation6 + $0xb18] sm:$0xff]
    %v569 = vld [vmem:[#allocation6 + $0xb20] sm:$0xff]
    %v570 = vld [vmem:[#allocation6 + $0xb28] sm:$0xff]
    %v571 = vld [vmem:[#allocation6 + $0xb30] sm:$0xff]
    %v572 = vld [vmem:[#allocation6 + $0xb38] sm:$0xff]
    %v573 = vld [vmem:[#allocation6 + $0xb40] sm:$0xff]
    %v574 = vld [vmem:[#allocation6 + $0xb48] sm:$0xff]
    %v575 = vld [vmem:[#allocation6 + $0xb50] sm:$0xff]
    %v576 = vld [vmem:[#allocation6 + $0xb58] sm:$0xff]
    %v577 = vld [vmem:[#allocation6 + $0xb60] sm:$0xff]
    %v578 = vld [vmem:[#allocation6 + $0xb68] sm:$0xff]
    %v579 = vld [vmem:[#allocation6 + $0xb70] sm:$0xff]
    %v580 = vld [vmem:[#allocation6 + $0xb78] sm:$0xff]
    %v581 = vld [vmem:[#allocation6 + $0xb80] sm:$0xff]
    %v582 = vld [vmem:[#allocation6 + $0xb88] sm:$0xff]
    %v583 = vld [vmem:[#allocation6 + $0xb90] sm:$0xff]
    %v584 = vld [vmem:[#allocation6 + $0xb98] sm:$0xff]
    %v585 = vld [vmem:[#allocation6 + $0xba0] sm:$0xff]
    %v586 = vld [vmem:[#allocation6 + $0xba8] sm:$0xff]
    %v587 = vld [vmem:[#allocation6 + $0xbb0] sm:$0xff]
    %v588 = vld [vmem:[#allocation6 + $0xbb8] sm:$0xff]
    %v589 = vld [vmem:[#allocation6 + $0xbc0] sm:$0xff]
    %v590 = vld [vmem:[#allocation6 + $0xbc8] sm:$0xff]
    %v591 = vld [vmem:[#allocation6 + $0xbd0] sm:$0xff]
    %v592 = vld [vmem:[#allocation6 + $0xbd8] sm:$0xff]
    %v593 = vld [vmem:[#allocation6 + $0xbe0] sm:$0xff]
    %v594 = vld [vmem:[#allocation6 + $0xbe8] sm:$0xff]
    %v595 = vld [vmem:[#allocation6 + $0xbf0] sm:$0xff]
    %v596 = vld [vmem:[#allocation6 + $0xbf8] sm:$0xff]
    %v597 = vld [vmem:[#allocation6 + $0xc00] sm:$0xff]
    %v598 = vld [vmem:[#allocation6 + $0xc08] sm:$0xff]
    %v599 = vld [vmem:[#allocation6 + $0xc10] sm:$0xff]
    %v600 = vld [vmem:[#allocation6 + $0xc18] sm:$0xff]
    %v601 = vld [vmem:[#allocation6 + $0xc20] sm:$0xff]
    %v602 = vld [vmem:[#allocation6 + $0xc28] sm:$0xff]
    %v603 = vld [vmem:[#allocation6 + $0xc30] sm:$0xff]
    %v604 = vld [vmem:[#allocation6 + $0xc38] sm:$0xff]
    %v605 = vld [vmem:[#allocation6 + $0xc40] sm:$0xff]
    %v606 = vld [vmem:[#allocation6 + $0xc48] sm:$0xff]
    %v607 = vld [vmem:[#allocation6 + $0xc50] sm:$0xff]
    %v608 = vld [vmem:[#allocation6 + $0xc58] sm:$0xff]
    %v609 = vld [vmem:[#allocation6 + $0xc60] sm:$0xff]
    %v610 = vld [vmem:[#allocation6 + $0xc68] sm:$0xff]
    %v611 = vld [vmem:[#allocation6 + $0xc70] sm:$0xff]
    %v612 = vld [vmem:[#allocation6 + $0xc78] sm:$0xff]
    %v613 = vld [vmem:[#allocation6 + $0xc80] sm:$0xff]
    %v614 = vld [vmem:[#allocation6 + $0xc88] sm:$0xff]
    %v615 = vld [vmem:[#allocation6 + $0xc90] sm:$0xff]
    %v616 = vld [vmem:[#allocation6 + $0xc98] sm:$0xff]
    %v617 = vld [vmem:[#allocation6 + $0xca0] sm:$0xff]
    %v618 = vld [vmem:[#allocation6 + $0xca8] sm:$0xff]
    %v619 = vld [vmem:[#allocation6 + $0xcb0] sm:$0xff]
    %v620 = vld [vmem:[#allocation6 + $0xcb8] sm:$0xff]
    %v621 = vld [vmem:[#allocation6 + $0xcc0] sm:$0xff]
    %v622 = vld [vmem:[#allocation6 + $0xcc8] sm:$0xff]
    %v623 = vld [vmem:[#allocation6 + $0xcd0] sm:$0xff]
    %v624 = vld [vmem:[#allocation6 + $0xcd8] sm:$0xff]
    %v625 = vld [vmem:[#allocation6 + $0xce0] sm:$0xff]
    %v626 = vld [vmem:[#allocation6 + $0xce8] sm:$0xff]
    %v627 = vld [vmem:[#allocation6 + $0xcf0] sm:$0xff]
    %v628 = vld [vmem:[#allocation6 + $0xcf8] sm:$0xff]
    %v629 = vld [vmem:[#allocation6 + $0xd00] sm:$0xff]
    %v630 = vld [vmem:[#allocation6 + $0xd08] sm:$0xff]
    %v631 = vld [vmem:[#allocation6 + $0xd10] sm:$0xff]
    %v632 = vld [vmem:[#allocation6 + $0xd18] sm:$0xff]
    %v633 = vld [vmem:[#allocation6 + $0xd20] sm:$0xff]
    %v634 = vld [vmem:[#allocation6 + $0xd28] sm:$0xff]
    %v635 = vld [vmem:[#allocation6 + $0xd30] sm:$0xff]
    %v636 = vld [vmem:[#allocation6 + $0xd38] sm:$0xff]
    %v637 = vld [vmem:[#allocation6 + $0xd40] sm:$0xff]
    %v638 = vld [vmem:[#allocation6 + $0xd48] sm:$0xff]
    %v639 = vld [vmem:[#allocation6 + $0xd50] sm:$0xff]
    %v640 = vld [vmem:[#allocation6 + $0xd58] sm:$0xff]
    %v641 = vld [vmem:[#allocation6 + $0xd60] sm:$0xff]
    %v642 = vld [vmem:[#allocation6 + $0xd68] sm:$0xff]
    %v643 = vld [vmem:[#allocation6 + $0xd70] sm:$0xff]
    %v644 = vld [vmem:[#allocation6 + $0xd78] sm:$0xff]
    %v645 = vld [vmem:[#allocation6 + $0xd80] sm:$0xff]
    %v646 = vld [vmem:[#allocation6 + $0xd88] sm:$0xff]
    %v647 = vld [vmem:[#allocation6 + $0xd90] sm:$0xff]
    %v648 = vld [vmem:[#allocation6 + $0xd98] sm:$0xff]
    %v649 = vld [vmem:[#allocation6 + $0xda0] sm:$0xff]
    %v650 = vld [vmem:[#allocation6 + $0xda8] sm:$0xff]
    %v651 = vld [vmem:[#allocation6 + $0xdb0] sm:$0xff]
    %v652 = vld [vmem:[#allocation6 + $0xdb8] sm:$0xff]
    %v653 = vld [vmem:[#allocation6 + $0xdc0] sm:$0xff]
    %v654 = vld [vmem:[#allocation6 + $0xdc8] sm:$0xff]
    %v655 = vld [vmem:[#allocation6 + $0xdd0] sm:$0xff]
    %v656 = vld [vmem:[#allocation6 + $0xdd8] sm:$0xff]
    %v657 = vld [vmem:[#allocation6 + $0xde0] sm:$0xff]
    %v658 = vld [vmem:[#allocation6 + $0xde8] sm:$0xff]
    %v659 = vld [vmem:[#allocation6 + $0xdf0] sm:$0xff]
    %v660 = vld [vmem:[#allocation6 + $0xdf8] sm:$0xff]
    %v661 = vld [vmem:[#allocation6 + $0xe00] sm:$0xff]
    %v662 = vld [vmem:[#allocation6 + $0xe08] sm:$0xff]
    %v663 = vld [vmem:[#allocation6 + $0xe10] sm:$0xff]
    %v664 = vld [vmem:[#allocation6 + $0xe18] sm:$0xff]
    %v665 = vld [vmem:[#allocation6 + $0xe20] sm:$0xff]
    %v666 = vld [vmem:[#allocation6 + $0xe28] sm:$0xff]
    %v667 = vld [vmem:[#allocation6 + $0xe30] sm:$0xff]
    %v668 = vld [vmem:[#allocation6 + $0xe38] sm:$0xff]
    %v669 = vld [vmem:[#allocation6 + $0xe40] sm:$0xff]
    %v670 = vld [vmem:[#allocation6 + $0xe48] sm:$0xff]
    %v671 = vld [vmem:[#allocation6 + $0xe50] sm:$0xff]
    %v672 = vld [vmem:[#allocation6 + $0xe58] sm:$0xff]
    %v673 = vld [vmem:[#allocation6 + $0xe60] sm:$0xff]
    %v674 = vld [vmem:[#allocation6 + $0xe68] sm:$0xff]
    %v675 = vld [vmem:[#allocation6 + $0xe70] sm:$0xff]
    %v676 = vld [vmem:[#allocation6 + $0xe78] sm:$0xff]
    %v677 = vld [vmem:[#allocation6 + $0xe80] sm:$0xff]
    %v678 = vld [vmem:[#allocation6 + $0xe88] sm:$0xff]
    %v679 = vld [vmem:[#allocation6 + $0xe90] sm:$0xff]
    %v680 = vld [vmem:[#allocation6 + $0xe98] sm:$0xff]
    %v681 = vld [vmem:[#allocation6 + $0xea0] sm:$0xff]
    %v682 = vld [vmem:[#allocation6 + $0xea8] sm:$0xff]
    %v683 = vld [vmem:[#allocation6 + $0xeb0] sm:$0xff]
    %v684 = vld [vmem:[#allocation6 + $0xeb8] sm:$0xff]
    %v685 = vld [vmem:[#allocation6 + $0xec0] sm:$0xff]
    %v686 = vld [vmem:[#allocation6 + $0xec8] sm:$0xff]
    %v687 = vld [vmem:[#allocation6 + $0xed0] sm:$0xff]
    %v688 = vld [vmem:[#allocation6 + $0xed8] sm:$0xff]
    %v689 = vld [vmem:[#allocation6 + $0xee0] sm:$0xff]
    %v690 = vld [vmem:[#allocation6 + $0xee8] sm:$0xff]
    %v691 = vld [vmem:[#allocation6 + $0xef0] sm:$0xff]
    %v692 = vld [vmem:[#allocation6 + $0xef8] sm:$0xff]
    %v693 = vld [vmem:[#allocation6 + $0xf00] sm:$0xff]
    %v694 = vld [vmem:[#allocation6 + $0xf08] sm:$0xff]
    %v695 = vld [vmem:[#allocation6 + $0xf10] sm:$0xff]
    %v696 = vld [vmem:[#allocation6 + $0xf18] sm:$0xff]
    %v697 = vld [vmem:[#allocation6 + $0xf20] sm:$0xff]
    %v698 = vld [vmem:[#allocation6 + $0xf28] sm:$0xff]
    %v699 = vld [vmem:[#allocation6 + $0xf30] sm:$0xff]
    %v700 = vld [vmem:[#allocation6 + $0xf38] sm:$0xff]
    %v701 = vld [vmem:[#allocation6 + $0xf40] sm:$0xff]
    %v702 = vld [vmem:[#allocation6 + $0xf48] sm:$0xff]
    %v703 = vld [vmem:[#allocation6 + $0xf50] sm:$0xff]
    %v704 = vld [vmem:[#allocation6 + $0xf58] sm:$0xff]
    %v705 = vld [vmem:[#allocation6 + $0xf60] sm:$0xff]
    %v706 = vld [vmem:[#allocation6 + $0xf68] sm:$0xff]
    %v707 = vld [vmem:[#allocation6 + $0xf70] sm:$0xff]
    %v708 = vld [vmem:[#allocation6 + $0xf78] sm:$0xff]
    %v709 = vld [vmem:[#allocation6 + $0xf80] sm:$0xff]
    %v710 = vld [vmem:[#allocation6 + $0xf88] sm:$0xff]
    %v711 = vld [vmem:[#allocation6 + $0xf90] sm:$0xff]
    %v712 = vld [vmem:[#allocation6 + $0xf98] sm:$0xff]
    %v713 = vld [vmem:[#allocation6 + $0xfa0] sm:$0xff]
    %v714 = vld [vmem:[#allocation6 + $0xfa8] sm:$0xff]
    %v715 = vld [vmem:[#allocation6 + $0xfb0] sm:$0xff]
    %v716 = vld [vmem:[#allocation6 + $0xfb8] sm:$0xff]
    %v717 = vld [vmem:[#allocation6 + $0xfc0] sm:$0xff]
    %v718 = vld [vmem:[#allocation6 + $0xfc8] sm:$0xff]
    %v719 = vld [vmem:[#allocation6 + $0xfd0] sm:$0xff]
    %v720 = vld [vmem:[#allocation6 + $0xfd8] sm:$0xff]
    %v721 = vld [vmem:[#allocation6 + $0xfe0] sm:$0xff]
    %v722 = vld [vmem:[#allocation6 + $0xfe8] sm:$0xff]
    %v723 = vld [vmem:[#allocation6 + $0xff0] sm:$0xff]
    %v724 = vld [vmem:[#allocation6 + $0xff8] sm:$0xff]
    %v725 = vld [vmem:[#allocation8] sm:$0xf]
    %v727 = vlaneseq
    %v728 = vshrl.u32 %v727, 7
    %v729 = vsub.s32 0, %v728
    %v730 = vrot.slane %v725, %v729
    %v731 = vlaneseq
    %v732 = vshrl.u32 %v731, 7
    %v733 = vsub.s32 1, %v732
    %v734 = vrot.slane %v725, %v733
    %v735 = vlaneseq
    %v736 = vshrl.u32 %v735, 7
    %v737 = vsub.s32 2, %v736
    %v738 = vrot.slane %v725, %v737
    %v739 = vlaneseq
    %v740 = vshrl.u32 %v739, 7
    %v741 = vsub.s32 3, %v740
    %v742 = vrot.slane %v725, %v741
    %v1259 = vunpack.c.l.b16 %v213
    %v1260 = vunpack.c.h.b16 %v213
    %v1261 = vunpack.c.l.b16 %v214
    %v1262 = vunpack.c.h.b16 %v214
    %v1263 = vunpack.c.l.b16 %v215
    %v1264 = vunpack.c.h.b16 %v215
    %v1265 = vunpack.c.l.b16 %v216
    %v1266 = vunpack.c.h.b16 %v216
    %v1267 = vunpack.c.l.b16 %v217
    %v1268 = vunpack.c.h.b16 %v217
    %v1269 = vunpack.c.l.b16 %v218
    %v1270 = vunpack.c.h.b16 %v218
    %v1271 = vunpack.c.l.b16 %v219
    %v1272 = vunpack.c.h.b16 %v219
    %v1273 = vunpack.c.l.b16 %v220
    %v1274 = vunpack.c.h.b16 %v220
    %v1275 = vunpack.c.l.b16 %v221
    %v1276 = vunpack.c.h.b16 %v221
    %v1277 = vunpack.c.l.b16 %v222
    %v1278 = vunpack.c.h.b16 %v222
    %v1279 = vunpack.c.l.b16 %v223
    %v1280 = vunpack.c.h.b16 %v223
    %v1281 = vunpack.c.l.b16 %v224
    %v1282 = vunpack.c.h.b16 %v224
    %v1283 = vunpack.c.l.b16 %v225
    %v1284 = vunpack.c.h.b16 %v225
    %v1285 = vunpack.c.l.b16 %v226
    %v1286 = vunpack.c.h.b16 %v226
    %v1287 = vunpack.c.l.b16 %v227
    %v1288 = vunpack.c.h.b16 %v227
    %v1289 = vunpack.c.l.b16 %v228
    %v1290 = vunpack.c.h.b16 %v228
    %v1291 = vunpack.c.l.b16 %v229
    %v1292 = vunpack.c.h.b16 %v229
    %v1293 = vunpack.c.l.b16 %v230
    %v1294 = vunpack.c.h.b16 %v230
    %v1295 = vunpack.c.l.b16 %v231
    %v1296 = vunpack.c.h.b16 %v231
    %v1297 = vunpack.c.l.b16 %v232
    %v1298 = vunpack.c.h.b16 %v232
    %v1299 = vunpack.c.l.b16 %v233
    %v1300 = vunpack.c.h.b16 %v233
    %v1301 = vunpack.c.l.b16 %v234
    %v1302 = vunpack.c.h.b16 %v234
    %v1303 = vunpack.c.l.b16 %v235
    %v1304 = vunpack.c.h.b16 %v235
    %v1305 = vunpack.c.l.b16 %v236
    %v1306 = vunpack.c.h.b16 %v236
    %v1307 = vunpack.c.l.b16 %v237
    %v1308 = vunpack.c.h.b16 %v237
    %v1309 = vunpack.c.l.b16 %v238
    %v1310 = vunpack.c.h.b16 %v238
    %v1311 = vunpack.c.l.b16 %v239
    %v1312 = vunpack.c.h.b16 %v239
    %v1313 = vunpack.c.l.b16 %v240
    %v1314 = vunpack.c.h.b16 %v240
    %v1315 = vunpack.c.l.b16 %v241
    %v1316 = vunpack.c.h.b16 %v241
    %v1317 = vunpack.c.l.b16 %v242
    %v1318 = vunpack.c.h.b16 %v242
    %v1319 = vunpack.c.l.b16 %v243
    %v1320 = vunpack.c.h.b16 %v243
    %v1321 = vunpack.c.l.b16 %v244
    %v1322 = vunpack.c.h.b16 %v244
    %v1323 = vunpack.c.l.b16 %v245
    %v1324 = vunpack.c.h.b16 %v245
    %v1325 = vunpack.c.l.b16 %v246
    %v1326 = vunpack.c.h.b16 %v246
    %v1327 = vunpack.c.l.b16 %v247
    %v1328 = vunpack.c.h.b16 %v247
    %v1329 = vunpack.c.l.b16 %v248
    %v1330 = vunpack.c.h.b16 %v248
    %v1331 = vunpack.c.l.b16 %v249
    %v1332 = vunpack.c.h.b16 %v249
    %v1333 = vunpack.c.l.b16 %v250
    %v1334 = vunpack.c.h.b16 %v250
    %v1335 = vunpack.c.l.b16 %v251
    %v1336 = vunpack.c.h.b16 %v251
    %v1337 = vunpack.c.l.b16 %v252
    %v1338 = vunpack.c.h.b16 %v252
    %v1339 = vunpack.c.l.b16 %v253
    %v1340 = vunpack.c.h.b16 %v253
    %v1341 = vunpack.c.l.b16 %v254
    %v1342 = vunpack.c.h.b16 %v254
    %v1343 = vunpack.c.l.b16 %v255
    %v1344 = vunpack.c.h.b16 %v255
    %v1345 = vunpack.c.l.b16 %v256
    %v1346 = vunpack.c.h.b16 %v256
    %v1347 = vunpack.c.l.b16 %v257
    %v1348 = vunpack.c.h.b16 %v257
    %v1349 = vunpack.c.l.b16 %v258
    %v1350 = vunpack.c.h.b16 %v258
    %v1351 = vunpack.c.l.b16 %v259
    %v1352 = vunpack.c.h.b16 %v259
    %v1353 = vunpack.c.l.b16 %v260
    %v1354 = vunpack.c.h.b16 %v260
    %v1355 = vunpack.c.l.b16 %v261
    %v1356 = vunpack.c.h.b16 %v261
    %v1357 = vunpack.c.l.b16 %v262
    %v1358 = vunpack.c.h.b16 %v262
    %v1359 = vunpack.c.l.b16 %v263
    %v1360 = vunpack.c.h.b16 %v263
    %v1361 = vunpack.c.l.b16 %v264
    %v1362 = vunpack.c.h.b16 %v264
    %v1363 = vunpack.c.l.b16 %v265
    %v1364 = vunpack.c.h.b16 %v265
    %v1365 = vunpack.c.l.b16 %v266
    %v1366 = vunpack.c.h.b16 %v266
    %v1367 = vunpack.c.l.b16 %v267
    %v1368 = vunpack.c.h.b16 %v267
    %v1369 = vunpack.c.l.b16 %v268
    %v1370 = vunpack.c.h.b16 %v268
    %v1371 = vunpack.c.l.b16 %v269
    %v1372 = vunpack.c.h.b16 %v269
    %v1373 = vunpack.c.l.b16 %v270
    %v1374 = vunpack.c.h.b16 %v270
    %v1375 = vunpack.c.l.b16 %v271
    %v1376 = vunpack.c.h.b16 %v271
    %v1377 = vunpack.c.l.b16 %v272
    %v1378 = vunpack.c.h.b16 %v272
    %v1379 = vunpack.c.l.b16 %v273
    %v1380 = vunpack.c.h.b16 %v273
    %v1381 = vunpack.c.l.b16 %v274
    %v1382 = vunpack.c.h.b16 %v274
    %v1383 = vunpack.c.l.b16 %v275
    %v1384 = vunpack.c.h.b16 %v275
    %v1385 = vunpack.c.l.b16 %v276
    %v1386 = vunpack.c.h.b16 %v276
    %v1387 = vunpack.c.l.b16 %v277
    %v1388 = vunpack.c.h.b16 %v277
    %v1389 = vunpack.c.l.b16 %v278
    %v1390 = vunpack.c.h.b16 %v278
    %v1391 = vunpack.c.l.b16 %v279
    %v1392 = vunpack.c.h.b16 %v279
    %v1393 = vunpack.c.l.b16 %v280
    %v1394 = vunpack.c.h.b16 %v280
    %v1395 = vunpack.c.l.b16 %v281
    %v1396 = vunpack.c.h.b16 %v281
    %v1397 = vunpack.c.l.b16 %v282
    %v1398 = vunpack.c.h.b16 %v282
    %v1399 = vunpack.c.l.b16 %v283
    %v1400 = vunpack.c.h.b16 %v283
    %v1401 = vunpack.c.l.b16 %v284
    %v1402 = vunpack.c.h.b16 %v284
    %v1403 = vunpack.c.l.b16 %v285
    %v1404 = vunpack.c.h.b16 %v285
    %v1405 = vunpack.c.l.b16 %v286
    %v1406 = vunpack.c.h.b16 %v286
    %v1407 = vunpack.c.l.b16 %v287
    %v1408 = vunpack.c.h.b16 %v287
    %v1409 = vunpack.c.l.b16 %v288
    %v1410 = vunpack.c.h.b16 %v288
    %v1411 = vunpack.c.l.b16 %v289
    %v1412 = vunpack.c.h.b16 %v289
    %v1413 = vunpack.c.l.b16 %v290
    %v1414 = vunpack.c.h.b16 %v290
    %v1415 = vunpack.c.l.b16 %v291
    %v1416 = vunpack.c.h.b16 %v291
    %v1417 = vunpack.c.l.b16 %v292
    %v1418 = vunpack.c.h.b16 %v292
    %v1419 = vunpack.c.l.b16 %v293
    %v1420 = vunpack.c.h.b16 %v293
    %v1421 = vunpack.c.l.b16 %v294
    %v1422 = vunpack.c.h.b16 %v294
    %v1423 = vunpack.c.l.b16 %v295
    %v1424 = vunpack.c.h.b16 %v295
    %v1425 = vunpack.c.l.b16 %v296
    %v1426 = vunpack.c.h.b16 %v296
    %v1427 = vunpack.c.l.b16 %v297
    %v1428 = vunpack.c.h.b16 %v297
    %v1429 = vunpack.c.l.b16 %v298
    %v1430 = vunpack.c.h.b16 %v298
    %v1431 = vunpack.c.l.b16 %v299
    %v1432 = vunpack.c.h.b16 %v299
    %v1433 = vunpack.c.l.b16 %v300
    %v1434 = vunpack.c.h.b16 %v300
    %v1435 = vunpack.c.l.b16 %v301
    %v1436 = vunpack.c.h.b16 %v301
    %v1437 = vunpack.c.l.b16 %v302
    %v1438 = vunpack.c.h.b16 %v302
    %v1439 = vunpack.c.l.b16 %v303
    %v1440 = vunpack.c.h.b16 %v303
    %v1441 = vunpack.c.l.b16 %v304
    %v1442 = vunpack.c.h.b16 %v304
    %v1443 = vunpack.c.l.b16 %v305
    %v1444 = vunpack.c.h.b16 %v305
    %v1445 = vunpack.c.l.b16 %v306
    %v1446 = vunpack.c.h.b16 %v306
    %v1447 = vunpack.c.l.b16 %v307
    %v1448 = vunpack.c.h.b16 %v307
    %v1449 = vunpack.c.l.b16 %v308
    %v1450 = vunpack.c.h.b16 %v308
    %v1451 = vunpack.c.l.b16 %v309
    %v1452 = vunpack.c.h.b16 %v309
    %v1453 = vunpack.c.l.b16 %v310
    %v1454 = vunpack.c.h.b16 %v310
    %v1455 = vunpack.c.l.b16 %v311
    %v1456 = vunpack.c.h.b16 %v311
    %v1457 = vunpack.c.l.b16 %v312
    %v1458 = vunpack.c.h.b16 %v312
    %v1459 = vunpack.c.l.b16 %v313
    %v1460 = vunpack.c.h.b16 %v313
    %v1461 = vunpack.c.l.b16 %v314
    %v1462 = vunpack.c.h.b16 %v314
    %v1463 = vunpack.c.l.b16 %v315
    %v1464 = vunpack.c.h.b16 %v315
    %v1465 = vunpack.c.l.b16 %v316
    %v1466 = vunpack.c.h.b16 %v316
    %v1467 = vunpack.c.l.b16 %v317
    %v1468 = vunpack.c.h.b16 %v317
    %v1469 = vunpack.c.l.b16 %v318
    %v1470 = vunpack.c.h.b16 %v318
    %v1471 = vunpack.c.l.b16 %v319
    %v1472 = vunpack.c.h.b16 %v319
    %v1473 = vunpack.c.l.b16 %v320
    %v1474 = vunpack.c.h.b16 %v320
    %v1475 = vunpack.c.l.b16 %v321
    %v1476 = vunpack.c.h.b16 %v321
    %v1477 = vunpack.c.l.b16 %v322
    %v1478 = vunpack.c.h.b16 %v322
    %v1479 = vunpack.c.l.b16 %v323
    %v1480 = vunpack.c.h.b16 %v323
    %v1481 = vunpack.c.l.b16 %v324
    %v1482 = vunpack.c.h.b16 %v324
    %v1483 = vunpack.c.l.b16 %v325
    %v1484 = vunpack.c.h.b16 %v325
    %v1485 = vunpack.c.l.b16 %v326
    %v1486 = vunpack.c.h.b16 %v326
    %v1487 = vunpack.c.l.b16 %v327
    %v1488 = vunpack.c.h.b16 %v327
    %v1489 = vunpack.c.l.b16 %v328
    %v1490 = vunpack.c.h.b16 %v328
    %v1491 = vunpack.c.l.b16 %v329
    %v1492 = vunpack.c.h.b16 %v329
    %v1493 = vunpack.c.l.b16 %v330
    %v1494 = vunpack.c.h.b16 %v330
    %v1495 = vunpack.c.l.b16 %v331
    %v1496 = vunpack.c.h.b16 %v331
    %v1497 = vunpack.c.l.b16 %v332
    %v1498 = vunpack.c.h.b16 %v332
    %v1499 = vunpack.c.l.b16 %v333
    %v1500 = vunpack.c.h.b16 %v333
    %v1501 = vunpack.c.l.b16 %v334
    %v1502 = vunpack.c.h.b16 %v334
    %v1503 = vunpack.c.l.b16 %v335
    %v1504 = vunpack.c.h.b16 %v335
    %v1505 = vunpack.c.l.b16 %v336
    %v1506 = vunpack.c.h.b16 %v336
    %v1507 = vunpack.c.l.b16 %v337
    %v1508 = vunpack.c.h.b16 %v337
    %v1509 = vunpack.c.l.b16 %v338
    %v1510 = vunpack.c.h.b16 %v338
    %v1511 = vunpack.c.l.b16 %v339
    %v1512 = vunpack.c.h.b16 %v339
    %v1513 = vunpack.c.l.b16 %v340
    %v1514 = vunpack.c.h.b16 %v340
    %v1515 = vunpack.c.l.b16 %v341
    %v1516 = vunpack.c.h.b16 %v341
    %v1517 = vunpack.c.l.b16 %v342
    %v1518 = vunpack.c.h.b16 %v342
    %v1519 = vunpack.c.l.b16 %v343
    %v1520 = vunpack.c.h.b16 %v343
    %v1521 = vunpack.c.l.b16 %v344
    %v1522 = vunpack.c.h.b16 %v344
    %v1523 = vunpack.c.l.b16 %v345
    %v1524 = vunpack.c.h.b16 %v345
    %v1525 = vunpack.c.l.b16 %v346
    %v1526 = vunpack.c.h.b16 %v346
    %v1527 = vunpack.c.l.b16 %v347
    %v1528 = vunpack.c.h.b16 %v347
    %v1529 = vunpack.c.l.b16 %v348
    %v1530 = vunpack.c.h.b16 %v348
    %v1531 = vunpack.c.l.b16 %v349
    %v1532 = vunpack.c.h.b16 %v349
    %v1533 = vunpack.c.l.b16 %v350
    %v1534 = vunpack.c.h.b16 %v350
    %v1535 = vunpack.c.l.b16 %v351
    %v1536 = vunpack.c.h.b16 %v351
    %v1537 = vunpack.c.l.b16 %v352
    %v1538 = vunpack.c.h.b16 %v352
    %v1539 = vunpack.c.l.b16 %v353
    %v1540 = vunpack.c.h.b16 %v353
    %v1541 = vunpack.c.l.b16 %v354
    %v1542 = vunpack.c.h.b16 %v354
    %v1543 = vunpack.c.l.b16 %v355
    %v1544 = vunpack.c.h.b16 %v355
    %v1545 = vunpack.c.l.b16 %v356
    %v1546 = vunpack.c.h.b16 %v356
    %v1547 = vunpack.c.l.b16 %v357
    %v1548 = vunpack.c.h.b16 %v357
    %v1549 = vunpack.c.l.b16 %v358
    %v1550 = vunpack.c.h.b16 %v358
    %v1551 = vunpack.c.l.b16 %v359
    %v1552 = vunpack.c.h.b16 %v359
    %v1553 = vunpack.c.l.b16 %v360
    %v1554 = vunpack.c.h.b16 %v360
    %v1555 = vunpack.c.l.b16 %v361
    %v1556 = vunpack.c.h.b16 %v361
    %v1557 = vunpack.c.l.b16 %v362
    %v1558 = vunpack.c.h.b16 %v362
    %v1559 = vunpack.c.l.b16 %v363
    %v1560 = vunpack.c.h.b16 %v363
    %v1561 = vunpack.c.l.b16 %v364
    %v1562 = vunpack.c.h.b16 %v364
    %v1563 = vunpack.c.l.b16 %v365
    %v1564 = vunpack.c.h.b16 %v365
    %v1565 = vunpack.c.l.b16 %v366
    %v1566 = vunpack.c.h.b16 %v366
    %v1567 = vunpack.c.l.b16 %v367
    %v1568 = vunpack.c.h.b16 %v367
    %v1569 = vunpack.c.l.b16 %v368
    %v1570 = vunpack.c.h.b16 %v368
    %v1571 = vunpack.c.l.b16 %v369
    %v1572 = vunpack.c.h.b16 %v369
    %v1573 = vunpack.c.l.b16 %v370
    %v1574 = vunpack.c.h.b16 %v370
    %v1575 = vunpack.c.l.b16 %v371
    %v1576 = vunpack.c.h.b16 %v371
    %v1577 = vunpack.c.l.b16 %v372
    %v1578 = vunpack.c.h.b16 %v372
    %v1579 = vunpack.c.l.b16 %v373
    %v1580 = vunpack.c.h.b16 %v373
    %v1581 = vunpack.c.l.b16 %v374
    %v1582 = vunpack.c.h.b16 %v374
    %v1583 = vunpack.c.l.b16 %v375
    %v1584 = vunpack.c.h.b16 %v375
    %v1585 = vunpack.c.l.b16 %v376
    %v1586 = vunpack.c.h.b16 %v376
    %v1587 = vunpack.c.l.b16 %v377
    %v1588 = vunpack.c.h.b16 %v377
    %v1589 = vunpack.c.l.b16 %v378
    %v1590 = vunpack.c.h.b16 %v378
    %v1591 = vunpack.c.l.b16 %v379
    %v1592 = vunpack.c.h.b16 %v379
    %v1593 = vunpack.c.l.b16 %v380
    %v1594 = vunpack.c.h.b16 %v380
    %v1595 = vunpack.c.l.b16 %v381
    %v1596 = vunpack.c.h.b16 %v381
    %v1597 = vunpack.c.l.b16 %v382
    %v1598 = vunpack.c.h.b16 %v382
    %v1599 = vunpack.c.l.b16 %v383
    %v1600 = vunpack.c.h.b16 %v383
    %v1601 = vunpack.c.l.b16 %v384
    %v1602 = vunpack.c.h.b16 %v384
    %v1603 = vunpack.c.l.b16 %v385
    %v1604 = vunpack.c.h.b16 %v385
    %v1605 = vunpack.c.l.b16 %v386
    %v1606 = vunpack.c.h.b16 %v386
    %v1607 = vunpack.c.l.b16 %v387
    %v1608 = vunpack.c.h.b16 %v387
    %v1609 = vunpack.c.l.b16 %v388
    %v1610 = vunpack.c.h.b16 %v388
    %v1611 = vunpack.c.l.b16 %v389
    %v1612 = vunpack.c.h.b16 %v389
    %v1613 = vunpack.c.l.b16 %v390
    %v1614 = vunpack.c.h.b16 %v390
    %v1615 = vunpack.c.l.b16 %v391
    %v1616 = vunpack.c.h.b16 %v391
    %v1617 = vunpack.c.l.b16 %v392
    %v1618 = vunpack.c.h.b16 %v392
    %v1619 = vunpack.c.l.b16 %v393
    %v1620 = vunpack.c.h.b16 %v393
    %v1621 = vunpack.c.l.b16 %v394
    %v1622 = vunpack.c.h.b16 %v394
    %v1623 = vunpack.c.l.b16 %v395
    %v1624 = vunpack.c.h.b16 %v395
    %v1625 = vunpack.c.l.b16 %v396
    %v1626 = vunpack.c.h.b16 %v396
    %v1627 = vunpack.c.l.b16 %v397
    %v1628 = vunpack.c.h.b16 %v397
    %v1629 = vunpack.c.l.b16 %v398
    %v1630 = vunpack.c.h.b16 %v398
    %v1631 = vunpack.c.l.b16 %v399
    %v1632 = vunpack.c.h.b16 %v399
    %v1633 = vunpack.c.l.b16 %v400
    %v1634 = vunpack.c.h.b16 %v400
    %v1635 = vunpack.c.l.b16 %v401
    %v1636 = vunpack.c.h.b16 %v401
    %v1637 = vunpack.c.l.b16 %v402
    %v1638 = vunpack.c.h.b16 %v402
    %v1639 = vunpack.c.l.b16 %v403
    %v1640 = vunpack.c.h.b16 %v403
    %v1641 = vunpack.c.l.b16 %v404
    %v1642 = vunpack.c.h.b16 %v404
    %v1643 = vunpack.c.l.b16 %v405
    %v1644 = vunpack.c.h.b16 %v405
    %v1645 = vunpack.c.l.b16 %v406
    %v1646 = vunpack.c.h.b16 %v406
    %v1647 = vunpack.c.l.b16 %v407
    %v1648 = vunpack.c.h.b16 %v407
    %v1649 = vunpack.c.l.b16 %v408
    %v1650 = vunpack.c.h.b16 %v408
    %v1651 = vunpack.c.l.b16 %v409
    %v1652 = vunpack.c.h.b16 %v409
    %v1653 = vunpack.c.l.b16 %v410
    %v1654 = vunpack.c.h.b16 %v410
    %v1655 = vunpack.c.l.b16 %v411
    %v1656 = vunpack.c.h.b16 %v411
    %v1657 = vunpack.c.l.b16 %v412
    %v1658 = vunpack.c.h.b16 %v412
    %v1659 = vunpack.c.l.b16 %v413
    %v1660 = vunpack.c.h.b16 %v413
    %v1661 = vunpack.c.l.b16 %v414
    %v1662 = vunpack.c.h.b16 %v414
    %v1663 = vunpack.c.l.b16 %v415
    %v1664 = vunpack.c.h.b16 %v415
    %v1665 = vunpack.c.l.b16 %v416
    %v1666 = vunpack.c.h.b16 %v416
    %v1667 = vunpack.c.l.b16 %v417
    %v1668 = vunpack.c.h.b16 %v417
    %v1669 = vunpack.c.l.b16 %v418
    %v1670 = vunpack.c.h.b16 %v418
    %v1671 = vunpack.c.l.b16 %v419
    %v1672 = vunpack.c.h.b16 %v419
    %v1673 = vunpack.c.l.b16 %v420
    %v1674 = vunpack.c.h.b16 %v420
    %v1675 = vunpack.c.l.b16 %v421
    %v1676 = vunpack.c.h.b16 %v421
    %v1677 = vunpack.c.l.b16 %v422
    %v1678 = vunpack.c.h.b16 %v422
    %v1679 = vunpack.c.l.b16 %v423
    %v1680 = vunpack.c.h.b16 %v423
    %v1681 = vunpack.c.l.b16 %v424
    %v1682 = vunpack.c.h.b16 %v424
    %v1683 = vunpack.c.l.b16 %v425
    %v1684 = vunpack.c.h.b16 %v425
    %v1685 = vunpack.c.l.b16 %v426
    %v1686 = vunpack.c.h.b16 %v426
    %v1687 = vunpack.c.l.b16 %v427
    %v1688 = vunpack.c.h.b16 %v427
    %v1689 = vunpack.c.l.b16 %v428
    %v1690 = vunpack.c.h.b16 %v428
    %v1691 = vunpack.c.l.b16 %v429
    %v1692 = vunpack.c.h.b16 %v429
    %v1693 = vunpack.c.l.b16 %v430
    %v1694 = vunpack.c.h.b16 %v430
    %v1695 = vunpack.c.l.b16 %v431
    %v1696 = vunpack.c.h.b16 %v431
    %v1697 = vunpack.c.l.b16 %v432
    %v1698 = vunpack.c.h.b16 %v432
    %v1699 = vunpack.c.l.b16 %v433
    %v1700 = vunpack.c.h.b16 %v433
    %v1701 = vunpack.c.l.b16 %v434
    %v1702 = vunpack.c.h.b16 %v434
    %v1703 = vunpack.c.l.b16 %v435
    %v1704 = vunpack.c.h.b16 %v435
    %v1705 = vunpack.c.l.b16 %v436
    %v1706 = vunpack.c.h.b16 %v436
    %v1707 = vunpack.c.l.b16 %v437
    %v1708 = vunpack.c.h.b16 %v437
    %v1709 = vunpack.c.l.b16 %v438
    %v1710 = vunpack.c.h.b16 %v438
    %v1711 = vunpack.c.l.b16 %v439
    %v1712 = vunpack.c.h.b16 %v439
    %v1713 = vunpack.c.l.b16 %v440
    %v1714 = vunpack.c.h.b16 %v440
    %v1715 = vunpack.c.l.b16 %v441
    %v1716 = vunpack.c.h.b16 %v441
    %v1717 = vunpack.c.l.b16 %v442
    %v1718 = vunpack.c.h.b16 %v442
    %v1719 = vunpack.c.l.b16 %v443
    %v1720 = vunpack.c.h.b16 %v443
    %v1721 = vunpack.c.l.b16 %v444
    %v1722 = vunpack.c.h.b16 %v444
    %v1723 = vunpack.c.l.b16 %v445
    %v1724 = vunpack.c.h.b16 %v445
    %v1725 = vunpack.c.l.b16 %v446
    %v1726 = vunpack.c.h.b16 %v446
    %v1727 = vunpack.c.l.b16 %v447
    %v1728 = vunpack.c.h.b16 %v447
    %v1729 = vunpack.c.l.b16 %v448
    %v1730 = vunpack.c.h.b16 %v448
    %v1731 = vunpack.c.l.b16 %v449
    %v1732 = vunpack.c.h.b16 %v449
    %v1733 = vunpack.c.l.b16 %v450
    %v1734 = vunpack.c.h.b16 %v450
    %v1735 = vunpack.c.l.b16 %v451
    %v1736 = vunpack.c.h.b16 %v451
    %v1737 = vunpack.c.l.b16 %v452
    %v1738 = vunpack.c.h.b16 %v452
    %v1739 = vunpack.c.l.b16 %v453
    %v1740 = vunpack.c.h.b16 %v453
    %v1741 = vunpack.c.l.b16 %v454
    %v1742 = vunpack.c.h.b16 %v454
    %v1743 = vunpack.c.l.b16 %v455
    %v1744 = vunpack.c.h.b16 %v455
    %v1745 = vunpack.c.l.b16 %v456
    %v1746 = vunpack.c.h.b16 %v456
    %v1747 = vunpack.c.l.b16 %v457
    %v1748 = vunpack.c.h.b16 %v457
    %v1749 = vunpack.c.l.b16 %v458
    %v1750 = vunpack.c.h.b16 %v458
    %v1751 = vunpack.c.l.b16 %v459
    %v1752 = vunpack.c.h.b16 %v459
    %v1753 = vunpack.c.l.b16 %v460
    %v1754 = vunpack.c.h.b16 %v460
    %v1755 = vunpack.c.l.b16 %v461
    %v1756 = vunpack.c.h.b16 %v461
    %v1757 = vunpack.c.l.b16 %v462
    %v1758 = vunpack.c.h.b16 %v462
    %v1759 = vunpack.c.l.b16 %v463
    %v1760 = vunpack.c.h.b16 %v463
    %v1761 = vunpack.c.l.b16 %v464
    %v1762 = vunpack.c.h.b16 %v464
    %v1763 = vunpack.c.l.b16 %v465
    %v1764 = vunpack.c.h.b16 %v465
    %v1765 = vunpack.c.l.b16 %v466
    %v1766 = vunpack.c.h.b16 %v466
    %v1767 = vunpack.c.l.b16 %v467
    %v1768 = vunpack.c.h.b16 %v467
    %v1769 = vunpack.c.l.b16 %v468
    %v1770 = vunpack.c.h.b16 %v468
    %v1771 = vunpack.c.l.b16 %v469
    %v1772 = vunpack.c.h.b16 %v469
    %v1773 = vunpack.c.l.b16 %v470
    %v1774 = vunpack.c.h.b16 %v470
    %v1775 = vunpack.c.l.b16 %v471
    %v1776 = vunpack.c.h.b16 %v471
    %v1777 = vunpack.c.l.b16 %v472
    %v1778 = vunpack.c.h.b16 %v472
    %v1779 = vunpack.c.l.b16 %v473
    %v1780 = vunpack.c.h.b16 %v473
    %v1781 = vunpack.c.l.b16 %v474
    %v1782 = vunpack.c.h.b16 %v474
    %v1783 = vunpack.c.l.b16 %v475
    %v1784 = vunpack.c.h.b16 %v475
    %v1785 = vunpack.c.l.b16 %v476
    %v1786 = vunpack.c.h.b16 %v476
    %v1787 = vunpack.c.l.b16 %v477
    %v1788 = vunpack.c.h.b16 %v477
    %v1789 = vunpack.c.l.b16 %v478
    %v1790 = vunpack.c.h.b16 %v478
    %v1791 = vunpack.c.l.b16 %v479
    %v1792 = vunpack.c.h.b16 %v479
    %v1793 = vunpack.c.l.b16 %v480
    %v1794 = vunpack.c.h.b16 %v480
    %v1795 = vunpack.c.l.b16 %v481
    %v1796 = vunpack.c.h.b16 %v481
    %v1797 = vunpack.c.l.b16 %v482
    %v1798 = vunpack.c.h.b16 %v482
    %v1799 = vunpack.c.l.b16 %v483
    %v1800 = vunpack.c.h.b16 %v483
    %v1801 = vunpack.c.l.b16 %v484
    %v1802 = vunpack.c.h.b16 %v484
    %v1803 = vunpack.c.l.b16 %v485
    %v1804 = vunpack.c.h.b16 %v485
    %v1805 = vunpack.c.l.b16 %v486
    %v1806 = vunpack.c.h.b16 %v486
    %v1807 = vunpack.c.l.b16 %v487
    %v1808 = vunpack.c.h.b16 %v487
    %v1809 = vunpack.c.l.b16 %v488
    %v1810 = vunpack.c.h.b16 %v488
    %v1811 = vunpack.c.l.b16 %v489
    %v1812 = vunpack.c.h.b16 %v489
    %v1813 = vunpack.c.l.b16 %v490
    %v1814 = vunpack.c.h.b16 %v490
    %v1815 = vunpack.c.l.b16 %v491
    %v1816 = vunpack.c.h.b16 %v491
    %v1817 = vunpack.c.l.b16 %v492
    %v1818 = vunpack.c.h.b16 %v492
    %v1819 = vunpack.c.l.b16 %v493
    %v1820 = vunpack.c.h.b16 %v493
    %v1821 = vunpack.c.l.b16 %v494
    %v1822 = vunpack.c.h.b16 %v494
    %v1823 = vunpack.c.l.b16 %v495
    %v1824 = vunpack.c.h.b16 %v495
    %v1825 = vunpack.c.l.b16 %v496
    %v1826 = vunpack.c.h.b16 %v496
    %v1827 = vunpack.c.l.b16 %v497
    %v1828 = vunpack.c.h.b16 %v497
    %v1829 = vunpack.c.l.b16 %v498
    %v1830 = vunpack.c.h.b16 %v498
    %v1831 = vunpack.c.l.b16 %v499
    %v1832 = vunpack.c.h.b16 %v499
    %v1833 = vunpack.c.l.b16 %v500
    %v1834 = vunpack.c.h.b16 %v500
    %v1835 = vunpack.c.l.b16 %v501
    %v1836 = vunpack.c.h.b16 %v501
    %v1837 = vunpack.c.l.b16 %v502
    %v1838 = vunpack.c.h.b16 %v502
    %v1839 = vunpack.c.l.b16 %v503
    %v1840 = vunpack.c.h.b16 %v503
    %v1841 = vunpack.c.l.b16 %v504
    %v1842 = vunpack.c.h.b16 %v504
    %v1843 = vunpack.c.l.b16 %v505
    %v1844 = vunpack.c.h.b16 %v505
    %v1845 = vunpack.c.l.b16 %v506
    %v1846 = vunpack.c.h.b16 %v506
    %v1847 = vunpack.c.l.b16 %v507
    %v1848 = vunpack.c.h.b16 %v507
    %v1849 = vunpack.c.l.b16 %v508
    %v1850 = vunpack.c.h.b16 %v508
    %v1851 = vunpack.c.l.b16 %v509
    %v1852 = vunpack.c.h.b16 %v509
    %v1853 = vunpack.c.l.b16 %v510
    %v1854 = vunpack.c.h.b16 %v510
    %v1855 = vunpack.c.l.b16 %v511
    %v1856 = vunpack.c.h.b16 %v511
    %v1857 = vunpack.c.l.b16 %v512
    %v1858 = vunpack.c.h.b16 %v512
    %v1859 = vunpack.c.l.b16 %v513
    %v1860 = vunpack.c.h.b16 %v513
    %v1861 = vunpack.c.l.b16 %v514
    %v1862 = vunpack.c.h.b16 %v514
    %v1863 = vunpack.c.l.b16 %v515
    %v1864 = vunpack.c.h.b16 %v515
    %v1865 = vunpack.c.l.b16 %v516
    %v1866 = vunpack.c.h.b16 %v516
    %v1867 = vunpack.c.l.b16 %v517
    %v1868 = vunpack.c.h.b16 %v517
    %v1869 = vunpack.c.l.b16 %v518
    %v1870 = vunpack.c.h.b16 %v518
    %v1871 = vunpack.c.l.b16 %v519
    %v1872 = vunpack.c.h.b16 %v519
    %v1873 = vunpack.c.l.b16 %v520
    %v1874 = vunpack.c.h.b16 %v520
    %v1875 = vunpack.c.l.b16 %v521
    %v1876 = vunpack.c.h.b16 %v521
    %v1877 = vunpack.c.l.b16 %v522
    %v1878 = vunpack.c.h.b16 %v522
    %v1879 = vunpack.c.l.b16 %v523
    %v1880 = vunpack.c.h.b16 %v523
    %v1881 = vunpack.c.l.b16 %v524
    %v1882 = vunpack.c.h.b16 %v524
    %v1883 = vunpack.c.l.b16 %v525
    %v1884 = vunpack.c.h.b16 %v525
    %v1885 = vunpack.c.l.b16 %v526
    %v1886 = vunpack.c.h.b16 %v526
    %v1887 = vunpack.c.l.b16 %v527
    %v1888 = vunpack.c.h.b16 %v527
    %v1889 = vunpack.c.l.b16 %v528
    %v1890 = vunpack.c.h.b16 %v528
    %v1891 = vunpack.c.l.b16 %v529
    %v1892 = vunpack.c.h.b16 %v529
    %v1893 = vunpack.c.l.b16 %v530
    %v1894 = vunpack.c.h.b16 %v530
    %v1895 = vunpack.c.l.b16 %v531
    %v1896 = vunpack.c.h.b16 %v531
    %v1897 = vunpack.c.l.b16 %v532
    %v1898 = vunpack.c.h.b16 %v532
    %v1899 = vunpack.c.l.b16 %v533
    %v1900 = vunpack.c.h.b16 %v533
    %v1901 = vunpack.c.l.b16 %v534
    %v1902 = vunpack.c.h.b16 %v534
    %v1903 = vunpack.c.l.b16 %v535
    %v1904 = vunpack.c.h.b16 %v535
    %v1905 = vunpack.c.l.b16 %v536
    %v1906 = vunpack.c.h.b16 %v536
    %v1907 = vunpack.c.l.b16 %v537
    %v1908 = vunpack.c.h.b16 %v537
    %v1909 = vunpack.c.l.b16 %v538
    %v1910 = vunpack.c.h.b16 %v538
    %v1911 = vunpack.c.l.b16 %v539
    %v1912 = vunpack.c.h.b16 %v539
    %v1913 = vunpack.c.l.b16 %v540
    %v1914 = vunpack.c.h.b16 %v540
    %v1915 = vunpack.c.l.b16 %v541
    %v1916 = vunpack.c.h.b16 %v541
    %v1917 = vunpack.c.l.b16 %v542
    %v1918 = vunpack.c.h.b16 %v542
    %v1919 = vunpack.c.l.b16 %v543
    %v1920 = vunpack.c.h.b16 %v543
    %v1921 = vunpack.c.l.b16 %v544
    %v1922 = vunpack.c.h.b16 %v544
    %v1923 = vunpack.c.l.b16 %v545
    %v1924 = vunpack.c.h.b16 %v545
    %v1925 = vunpack.c.l.b16 %v546
    %v1926 = vunpack.c.h.b16 %v546
    %v1927 = vunpack.c.l.b16 %v547
    %v1928 = vunpack.c.h.b16 %v547
    %v1929 = vunpack.c.l.b16 %v548
    %v1930 = vunpack.c.h.b16 %v548
    %v1931 = vunpack.c.l.b16 %v549
    %v1932 = vunpack.c.h.b16 %v549
    %v1933 = vunpack.c.l.b16 %v550
    %v1934 = vunpack.c.h.b16 %v550
    %v1935 = vunpack.c.l.b16 %v551
    %v1936 = vunpack.c.h.b16 %v551
    %v1937 = vunpack.c.l.b16 %v552
    %v1938 = vunpack.c.h.b16 %v552
    %v1939 = vunpack.c.l.b16 %v553
    %v1940 = vunpack.c.h.b16 %v553
    %v1941 = vunpack.c.l.b16 %v554
    %v1942 = vunpack.c.h.b16 %v554
    %v1943 = vunpack.c.l.b16 %v555
    %v1944 = vunpack.c.h.b16 %v555
    %v1945 = vunpack.c.l.b16 %v556
    %v1946 = vunpack.c.h.b16 %v556
    %v1947 = vunpack.c.l.b16 %v557
    %v1948 = vunpack.c.h.b16 %v557
    %v1949 = vunpack.c.l.b16 %v558
    %v1950 = vunpack.c.h.b16 %v558
    %v1951 = vunpack.c.l.b16 %v559
    %v1952 = vunpack.c.h.b16 %v559
    %v1953 = vunpack.c.l.b16 %v560
    %v1954 = vunpack.c.h.b16 %v560
    %v1955 = vunpack.c.l.b16 %v561
    %v1956 = vunpack.c.h.b16 %v561
    %v1957 = vunpack.c.l.b16 %v562
    %v1958 = vunpack.c.h.b16 %v562
    %v1959 = vunpack.c.l.b16 %v563
    %v1960 = vunpack.c.h.b16 %v563
    %v1961 = vunpack.c.l.b16 %v564
    %v1962 = vunpack.c.h.b16 %v564
    %v1963 = vunpack.c.l.b16 %v565
    %v1964 = vunpack.c.h.b16 %v565
    %v1965 = vunpack.c.l.b16 %v566
    %v1966 = vunpack.c.h.b16 %v566
    %v1967 = vunpack.c.l.b16 %v567
    %v1968 = vunpack.c.h.b16 %v567
    %v1969 = vunpack.c.l.b16 %v568
    %v1970 = vunpack.c.h.b16 %v568
    %v1971 = vunpack.c.l.b16 %v569
    %v1972 = vunpack.c.h.b16 %v569
    %v1973 = vunpack.c.l.b16 %v570
    %v1974 = vunpack.c.h.b16 %v570
    %v1975 = vunpack.c.l.b16 %v571
    %v1976 = vunpack.c.h.b16 %v571
    %v1977 = vunpack.c.l.b16 %v572
    %v1978 = vunpack.c.h.b16 %v572
    %v1979 = vunpack.c.l.b16 %v573
    %v1980 = vunpack.c.h.b16 %v573
    %v1981 = vunpack.c.l.b16 %v574
    %v1982 = vunpack.c.h.b16 %v574
    %v1983 = vunpack.c.l.b16 %v575
    %v1984 = vunpack.c.h.b16 %v575
    %v1985 = vunpack.c.l.b16 %v576
    %v1986 = vunpack.c.h.b16 %v576
    %v1987 = vunpack.c.l.b16 %v577
    %v1988 = vunpack.c.h.b16 %v577
    %v1989 = vunpack.c.l.b16 %v578
    %v1990 = vunpack.c.h.b16 %v578
    %v1991 = vunpack.c.l.b16 %v579
    %v1992 = vunpack.c.h.b16 %v579
    %v1993 = vunpack.c.l.b16 %v580
    %v1994 = vunpack.c.h.b16 %v580
    %v1995 = vunpack.c.l.b16 %v581
    %v1996 = vunpack.c.h.b16 %v581
    %v1997 = vunpack.c.l.b16 %v582
    %v1998 = vunpack.c.h.b16 %v582
    %v1999 = vunpack.c.l.b16 %v583
    %v2000 = vunpack.c.h.b16 %v583
    %v2001 = vunpack.c.l.b16 %v584
    %v2002 = vunpack.c.h.b16 %v584
    %v2003 = vunpack.c.l.b16 %v585
    %v2004 = vunpack.c.h.b16 %v585
    %v2005 = vunpack.c.l.b16 %v586
    %v2006 = vunpack.c.h.b16 %v586
    %v2007 = vunpack.c.l.b16 %v587
    %v2008 = vunpack.c.h.b16 %v587
    %v2009 = vunpack.c.l.b16 %v588
    %v2010 = vunpack.c.h.b16 %v588
    %v2011 = vunpack.c.l.b16 %v589
    %v2012 = vunpack.c.h.b16 %v589
    %v2013 = vunpack.c.l.b16 %v590
    %v2014 = vunpack.c.h.b16 %v590
    %v2015 = vunpack.c.l.b16 %v591
    %v2016 = vunpack.c.h.b16 %v591
    %v2017 = vunpack.c.l.b16 %v592
    %v2018 = vunpack.c.h.b16 %v592
    %v2019 = vunpack.c.l.b16 %v593
    %v2020 = vunpack.c.h.b16 %v593
    %v2021 = vunpack.c.l.b16 %v594
    %v2022 = vunpack.c.h.b16 %v594
    %v2023 = vunpack.c.l.b16 %v595
    %v2024 = vunpack.c.h.b16 %v595
    %v2025 = vunpack.c.l.b16 %v596
    %v2026 = vunpack.c.h.b16 %v596
    %v2027 = vunpack.c.l.b16 %v597
    %v2028 = vunpack.c.h.b16 %v597
    %v2029 = vunpack.c.l.b16 %v598
    %v2030 = vunpack.c.h.b16 %v598
    %v2031 = vunpack.c.l.b16 %v599
    %v2032 = vunpack.c.h.b16 %v599
    %v2033 = vunpack.c.l.b16 %v600
    %v2034 = vunpack.c.h.b16 %v600
    %v2035 = vunpack.c.l.b16 %v601
    %v2036 = vunpack.c.h.b16 %v601
    %v2037 = vunpack.c.l.b16 %v602
    %v2038 = vunpack.c.h.b16 %v602
    %v2039 = vunpack.c.l.b16 %v603
    %v2040 = vunpack.c.h.b16 %v603
    %v2041 = vunpack.c.l.b16 %v604
    %v2042 = vunpack.c.h.b16 %v604
    %v2043 = vunpack.c.l.b16 %v605
    %v2044 = vunpack.c.h.b16 %v605
    %v2045 = vunpack.c.l.b16 %v606
    %v2046 = vunpack.c.h.b16 %v606
    %v2047 = vunpack.c.l.b16 %v607
    %v2048 = vunpack.c.h.b16 %v607
    %v2049 = vunpack.c.l.b16 %v608
    %v2050 = vunpack.c.h.b16 %v608
    %v2051 = vunpack.c.l.b16 %v609
    %v2052 = vunpack.c.h.b16 %v609
    %v2053 = vunpack.c.l.b16 %v610
    %v2054 = vunpack.c.h.b16 %v610
    %v2055 = vunpack.c.l.b16 %v611
    %v2056 = vunpack.c.h.b16 %v611
    %v2057 = vunpack.c.l.b16 %v612
    %v2058 = vunpack.c.h.b16 %v612
    %v2059 = vunpack.c.l.b16 %v613
    %v2060 = vunpack.c.h.b16 %v613
    %v2061 = vunpack.c.l.b16 %v614
    %v2062 = vunpack.c.h.b16 %v614
    %v2063 = vunpack.c.l.b16 %v615
    %v2064 = vunpack.c.h.b16 %v615
    %v2065 = vunpack.c.l.b16 %v616
    %v2066 = vunpack.c.h.b16 %v616
    %v2067 = vunpack.c.l.b16 %v617
    %v2068 = vunpack.c.h.b16 %v617
    %v2069 = vunpack.c.l.b16 %v618
    %v2070 = vunpack.c.h.b16 %v618
    %v2071 = vunpack.c.l.b16 %v619
    %v2072 = vunpack.c.h.b16 %v619
    %v2073 = vunpack.c.l.b16 %v620
    %v2074 = vunpack.c.h.b16 %v620
    %v2075 = vunpack.c.l.b16 %v621
    %v2076 = vunpack.c.h.b16 %v621
    %v2077 = vunpack.c.l.b16 %v622
    %v2078 = vunpack.c.h.b16 %v622
    %v2079 = vunpack.c.l.b16 %v623
    %v2080 = vunpack.c.h.b16 %v623
    %v2081 = vunpack.c.l.b16 %v624
    %v2082 = vunpack.c.h.b16 %v624
    %v2083 = vunpack.c.l.b16 %v625
    %v2084 = vunpack.c.h.b16 %v625
    %v2085 = vunpack.c.l.b16 %v626
    %v2086 = vunpack.c.h.b16 %v626
    %v2087 = vunpack.c.l.b16 %v627
    %v2088 = vunpack.c.h.b16 %v627
    %v2089 = vunpack.c.l.b16 %v628
    %v2090 = vunpack.c.h.b16 %v628
    %v2091 = vunpack.c.l.b16 %v629
    %v2092 = vunpack.c.h.b16 %v629
    %v2093 = vunpack.c.l.b16 %v630
    %v2094 = vunpack.c.h.b16 %v630
    %v2095 = vunpack.c.l.b16 %v631
    %v2096 = vunpack.c.h.b16 %v631
    %v2097 = vunpack.c.l.b16 %v632
    %v2098 = vunpack.c.h.b16 %v632
    %v2099 = vunpack.c.l.b16 %v633
    %v2100 = vunpack.c.h.b16 %v633
    %v2101 = vunpack.c.l.b16 %v634
    %v2102 = vunpack.c.h.b16 %v634
    %v2103 = vunpack.c.l.b16 %v635
    %v2104 = vunpack.c.h.b16 %v635
    %v2105 = vunpack.c.l.b16 %v636
    %v2106 = vunpack.c.h.b16 %v636
    %v2107 = vunpack.c.l.b16 %v637
    %v2108 = vunpack.c.h.b16 %v637
    %v2109 = vunpack.c.l.b16 %v638
    %v2110 = vunpack.c.h.b16 %v638
    %v2111 = vunpack.c.l.b16 %v639
    %v2112 = vunpack.c.h.b16 %v639
    %v2113 = vunpack.c.l.b16 %v640
    %v2114 = vunpack.c.h.b16 %v640
    %v2115 = vunpack.c.l.b16 %v641
    %v2116 = vunpack.c.h.b16 %v641
    %v2117 = vunpack.c.l.b16 %v642
    %v2118 = vunpack.c.h.b16 %v642
    %v2119 = vunpack.c.l.b16 %v643
    %v2120 = vunpack.c.h.b16 %v643
    %v2121 = vunpack.c.l.b16 %v644
    %v2122 = vunpack.c.h.b16 %v644
    %v2123 = vunpack.c.l.b16 %v645
    %v2124 = vunpack.c.h.b16 %v645
    %v2125 = vunpack.c.l.b16 %v646
    %v2126 = vunpack.c.h.b16 %v646
    %v2127 = vunpack.c.l.b16 %v647
    %v2128 = vunpack.c.h.b16 %v647
    %v2129 = vunpack.c.l.b16 %v648
    %v2130 = vunpack.c.h.b16 %v648
    %v2131 = vunpack.c.l.b16 %v649
    %v2132 = vunpack.c.h.b16 %v649
    %v2133 = vunpack.c.l.b16 %v650
    %v2134 = vunpack.c.h.b16 %v650
    %v2135 = vunpack.c.l.b16 %v651
    %v2136 = vunpack.c.h.b16 %v651
    %v2137 = vunpack.c.l.b16 %v652
    %v2138 = vunpack.c.h.b16 %v652
    %v2139 = vunpack.c.l.b16 %v653
    %v2140 = vunpack.c.h.b16 %v653
    %v2141 = vunpack.c.l.b16 %v654
    %v2142 = vunpack.c.h.b16 %v654
    %v2143 = vunpack.c.l.b16 %v655
    %v2144 = vunpack.c.h.b16 %v655
    %v2145 = vunpack.c.l.b16 %v656
    %v2146 = vunpack.c.h.b16 %v656
    %v2147 = vunpack.c.l.b16 %v657
    %v2148 = vunpack.c.h.b16 %v657
    %v2149 = vunpack.c.l.b16 %v658
    %v2150 = vunpack.c.h.b16 %v658
    %v2151 = vunpack.c.l.b16 %v659
    %v2152 = vunpack.c.h.b16 %v659
    %v2153 = vunpack.c.l.b16 %v660
    %v2154 = vunpack.c.h.b16 %v660
    %v2155 = vunpack.c.l.b16 %v661
    %v2156 = vunpack.c.h.b16 %v661
    %v2157 = vunpack.c.l.b16 %v662
    %v2158 = vunpack.c.h.b16 %v662
    %v2159 = vunpack.c.l.b16 %v663
    %v2160 = vunpack.c.h.b16 %v663
    %v2161 = vunpack.c.l.b16 %v664
    %v2162 = vunpack.c.h.b16 %v664
    %v2163 = vunpack.c.l.b16 %v665
    %v2164 = vunpack.c.h.b16 %v665
    %v2165 = vunpack.c.l.b16 %v666
    %v2166 = vunpack.c.h.b16 %v666
    %v2167 = vunpack.c.l.b16 %v667
    %v2168 = vunpack.c.h.b16 %v667
    %v2169 = vunpack.c.l.b16 %v668
    %v2170 = vunpack.c.h.b16 %v668
    %v2171 = vunpack.c.l.b16 %v669
    %v2172 = vunpack.c.h.b16 %v669
    %v2173 = vunpack.c.l.b16 %v670
    %v2174 = vunpack.c.h.b16 %v670
    %v2175 = vunpack.c.l.b16 %v671
    %v2176 = vunpack.c.h.b16 %v671
    %v2177 = vunpack.c.l.b16 %v672
    %v2178 = vunpack.c.h.b16 %v672
    %v2179 = vunpack.c.l.b16 %v673
    %v2180 = vunpack.c.h.b16 %v673
    %v2181 = vunpack.c.l.b16 %v674
    %v2182 = vunpack.c.h.b16 %v674
    %v2183 = vunpack.c.l.b16 %v675
    %v2184 = vunpack.c.h.b16 %v675
    %v2185 = vunpack.c.l.b16 %v676
    %v2186 = vunpack.c.h.b16 %v676
    %v2187 = vunpack.c.l.b16 %v677
    %v2188 = vunpack.c.h.b16 %v677
    %v2189 = vunpack.c.l.b16 %v678
    %v2190 = vunpack.c.h.b16 %v678
    %v2191 = vunpack.c.l.b16 %v679
    %v2192 = vunpack.c.h.b16 %v679
    %v2193 = vunpack.c.l.b16 %v680
    %v2194 = vunpack.c.h.b16 %v680
    %v2195 = vunpack.c.l.b16 %v681
    %v2196 = vunpack.c.h.b16 %v681
    %v2197 = vunpack.c.l.b16 %v682
    %v2198 = vunpack.c.h.b16 %v682
    %v2199 = vunpack.c.l.b16 %v683
    %v2200 = vunpack.c.h.b16 %v683
    %v2201 = vunpack.c.l.b16 %v684
    %v2202 = vunpack.c.h.b16 %v684
    %v2203 = vunpack.c.l.b16 %v685
    %v2204 = vunpack.c.h.b16 %v685
    %v2205 = vunpack.c.l.b16 %v686
    %v2206 = vunpack.c.h.b16 %v686
    %v2207 = vunpack.c.l.b16 %v687
    %v2208 = vunpack.c.h.b16 %v687
    %v2209 = vunpack.c.l.b16 %v688
    %v2210 = vunpack.c.h.b16 %v688
    %v2211 = vunpack.c.l.b16 %v689
    %v2212 = vunpack.c.h.b16 %v689
    %v2213 = vunpack.c.l.b16 %v690
    %v2214 = vunpack.c.h.b16 %v690
    %v2215 = vunpack.c.l.b16 %v691
    %v2216 = vunpack.c.h.b16 %v691
    %v2217 = vunpack.c.l.b16 %v692
    %v2218 = vunpack.c.h.b16 %v692
    %v2219 = vunpack.c.l.b16 %v693
    %v2220 = vunpack.c.h.b16 %v693
    %v2221 = vunpack.c.l.b16 %v694
    %v2222 = vunpack.c.h.b16 %v694
    %v2223 = vunpack.c.l.b16 %v695
    %v2224 = vunpack.c.h.b16 %v695
    %v2225 = vunpack.c.l.b16 %v696
    %v2226 = vunpack.c.h.b16 %v696
    %v2227 = vunpack.c.l.b16 %v697
    %v2228 = vunpack.c.h.b16 %v697
    %v2229 = vunpack.c.l.b16 %v698
    %v2230 = vunpack.c.h.b16 %v698
    %v2231 = vunpack.c.l.b16 %v699
    %v2232 = vunpack.c.h.b16 %v699
    %v2233 = vunpack.c.l.b16 %v700
    %v2234 = vunpack.c.h.b16 %v700
    %v2235 = vunpack.c.l.b16 %v701
    %v2236 = vunpack.c.h.b16 %v701
    %v2237 = vunpack.c.l.b16 %v702
    %v2238 = vunpack.c.h.b16 %v702
    %v2239 = vunpack.c.l.b16 %v703
    %v2240 = vunpack.c.h.b16 %v703
    %v2241 = vunpack.c.l.b16 %v704
    %v2242 = vunpack.c.h.b16 %v704
    %v2243 = vunpack.c.l.b16 %v705
    %v2244 = vunpack.c.h.b16 %v705
    %v2245 = vunpack.c.l.b16 %v706
    %v2246 = vunpack.c.h.b16 %v706
    %v2247 = vunpack.c.l.b16 %v707
    %v2248 = vunpack.c.h.b16 %v707
    %v2249 = vunpack.c.l.b16 %v708
    %v2250 = vunpack.c.h.b16 %v708
    %v2251 = vunpack.c.l.b16 %v709
    %v2252 = vunpack.c.h.b16 %v709
    %v2253 = vunpack.c.l.b16 %v710
    %v2254 = vunpack.c.h.b16 %v710
    %v2255 = vunpack.c.l.b16 %v711
    %v2256 = vunpack.c.h.b16 %v711
    %v2257 = vunpack.c.l.b16 %v712
    %v2258 = vunpack.c.h.b16 %v712
    %v2259 = vunpack.c.l.b16 %v713
    %v2260 = vunpack.c.h.b16 %v713
    %v2261 = vunpack.c.l.b16 %v714
    %v2262 = vunpack.c.h.b16 %v714
    %v2263 = vunpack.c.l.b16 %v715
    %v2264 = vunpack.c.h.b16 %v715
    %v2265 = vunpack.c.l.b16 %v716
    %v2266 = vunpack.c.h.b16 %v716
    %v2267 = vunpack.c.l.b16 %v717
    %v2268 = vunpack.c.h.b16 %v717
    %v2269 = vunpack.c.l.b16 %v718
    %v2270 = vunpack.c.h.b16 %v718
    %v2271 = vunpack.c.l.b16 %v719
    %v2272 = vunpack.c.h.b16 %v719
    %v2273 = vunpack.c.l.b16 %v720
    %v2274 = vunpack.c.h.b16 %v720
    %v2275 = vunpack.c.l.b16 %v721
    %v2276 = vunpack.c.h.b16 %v721
    %v2277 = vunpack.c.l.b16 %v722
    %v2278 = vunpack.c.h.b16 %v722
    %v2279 = vunpack.c.l.b16 %v723
    %v2280 = vunpack.c.h.b16 %v723
    %v2281 = vunpack.c.l.b16 %v724
    %v2282 = vunpack.c.h.b16 %v724
    %v2283 = vpack.c.b16 %v1263, %v1259
    %v2284 = vpack.c.b16 %v1264, %v1260
    %v2285 = vpack.c.b16 %v1265, %v1261
    %v2286 = vpack.c.b16 %v1266, %v1262
    %v2287 = vpack.c.b16 %v1271, %v1267
    %v2288 = vpack.c.b16 %v1272, %v1268
    %v2289 = vpack.c.b16 %v1273, %v1269
    %v2290 = vpack.c.b16 %v1274, %v1270
    %v2291 = vpack.c.b16 %v1279, %v1275
    %v2292 = vpack.c.b16 %v1280, %v1276
    %v2293 = vpack.c.b16 %v1281, %v1277
    %v2294 = vpack.c.b16 %v1282, %v1278
    %v2295 = vpack.c.b16 %v1287, %v1283
    %v2296 = vpack.c.b16 %v1288, %v1284
    %v2297 = vpack.c.b16 %v1289, %v1285
    %v2298 = vpack.c.b16 %v1290, %v1286
    %v2299 = vpack.c.b16 %v1295, %v1291
    %v2300 = vpack.c.b16 %v1296, %v1292
    %v2301 = vpack.c.b16 %v1297, %v1293
    %v2302 = vpack.c.b16 %v1298, %v1294
    %v2303 = vpack.c.b16 %v1303, %v1299
    %v2304 = vpack.c.b16 %v1304, %v1300
    %v2305 = vpack.c.b16 %v1305, %v1301
    %v2306 = vpack.c.b16 %v1306, %v1302
    %v2307 = vpack.c.b16 %v1311, %v1307
    %v2308 = vpack.c.b16 %v1312, %v1308
    %v2309 = vpack.c.b16 %v1313, %v1309
    %v2310 = vpack.c.b16 %v1314, %v1310
    %v2311 = vpack.c.b16 %v1319, %v1315
    %v2312 = vpack.c.b16 %v1320, %v1316
    %v2313 = vpack.c.b16 %v1321, %v1317
    %v2314 = vpack.c.b16 %v1322, %v1318
    %v2315 = vpack.c.b16 %v1327, %v1323
    %v2316 = vpack.c.b16 %v1328, %v1324
    %v2317 = vpack.c.b16 %v1329, %v1325
    %v2318 = vpack.c.b16 %v1330, %v1326
    %v2319 = vpack.c.b16 %v1335, %v1331
    %v2320 = vpack.c.b16 %v1336, %v1332
    %v2321 = vpack.c.b16 %v1337, %v1333
    %v2322 = vpack.c.b16 %v1338, %v1334
    %v2323 = vpack.c.b16 %v1343, %v1339
    %v2324 = vpack.c.b16 %v1344, %v1340
    %v2325 = vpack.c.b16 %v1345, %v1341
    %v2326 = vpack.c.b16 %v1346, %v1342
    %v2327 = vpack.c.b16 %v1351, %v1347
    %v2328 = vpack.c.b16 %v1352, %v1348
    %v2329 = vpack.c.b16 %v1353, %v1349
    %v2330 = vpack.c.b16 %v1354, %v1350
    %v2331 = vpack.c.b16 %v1359, %v1355
    %v2332 = vpack.c.b16 %v1360, %v1356
    %v2333 = vpack.c.b16 %v1361, %v1357
    %v2334 = vpack.c.b16 %v1362, %v1358
    %v2335 = vpack.c.b16 %v1367, %v1363
    %v2336 = vpack.c.b16 %v1368, %v1364
    %v2337 = vpack.c.b16 %v1369, %v1365
    %v2338 = vpack.c.b16 %v1370, %v1366
    %v2339 = vpack.c.b16 %v1375, %v1371
    %v2340 = vpack.c.b16 %v1376, %v1372
    %v2341 = vpack.c.b16 %v1377, %v1373
    %v2342 = vpack.c.b16 %v1378, %v1374
    %v2343 = vpack.c.b16 %v1383, %v1379
    %v2344 = vpack.c.b16 %v1384, %v1380
    %v2345 = vpack.c.b16 %v1385, %v1381
    %v2346 = vpack.c.b16 %v1386, %v1382
    %v2347 = vpack.c.b16 %v1391, %v1387
    %v2348 = vpack.c.b16 %v1392, %v1388
    %v2349 = vpack.c.b16 %v1393, %v1389
    %v2350 = vpack.c.b16 %v1394, %v1390
    %v2351 = vpack.c.b16 %v1399, %v1395
    %v2352 = vpack.c.b16 %v1400, %v1396
    %v2353 = vpack.c.b16 %v1401, %v1397
    %v2354 = vpack.c.b16 %v1402, %v1398
    %v2355 = vpack.c.b16 %v1407, %v1403
    %v2356 = vpack.c.b16 %v1408, %v1404
    %v2357 = vpack.c.b16 %v1409, %v1405
    %v2358 = vpack.c.b16 %v1410, %v1406
    %v2359 = vpack.c.b16 %v1415, %v1411
    %v2360 = vpack.c.b16 %v1416, %v1412
    %v2361 = vpack.c.b16 %v1417, %v1413
    %v2362 = vpack.c.b16 %v1418, %v1414
    %v2363 = vpack.c.b16 %v1423, %v1419
    %v2364 = vpack.c.b16 %v1424, %v1420
    %v2365 = vpack.c.b16 %v1425, %v1421
    %v2366 = vpack.c.b16 %v1426, %v1422
    %v2367 = vpack.c.b16 %v1431, %v1427
    %v2368 = vpack.c.b16 %v1432, %v1428
    %v2369 = vpack.c.b16 %v1433, %v1429
    %v2370 = vpack.c.b16 %v1434, %v1430
    %v2371 = vpack.c.b16 %v1439, %v1435
    %v2372 = vpack.c.b16 %v1440, %v1436
    %v2373 = vpack.c.b16 %v1441, %v1437
    %v2374 = vpack.c.b16 %v1442, %v1438
    %v2375 = vpack.c.b16 %v1447, %v1443
    %v2376 = vpack.c.b16 %v1448, %v1444
    %v2377 = vpack.c.b16 %v1449, %v1445
    %v2378 = vpack.c.b16 %v1450, %v1446
    %v2379 = vpack.c.b16 %v1455, %v1451
    %v2380 = vpack.c.b16 %v1456, %v1452
    %v2381 = vpack.c.b16 %v1457, %v1453
    %v2382 = vpack.c.b16 %v1458, %v1454
    %v2383 = vpack.c.b16 %v1463, %v1459
    %v2384 = vpack.c.b16 %v1464, %v1460
    %v2385 = vpack.c.b16 %v1465, %v1461
    %v2386 = vpack.c.b16 %v1466, %v1462
    %v2387 = vpack.c.b16 %v1471, %v1467
    %v2388 = vpack.c.b16 %v1472, %v1468
    %v2389 = vpack.c.b16 %v1473, %v1469
    %v2390 = vpack.c.b16 %v1474, %v1470
    %v2391 = vpack.c.b16 %v1479, %v1475
    %v2392 = vpack.c.b16 %v1480, %v1476
    %v2393 = vpack.c.b16 %v1481, %v1477
    %v2394 = vpack.c.b16 %v1482, %v1478
    %v2395 = vpack.c.b16 %v1487, %v1483
    %v2396 = vpack.c.b16 %v1488, %v1484
    %v2397 = vpack.c.b16 %v1489, %v1485
    %v2398 = vpack.c.b16 %v1490, %v1486
    %v2399 = vpack.c.b16 %v1495, %v1491
    %v2400 = vpack.c.b16 %v1496, %v1492
    %v2401 = vpack.c.b16 %v1497, %v1493
    %v2402 = vpack.c.b16 %v1498, %v1494
    %v2403 = vpack.c.b16 %v1503, %v1499
    %v2404 = vpack.c.b16 %v1504, %v1500
    %v2405 = vpack.c.b16 %v1505, %v1501
    %v2406 = vpack.c.b16 %v1506, %v1502
    %v2407 = vpack.c.b16 %v1511, %v1507
    %v2408 = vpack.c.b16 %v1512, %v1508
    %v2409 = vpack.c.b16 %v1513, %v1509
    %v2410 = vpack.c.b16 %v1514, %v1510
    %v2411 = vpack.c.b16 %v1519, %v1515
    %v2412 = vpack.c.b16 %v1520, %v1516
    %v2413 = vpack.c.b16 %v1521, %v1517
    %v2414 = vpack.c.b16 %v1522, %v1518
    %v2415 = vpack.c.b16 %v1527, %v1523
    %v2416 = vpack.c.b16 %v1528, %v1524
    %v2417 = vpack.c.b16 %v1529, %v1525
    %v2418 = vpack.c.b16 %v1530, %v1526
    %v2419 = vpack.c.b16 %v1535, %v1531
    %v2420 = vpack.c.b16 %v1536, %v1532
    %v2421 = vpack.c.b16 %v1537, %v1533
    %v2422 = vpack.c.b16 %v1538, %v1534
    %v2423 = vpack.c.b16 %v1543, %v1539
    %v2424 = vpack.c.b16 %v1544, %v1540
    %v2425 = vpack.c.b16 %v1545, %v1541
    %v2426 = vpack.c.b16 %v1546, %v1542
    %v2427 = vpack.c.b16 %v1551, %v1547
    %v2428 = vpack.c.b16 %v1552, %v1548
    %v2429 = vpack.c.b16 %v1553, %v1549
    %v2430 = vpack.c.b16 %v1554, %v1550
    %v2431 = vpack.c.b16 %v1559, %v1555
    %v2432 = vpack.c.b16 %v1560, %v1556
    %v2433 = vpack.c.b16 %v1561, %v1557
    %v2434 = vpack.c.b16 %v1562, %v1558
    %v2435 = vpack.c.b16 %v1567, %v1563
    %v2436 = vpack.c.b16 %v1568, %v1564
    %v2437 = vpack.c.b16 %v1569, %v1565
    %v2438 = vpack.c.b16 %v1570, %v1566
    %v2439 = vpack.c.b16 %v1575, %v1571
    %v2440 = vpack.c.b16 %v1576, %v1572
    %v2441 = vpack.c.b16 %v1577, %v1573
    %v2442 = vpack.c.b16 %v1578, %v1574
    %v2443 = vpack.c.b16 %v1583, %v1579
    %v2444 = vpack.c.b16 %v1584, %v1580
    %v2445 = vpack.c.b16 %v1585, %v1581
    %v2446 = vpack.c.b16 %v1586, %v1582
    %v2447 = vpack.c.b16 %v1591, %v1587
    %v2448 = vpack.c.b16 %v1592, %v1588
    %v2449 = vpack.c.b16 %v1593, %v1589
    %v2450 = vpack.c.b16 %v1594, %v1590
    %v2451 = vpack.c.b16 %v1599, %v1595
    %v2452 = vpack.c.b16 %v1600, %v1596
    %v2453 = vpack.c.b16 %v1601, %v1597
    %v2454 = vpack.c.b16 %v1602, %v1598
    %v2455 = vpack.c.b16 %v1607, %v1603
    %v2456 = vpack.c.b16 %v1608, %v1604
    %v2457 = vpack.c.b16 %v1609, %v1605
    %v2458 = vpack.c.b16 %v1610, %v1606
    %v2459 = vpack.c.b16 %v1615, %v1611
    %v2460 = vpack.c.b16 %v1616, %v1612
    %v2461 = vpack.c.b16 %v1617, %v1613
    %v2462 = vpack.c.b16 %v1618, %v1614
    %v2463 = vpack.c.b16 %v1623, %v1619
    %v2464 = vpack.c.b16 %v1624, %v1620
    %v2465 = vpack.c.b16 %v1625, %v1621
    %v2466 = vpack.c.b16 %v1626, %v1622
    %v2467 = vpack.c.b16 %v1631, %v1627
    %v2468 = vpack.c.b16 %v1632, %v1628
    %v2469 = vpack.c.b16 %v1633, %v1629
    %v2470 = vpack.c.b16 %v1634, %v1630
    %v2471 = vpack.c.b16 %v1639, %v1635
    %v2472 = vpack.c.b16 %v1640, %v1636
    %v2473 = vpack.c.b16 %v1641, %v1637
    %v2474 = vpack.c.b16 %v1642, %v1638
    %v2475 = vpack.c.b16 %v1647, %v1643
    %v2476 = vpack.c.b16 %v1648, %v1644
    %v2477 = vpack.c.b16 %v1649, %v1645
    %v2478 = vpack.c.b16 %v1650, %v1646
    %v2479 = vpack.c.b16 %v1655, %v1651
    %v2480 = vpack.c.b16 %v1656, %v1652
    %v2481 = vpack.c.b16 %v1657, %v1653
    %v2482 = vpack.c.b16 %v1658, %v1654
    %v2483 = vpack.c.b16 %v1663, %v1659
    %v2484 = vpack.c.b16 %v1664, %v1660
    %v2485 = vpack.c.b16 %v1665, %v1661
    %v2486 = vpack.c.b16 %v1666, %v1662
    %v2487 = vpack.c.b16 %v1671, %v1667
    %v2488 = vpack.c.b16 %v1672, %v1668
    %v2489 = vpack.c.b16 %v1673, %v1669
    %v2490 = vpack.c.b16 %v1674, %v1670
    %v2491 = vpack.c.b16 %v1679, %v1675
    %v2492 = vpack.c.b16 %v1680, %v1676
    %v2493 = vpack.c.b16 %v1681, %v1677
    %v2494 = vpack.c.b16 %v1682, %v1678
    %v2495 = vpack.c.b16 %v1687, %v1683
    %v2496 = vpack.c.b16 %v1688, %v1684
    %v2497 = vpack.c.b16 %v1689, %v1685
    %v2498 = vpack.c.b16 %v1690, %v1686
    %v2499 = vpack.c.b16 %v1695, %v1691
    %v2500 = vpack.c.b16 %v1696, %v1692
    %v2501 = vpack.c.b16 %v1697, %v1693
    %v2502 = vpack.c.b16 %v1698, %v1694
    %v2503 = vpack.c.b16 %v1703, %v1699
    %v2504 = vpack.c.b16 %v1704, %v1700
    %v2505 = vpack.c.b16 %v1705, %v1701
    %v2506 = vpack.c.b16 %v1706, %v1702
    %v2507 = vpack.c.b16 %v1711, %v1707
    %v2508 = vpack.c.b16 %v1712, %v1708
    %v2509 = vpack.c.b16 %v1713, %v1709
    %v2510 = vpack.c.b16 %v1714, %v1710
    %v2511 = vpack.c.b16 %v1719, %v1715
    %v2512 = vpack.c.b16 %v1720, %v1716
    %v2513 = vpack.c.b16 %v1721, %v1717
    %v2514 = vpack.c.b16 %v1722, %v1718
    %v2515 = vpack.c.b16 %v1727, %v1723
    %v2516 = vpack.c.b16 %v1728, %v1724
    %v2517 = vpack.c.b16 %v1729, %v1725
    %v2518 = vpack.c.b16 %v1730, %v1726
    %v2519 = vpack.c.b16 %v1735, %v1731
    %v2520 = vpack.c.b16 %v1736, %v1732
    %v2521 = vpack.c.b16 %v1737, %v1733
    %v2522 = vpack.c.b16 %v1738, %v1734
    %v2523 = vpack.c.b16 %v1743, %v1739
    %v2524 = vpack.c.b16 %v1744, %v1740
    %v2525 = vpack.c.b16 %v1745, %v1741
    %v2526 = vpack.c.b16 %v1746, %v1742
    %v2527 = vpack.c.b16 %v1751, %v1747
    %v2528 = vpack.c.b16 %v1752, %v1748
    %v2529 = vpack.c.b16 %v1753, %v1749
    %v2530 = vpack.c.b16 %v1754, %v1750
    %v2531 = vpack.c.b16 %v1759, %v1755
    %v2532 = vpack.c.b16 %v1760, %v1756
    %v2533 = vpack.c.b16 %v1761, %v1757
    %v2534 = vpack.c.b16 %v1762, %v1758
    %v2535 = vpack.c.b16 %v1767, %v1763
    %v2536 = vpack.c.b16 %v1768, %v1764
    %v2537 = vpack.c.b16 %v1769, %v1765
    %v2538 = vpack.c.b16 %v1770, %v1766
    %v2539 = vpack.c.b16 %v1775, %v1771
    %v2540 = vpack.c.b16 %v1776, %v1772
    %v2541 = vpack.c.b16 %v1777, %v1773
    %v2542 = vpack.c.b16 %v1778, %v1774
    %v2543 = vpack.c.b16 %v1783, %v1779
    %v2544 = vpack.c.b16 %v1784, %v1780
    %v2545 = vpack.c.b16 %v1785, %v1781
    %v2546 = vpack.c.b16 %v1786, %v1782
    %v2547 = vpack.c.b16 %v1791, %v1787
    %v2548 = vpack.c.b16 %v1792, %v1788
    %v2549 = vpack.c.b16 %v1793, %v1789
    %v2550 = vpack.c.b16 %v1794, %v1790
    %v2551 = vpack.c.b16 %v1799, %v1795
    %v2552 = vpack.c.b16 %v1800, %v1796
    %v2553 = vpack.c.b16 %v1801, %v1797
    %v2554 = vpack.c.b16 %v1802, %v1798
    %v2555 = vpack.c.b16 %v1807, %v1803
    %v2556 = vpack.c.b16 %v1808, %v1804
    %v2557 = vpack.c.b16 %v1809, %v1805
    %v2558 = vpack.c.b16 %v1810, %v1806
    %v2559 = vpack.c.b16 %v1815, %v1811
    %v2560 = vpack.c.b16 %v1816, %v1812
    %v2561 = vpack.c.b16 %v1817, %v1813
    %v2562 = vpack.c.b16 %v1818, %v1814
    %v2563 = vpack.c.b16 %v1823, %v1819
    %v2564 = vpack.c.b16 %v1824, %v1820
    %v2565 = vpack.c.b16 %v1825, %v1821
    %v2566 = vpack.c.b16 %v1826, %v1822
    %v2567 = vpack.c.b16 %v1831, %v1827
    %v2568 = vpack.c.b16 %v1832, %v1828
    %v2569 = vpack.c.b16 %v1833, %v1829
    %v2570 = vpack.c.b16 %v1834, %v1830
    %v2571 = vpack.c.b16 %v1839, %v1835
    %v2572 = vpack.c.b16 %v1840, %v1836
    %v2573 = vpack.c.b16 %v1841, %v1837
    %v2574 = vpack.c.b16 %v1842, %v1838
    %v2575 = vpack.c.b16 %v1847, %v1843
    %v2576 = vpack.c.b16 %v1848, %v1844
    %v2577 = vpack.c.b16 %v1849, %v1845
    %v2578 = vpack.c.b16 %v1850, %v1846
    %v2579 = vpack.c.b16 %v1855, %v1851
    %v2580 = vpack.c.b16 %v1856, %v1852
    %v2581 = vpack.c.b16 %v1857, %v1853
    %v2582 = vpack.c.b16 %v1858, %v1854
    %v2583 = vpack.c.b16 %v1863, %v1859
    %v2584 = vpack.c.b16 %v1864, %v1860
    %v2585 = vpack.c.b16 %v1865, %v1861
    %v2586 = vpack.c.b16 %v1866, %v1862
    %v2587 = vpack.c.b16 %v1871, %v1867
    %v2588 = vpack.c.b16 %v1872, %v1868
    %v2589 = vpack.c.b16 %v1873, %v1869
    %v2590 = vpack.c.b16 %v1874, %v1870
    %v2591 = vpack.c.b16 %v1879, %v1875
    %v2592 = vpack.c.b16 %v1880, %v1876
    %v2593 = vpack.c.b16 %v1881, %v1877
    %v2594 = vpack.c.b16 %v1882, %v1878
    %v2595 = vpack.c.b16 %v1887, %v1883
    %v2596 = vpack.c.b16 %v1888, %v1884
    %v2597 = vpack.c.b16 %v1889, %v1885
    %v2598 = vpack.c.b16 %v1890, %v1886
    %v2599 = vpack.c.b16 %v1895, %v1891
    %v2600 = vpack.c.b16 %v1896, %v1892
    %v2601 = vpack.c.b16 %v1897, %v1893
    %v2602 = vpack.c.b16 %v1898, %v1894
    %v2603 = vpack.c.b16 %v1903, %v1899
    %v2604 = vpack.c.b16 %v1904, %v1900
    %v2605 = vpack.c.b16 %v1905, %v1901
    %v2606 = vpack.c.b16 %v1906, %v1902
    %v2607 = vpack.c.b16 %v1911, %v1907
    %v2608 = vpack.c.b16 %v1912, %v1908
    %v2609 = vpack.c.b16 %v1913, %v1909
    %v2610 = vpack.c.b16 %v1914, %v1910
    %v2611 = vpack.c.b16 %v1919, %v1915
    %v2612 = vpack.c.b16 %v1920, %v1916
    %v2613 = vpack.c.b16 %v1921, %v1917
    %v2614 = vpack.c.b16 %v1922, %v1918
    %v2615 = vpack.c.b16 %v1927, %v1923
    %v2616 = vpack.c.b16 %v1928, %v1924
    %v2617 = vpack.c.b16 %v1929, %v1925
    %v2618 = vpack.c.b16 %v1930, %v1926
    %v2619 = vpack.c.b16 %v1935, %v1931
    %v2620 = vpack.c.b16 %v1936, %v1932
    %v2621 = vpack.c.b16 %v1937, %v1933
    %v2622 = vpack.c.b16 %v1938, %v1934
    %v2623 = vpack.c.b16 %v1943, %v1939
    %v2624 = vpack.c.b16 %v1944, %v1940
    %v2625 = vpack.c.b16 %v1945, %v1941
    %v2626 = vpack.c.b16 %v1946, %v1942
    %v2627 = vpack.c.b16 %v1951, %v1947
    %v2628 = vpack.c.b16 %v1952, %v1948
    %v2629 = vpack.c.b16 %v1953, %v1949
    %v2630 = vpack.c.b16 %v1954, %v1950
    %v2631 = vpack.c.b16 %v1959, %v1955
    %v2632 = vpack.c.b16 %v1960, %v1956
    %v2633 = vpack.c.b16 %v1961, %v1957
    %v2634 = vpack.c.b16 %v1962, %v1958
    %v2635 = vpack.c.b16 %v1967, %v1963
    %v2636 = vpack.c.b16 %v1968, %v1964
    %v2637 = vpack.c.b16 %v1969, %v1965
    %v2638 = vpack.c.b16 %v1970, %v1966
    %v2639 = vpack.c.b16 %v1975, %v1971
    %v2640 = vpack.c.b16 %v1976, %v1972
    %v2641 = vpack.c.b16 %v1977, %v1973
    %v2642 = vpack.c.b16 %v1978, %v1974
    %v2643 = vpack.c.b16 %v1983, %v1979
    %v2644 = vpack.c.b16 %v1984, %v1980
    %v2645 = vpack.c.b16 %v1985, %v1981
    %v2646 = vpack.c.b16 %v1986, %v1982
    %v2647 = vpack.c.b16 %v1991, %v1987
    %v2648 = vpack.c.b16 %v1992, %v1988
    %v2649 = vpack.c.b16 %v1993, %v1989
    %v2650 = vpack.c.b16 %v1994, %v1990
    %v2651 = vpack.c.b16 %v1999, %v1995
    %v2652 = vpack.c.b16 %v2000, %v1996
    %v2653 = vpack.c.b16 %v2001, %v1997
    %v2654 = vpack.c.b16 %v2002, %v1998
    %v2655 = vpack.c.b16 %v2007, %v2003
    %v2656 = vpack.c.b16 %v2008, %v2004
    %v2657 = vpack.c.b16 %v2009, %v2005
    %v2658 = vpack.c.b16 %v2010, %v2006
    %v2659 = vpack.c.b16 %v2015, %v2011
    %v2660 = vpack.c.b16 %v2016, %v2012
    %v2661 = vpack.c.b16 %v2017, %v2013
    %v2662 = vpack.c.b16 %v2018, %v2014
    %v2663 = vpack.c.b16 %v2023, %v2019
    %v2664 = vpack.c.b16 %v2024, %v2020
    %v2665 = vpack.c.b16 %v2025, %v2021
    %v2666 = vpack.c.b16 %v2026, %v2022
    %v2667 = vpack.c.b16 %v2031, %v2027
    %v2668 = vpack.c.b16 %v2032, %v2028
    %v2669 = vpack.c.b16 %v2033, %v2029
    %v2670 = vpack.c.b16 %v2034, %v2030
    %v2671 = vpack.c.b16 %v2039, %v2035
    %v2672 = vpack.c.b16 %v2040, %v2036
    %v2673 = vpack.c.b16 %v2041, %v2037
    %v2674 = vpack.c.b16 %v2042, %v2038
    %v2675 = vpack.c.b16 %v2047, %v2043
    %v2676 = vpack.c.b16 %v2048, %v2044
    %v2677 = vpack.c.b16 %v2049, %v2045
    %v2678 = vpack.c.b16 %v2050, %v2046
    %v2679 = vpack.c.b16 %v2055, %v2051
    %v2680 = vpack.c.b16 %v2056, %v2052
    %v2681 = vpack.c.b16 %v2057, %v2053
    %v2682 = vpack.c.b16 %v2058, %v2054
    %v2683 = vpack.c.b16 %v2063, %v2059
    %v2684 = vpack.c.b16 %v2064, %v2060
    %v2685 = vpack.c.b16 %v2065, %v2061
    %v2686 = vpack.c.b16 %v2066, %v2062
    %v2687 = vpack.c.b16 %v2071, %v2067
    %v2688 = vpack.c.b16 %v2072, %v2068
    %v2689 = vpack.c.b16 %v2073, %v2069
    %v2690 = vpack.c.b16 %v2074, %v2070
    %v2691 = vpack.c.b16 %v2079, %v2075
    %v2692 = vpack.c.b16 %v2080, %v2076
    %v2693 = vpack.c.b16 %v2081, %v2077
    %v2694 = vpack.c.b16 %v2082, %v2078
    %v2695 = vpack.c.b16 %v2087, %v2083
    %v2696 = vpack.c.b16 %v2088, %v2084
    %v2697 = vpack.c.b16 %v2089, %v2085
    %v2698 = vpack.c.b16 %v2090, %v2086
    %v2699 = vpack.c.b16 %v2095, %v2091
    %v2700 = vpack.c.b16 %v2096, %v2092
    %v2701 = vpack.c.b16 %v2097, %v2093
    %v2702 = vpack.c.b16 %v2098, %v2094
    %v2703 = vpack.c.b16 %v2103, %v2099
    %v2704 = vpack.c.b16 %v2104, %v2100
    %v2705 = vpack.c.b16 %v2105, %v2101
    %v2706 = vpack.c.b16 %v2106, %v2102
    %v2707 = vpack.c.b16 %v2111, %v2107
    %v2708 = vpack.c.b16 %v2112, %v2108
    %v2709 = vpack.c.b16 %v2113, %v2109
    %v2710 = vpack.c.b16 %v2114, %v2110
    %v2711 = vpack.c.b16 %v2119, %v2115
    %v2712 = vpack.c.b16 %v2120, %v2116
    %v2713 = vpack.c.b16 %v2121, %v2117
    %v2714 = vpack.c.b16 %v2122, %v2118
    %v2715 = vpack.c.b16 %v2127, %v2123
    %v2716 = vpack.c.b16 %v2128, %v2124
    %v2717 = vpack.c.b16 %v2129, %v2125
    %v2718 = vpack.c.b16 %v2130, %v2126
    %v2719 = vpack.c.b16 %v2135, %v2131
    %v2720 = vpack.c.b16 %v2136, %v2132
    %v2721 = vpack.c.b16 %v2137, %v2133
    %v2722 = vpack.c.b16 %v2138, %v2134
    %v2723 = vpack.c.b16 %v2143, %v2139
    %v2724 = vpack.c.b16 %v2144, %v2140
    %v2725 = vpack.c.b16 %v2145, %v2141
    %v2726 = vpack.c.b16 %v2146, %v2142
    %v2727 = vpack.c.b16 %v2151, %v2147
    %v2728 = vpack.c.b16 %v2152, %v2148
    %v2729 = vpack.c.b16 %v2153, %v2149
    %v2730 = vpack.c.b16 %v2154, %v2150
    %v2731 = vpack.c.b16 %v2159, %v2155
    %v2732 = vpack.c.b16 %v2160, %v2156
    %v2733 = vpack.c.b16 %v2161, %v2157
    %v2734 = vpack.c.b16 %v2162, %v2158
    %v2735 = vpack.c.b16 %v2167, %v2163
    %v2736 = vpack.c.b16 %v2168, %v2164
    %v2737 = vpack.c.b16 %v2169, %v2165
    %v2738 = vpack.c.b16 %v2170, %v2166
    %v2739 = vpack.c.b16 %v2175, %v2171
    %v2740 = vpack.c.b16 %v2176, %v2172
    %v2741 = vpack.c.b16 %v2177, %v2173
    %v2742 = vpack.c.b16 %v2178, %v2174
    %v2743 = vpack.c.b16 %v2183, %v2179
    %v2744 = vpack.c.b16 %v2184, %v2180
    %v2745 = vpack.c.b16 %v2185, %v2181
    %v2746 = vpack.c.b16 %v2186, %v2182
    %v2747 = vpack.c.b16 %v2191, %v2187
    %v2748 = vpack.c.b16 %v2192, %v2188
    %v2749 = vpack.c.b16 %v2193, %v2189
    %v2750 = vpack.c.b16 %v2194, %v2190
    %v2751 = vpack.c.b16 %v2199, %v2195
    %v2752 = vpack.c.b16 %v2200, %v2196
    %v2753 = vpack.c.b16 %v2201, %v2197
    %v2754 = vpack.c.b16 %v2202, %v2198
    %v2755 = vpack.c.b16 %v2207, %v2203
    %v2756 = vpack.c.b16 %v2208, %v2204
    %v2757 = vpack.c.b16 %v2209, %v2205
    %v2758 = vpack.c.b16 %v2210, %v2206
    %v2759 = vpack.c.b16 %v2215, %v2211
    %v2760 = vpack.c.b16 %v2216, %v2212
    %v2761 = vpack.c.b16 %v2217, %v2213
    %v2762 = vpack.c.b16 %v2218, %v2214
    %v2763 = vpack.c.b16 %v2223, %v2219
    %v2764 = vpack.c.b16 %v2224, %v2220
    %v2765 = vpack.c.b16 %v2225, %v2221
    %v2766 = vpack.c.b16 %v2226, %v2222
    %v2767 = vpack.c.b16 %v2231, %v2227
    %v2768 = vpack.c.b16 %v2232, %v2228
    %v2769 = vpack.c.b16 %v2233, %v2229
    %v2770 = vpack.c.b16 %v2234, %v2230
    %v2771 = vpack.c.b16 %v2239, %v2235
    %v2772 = vpack.c.b16 %v2240, %v2236
    %v2773 = vpack.c.b16 %v2241, %v2237
    %v2774 = vpack.c.b16 %v2242, %v2238
    %v2775 = vpack.c.b16 %v2247, %v2243
    %v2776 = vpack.c.b16 %v2248, %v2244
    %v2777 = vpack.c.b16 %v2249, %v2245
    %v2778 = vpack.c.b16 %v2250, %v2246
    %v2779 = vpack.c.b16 %v2255, %v2251
    %v2780 = vpack.c.b16 %v2256, %v2252
    %v2781 = vpack.c.b16 %v2257, %v2253
    %v2782 = vpack.c.b16 %v2258, %v2254
    %v2783 = vpack.c.b16 %v2263, %v2259
    %v2784 = vpack.c.b16 %v2264, %v2260
    %v2785 = vpack.c.b16 %v2265, %v2261
    %v2786 = vpack.c.b16 %v2266, %v2262
    %v2787 = vpack.c.b16 %v2271, %v2267
    %v2788 = vpack.c.b16 %v2272, %v2268
    %v2789 = vpack.c.b16 %v2273, %v2269
    %v2790 = vpack.c.b16 %v2274, %v2270
    %v2791 = vpack.c.b16 %v2279, %v2275
    %v2792 = vpack.c.b16 %v2280, %v2276
    %v2793 = vpack.c.b16 %v2281, %v2277
    %v2794 = vpack.c.b16 %v2282, %v2278
    %3307 = vmatprep.subr.bf16.mxu0 %v2312
    %3308 = vmatpush1.bf16.msra.mxu0 %v2311
    %3309 = vmatprep.subr.bf16.mxu0 %v2308
    %3310 = vmatpush1.bf16.msra.mxu0 %v2307
    %3311 = vmatprep.subr.bf16.mxu0 %v2304
    %3312 = vmatpush1.bf16.msra.mxu0 %v2303
    %3313 = vmatprep.subr.bf16.mxu0 %v2300
    %3314 = vmatpush1.bf16.msra.mxu0 %v2299
    %3315 = vmatprep.subr.bf16.mxu0 %v2296
    %3316 = vmatpush1.bf16.msra.mxu0 %v2295
    %3317 = vmatprep.subr.bf16.mxu0 %v2292
    %3318 = vmatpush1.bf16.msra.mxu0 %v2291
    %3319 = vmatprep.subr.bf16.mxu0 %v2288
    %3320 = vmatpush1.bf16.msra.mxu0 %v2287
    %3321 = vmatprep.subr.bf16.mxu0 %v2284
    %3322 = vmatpush1.bf16.msra.mxu0 %v2283
    %3323 = vmatprep.subr.bf16.mxu0 %v2344
    %3324 = vmatpush2.bf16.msra.mxu0 %v2343
    %3325 = vmatprep.subr.bf16.mxu0 %v2340
    %3326 = vmatpush2.bf16.msra.mxu0 %v2339
    %3327 = vmatprep.subr.bf16.mxu0 %v2336
    %3328 = vmatpush2.bf16.msra.mxu0 %v2335
    %3329 = vmatprep.subr.bf16.mxu0 %v2332
    %3330 = vmatpush2.bf16.msra.mxu0 %v2331
    %3331 = vmatprep.subr.bf16.mxu0 %v2328
    %3332 = vmatpush2.bf16.msra.mxu0 %v2327
    %3333 = vmatprep.subr.bf16.mxu0 %v2324
    %3334 = vmatpush2.bf16.msra.mxu0 %v2323
    %3335 = vmatprep.subr.bf16.mxu0 %v2320
    %3336 = vmatpush2.bf16.msra.mxu0 %v2319
    %3337 = vmatprep.subr.bf16.mxu0 %v2316
    %3338 = vmatpush2.bf16.msra.mxu0 %v2315
    %3339 = vmatprep.mubr.bf16.mxu0 %v182
    %3340 = vmatmul.mubr.bf16.gmra.mxu0 %v181
    %v3341 = vpop.f32.mrf.mxu0
    %v3342 = vadd.f32 %v730, %v3341
    %v3343 = vpop.f32.mrf.mxu0
    %v3344 = vadd.f32 %v734, %v3343
    %v3345 = vpop.f32.mrf.mxu0
    %v3346 = vadd.f32 %v730, %v3345
    %v3347 = vpop.f32.mrf.mxu0
    %v3348 = vadd.f32 %v734, %v3347
    %3349 = vmatprep.mubr.bf16.mxu0 %v198
    %3350 = vmatmul.mubr.bf16.gmra.mxu0 %v197
    %v3351 = vpop.f32.mrf.mxu0
    %v3352 = vadd.f32 %v730, %v3351
    %v3353 = vpop.f32.mrf.mxu0
    %v3354 = vadd.f32 %v734, %v3353
    %v3355 = vpop.f32.mrf.mxu0
    %v3356 = vadd.f32 %v730, %v3355
    %v3357 = vpop.f32.mrf.mxu0
    %v3358 = vadd.f32 %v734, %v3357
    %3359 = vdwg.mxu0
    %3360 = vmatprep.subr.bf16.mxu0 %v2376
    %3361 = vmatpush1.bf16.msra.mxu0 %v2375
    %3362 = vmatprep.subr.bf16.mxu0 %v2372
    %3363 = vmatpush1.bf16.msra.mxu0 %v2371
    %3364 = vmatprep.subr.bf16.mxu0 %v2368
    %3365 = vmatpush1.bf16.msra.mxu0 %v2367
    %3366 = vmatprep.subr.bf16.mxu0 %v2364
    %3367 = vmatpush1.bf16.msra.mxu0 %v2363
    %3368 = vmatprep.subr.bf16.mxu0 %v2360
    %3369 = vmatpush1.bf16.msra.mxu0 %v2359
    %3370 = vmatprep.subr.bf16.mxu0 %v2356
    %3371 = vmatpush1.bf16.msra.mxu0 %v2355
    %3372 = vmatprep.subr.bf16.mxu0 %v2352
    %3373 = vmatpush1.bf16.msra.mxu0 %v2351
    %3374 = vmatprep.subr.bf16.mxu0 %v2348
    %3375 = vmatpush1.bf16.msra.mxu0 %v2347
    %3376 = vmatprep.subr.bf16.mxu0 %v2408
    %3377 = vmatpush2.bf16.msra.mxu0 %v2407
    %3378 = vmatprep.subr.bf16.mxu0 %v2404
    %3379 = vmatpush2.bf16.msra.mxu0 %v2403
    %3380 = vmatprep.subr.bf16.mxu0 %v2400
    %3381 = vmatpush2.bf16.msra.mxu0 %v2399
    %3382 = vmatprep.subr.bf16.mxu0 %v2396
    %3383 = vmatpush2.bf16.msra.mxu0 %v2395
    %3384 = vmatprep.subr.bf16.mxu0 %v2392
    %3385 = vmatpush2.bf16.msra.mxu0 %v2391
    %3386 = vmatprep.subr.bf16.mxu0 %v2388
    %3387 = vmatpush2.bf16.msra.mxu0 %v2387
    %3388 = vmatprep.subr.bf16.mxu0 %v2384
    %3389 = vmatpush2.bf16.msra.mxu0 %v2383
    %3390 = vmatprep.subr.bf16.mxu0 %v2380
    %3391 = vmatpush2.bf16.msra.mxu0 %v2379
    %3392 = vmatprep.mubr.bf16.mxu0 %v184
    %3393 = vmatmul.mubr.bf16.gmra.mxu0 %v183
    %v3394 = vpop.f32.mrf.mxu0
    %v3395 = vadd.f32 %v3342, %v3394
    %v3396 = vpop.f32.mrf.mxu0
    %v3397 = vadd.f32 %v3344, %v3396
    %v3398 = vpop.f32.mrf.mxu0
    %v3399 = vadd.f32 %v3346, %v3398
    %v3400 = vpop.f32.mrf.mxu0
    %v3401 = vadd.f32 %v3348, %v3400
    %3402 = vmatprep.mubr.bf16.mxu0 %v200
    %3403 = vmatmul.mubr.bf16.gmra.mxu0 %v199
    %v3404 = vpop.f32.mrf.mxu0
    %v3405 = vadd.f32 %v3352, %v3404
    %v3406 = vpop.f32.mrf.mxu0
    %v3407 = vadd.f32 %v3354, %v3406
    %v3408 = vpop.f32.mrf.mxu0
    %v3409 = vadd.f32 %v3356, %v3408
    %v3410 = vpop.f32.mrf.mxu0
    %v3411 = vadd.f32 %v3358, %v3410
    %3412 = vdwg.mxu0
    %3413 = vmatprep.subr.bf16.mxu0 %v2440
    %3414 = vmatpush1.bf16.msra.mxu0 %v2439
    %3415 = vmatprep.subr.bf16.mxu0 %v2436
    %3416 = vmatpush1.bf16.msra.mxu0 %v2435
    %3417 = vmatprep.subr.bf16.mxu0 %v2432
    %3418 = vmatpush1.bf16.msra.mxu0 %v2431
    %3419 = vmatprep.subr.bf16.mxu0 %v2428
    %3420 = vmatpush1.bf16.msra.mxu0 %v2427
    %3421 = vmatprep.subr.bf16.mxu0 %v2424
    %3422 = vmatpush1.bf16.msra.mxu0 %v2423
    %3423 = vmatprep.subr.bf16.mxu0 %v2420
    %3424 = vmatpush1.bf16.msra.mxu0 %v2419
    %3425 = vmatprep.subr.bf16.mxu0 %v2416
    %3426 = vmatpush1.bf16.msra.mxu0 %v2415
    %3427 = vmatprep.subr.bf16.mxu0 %v2412
    %3428 = vmatpush1.bf16.msra.mxu0 %v2411
    %3429 = vmatprep.subr.bf16.mxu0 %v2472
    %3430 = vmatpush2.bf16.msra.mxu0 %v2471
    %3431 = vmatprep.subr.bf16.mxu0 %v2468
    %3432 = vmatpush2.bf16.msra.mxu0 %v2467
    %3433 = vmatprep.subr.bf16.mxu0 %v2464
    %3434 = vmatpush2.bf16.msra.mxu0 %v2463
    %3435 = vmatprep.subr.bf16.mxu0 %v2460
    %3436 = vmatpush2.bf16.msra.mxu0 %v2459
    %3437 = vmatprep.subr.bf16.mxu0 %v2456
    %3438 = vmatpush2.bf16.msra.mxu0 %v2455
    %3439 = vmatprep.subr.bf16.mxu0 %v2452
    %3440 = vmatpush2.bf16.msra.mxu0 %v2451
    %3441 = vmatprep.subr.bf16.mxu0 %v2448
    %3442 = vmatpush2.bf16.msra.mxu0 %v2447
    %3443 = vmatprep.subr.bf16.mxu0 %v2444
    %3444 = vmatpush2.bf16.msra.mxu0 %v2443
    %3445 = vmatprep.mubr.bf16.mxu0 %v186
    %3446 = vmatmul.mubr.bf16.gmra.mxu0 %v185
    %v3447 = vpop.f32.mrf.mxu0
    %v3448 = vadd.f32 %v3395, %v3447
    %v3449 = vpop.f32.mrf.mxu0
    %v3450 = vadd.f32 %v3397, %v3449
    %v3451 = vpop.f32.mrf.mxu0
    %v3452 = vadd.f32 %v3399, %v3451
    %v3453 = vpop.f32.mrf.mxu0
    %v3454 = vadd.f32 %v3401, %v3453
    %3455 = vmatprep.mubr.bf16.mxu0 %v202
    %3456 = vmatmul.mubr.bf16.gmra.mxu0 %v201
    %v3457 = vpop.f32.mrf.mxu0
    %v3458 = vadd.f32 %v3405, %v3457
    %v3459 = vpop.f32.mrf.mxu0
    %v3460 = vadd.f32 %v3407, %v3459
    %v3461 = vpop.f32.mrf.mxu0
    %v3462 = vadd.f32 %v3409, %v3461
    %v3463 = vpop.f32.mrf.mxu0
    %v3464 = vadd.f32 %v3411, %v3463
    %3465 = vdwg.mxu0
    %3466 = vmatprep.subr.bf16.mxu0 %v2504
    %3467 = vmatpush1.bf16.msra.mxu0 %v2503
    %3468 = vmatprep.subr.bf16.mxu0 %v2500
    %3469 = vmatpush1.bf16.msra.mxu0 %v2499
    %3470 = vmatprep.subr.bf16.mxu0 %v2496
    %3471 = vmatpush1.bf16.msra.mxu0 %v2495
    %3472 = vmatprep.subr.bf16.mxu0 %v2492
    %3473 = vmatpush1.bf16.msra.mxu0 %v2491
    %3474 = vmatprep.subr.bf16.mxu0 %v2488
    %3475 = vmatpush1.bf16.msra.mxu0 %v2487
    %3476 = vmatprep.subr.bf16.mxu0 %v2484
    %3477 = vmatpush1.bf16.msra.mxu0 %v2483
    %3478 = vmatprep.subr.bf16.mxu0 %v2480
    %3479 = vmatpush1.bf16.msra.mxu0 %v2479
    %3480 = vmatprep.subr.bf16.mxu0 %v2476
    %3481 = vmatpush1.bf16.msra.mxu0 %v2475
    %3482 = vmatprep.subr.bf16.mxu0 %v2536
    %3483 = vmatpush2.bf16.msra.mxu0 %v2535
    %3484 = vmatprep.subr.bf16.mxu0 %v2532
    %3485 = vmatpush2.bf16.msra.mxu0 %v2531
    %3486 = vmatprep.subr.bf16.mxu0 %v2528
    %3487 = vmatpush2.bf16.msra.mxu0 %v2527
    %3488 = vmatprep.subr.bf16.mxu0 %v2524
    %3489 = vmatpush2.bf16.msra.mxu0 %v2523
    %3490 = vmatprep.subr.bf16.mxu0 %v2520
    %3491 = vmatpush2.bf16.msra.mxu0 %v2519
    %3492 = vmatprep.subr.bf16.mxu0 %v2516
    %3493 = vmatpush2.bf16.msra.mxu0 %v2515
    %3494 = vmatprep.subr.bf16.mxu0 %v2512
    %3495 = vmatpush2.bf16.msra.mxu0 %v2511
    %3496 = vmatprep.subr.bf16.mxu0 %v2508
    %3497 = vmatpush2.bf16.msra.mxu0 %v2507
    %3498 = vmatprep.mubr.bf16.mxu0 %v188
    %3499 = vmatmul.mubr.bf16.gmra.mxu0 %v187
    %v3500 = vpop.f32.mrf.mxu0
    %v3501 = vadd.f32 %v3448, %v3500
    %v3502 = vpop.f32.mrf.mxu0
    %v3503 = vadd.f32 %v3450, %v3502
    %v3504 = vpop.f32.mrf.mxu0
    %v3505 = vadd.f32 %v3452, %v3504
    %v3506 = vpop.f32.mrf.mxu0
    %v3507 = vadd.f32 %v3454, %v3506
    %3508 = vmatprep.mubr.bf16.mxu0 %v204
    %3509 = vmatmul.mubr.bf16.gmra.mxu0 %v203
    %v3510 = vpop.f32.mrf.mxu0
    %v3511 = vadd.f32 %v3458, %v3510
    %v3512 = vpop.f32.mrf.mxu0
    %v3513 = vadd.f32 %v3460, %v3512
    %v3514 = vpop.f32.mrf.mxu0
    %v3515 = vadd.f32 %v3462, %v3514
    %v3516 = vpop.f32.mrf.mxu0
    %v3517 = vadd.f32 %v3464, %v3516
    %3518 = vdwg.mxu0
    %3519 = vmatprep.subr.bf16.mxu0 %v2568
    %3520 = vmatpush1.bf16.msra.mxu0 %v2567
    %3521 = vmatprep.subr.bf16.mxu0 %v2564
    %3522 = vmatpush1.bf16.msra.mxu0 %v2563
    %3523 = vmatprep.subr.bf16.mxu0 %v2560
    %3524 = vmatpush1.bf16.msra.mxu0 %v2559
    %3525 = vmatprep.subr.bf16.mxu0 %v2556
    %3526 = vmatpush1.bf16.msra.mxu0 %v2555
    %3527 = vmatprep.subr.bf16.mxu0 %v2552
    %3528 = vmatpush1.bf16.msra.mxu0 %v2551
    %3529 = vmatprep.subr.bf16.mxu0 %v2548
    %3530 = vmatpush1.bf16.msra.mxu0 %v2547
    %3531 = vmatprep.subr.bf16.mxu0 %v2544
    %3532 = vmatpush1.bf16.msra.mxu0 %v2543
    %3533 = vmatprep.subr.bf16.mxu0 %v2540
    %3534 = vmatpush1.bf16.msra.mxu0 %v2539
    %3535 = vmatprep.subr.bf16.mxu0 %v2600
    %3536 = vmatpush2.bf16.msra.mxu0 %v2599
    %3537 = vmatprep.subr.bf16.mxu0 %v2596
    %3538 = vmatpush2.bf16.msra.mxu0 %v2595
    %3539 = vmatprep.subr.bf16.mxu0 %v2592
    %3540 = vmatpush2.bf16.msra.mxu0 %v2591
    %3541 = vmatprep.subr.bf16.mxu0 %v2588
    %3542 = vmatpush2.bf16.msra.mxu0 %v2587
    %3543 = vmatprep.subr.bf16.mxu0 %v2584
    %3544 = vmatpush2.bf16.msra.mxu0 %v2583
    %3545 = vmatprep.subr.bf16.mxu0 %v2580
    %3546 = vmatpush2.bf16.msra.mxu0 %v2579
    %3547 = vmatprep.subr.bf16.mxu0 %v2576
    %3548 = vmatpush2.bf16.msra.mxu0 %v2575
    %3549 = vmatprep.subr.bf16.mxu0 %v2572
    %3550 = vmatpush2.bf16.msra.mxu0 %v2571
    %3551 = vmatprep.mubr.bf16.mxu0 %v190
    %3552 = vmatmul.mubr.bf16.gmra.mxu0 %v189
    %v3553 = vpop.f32.mrf.mxu0
    %v3554 = vadd.f32 %v3501, %v3553
    %v3555 = vpop.f32.mrf.mxu0
    %v3556 = vadd.f32 %v3503, %v3555
    %v3557 = vpop.f32.mrf.mxu0
    %v3558 = vadd.f32 %v3505, %v3557
    %v3559 = vpop.f32.mrf.mxu0
    %v3560 = vadd.f32 %v3507, %v3559
    %3561 = vmatprep.mubr.bf16.mxu0 %v206
    %3562 = vmatmul.mubr.bf16.gmra.mxu0 %v205
    %v3563 = vpop.f32.mrf.mxu0
    %v3564 = vadd.f32 %v3511, %v3563
    %v3565 = vpop.f32.mrf.mxu0
    %v3566 = vadd.f32 %v3513, %v3565
    %v3567 = vpop.f32.mrf.mxu0
    %v3568 = vadd.f32 %v3515, %v3567
    %v3569 = vpop.f32.mrf.mxu0
    %v3570 = vadd.f32 %v3517, %v3569
    %3571 = vdwg.mxu0
    %3572 = vmatprep.subr.bf16.mxu0 %v2632
    %3573 = vmatpush1.bf16.msra.mxu0 %v2631
    %3574 = vmatprep.subr.bf16.mxu0 %v2628
    %3575 = vmatpush1.bf16.msra.mxu0 %v2627
    %3576 = vmatprep.subr.bf16.mxu0 %v2624
    %3577 = vmatpush1.bf16.msra.mxu0 %v2623
    %3578 = vmatprep.subr.bf16.mxu0 %v2620
    %3579 = vmatpush1.bf16.msra.mxu0 %v2619
    %3580 = vmatprep.subr.bf16.mxu0 %v2616
    %3581 = vmatpush1.bf16.msra.mxu0 %v2615
    %3582 = vmatprep.subr.bf16.mxu0 %v2612
    %3583 = vmatpush1.bf16.msra.mxu0 %v2611
    %3584 = vmatprep.subr.bf16.mxu0 %v2608
    %3585 = vmatpush1.bf16.msra.mxu0 %v2607
    %3586 = vmatprep.subr.bf16.mxu0 %v2604
    %3587 = vmatpush1.bf16.msra.mxu0 %v2603
    %3588 = vmatprep.subr.bf16.mxu0 %v2664
    %3589 = vmatpush2.bf16.msra.mxu0 %v2663
    %3590 = vmatprep.subr.bf16.mxu0 %v2660
    %3591 = vmatpush2.bf16.msra.mxu0 %v2659
    %3592 = vmatprep.subr.bf16.mxu0 %v2656
    %3593 = vmatpush2.bf16.msra.mxu0 %v2655
    %3594 = vmatprep.subr.bf16.mxu0 %v2652
    %3595 = vmatpush2.bf16.msra.mxu0 %v2651
    %3596 = vmatprep.subr.bf16.mxu0 %v2648
    %3597 = vmatpush2.bf16.msra.mxu0 %v2647
    %3598 = vmatprep.subr.bf16.mxu0 %v2644
    %3599 = vmatpush2.bf16.msra.mxu0 %v2643
    %3600 = vmatprep.subr.bf16.mxu0 %v2640
    %3601 = vmatpush2.bf16.msra.mxu0 %v2639
    %3602 = vmatprep.subr.bf16.mxu0 %v2636
    %3603 = vmatpush2.bf16.msra.mxu0 %v2635
    %3604 = vmatprep.mubr.bf16.mxu0 %v192
    %3605 = vmatmul.mubr.bf16.gmra.mxu0 %v191
    %v3606 = vpop.f32.mrf.mxu0
    %v3607 = vadd.f32 %v3554, %v3606
    %v3608 = vpop.f32.mrf.mxu0
    %v3609 = vadd.f32 %v3556, %v3608
    %v3610 = vpop.f32.mrf.mxu0
    %v3611 = vadd.f32 %v3558, %v3610
    %v3612 = vpop.f32.mrf.mxu0
    %v3613 = vadd.f32 %v3560, %v3612
    %3614 = vmatprep.mubr.bf16.mxu0 %v208
    %3615 = vmatmul.mubr.bf16.gmra.mxu0 %v207
    %v3616 = vpop.f32.mrf.mxu0
    %v3617 = vadd.f32 %v3564, %v3616
    %v3618 = vpop.f32.mrf.mxu0
    %v3619 = vadd.f32 %v3566, %v3618
    %v3620 = vpop.f32.mrf.mxu0
    %v3621 = vadd.f32 %v3568, %v3620
    %v3622 = vpop.f32.mrf.mxu0
    %v3623 = vadd.f32 %v3570, %v3622
    %3624 = vdwg.mxu0
    %3625 = vmatprep.subr.bf16.mxu0 %v2696
    %3626 = vmatpush1.bf16.msra.mxu0 %v2695
    %3627 = vmatprep.subr.bf16.mxu0 %v2692
    %3628 = vmatpush1.bf16.msra.mxu0 %v2691
    %3629 = vmatprep.subr.bf16.mxu0 %v2688
    %3630 = vmatpush1.bf16.msra.mxu0 %v2687
    %3631 = vmatprep.subr.bf16.mxu0 %v2684
    %3632 = vmatpush1.bf16.msra.mxu0 %v2683
    %3633 = vmatprep.subr.bf16.mxu0 %v2680
    %3634 = vmatpush1.bf16.msra.mxu0 %v2679
    %3635 = vmatprep.subr.bf16.mxu0 %v2676
    %3636 = vmatpush1.bf16.msra.mxu0 %v2675
    %3637 = vmatprep.subr.bf16.mxu0 %v2672
    %3638 = vmatpush1.bf16.msra.mxu0 %v2671
    %3639 = vmatprep.subr.bf16.mxu0 %v2668
    %3640 = vmatpush1.bf16.msra.mxu0 %v2667
    %3641 = vmatprep.subr.bf16.mxu0 %v2728
    %3642 = vmatpush2.bf16.msra.mxu0 %v2727
    %3643 = vmatprep.subr.bf16.mxu0 %v2724
    %3644 = vmatpush2.bf16.msra.mxu0 %v2723
    %3645 = vmatprep.subr.bf16.mxu0 %v2720
    %3646 = vmatpush2.bf16.msra.mxu0 %v2719
    %3647 = vmatprep.subr.bf16.mxu0 %v2716
    %3648 = vmatpush2.bf16.msra.mxu0 %v2715
    %3649 = vmatprep.subr.bf16.mxu0 %v2712
    %3650 = vmatpush2.bf16.msra.mxu0 %v2711
    %3651 = vmatprep.subr.bf16.mxu0 %v2708
    %3652 = vmatpush2.bf16.msra.mxu0 %v2707
    %3653 = vmatprep.subr.bf16.mxu0 %v2704
    %3654 = vmatpush2.bf16.msra.mxu0 %v2703
    %3655 = vmatprep.subr.bf16.mxu0 %v2700
    %3656 = vmatpush2.bf16.msra.mxu0 %v2699
    %3657 = vmatprep.mubr.bf16.mxu0 %v194
    %3658 = vmatmul.mubr.bf16.gmra.mxu0 %v193
    %v3659 = vpop.f32.mrf.mxu0
    %v3660 = vadd.f32 %v3607, %v3659
    %v3661 = vpop.f32.mrf.mxu0
    %v3662 = vadd.f32 %v3609, %v3661
    %v3663 = vpop.f32.mrf.mxu0
    %v3664 = vadd.f32 %v3611, %v3663
    %v3665 = vpop.f32.mrf.mxu0
    %v3666 = vadd.f32 %v3613, %v3665
    %3667 = vmatprep.mubr.bf16.mxu0 %v210
    %3668 = vmatmul.mubr.bf16.gmra.mxu0 %v209
    %v3669 = vpop.f32.mrf.mxu0
    %v3670 = vadd.f32 %v3617, %v3669
    %v3671 = vpop.f32.mrf.mxu0
    %v3672 = vadd.f32 %v3619, %v3671
    %v3673 = vpop.f32.mrf.mxu0
    %v3674 = vadd.f32 %v3621, %v3673
    %v3675 = vpop.f32.mrf.mxu0
    %v3676 = vadd.f32 %v3623, %v3675
    %3677 = vdwg.mxu0
    %3678 = vmatprep.subr.bf16.mxu0 %v2760
    %3679 = vmatpush1.bf16.msra.mxu0 %v2759
    %3680 = vmatprep.subr.bf16.mxu0 %v2756
    %3681 = vmatpush1.bf16.msra.mxu0 %v2755
    %3682 = vmatprep.subr.bf16.mxu0 %v2752
    %3683 = vmatpush1.bf16.msra.mxu0 %v2751
    %3684 = vmatprep.subr.bf16.mxu0 %v2748
    %3685 = vmatpush1.bf16.msra.mxu0 %v2747
    %3686 = vmatprep.subr.bf16.mxu0 %v2744
    %3687 = vmatpush1.bf16.msra.mxu0 %v2743
    %3688 = vmatprep.subr.bf16.mxu0 %v2740
    %3689 = vmatpush1.bf16.msra.mxu0 %v2739
    %3690 = vmatprep.subr.bf16.mxu0 %v2736
    %3691 = vmatpush1.bf16.msra.mxu0 %v2735
    %3692 = vmatprep.subr.bf16.mxu0 %v2732
    %3693 = vmatpush1.bf16.msra.mxu0 %v2731
    %3694 = vmatprep.subr.bf16.mxu0 %v2792
    %3695 = vmatpush2.bf16.msra.mxu0 %v2791
    %3696 = vmatprep.subr.bf16.mxu0 %v2788
    %3697 = vmatpush2.bf16.msra.mxu0 %v2787
    %3698 = vmatprep.subr.bf16.mxu0 %v2784
    %3699 = vmatpush2.bf16.msra.mxu0 %v2783
    %3700 = vmatprep.subr.bf16.mxu0 %v2780
    %3701 = vmatpush2.bf16.msra.mxu0 %v2779
    %3702 = vmatprep.subr.bf16.mxu0 %v2776
    %3703 = vmatpush2.bf16.msra.mxu0 %v2775
    %3704 = vmatprep.subr.bf16.mxu0 %v2772
    %3705 = vmatpush2.bf16.msra.mxu0 %v2771
    %3706 = vmatprep.subr.bf16.mxu0 %v2768
    %3707 = vmatpush2.bf16.msra.mxu0 %v2767
    %3708 = vmatprep.subr.bf16.mxu0 %v2764
    %3709 = vmatpush2.bf16.msra.mxu0 %v2763
    %3710 = vmatprep.mubr.bf16.mxu0 %v196
    %3711 = vmatmul.mubr.bf16.gmra.mxu0 %v195
    %v3712 = vpop.f32.mrf.mxu0
    %v3713 = vadd.f32 %v3660, %v3712
    %v3714 = vpop.f32.mrf.mxu0
    %v3715 = vadd.f32 %v3662, %v3714
    %v3716 = vpop.f32.mrf.mxu0
    %v3717 = vadd.f32 %v3664, %v3716
    %v3718 = vpop.f32.mrf.mxu0
    %v3719 = vadd.f32 %v3666, %v3718
    %3720 = vmatprep.mubr.bf16.mxu0 %v212
    %3721 = vmatmul.mubr.bf16.gmra.mxu0 %v211
    %v3722 = vpop.f32.mrf.mxu0
    %v3723 = vadd.f32 %v3670, %v3722
    %v3724 = vpop.f32.mrf.mxu0
    %v3725 = vadd.f32 %v3672, %v3724
    %v3726 = vpop.f32.mrf.mxu0
    %v3727 = vadd.f32 %v3674, %v3726
    %v3728 = vpop.f32.mrf.mxu0
    %v3729 = vadd.f32 %v3676, %v3728
    %3730 = vdwg.mxu0
    %3731 = vmatprep.subr.bf16.mxu0 %v2314
    %3732 = vmatpush1.bf16.msra.mxu0 %v2313
    %3733 = vmatprep.subr.bf16.mxu0 %v2310
    %3734 = vmatpush1.bf16.msra.mxu0 %v2309
    %3735 = vmatprep.subr.bf16.mxu0 %v2306
    %3736 = vmatpush1.bf16.msra.mxu0 %v2305
    %3737 = vmatprep.subr.bf16.mxu0 %v2302
    %3738 = vmatpush1.bf16.msra.mxu0 %v2301
    %3739 = vmatprep.subr.bf16.mxu0 %v2298
    %3740 = vmatpush1.bf16.msra.mxu0 %v2297
    %3741 = vmatprep.subr.bf16.mxu0 %v2294
    %3742 = vmatpush1.bf16.msra.mxu0 %v2293
    %3743 = vmatprep.subr.bf16.mxu0 %v2290
    %3744 = vmatpush1.bf16.msra.mxu0 %v2289
    %3745 = vmatprep.subr.bf16.mxu0 %v2286
    %3746 = vmatpush1.bf16.msra.mxu0 %v2285
    %3747 = vmatprep.subr.bf16.mxu0 %v2346
    %3748 = vmatpush2.bf16.msra.mxu0 %v2345
    %3749 = vmatprep.subr.bf16.mxu0 %v2342
    %3750 = vmatpush2.bf16.msra.mxu0 %v2341
    %3751 = vmatprep.subr.bf16.mxu0 %v2338
    %3752 = vmatpush2.bf16.msra.mxu0 %v2337
    %3753 = vmatprep.subr.bf16.mxu0 %v2334
    %3754 = vmatpush2.bf16.msra.mxu0 %v2333
    %3755 = vmatprep.subr.bf16.mxu0 %v2330
    %3756 = vmatpush2.bf16.msra.mxu0 %v2329
    %3757 = vmatprep.subr.bf16.mxu0 %v2326
    %3758 = vmatpush2.bf16.msra.mxu0 %v2325
    %3759 = vmatprep.subr.bf16.mxu0 %v2322
    %3760 = vmatpush2.bf16.msra.mxu0 %v2321
    %3761 = vmatprep.subr.bf16.mxu0 %v2318
    %3762 = vmatpush2.bf16.msra.mxu0 %v2317
    %3763 = vmatprep.mubr.bf16.mxu0 %v182
    %3764 = vmatmul.mubr.bf16.gmra.mxu0 %v181
    %v3765 = vpop.f32.mrf.mxu0
    %v3766 = vadd.f32 %v738, %v3765
    %v3767 = vpop.f32.mrf.mxu0
    %v3768 = vadd.f32 %v742, %v3767
    %v3769 = vpop.f32.mrf.mxu0
    %v3770 = vadd.f32 %v738, %v3769
    %v3771 = vpop.f32.mrf.mxu0
    %v3772 = vadd.f32 %v742, %v3771
    %3773 = vmatprep.mubr.bf16.mxu0 %v198
    %3774 = vmatmul.mubr.bf16.gmra.mxu0 %v197
    %v3775 = vpop.f32.mrf.mxu0
    %v3776 = vadd.f32 %v738, %v3775
    %v3777 = vpop.f32.mrf.mxu0
    %v3778 = vadd.f32 %v742, %v3777
    %v3779 = vpop.f32.mrf.mxu0
    %v3780 = vadd.f32 %v738, %v3779
    %v3781 = vpop.f32.mrf.mxu0
    %v3782 = vadd.f32 %v742, %v3781
    %3783 = vdwg.mxu0
    %3784 = vmatprep.subr.bf16.mxu0 %v2378
    %3785 = vmatpush1.bf16.msra.mxu0 %v2377
    %3786 = vmatprep.subr.bf16.mxu0 %v2374
    %3787 = vmatpush1.bf16.msra.mxu0 %v2373
    %3788 = vmatprep.subr.bf16.mxu0 %v2370
    %3789 = vmatpush1.bf16.msra.mxu0 %v2369
    %3790 = vmatprep.subr.bf16.mxu0 %v2366
    %3791 = vmatpush1.bf16.msra.mxu0 %v2365
    %3792 = vmatprep.subr.bf16.mxu0 %v2362
    %3793 = vmatpush1.bf16.msra.mxu0 %v2361
    %3794 = vmatprep.subr.bf16.mxu0 %v2358
    %3795 = vmatpush1.bf16.msra.mxu0 %v2357
    %3796 = vmatprep.subr.bf16.mxu0 %v2354
    %3797 = vmatpush1.bf16.msra.mxu0 %v2353
    %3798 = vmatprep.subr.bf16.mxu0 %v2350
    %3799 = vmatpush1.bf16.msra.mxu0 %v2349
    %3800 = vmatprep.subr.bf16.mxu0 %v2410
    %3801 = vmatpush2.bf16.msra.mxu0 %v2409
    %3802 = vmatprep.subr.bf16.mxu0 %v2406
    %3803 = vmatpush2.bf16.msra.mxu0 %v2405
    %3804 = vmatprep.subr.bf16.mxu0 %v2402
    %3805 = vmatpush2.bf16.msra.mxu0 %v2401
    %3806 = vmatprep.subr.bf16.mxu0 %v2398
    %3807 = vmatpush2.bf16.msra.mxu0 %v2397
    %3808 = vmatprep.subr.bf16.mxu0 %v2394
    %3809 = vmatpush2.bf16.msra.mxu0 %v2393
    %3810 = vmatprep.subr.bf16.mxu0 %v2390
    %3811 = vmatpush2.bf16.msra.mxu0 %v2389
    %3812 = vmatprep.subr.bf16.mxu0 %v2386
    %3813 = vmatpush2.bf16.msra.mxu0 %v2385
    %3814 = vmatprep.subr.bf16.mxu0 %v2382
    %3815 = vmatpush2.bf16.msra.mxu0 %v2381
    %3816 = vmatprep.mubr.bf16.mxu0 %v184
    %3817 = vmatmul.mubr.bf16.gmra.mxu0 %v183
    %v3818 = vpop.f32.mrf.mxu0
    %v3819 = vadd.f32 %v3766, %v3818
    %v3820 = vpop.f32.mrf.mxu0
    %v3821 = vadd.f32 %v3768, %v3820
    %v3822 = vpop.f32.mrf.mxu0
    %v3823 = vadd.f32 %v3770, %v3822
    %v3824 = vpop.f32.mrf.mxu0
    %v3825 = vadd.f32 %v3772, %v3824
    %3826 = vmatprep.mubr.bf16.mxu0 %v200
    %3827 = vmatmul.mubr.bf16.gmra.mxu0 %v199
    %v3828 = vpop.f32.mrf.mxu0
    %v3829 = vadd.f32 %v3776, %v3828
    %v3830 = vpop.f32.mrf.mxu0
    %v3831 = vadd.f32 %v3778, %v3830
    %v3832 = vpop.f32.mrf.mxu0
    %v3833 = vadd.f32 %v3780, %v3832
    %v3834 = vpop.f32.mrf.mxu0
    %v3835 = vadd.f32 %v3782, %v3834
    %3836 = vdwg.mxu0
    %3837 = vmatprep.subr.bf16.mxu0 %v2442
    %3838 = vmatpush1.bf16.msra.mxu0 %v2441
    %3839 = vmatprep.subr.bf16.mxu0 %v2438
    %3840 = vmatpush1.bf16.msra.mxu0 %v2437
    %3841 = vmatprep.subr.bf16.mxu0 %v2434
    %3842 = vmatpush1.bf16.msra.mxu0 %v2433
    %3843 = vmatprep.subr.bf16.mxu0 %v2430
    %3844 = vmatpush1.bf16.msra.mxu0 %v2429
    %3845 = vmatprep.subr.bf16.mxu0 %v2426
    %3846 = vmatpush1.bf16.msra.mxu0 %v2425
    %3847 = vmatprep.subr.bf16.mxu0 %v2422
    %3848 = vmatpush1.bf16.msra.mxu0 %v2421
    %3849 = vmatprep.subr.bf16.mxu0 %v2418
    %3850 = vmatpush1.bf16.msra.mxu0 %v2417
    %3851 = vmatprep.subr.bf16.mxu0 %v2414
    %3852 = vmatpush1.bf16.msra.mxu0 %v2413
    %3853 = vmatprep.subr.bf16.mxu0 %v2474
    %3854 = vmatpush2.bf16.msra.mxu0 %v2473
    %3855 = vmatprep.subr.bf16.mxu0 %v2470
    %3856 = vmatpush2.bf16.msra.mxu0 %v2469
    %3857 = vmatprep.subr.bf16.mxu0 %v2466
    %3858 = vmatpush2.bf16.msra.mxu0 %v2465
    %3859 = vmatprep.subr.bf16.mxu0 %v2462
    %3860 = vmatpush2.bf16.msra.mxu0 %v2461
    %3861 = vmatprep.subr.bf16.mxu0 %v2458
    %3862 = vmatpush2.bf16.msra.mxu0 %v2457
    %3863 = vmatprep.subr.bf16.mxu0 %v2454
    %3864 = vmatpush2.bf16.msra.mxu0 %v2453
    %3865 = vmatprep.subr.bf16.mxu0 %v2450
    %3866 = vmatpush2.bf16.msra.mxu0 %v2449
    %3867 = vmatprep.subr.bf16.mxu0 %v2446
    %3868 = vmatpush2.bf16.msra.mxu0 %v2445
    %3869 = vmatprep.mubr.bf16.mxu0 %v186
    %3870 = vmatmul.mubr.bf16.gmra.mxu0 %v185
    %v3871 = vpop.f32.mrf.mxu0
    %v3872 = vadd.f32 %v3819, %v3871
    %v3873 = vpop.f32.mrf.mxu0
    %v3874 = vadd.f32 %v3821, %v3873
    %v3875 = vpop.f32.mrf.mxu0
    %v3876 = vadd.f32 %v3823, %v3875
    %v3877 = vpop.f32.mrf.mxu0
    %v3878 = vadd.f32 %v3825, %v3877
    %3879 = vmatprep.mubr.bf16.mxu0 %v202
    %3880 = vmatmul.mubr.bf16.gmra.mxu0 %v201
    %v3881 = vpop.f32.mrf.mxu0
    %v3882 = vadd.f32 %v3829, %v3881
    %v3883 = vpop.f32.mrf.mxu0
    %v3884 = vadd.f32 %v3831, %v3883
    %v3885 = vpop.f32.mrf.mxu0
    %v3886 = vadd.f32 %v3833, %v3885
    %v3887 = vpop.f32.mrf.mxu0
    %v3888 = vadd.f32 %v3835, %v3887
    %3889 = vdwg.mxu0
    %3890 = vmatprep.subr.bf16.mxu0 %v2506
    %3891 = vmatpush1.bf16.msra.mxu0 %v2505
    %3892 = vmatprep.subr.bf16.mxu0 %v2502
    %3893 = vmatpush1.bf16.msra.mxu0 %v2501
    %3894 = vmatprep.subr.bf16.mxu0 %v2498
    %3895 = vmatpush1.bf16.msra.mxu0 %v2497
    %3896 = vmatprep.subr.bf16.mxu0 %v2494
    %3897 = vmatpush1.bf16.msra.mxu0 %v2493
    %3898 = vmatprep.subr.bf16.mxu0 %v2490
    %3899 = vmatpush1.bf16.msra.mxu0 %v2489
    %3900 = vmatprep.subr.bf16.mxu0 %v2486
    %3901 = vmatpush1.bf16.msra.mxu0 %v2485
    %3902 = vmatprep.subr.bf16.mxu0 %v2482
    %3903 = vmatpush1.bf16.msra.mxu0 %v2481
    %3904 = vmatprep.subr.bf16.mxu0 %v2478
    %3905 = vmatpush1.bf16.msra.mxu0 %v2477
    %3906 = vmatprep.subr.bf16.mxu0 %v2538
    %3907 = vmatpush2.bf16.msra.mxu0 %v2537
    %3908 = vmatprep.subr.bf16.mxu0 %v2534
    %3909 = vmatpush2.bf16.msra.mxu0 %v2533
    %3910 = vmatprep.subr.bf16.mxu0 %v2530
    %3911 = vmatpush2.bf16.msra.mxu0 %v2529
    %3912 = vmatprep.subr.bf16.mxu0 %v2526
    %3913 = vmatpush2.bf16.msra.mxu0 %v2525
    %3914 = vmatprep.subr.bf16.mxu0 %v2522
    %3915 = vmatpush2.bf16.msra.mxu0 %v2521
    %3916 = vmatprep.subr.bf16.mxu0 %v2518
    %3917 = vmatpush2.bf16.msra.mxu0 %v2517
    %3918 = vmatprep.subr.bf16.mxu0 %v2514
    %3919 = vmatpush2.bf16.msra.mxu0 %v2513
    %3920 = vmatprep.subr.bf16.mxu0 %v2510
    %3921 = vmatpush2.bf16.msra.mxu0 %v2509
    %3922 = vmatprep.mubr.bf16.mxu0 %v188
    %3923 = vmatmul.mubr.bf16.gmra.mxu0 %v187
    %v3924 = vpop.f32.mrf.mxu0
    %v3925 = vadd.f32 %v3872, %v3924
    %v3926 = vpop.f32.mrf.mxu0
    %v3927 = vadd.f32 %v3874, %v3926
    %v3928 = vpop.f32.mrf.mxu0
    %v3929 = vadd.f32 %v3876, %v3928
    %v3930 = vpop.f32.mrf.mxu0
    %v3931 = vadd.f32 %v3878, %v3930
    %3932 = vmatprep.mubr.bf16.mxu0 %v204
    %3933 = vmatmul.mubr.bf16.gmra.mxu0 %v203
    %v3934 = vpop.f32.mrf.mxu0
    %v3935 = vadd.f32 %v3882, %v3934
    %v3936 = vpop.f32.mrf.mxu0
    %v3937 = vadd.f32 %v3884, %v3936
    %v3938 = vpop.f32.mrf.mxu0
    %v3939 = vadd.f32 %v3886, %v3938
    %v3940 = vpop.f32.mrf.mxu0
    %v3941 = vadd.f32 %v3888, %v3940
    %3942 = vdwg.mxu0
    %3943 = vmatprep.subr.bf16.mxu0 %v2570
    %3944 = vmatpush1.bf16.msra.mxu0 %v2569
    %3945 = vmatprep.subr.bf16.mxu0 %v2566
    %3946 = vmatpush1.bf16.msra.mxu0 %v2565
    %3947 = vmatprep.subr.bf16.mxu0 %v2562
    %3948 = vmatpush1.bf16.msra.mxu0 %v2561
    %3949 = vmatprep.subr.bf16.mxu0 %v2558
    %3950 = vmatpush1.bf16.msra.mxu0 %v2557
    %3951 = vmatprep.subr.bf16.mxu0 %v2554
    %3952 = vmatpush1.bf16.msra.mxu0 %v2553
    %3953 = vmatprep.subr.bf16.mxu0 %v2550
    %3954 = vmatpush1.bf16.msra.mxu0 %v2549
    %3955 = vmatprep.subr.bf16.mxu0 %v2546
    %3956 = vmatpush1.bf16.msra.mxu0 %v2545
    %3957 = vmatprep.subr.bf16.mxu0 %v2542
    %3958 = vmatpush1.bf16.msra.mxu0 %v2541
    %3959 = vmatprep.subr.bf16.mxu0 %v2602
    %3960 = vmatpush2.bf16.msra.mxu0 %v2601
    %3961 = vmatprep.subr.bf16.mxu0 %v2598
    %3962 = vmatpush2.bf16.msra.mxu0 %v2597
    %3963 = vmatprep.subr.bf16.mxu0 %v2594
    %3964 = vmatpush2.bf16.msra.mxu0 %v2593
    %3965 = vmatprep.subr.bf16.mxu0 %v2590
    %3966 = vmatpush2.bf16.msra.mxu0 %v2589
    %3967 = vmatprep.subr.bf16.mxu0 %v2586
    %3968 = vmatpush2.bf16.msra.mxu0 %v2585
    %3969 = vmatprep.subr.bf16.mxu0 %v2582
    %3970 = vmatpush2.bf16.msra.mxu0 %v2581
    %3971 = vmatprep.subr.bf16.mxu0 %v2578
    %3972 = vmatpush2.bf16.msra.mxu0 %v2577
    %3973 = vmatprep.subr.bf16.mxu0 %v2574
    %3974 = vmatpush2.bf16.msra.mxu0 %v2573
    %3975 = vmatprep.mubr.bf16.mxu0 %v190
    %3976 = vmatmul.mubr.bf16.gmra.mxu0 %v189
    %v3977 = vpop.f32.mrf.mxu0
    %v3978 = vadd.f32 %v3925, %v3977
    %v3979 = vpop.f32.mrf.mxu0
    %v3980 = vadd.f32 %v3927, %v3979
    %v3981 = vpop.f32.mrf.mxu0
    %v3982 = vadd.f32 %v3929, %v3981
    %v3983 = vpop.f32.mrf.mxu0
    %v3984 = vadd.f32 %v3931, %v3983
    %3985 = vmatprep.mubr.bf16.mxu0 %v206
    %3986 = vmatmul.mubr.bf16.gmra.mxu0 %v205
    %v3987 = vpop.f32.mrf.mxu0
    %v3988 = vadd.f32 %v3935, %v3987
    %v3989 = vpop.f32.mrf.mxu0
    %v3990 = vadd.f32 %v3937, %v3989
    %v3991 = vpop.f32.mrf.mxu0
    %v3992 = vadd.f32 %v3939, %v3991
    %v3993 = vpop.f32.mrf.mxu0
    %v3994 = vadd.f32 %v3941, %v3993
    %3995 = vdwg.mxu0
    %3996 = vmatprep.subr.bf16.mxu0 %v2634
    %3997 = vmatpush1.bf16.msra.mxu0 %v2633
    %3998 = vmatprep.subr.bf16.mxu0 %v2630
    %3999 = vmatpush1.bf16.msra.mxu0 %v2629
    %4000 = vmatprep.subr.bf16.mxu0 %v2626
    %4001 = vmatpush1.bf16.msra.mxu0 %v2625
    %4002 = vmatprep.subr.bf16.mxu0 %v2622
    %4003 = vmatpush1.bf16.msra.mxu0 %v2621
    %4004 = vmatprep.subr.bf16.mxu0 %v2618
    %4005 = vmatpush1.bf16.msra.mxu0 %v2617
    %4006 = vmatprep.subr.bf16.mxu0 %v2614
    %4007 = vmatpush1.bf16.msra.mxu0 %v2613
    %4008 = vmatprep.subr.bf16.mxu0 %v2610
    %4009 = vmatpush1.bf16.msra.mxu0 %v2609
    %4010 = vmatprep.subr.bf16.mxu0 %v2606
    %4011 = vmatpush1.bf16.msra.mxu0 %v2605
    %4012 = vmatprep.subr.bf16.mxu0 %v2666
    %4013 = vmatpush2.bf16.msra.mxu0 %v2665
    %4014 = vmatprep.subr.bf16.mxu0 %v2662
    %4015 = vmatpush2.bf16.msra.mxu0 %v2661
    %4016 = vmatprep.subr.bf16.mxu0 %v2658
    %4017 = vmatpush2.bf16.msra.mxu0 %v2657
    %4018 = vmatprep.subr.bf16.mxu0 %v2654
    %4019 = vmatpush2.bf16.msra.mxu0 %v2653
    %4020 = vmatprep.subr.bf16.mxu0 %v2650
    %4021 = vmatpush2.bf16.msra.mxu0 %v2649
    %4022 = vmatprep.subr.bf16.mxu0 %v2646
    %4023 = vmatpush2.bf16.msra.mxu0 %v2645
    %4024 = vmatprep.subr.bf16.mxu0 %v2642
    %4025 = vmatpush2.bf16.msra.mxu0 %v2641
    %4026 = vmatprep.subr.bf16.mxu0 %v2638
    %4027 = vmatpush2.bf16.msra.mxu0 %v2637
    %4028 = vmatprep.mubr.bf16.mxu0 %v192
    %4029 = vmatmul.mubr.bf16.gmra.mxu0 %v191
    %v4030 = vpop.f32.mrf.mxu0
    %v4031 = vadd.f32 %v3978, %v4030
    %v4032 = vpop.f32.mrf.mxu0
    %v4033 = vadd.f32 %v3980, %v4032
    %v4034 = vpop.f32.mrf.mxu0
    %v4035 = vadd.f32 %v3982, %v4034
    %v4036 = vpop.f32.mrf.mxu0
    %v4037 = vadd.f32 %v3984, %v4036
    %4038 = vmatprep.mubr.bf16.mxu0 %v208
    %4039 = vmatmul.mubr.bf16.gmra.mxu0 %v207
    %v4040 = vpop.f32.mrf.mxu0
    %v4041 = vadd.f32 %v3988, %v4040
    %v4042 = vpop.f32.mrf.mxu0
    %v4043 = vadd.f32 %v3990, %v4042
    %v4044 = vpop.f32.mrf.mxu0
    %v4045 = vadd.f32 %v3992, %v4044
    %v4046 = vpop.f32.mrf.mxu0
    %v4047 = vadd.f32 %v3994, %v4046
    %4048 = vdwg.mxu0
    %4049 = vmatprep.subr.bf16.mxu0 %v2698
    %4050 = vmatpush1.bf16.msra.mxu0 %v2697
    %4051 = vmatprep.subr.bf16.mxu0 %v2694
    %4052 = vmatpush1.bf16.msra.mxu0 %v2693
    %4053 = vmatprep.subr.bf16.mxu0 %v2690
    %4054 = vmatpush1.bf16.msra.mxu0 %v2689
    %4055 = vmatprep.subr.bf16.mxu0 %v2686
    %4056 = vmatpush1.bf16.msra.mxu0 %v2685
    %4057 = vmatprep.subr.bf16.mxu0 %v2682
    %4058 = vmatpush1.bf16.msra.mxu0 %v2681
    %4059 = vmatprep.subr.bf16.mxu0 %v2678
    %4060 = vmatpush1.bf16.msra.mxu0 %v2677
    %4061 = vmatprep.subr.bf16.mxu0 %v2674
    %4062 = vmatpush1.bf16.msra.mxu0 %v2673
    %4063 = vmatprep.subr.bf16.mxu0 %v2670
    %4064 = vmatpush1.bf16.msra.mxu0 %v2669
    %4065 = vmatprep.subr.bf16.mxu0 %v2730
    %4066 = vmatpush2.bf16.msra.mxu0 %v2729
    %4067 = vmatprep.subr.bf16.mxu0 %v2726
    %4068 = vmatpush2.bf16.msra.mxu0 %v2725
    %4069 = vmatprep.subr.bf16.mxu0 %v2722
    %4070 = vmatpush2.bf16.msra.mxu0 %v2721
    %4071 = vmatprep.subr.bf16.mxu0 %v2718
    %4072 = vmatpush2.bf16.msra.mxu0 %v2717
    %4073 = vmatprep.subr.bf16.mxu0 %v2714
    %4074 = vmatpush2.bf16.msra.mxu0 %v2713
    %4075 = vmatprep.subr.bf16.mxu0 %v2710
    %4076 = vmatpush2.bf16.msra.mxu0 %v2709
    %4077 = vmatprep.subr.bf16.mxu0 %v2706
    %4078 = vmatpush2.bf16.msra.mxu0 %v2705
    %4079 = vmatprep.subr.bf16.mxu0 %v2702
    %4080 = vmatpush2.bf16.msra.mxu0 %v2701
    %4081 = vmatprep.mubr.bf16.mxu0 %v194
    %4082 = vmatmul.mubr.bf16.gmra.mxu0 %v193
    %v4083 = vpop.f32.mrf.mxu0
    %v4084 = vadd.f32 %v4031, %v4083
    %v4085 = vpop.f32.mrf.mxu0
    %v4086 = vadd.f32 %v4033, %v4085
    %v4087 = vpop.f32.mrf.mxu0
    %v4088 = vadd.f32 %v4035, %v4087
    %v4089 = vpop.f32.mrf.mxu0
    %v4090 = vadd.f32 %v4037, %v4089
    %4091 = vmatprep.mubr.bf16.mxu0 %v210
    %4092 = vmatmul.mubr.bf16.gmra.mxu0 %v209
    %v4093 = vpop.f32.mrf.mxu0
    %v4094 = vadd.f32 %v4041, %v4093
    %v4095 = vpop.f32.mrf.mxu0
    %v4096 = vadd.f32 %v4043, %v4095
    %v4097 = vpop.f32.mrf.mxu0
    %v4098 = vadd.f32 %v4045, %v4097
    %v4099 = vpop.f32.mrf.mxu0
    %v4100 = vadd.f32 %v4047, %v4099
    %4101 = vdwg.mxu0
    %4102 = vmatprep.subr.bf16.mxu0 %v2762
    %4103 = vmatpush1.bf16.msra.mxu0 %v2761
    %4104 = vmatprep.subr.bf16.mxu0 %v2758
    %4105 = vmatpush1.bf16.msra.mxu0 %v2757
    %4106 = vmatprep.subr.bf16.mxu0 %v2754
    %4107 = vmatpush1.bf16.msra.mxu0 %v2753
    %4108 = vmatprep.subr.bf16.mxu0 %v2750
    %4109 = vmatpush1.bf16.msra.mxu0 %v2749
    %4110 = vmatprep.subr.bf16.mxu0 %v2746
    %4111 = vmatpush1.bf16.msra.mxu0 %v2745
    %4112 = vmatprep.subr.bf16.mxu0 %v2742
    %4113 = vmatpush1.bf16.msra.mxu0 %v2741
    %4114 = vmatprep.subr.bf16.mxu0 %v2738
    %4115 = vmatpush1.bf16.msra.mxu0 %v2737
    %4116 = vmatprep.subr.bf16.mxu0 %v2734
    %4117 = vmatpush1.bf16.msra.mxu0 %v2733
    %4118 = vmatprep.subr.bf16.mxu0 %v2794
    %4119 = vmatpush2.bf16.msra.mxu0 %v2793
    %4120 = vmatprep.subr.bf16.mxu0 %v2790
    %4121 = vmatpush2.bf16.msra.mxu0 %v2789
    %4122 = vmatprep.subr.bf16.mxu0 %v2786
    %4123 = vmatpush2.bf16.msra.mxu0 %v2785
    %4124 = vmatprep.subr.bf16.mxu0 %v2782
    %4125 = vmatpush2.bf16.msra.mxu0 %v2781
    %4126 = vmatprep.subr.bf16.mxu0 %v2778
    %4127 = vmatpush2.bf16.msra.mxu0 %v2777
    %4128 = vmatprep.subr.bf16.mxu0 %v2774
    %4129 = vmatpush2.bf16.msra.mxu0 %v2773
    %4130 = vmatprep.subr.bf16.mxu0 %v2770
    %4131 = vmatpush2.bf16.msra.mxu0 %v2769
    %4132 = vmatprep.subr.bf16.mxu0 %v2766
    %4133 = vmatpush2.bf16.msra.mxu0 %v2765
    %4134 = vmatprep.mubr.bf16.mxu0 %v196
    %4135 = vmatmul.mubr.bf16.gmra.mxu0 %v195
    %v4136 = vpop.f32.mrf.mxu0
    %v4137 = vadd.f32 %v4084, %v4136
    %v4138 = vpop.f32.mrf.mxu0
    %v4139 = vadd.f32 %v4086, %v4138
    %v4140 = vpop.f32.mrf.mxu0
    %v4141 = vadd.f32 %v4088, %v4140
    %v4142 = vpop.f32.mrf.mxu0
    %v4143 = vadd.f32 %v4090, %v4142
    %4144 = vmatprep.mubr.bf16.mxu0 %v212
    %4145 = vmatmul.mubr.bf16.gmra.mxu0 %v211
    %v4146 = vpop.f32.mrf.mxu0
    %v4147 = vadd.f32 %v4094, %v4146
    %v4148 = vpop.f32.mrf.mxu0
    %v4149 = vadd.f32 %v4096, %v4148
    %v4150 = vpop.f32.mrf.mxu0
    %v4151 = vadd.f32 %v4098, %v4150
    %v4152 = vpop.f32.mrf.mxu0
    %v4153 = vadd.f32 %v4100, %v4152
    %4154 = vdwg.mxu0
    %v4155 = vmax.f32 %v3713, 0.0
    %v4156 = vmax.f32 %v3715, 0.0
    %v4157 = vmax.f32 %v4137, 0.0
    %v4158 = vmax.f32 %v4139, 0.0
    %v4159 = vmax.f32 %v3717, 0.0
    %v4160 = vmax.f32 %v3719, 0.0
    %v4161 = vmax.f32 %v4141, 0.0
    %v4162 = vmax.f32 %v4143, 0.0
    %v4163 = vmax.f32 %v3723, 0.0
    %v4164 = vmax.f32 %v3725, 0.0
    %v4165 = vmax.f32 %v4147, 0.0
    %v4166 = vmax.f32 %v4149, 0.0
    %v4167 = vmax.f32 %v3727, 0.0
    %v4168 = vmax.f32 %v3729, 0.0
    %v4169 = vmax.f32 %v4151, 0.0
    %v4170 = vmax.f32 %v4153, 0.0
    %vm4171 = vcmask 1040384
    %vm4172 = vsmask.f32 256
    %vm4173 = vmand %vm4171, %vm4172
    %vm4174 = vcmask 1044484
    %vm4175 = vsmask.f32 4352
    %vm4176 = vmand %vm4174, %vm4175
    %vm4177 = vmor %vm4176, %vm4173
    %v4178 = vld [vmem:[#allocation2] sm:$0x11]
    %v4179 = vsel %vm4177, 0, %v4178
    %4180 = vst [vmem:[#allocation2] sm:$0x11] %v4179
    %v4181 = vld [vmem:[#allocation2 + $0x8] sm:$0x11]
    %v4182 = vsel %vm4177, 0, %v4181
    %4183 = vst [vmem:[#allocation2 + $0x8] sm:$0x11] %v4182
    %vm4184 = vcmask 516096
    %vm4185 = vmand %vm4184, %vm4172
    %v4186 = vld [vmem:[#allocation2 + $0x10] sm:$0x1]
    %v4187 = vsel %vm4185, 0, %v4186
    %4188 = vst [vmem:[#allocation2 + $0x10] sm:$0x1] %v4187
    %v4189 = vld [vmem:[#allocation2 + $0x3c] sm:$0x11]
    %v4190 = vsel %vm4177, 0, %v4189
    %4191 = vst [vmem:[#allocation2 + $0x3c] sm:$0x11] %v4190
    %v4192 = vld [vmem:[#allocation2 + $0x44] sm:$0x11]
    %v4193 = vsel %vm4177, 0, %v4192
    %4194 = vst [vmem:[#allocation2 + $0x44] sm:$0x11] %v4193
    %v4195 = vld [vmem:[#allocation2 + $0x4c] sm:$0x1]
    %v4196 = vsel %vm4185, 0, %v4195
    %4197 = vst [vmem:[#allocation2 + $0x4c] sm:$0x1] %v4196
    %vm4198 = vsmask.f32 7938
    %vm4199 = vmand %vm4171, %vm4198
    %vm4200 = vsmask.f32 7954
    %vm4201 = vmand %vm4174, %vm4200
    %vm4202 = vmor %vm4201, %vm4199
    %v4203 = vld [vmem:[#allocation2 + $0x28] sm:$0x11]
    %v4204 = vsel %vm4202, 0, %v4203
    %4205 = vst [vmem:[#allocation2 + $0x28] sm:$0x11] %v4204
    %v4206 = vld [vmem:[#allocation2 + $0x30] sm:$0x11]
    %v4207 = vsel %vm4202, 0, %v4206
    %4208 = vst [vmem:[#allocation2 + $0x30] sm:$0x11] %v4207
    %vm4209 = vmand %vm4184, %vm4198
    %v4210 = vld [vmem:[#allocation2 + $0x38] sm:$0x1]
    %v4211 = vsel %vm4209, 0, %v4210
    %4212 = vst [vmem:[#allocation2 + $0x38] sm:$0x1] %v4211
    %v4213 = vld [vmem:[#allocation2 + $0x64] sm:$0x11]
    %v4214 = vsel %vm4202, 0, %v4213
    %4215 = vst [vmem:[#allocation2 + $0x64] sm:$0x11] %v4214
    %v4216 = vld [vmem:[#allocation2 + $0x6c] sm:$0x11]
    %v4217 = vsel %vm4202, 0, %v4216
    %4218 = vst [vmem:[#allocation2 + $0x6c] sm:$0x11] %v4217
    %v4219 = vld [vmem:[#allocation2 + $0x74] sm:$0x1]
    %v4220 = vsel %vm4209, 0, %v4219
    %4221 = vst [vmem:[#allocation2 + $0x74] sm:$0x1] %v4220
    %vm4222 = vcmask 257024
    %4223 = vst.msk [vmem:[#allocation2] sm:$0xf] %vm4222, 0
    %4224 = vst.msk [vmem:[#allocation2 + $0x14] sm:$0xf] %vm4222, 0
    %vm4225 = vcmask 253952
    %4226 = vst.msk [vmem:[#allocation2 + $0x28] sm:$0x1] %vm4225, 0
    %4227 = vst.msk [vmem:[#allocation2 + $0x3c] sm:$0xf] %vm4222, 0
    %4228 = vst.msk [vmem:[#allocation2 + $0x50] sm:$0xf] %vm4222, 0
    %4229 = vst.msk [vmem:[#allocation2 + $0x64] sm:$0x1] %vm4225, 0
    %vm4230 = vcmask 519424
    %4231 = vst.msk [vmem:[#allocation2 + $0x10] sm:$0xf] %vm4230, 0
    %4232 = vst.msk [vmem:[#allocation2 + $0x24] sm:$0xf] %vm4230, 0
    %vm4233 = vcmask 516352
    %4234 = vst.msk [vmem:[#allocation2 + $0x38] sm:$0x1] %vm4233, 0
    %4235 = vst.msk [vmem:[#allocation2 + $0x4c] sm:$0xf] %vm4230, 0
    %4236 = vst.msk [vmem:[#allocation2 + $0x60] sm:$0xf] %vm4230, 0
    %4237 = vst.msk [vmem:[#allocation2 + $0x74] sm:$0x1] %vm4233, 0
    %v4238 = vpack.c.bf16 %v4159, %v4155
    %v4239 = vpack.c.bf16 %v4160, %v4156
    %v4240 = vpack.c.bf16 %v4161, %v4157
    %v4241 = vpack.c.bf16 %v4162, %v4158
    %v4242 = vpack.c.bf16 %v4167, %v4163
    %v4243 = vpack.c.bf16 %v4168, %v4164
    %v4244 = vpack.c.bf16 %v4169, %v4165
    %v4245 = vpack.c.bf16 %v4170, %v4166
    %v4254 = vunpack.c.l.b16 %v4238
    %v4255 = vunpack.c.l.b16 %v4239
    %v4256 = vunpack.c.l.b16 %v4240
    %v4257 = vunpack.c.l.b16 %v4241
    %v4258 = vunpack.c.h.b16 %v4238
    %v4259 = vunpack.c.h.b16 %v4239
    %v4260 = vunpack.c.h.b16 %v4240
    %v4261 = vunpack.c.h.b16 %v4241
    %v4262 = vunpack.c.l.b16 %v4242
    %v4263 = vunpack.c.l.b16 %v4243
    %v4264 = vunpack.c.l.b16 %v4244
    %v4265 = vunpack.c.l.b16 %v4245
    %v4266 = vunpack.c.h.b16 %v4242
    %v4267 = vunpack.c.h.b16 %v4243
    %v4268 = vunpack.c.h.b16 %v4244
    %v4269 = vunpack.c.h.b16 %v4245
    %v4270 = vpack.c.b16 %v4255, %v4254
    %v4271 = vpack.c.b16 %v4257, %v4256
    %v4272 = vpack.c.b16 %v4259, %v4258
    %v4273 = vpack.c.b16 %v4261, %v4260
    %v4274 = vpack.c.b16 %v4263, %v4262
    %v4275 = vpack.c.b16 %v4265, %v4264
    %v4276 = vpack.c.b16 %v4267, %v4266
    %v4277 = vpack.c.b16 %v4269, %v4268
    %vm4278 = vsmask.f32 4368
    %vm4279 = vmor %vm4172, %vm4278
    %v4281 = vshrl.u32 %v4270, 16
    %v4283 = vrot.slane %v4281, 7
    %v4284 = vshll.u32 %v4270, 16
    %v4286 = vor.u32 %v4283, %v4284
    %v4288 = vshrl.u32 %v4271, 16
    %v4290 = vrot.slane %v4288, 7
    %v4291 = vshll.u32 %v4271, 16
    %v4293 = vor.u32 %v4290, %v4291
    %v4294 = vrot.slane %v4283, 4
    %v4296 = vshrl.u32 %v4272, 16
    %v4298 = vrot.slane %v4296, 7
    %v4299 = vshll.u32 %v4272, 16
    %v4301 = vor.u32 %v4298, %v4299
    %v4302 = vsel %vm4279, %v4294, %v4301
    %v4303 = vrot.slane %v4290, 4
    %v4305 = vshrl.u32 %v4273, 16
    %v4307 = vrot.slane %v4305, 7
    %v4308 = vshll.u32 %v4273, 16
    %v4310 = vor.u32 %v4307, %v4308
    %v4311 = vsel %vm4279, %v4303, %v4310
    %v4312 = vrot.slane %v4298, 4
    %v4313 = vrot.slane %v4307, 4
    %v4315 = vshrl.u32 %v4274, 16
    %v4317 = vrot.slane %v4315, 7
    %v4318 = vshll.u32 %v4274, 16
    %v4320 = vor.u32 %v4317, %v4318
    %v4322 = vshrl.u32 %v4275, 16
    %v4324 = vrot.slane %v4322, 7
    %v4325 = vshll.u32 %v4275, 16
    %v4327 = vor.u32 %v4324, %v4325
    %v4328 = vrot.slane %v4317, 4
    %v4330 = vshrl.u32 %v4276, 16
    %v4332 = vrot.slane %v4330, 7
    %v4333 = vshll.u32 %v4276, 16
    %v4335 = vor.u32 %v4332, %v4333
    %v4336 = vsel %vm4279, %v4328, %v4335
    %v4337 = vrot.slane %v4324, 4
    %v4339 = vshrl.u32 %v4277, 16
    %v4341 = vrot.slane %v4339, 7
    %v4342 = vshll.u32 %v4277, 16
    %v4344 = vor.u32 %v4341, %v4342
    %v4345 = vsel %vm4279, %v4337, %v4344
    %v4346 = vrot.slane %v4332, 4
    %v4347 = vrot.slane %v4341, 4
    %4348 = vrot.lane.b32.xlu0 %v4286, 32
    %v4349 = vpop.permute.xlu0 %4348
    %4350 = vrot.lane.b32.xlu0 %v4293, 32
    %v4351 = vpop.permute.xlu0 %4350
    %4352 = vrot.lane.b32.xlu0 %v4302, 32
    %v4353 = vpop.permute.xlu0 %4352
    %4354 = vrot.lane.b32.xlu0 %v4311, 32
    %v4355 = vpop.permute.xlu0 %4354
    %4356 = vrot.lane.b32.xlu0 %v4312, 32
    %v4357 = vpop.permute.xlu0 %4356
    %4358 = vrot.lane.b32.xlu0 %v4313, 32
    %v4359 = vpop.permute.xlu0 %4358
    %4360 = vrot.lane.b32.xlu0 %v4320, 32
    %v4361 = vpop.permute.xlu0 %4360
    %4362 = vrot.lane.b32.xlu0 %v4327, 32
    %v4363 = vpop.permute.xlu0 %4362
    %4364 = vrot.lane.b32.xlu0 %v4336, 32
    %v4365 = vpop.permute.xlu0 %4364
    %4366 = vrot.lane.b32.xlu0 %v4345, 32
    %v4367 = vpop.permute.xlu0 %4366
    %4368 = vrot.lane.b32.xlu0 %v4346, 32
    %v4369 = vpop.permute.xlu0 %4368
    %4370 = vrot.lane.b32.xlu0 %v4347, 32
    %v4371 = vpop.permute.xlu0 %4370
    %v4372 = vrot.slane %v4349, 4
    %v4373 = vrot.slane %v4351, 4
    %v4374 = vrot.slane %v4353, 4
    %v4375 = vrot.slane %v4355, 4
    %v4376 = vrot.slane %v4357, 4
    %v4377 = vrot.slane %v4359, 4
    %v4378 = vrot.slane %v4361, 4
    %v4379 = vrot.slane %v4363, 4
    %v4380 = vrot.slane %v4365, 4
    %v4381 = vrot.slane %v4367, 4
    %v4382 = vrot.slane %v4369, 4
    %v4383 = vrot.slane %v4371, 4
    %vm4384 = vcmask 261120
    %v4385 = vsel %vm4384, %v4372, %v4349
    %vm4386 = vcmask 1043456
    %v4387 = vsel %vm4386, %v4372, %v4373
    %v4388 = vsel %vm4384, %v4387, %v4351
    %v4389 = vsel %vm4384, %v4374, %v4353
    %v4390 = vsel %vm4386, %v4374, %v4375
    %v4391 = vsel %vm4384, %v4390, %v4355
    %v4392 = vsel %vm4384, %v4376, %v4357
    %v4393 = vsel %vm4386, %v4376, %v4377
    %v4394 = vsel %vm4384, %v4393, %v4359
    %v4395 = vsel %vm4384, %v4378, %v4361
    %v4396 = vsel %vm4386, %v4378, %v4379
    %v4397 = vsel %vm4384, %v4396, %v4363
    %v4398 = vsel %vm4384, %v4380, %v4365
    %v4399 = vsel %vm4386, %v4380, %v4381
    %v4400 = vsel %vm4384, %v4399, %v4367
    %v4401 = vsel %vm4384, %v4382, %v4369
    %v4402 = vsel %vm4386, %v4382, %v4383
    %v4403 = vsel %vm4384, %v4402, %v4371
    %vm4422 = vcmask 1043712
    %vm4423 = vmand %vm4422, %vm4198
    %vm4424 = vcmask 1047556
    %vm4425 = vmand %vm4424, %vm4200
    %vm4426 = vmor %vm4425, %vm4423
    %v4427 = vld [vmem:[#allocation2] sm:$0xff]
    %v4428 = vsel %vm4426, %v4385, %v4427
    %4429 = vst [vmem:[#allocation2] sm:$0xff] %v4428
    %vm4430 = vmand %vm4386, %vm4198
    %vm4431 = vmor %vm4425, %vm4430
    %v4432 = vld [vmem:[#allocation2 + $0x8] sm:$0xff]
    %v4433 = vsel %vm4431, %v4388, %v4432
    %4434 = vst [vmem:[#allocation2 + $0x8] sm:$0xff] %v4433
    %vm4435 = vcmask 257024
    %vm4436 = vmand %vm4435, %vm4198
    %v4437 = vld [vmem:[#allocation2 + $0x10] sm:$0xf]
    %v4438 = vsel %vm4436, %v4373, %v4437
    %4439 = vst [vmem:[#allocation2 + $0x10] sm:$0xf] %v4438
    %vm4440 = vcmask 1043712
    %vm4441 = vcmask 1047556
    %vm4442 = vmor %vm4441, %vm4440
    %4443 = vst.msk [vmem:[#allocation2 + $0x14] sm:$0xff] %vm4442, %v4389
    %4444 = vst [vmem:[#allocation2 + $0x1c] sm:$0xff] %v4391
    %4445 = vst.msk [vmem:[#allocation2 + $0x24] sm:$0xf] %vm4222, %v4375
    %vm4446 = vcmask 1040640
    %vm4447 = vmand %vm4446, %vm4172
    %vm4448 = vmor %vm4176, %vm4447
    %v4449 = vld [vmem:[#allocation2 + $0x28] sm:$0x11]
    %v4450 = vsel %vm4448, %v4392, %v4449
    %4451 = vst [vmem:[#allocation2 + $0x28] sm:$0x11] %v4450
    %v4452 = vld [vmem:[#allocation2 + $0x30] sm:$0x11]
    %v4453 = vsel %vm4177, %v4394, %v4452
    %4454 = vst [vmem:[#allocation2 + $0x30] sm:$0x11] %v4453
    %vm4455 = vcmask 253952
    %vm4456 = vmand %vm4455, %vm4172
    %v4457 = vld [vmem:[#allocation2 + $0x38] sm:$0x1]
    %v4458 = vsel %vm4456, %v4377, %v4457
    %4459 = vst [vmem:[#allocation2 + $0x38] sm:$0x1] %v4458
    %v4460 = vld [vmem:[#allocation2 + $0x3c] sm:$0xff]
    %v4461 = vsel %vm4426, %v4395, %v4460
    %4462 = vst [vmem:[#allocation2 + $0x3c] sm:$0xff] %v4461
    %v4463 = vld [vmem:[#allocation2 + $0x44] sm:$0xff]
    %v4464 = vsel %vm4431, %v4397, %v4463
    %4465 = vst [vmem:[#allocation2 + $0x44] sm:$0xff] %v4464
    %v4466 = vld [vmem:[#allocation2 + $0x4c] sm:$0xf]
    %v4467 = vsel %vm4436, %v4379, %v4466
    %4468 = vst [vmem:[#allocation2 + $0x4c] sm:$0xf] %v4467
    %4469 = vst.msk [vmem:[#allocation2 + $0x50] sm:$0xff] %vm4442, %v4398
    %4470 = vst [vmem:[#allocation2 + $0x58] sm:$0xff] %v4400
    %4471 = vst.msk [vmem:[#allocation2 + $0x60] sm:$0xf] %vm4222, %v4381
    %v4472 = vld [vmem:[#allocation2 + $0x64] sm:$0x11]
    %v4473 = vsel %vm4448, %v4401, %v4472
    %4474 = vst [vmem:[#allocation2 + $0x64] sm:$0x11] %v4473
    %v4475 = vld [vmem:[#allocation2 + $0x6c] sm:$0x11]
    %v4476 = vsel %vm4177, %v4403, %v4475
    %4477 = vst [vmem:[#allocation2 + $0x6c] sm:$0x11] %v4476
    %v4478 = vld [vmem:[#allocation2 + $0x74] sm:$0x1]
    %v4479 = vsel %vm4456, %v4383, %v4478
    %4480 = vst [vmem:[#allocation2 + $0x74] sm:$0x1] %v4479
    %v4481 = vld [vmem:[#allocation2] sm:$0xff]
    %v4482 = vld [vmem:[#allocation2 + $0x8] sm:$0xff]
    %v4483 = vld [vmem:[#allocation2 + $0x10] sm:$0xf]
    %v4484 = vld [vmem:[#allocation2 + $0x14] sm:$0xff]
    %v4485 = vld [vmem:[#allocation2 + $0x1c] sm:$0xff]
    %v4486 = vld [vmem:[#allocation2 + $0x24] sm:$0xf]
    %v4487 = vld [vmem:[#allocation2 + $0x3c] sm:$0xff]
    %v4488 = vld [vmem:[#allocation2 + $0x44] sm:$0xff]
    %v4489 = vld [vmem:[#allocation2 + $0x4c] sm:$0xf]
    %v4490 = vld [vmem:[#allocation2 + $0x50] sm:$0xff]
    %v4491 = vld [vmem:[#allocation2 + $0x58] sm:$0xff]
    %v4492 = vld [vmem:[#allocation2 + $0x60] sm:$0xf]
    %v4493 = vld [vmem:[#allocation9] sm:$0xff]
    %v4494 = vld [vmem:[#allocation9 + $0x8] sm:$0xff]
    %v4495 = vld [vmem:[#allocation9 + $0x10] sm:$0xff]
    %v4496 = vld [vmem:[#allocation9 + $0x18] sm:$0xff]
    %v4497 = vld [vmem:[#allocation9 + $0x20] sm:$0xff]
    %v4498 = vld [vmem:[#allocation9 + $0x28] sm:$0xff]
    %v4499 = vld [vmem:[#allocation9 + $0x30] sm:$0xff]
    %v4500 = vld [vmem:[#allocation9 + $0x38] sm:$0xff]
    %v4501 = vld [vmem:[#allocation9 + $0x40] sm:$0xff]
    %v4502 = vld [vmem:[#allocation9 + $0x48] sm:$0xff]
    %v4503 = vld [vmem:[#allocation9 + $0x50] sm:$0xff]
    %v4504 = vld [vmem:[#allocation9 + $0x58] sm:$0xff]
    %v4505 = vld [vmem:[#allocation9 + $0x60] sm:$0xff]
    %v4506 = vld [vmem:[#allocation9 + $0x68] sm:$0xff]
    %v4507 = vld [vmem:[#allocation9 + $0x70] sm:$0xff]
    %v4508 = vld [vmem:[#allocation9 + $0x78] sm:$0xff]
    %v4509 = vld [vmem:[#allocation9 + $0x80] sm:$0xff]
    %v4510 = vld [vmem:[#allocation9 + $0x88] sm:$0xff]
    %v4511 = vld [vmem:[#allocation9 + $0x90] sm:$0xff]
    %v4512 = vld [vmem:[#allocation9 + $0x98] sm:$0xff]
    %v4513 = vld [vmem:[#allocation9 + $0xa0] sm:$0xff]
    %v4514 = vld [vmem:[#allocation9 + $0xa8] sm:$0xff]
    %v4515 = vld [vmem:[#allocation9 + $0xb0] sm:$0xff]
    %v4516 = vld [vmem:[#allocation9 + $0xb8] sm:$0xff]
    %v4517 = vld [vmem:[#allocation9 + $0xc0] sm:$0xff]
    %v4518 = vld [vmem:[#allocation9 + $0xc8] sm:$0xff]
    %v4519 = vld [vmem:[#allocation9 + $0xd0] sm:$0xff]
    %v4520 = vld [vmem:[#allocation9 + $0xd8] sm:$0xff]
    %v4521 = vld [vmem:[#allocation9 + $0xe0] sm:$0xff]
    %v4522 = vld [vmem:[#allocation9 + $0xe8] sm:$0xff]
    %v4523 = vld [vmem:[#allocation9 + $0xf0] sm:$0xff]
    %v4524 = vld [vmem:[#allocation9 + $0xf8] sm:$0xff]
    %v4525 = vld [vmem:[#allocation9 + $0x100] sm:$0xff]
    %v4526 = vld [vmem:[#allocation9 + $0x108] sm:$0xff]
    %v4527 = vld [vmem:[#allocation9 + $0x110] sm:$0xff]
    %v4528 = vld [vmem:[#allocation9 + $0x118] sm:$0xff]
    %v4529 = vld [vmem:[#allocation9 + $0x120] sm:$0xff]
    %v4530 = vld [vmem:[#allocation9 + $0x128] sm:$0xff]
    %v4531 = vld [vmem:[#allocation9 + $0x130] sm:$0xff]
    %v4532 = vld [vmem:[#allocation9 + $0x138] sm:$0xff]
    %v4533 = vld [vmem:[#allocation9 + $0x140] sm:$0xff]
    %v4534 = vld [vmem:[#allocation9 + $0x148] sm:$0xff]
    %v4535 = vld [vmem:[#allocation9 + $0x150] sm:$0xff]
    %v4536 = vld [vmem:[#allocation9 + $0x158] sm:$0xff]
    %v4537 = vld [vmem:[#allocation9 + $0x160] sm:$0xff]
    %v4538 = vld [vmem:[#allocation9 + $0x168] sm:$0xff]
    %v4539 = vld [vmem:[#allocation9 + $0x170] sm:$0xff]
    %v4540 = vld [vmem:[#allocation9 + $0x178] sm:$0xff]
    %v4541 = vld [vmem:[#allocation9 + $0x180] sm:$0xff]
    %v4542 = vld [vmem:[#allocation9 + $0x188] sm:$0xff]
    %v4543 = vld [vmem:[#allocation9 + $0x190] sm:$0xff]
    %v4544 = vld [vmem:[#allocation9 + $0x198] sm:$0xff]
    %v4545 = vld [vmem:[#allocation9 + $0x1a0] sm:$0xff]
    %v4546 = vld [vmem:[#allocation9 + $0x1a8] sm:$0xff]
    %v4547 = vld [vmem:[#allocation9 + $0x1b0] sm:$0xff]
    %v4548 = vld [vmem:[#allocation9 + $0x1b8] sm:$0xff]
    %v4549 = vld [vmem:[#allocation9 + $0x1c0] sm:$0xff]
    %v4550 = vld [vmem:[#allocation9 + $0x1c8] sm:$0xff]
    %v4551 = vld [vmem:[#allocation9 + $0x1d0] sm:$0xff]
    %v4552 = vld [vmem:[#allocation9 + $0x1d8] sm:$0xff]
    %v4553 = vld [vmem:[#allocation9 + $0x1e0] sm:$0xff]
    %v4554 = vld [vmem:[#allocation9 + $0x1e8] sm:$0xff]
    %v4555 = vld [vmem:[#allocation9 + $0x1f0] sm:$0xff]
    %v4556 = vld [vmem:[#allocation9 + $0x1f8] sm:$0xff]
    %v4557 = vld [vmem:[#allocation9 + $0x200] sm:$0xff]
    %v4558 = vld [vmem:[#allocation9 + $0x208] sm:$0xff]
    %v4559 = vld [vmem:[#allocation9 + $0x210] sm:$0xff]
    %v4560 = vld [vmem:[#allocation9 + $0x218] sm:$0xff]
    %v4561 = vld [vmem:[#allocation9 + $0x220] sm:$0xff]
    %v4562 = vld [vmem:[#allocation9 + $0x228] sm:$0xff]
    %v4563 = vld [vmem:[#allocation9 + $0x230] sm:$0xff]
    %v4564 = vld [vmem:[#allocation9 + $0x238] sm:$0xff]
    %v4565 = vld [vmem:[#allocation9 + $0x240] sm:$0xff]
    %v4566 = vld [vmem:[#allocation9 + $0x248] sm:$0xff]
    %v4567 = vld [vmem:[#allocation9 + $0x250] sm:$0xff]
    %v4568 = vld [vmem:[#allocation9 + $0x258] sm:$0xff]
    %v4569 = vld [vmem:[#allocation9 + $0x260] sm:$0xff]
    %v4570 = vld [vmem:[#allocation9 + $0x268] sm:$0xff]
    %v4571 = vld [vmem:[#allocation9 + $0x270] sm:$0xff]
    %v4572 = vld [vmem:[#allocation9 + $0x278] sm:$0xff]
    %v4573 = vld [vmem:[#allocation9 + $0x280] sm:$0xff]
    %v4574 = vld [vmem:[#allocation9 + $0x288] sm:$0xff]
    %v4575 = vld [vmem:[#allocation9 + $0x290] sm:$0xff]
    %v4576 = vld [vmem:[#allocation9 + $0x298] sm:$0xff]
    %v4577 = vld [vmem:[#allocation9 + $0x2a0] sm:$0xff]
    %v4578 = vld [vmem:[#allocation9 + $0x2a8] sm:$0xff]
    %v4579 = vld [vmem:[#allocation9 + $0x2b0] sm:$0xff]
    %v4580 = vld [vmem:[#allocation9 + $0x2b8] sm:$0xff]
    %v4581 = vld [vmem:[#allocation9 + $0x2c0] sm:$0xff]
    %v4582 = vld [vmem:[#allocation9 + $0x2c8] sm:$0xff]
    %v4583 = vld [vmem:[#allocation9 + $0x2d0] sm:$0xff]
    %v4584 = vld [vmem:[#allocation9 + $0x2d8] sm:$0xff]
    %v4585 = vld [vmem:[#allocation9 + $0x2e0] sm:$0xff]
    %v4586 = vld [vmem:[#allocation9 + $0x2e8] sm:$0xff]
    %v4587 = vld [vmem:[#allocation9 + $0x2f0] sm:$0xff]
    %v4588 = vld [vmem:[#allocation9 + $0x2f8] sm:$0xff]
    %v4589 = vld [vmem:[#allocation9 + $0x300] sm:$0xff]
    %v4590 = vld [vmem:[#allocation9 + $0x308] sm:$0xff]
    %v4591 = vld [vmem:[#allocation9 + $0x310] sm:$0xff]
    %v4592 = vld [vmem:[#allocation9 + $0x318] sm:$0xff]
    %v4593 = vld [vmem:[#allocation9 + $0x320] sm:$0xff]
    %v4594 = vld [vmem:[#allocation9 + $0x328] sm:$0xff]
    %v4595 = vld [vmem:[#allocation9 + $0x330] sm:$0xff]
    %v4596 = vld [vmem:[#allocation9 + $0x338] sm:$0xff]
    %v4597 = vld [vmem:[#allocation9 + $0x340] sm:$0xff]
    %v4598 = vld [vmem:[#allocation9 + $0x348] sm:$0xff]
    %v4599 = vld [vmem:[#allocation9 + $0x350] sm:$0xff]
    %v4600 = vld [vmem:[#allocation9 + $0x358] sm:$0xff]
    %v4601 = vld [vmem:[#allocation9 + $0x360] sm:$0xff]
    %v4602 = vld [vmem:[#allocation9 + $0x368] sm:$0xff]
    %v4603 = vld [vmem:[#allocation9 + $0x370] sm:$0xff]
    %v4604 = vld [vmem:[#allocation9 + $0x378] sm:$0xff]
    %v4605 = vld [vmem:[#allocation9 + $0x380] sm:$0xff]
    %v4606 = vld [vmem:[#allocation9 + $0x388] sm:$0xff]
    %v4607 = vld [vmem:[#allocation9 + $0x390] sm:$0xff]
    %v4608 = vld [vmem:[#allocation9 + $0x398] sm:$0xff]
    %v4609 = vld [vmem:[#allocation9 + $0x3a0] sm:$0xff]
    %v4610 = vld [vmem:[#allocation9 + $0x3a8] sm:$0xff]
    %v4611 = vld [vmem:[#allocation9 + $0x3b0] sm:$0xff]
    %v4612 = vld [vmem:[#allocation9 + $0x3b8] sm:$0xff]
    %v4613 = vld [vmem:[#allocation9 + $0x3c0] sm:$0xff]
    %v4614 = vld [vmem:[#allocation9 + $0x3c8] sm:$0xff]
    %v4615 = vld [vmem:[#allocation9 + $0x3d0] sm:$0xff]
    %v4616 = vld [vmem:[#allocation9 + $0x3d8] sm:$0xff]
    %v4617 = vld [vmem:[#allocation9 + $0x3e0] sm:$0xff]
    %v4618 = vld [vmem:[#allocation9 + $0x3e8] sm:$0xff]
    %v4619 = vld [vmem:[#allocation9 + $0x3f0] sm:$0xff]
    %v4620 = vld [vmem:[#allocation9 + $0x3f8] sm:$0xff]
    %v4621 = vld [vmem:[#allocation9 + $0x400] sm:$0xff]
    %v4622 = vld [vmem:[#allocation9 + $0x408] sm:$0xff]
    %v4623 = vld [vmem:[#allocation9 + $0x410] sm:$0xff]
    %v4624 = vld [vmem:[#allocation9 + $0x418] sm:$0xff]
    %v4625 = vld [vmem:[#allocation9 + $0x420] sm:$0xff]
    %v4626 = vld [vmem:[#allocation9 + $0x428] sm:$0xff]
    %v4627 = vld [vmem:[#allocation9 + $0x430] sm:$0xff]
    %v4628 = vld [vmem:[#allocation9 + $0x438] sm:$0xff]
    %v4629 = vld [vmem:[#allocation9 + $0x440] sm:$0xff]
    %v4630 = vld [vmem:[#allocation9 + $0x448] sm:$0xff]
    %v4631 = vld [vmem:[#allocation9 + $0x450] sm:$0xff]
    %v4632 = vld [vmem:[#allocation9 + $0x458] sm:$0xff]
    %v4633 = vld [vmem:[#allocation9 + $0x460] sm:$0xff]
    %v4634 = vld [vmem:[#allocation9 + $0x468] sm:$0xff]
    %v4635 = vld [vmem:[#allocation9 + $0x470] sm:$0xff]
    %v4636 = vld [vmem:[#allocation9 + $0x478] sm:$0xff]
    %v4637 = vld [vmem:[#allocation2 + $0x28] sm:$0x11]
    %v4638 = vld [vmem:[#allocation2 + $0x30] sm:$0x11]
    %v4639 = vld [vmem:[#allocation2 + $0x38] sm:$0x1]
    %v4640 = vld [vmem:[#allocation2 + $0x64] sm:$0x11]
    %v4641 = vld [vmem:[#allocation2 + $0x6c] sm:$0x11]
    %v4642 = vld [vmem:[#allocation2 + $0x74] sm:$0x1]
    %vm4643 = vsmask.f32 3328
    %vm4644 = vsmask.f32 7440
    %vm4645 = vmor %vm4643, %vm4644
    %v4647 = vshrl.u32 %v4481, 16
    %v4649 = vrot.slane %v4647, 4
    %v4650 = vshll.u32 %v4481, 16
    %v4652 = vrot.slane %v4650, 5
    %v4653 = vor.u32 %v4649, %v4652
    %v4654 = vrot.slane %v4653, 4
    %v4656 = vshll.u32 %v4484, 16
    %v4658 = vrot.slane %v4656, 5
    %v4659 = vsel %vm4645, %v4654, %v4658
    %v4661 = vshrl.u32 %v4482, 16
    %v4663 = vrot.slane %v4661, 4
    %v4664 = vshll.u32 %v4482, 16
    %v4666 = vrot.slane %v4664, 5
    %v4667 = vor.u32 %v4663, %v4666
    %v4668 = vrot.slane %v4667, 4
    %v4670 = vshll.u32 %v4485, 16
    %v4672 = vrot.slane %v4670, 5
    %v4673 = vsel %vm4645, %v4668, %v4672
    %v4675 = vshrl.u32 %v4483, 16
    %v4677 = vrot.slane %v4675, 4
    %v4678 = vshll.u32 %v4483, 16
    %v4680 = vrot.slane %v4678, 5
    %v4681 = vor.u32 %v4677, %v4680
    %v4682 = vrot.slane %v4681, 4
    %v4684 = vshll.u32 %v4486, 16
    %v4686 = vrot.slane %v4684, 5
    %v4687 = vsel %vm4645, %v4682, %v4686
    %v4688 = vshrl.u32 %v4484, 16
    %v4690 = vrot.slane %v4688, 4
    %v4691 = vor.u32 %v4690, %v4658
    %v4692 = vrot.slane %v4691, 4
    %v4694 = vshll.u32 %v4637, 16
    %v4696 = vrot.slane %v4694, 5
    %v4697 = vsel %vm4645, %v4692, %v4696
    %v4698 = vshrl.u32 %v4485, 16
    %v4700 = vrot.slane %v4698, 4
    %v4701 = vor.u32 %v4700, %v4672
    %v4702 = vrot.slane %v4701, 4
    %v4704 = vshll.u32 %v4638, 16
    %v4706 = vrot.slane %v4704, 5
    %v4707 = vsel %vm4645, %v4702, %v4706
    %v4708 = vshrl.u32 %v4486, 16
    %v4710 = vrot.slane %v4708, 4
    %v4711 = vor.u32 %v4710, %v4686
    %v4712 = vrot.slane %v4711, 4
    %v4714 = vshll.u32 %v4639, 16
    %v4716 = vrot.slane %v4714, 5
    %v4717 = vsel %vm4645, %v4712, %v4716
    %v4719 = vshrl.u32 %v4487, 16
    %v4721 = vrot.slane %v4719, 4
    %v4722 = vshll.u32 %v4487, 16
    %v4724 = vrot.slane %v4722, 5
    %v4725 = vor.u32 %v4721, %v4724
    %v4726 = vrot.slane %v4725, 4
    %v4728 = vshll.u32 %v4490, 16
    %v4730 = vrot.slane %v4728, 5
    %v4731 = vsel %vm4645, %v4726, %v4730
    %v4733 = vshrl.u32 %v4488, 16
    %v4735 = vrot.slane %v4733, 4
    %v4736 = vshll.u32 %v4488, 16
    %v4738 = vrot.slane %v4736, 5
    %v4739 = vor.u32 %v4735, %v4738
    %v4740 = vrot.slane %v4739, 4
    %v4742 = vshll.u32 %v4491, 16
    %v4744 = vrot.slane %v4742, 5
    %v4745 = vsel %vm4645, %v4740, %v4744
    %v4747 = vshrl.u32 %v4489, 16
    %v4749 = vrot.slane %v4747, 4
    %v4750 = vshll.u32 %v4489, 16
    %v4752 = vrot.slane %v4750, 5
    %v4753 = vor.u32 %v4749, %v4752
    %v4754 = vrot.slane %v4753, 4
    %v4756 = vshll.u32 %v4492, 16
    %v4758 = vrot.slane %v4756, 5
    %v4759 = vsel %vm4645, %v4754, %v4758
    %v4760 = vshrl.u32 %v4490, 16
    %v4762 = vrot.slane %v4760, 4
    %v4763 = vor.u32 %v4762, %v4730
    %v4764 = vrot.slane %v4763, 4
    %v4766 = vshll.u32 %v4640, 16
    %v4768 = vrot.slane %v4766, 5
    %v4769 = vsel %vm4645, %v4764, %v4768
    %v4770 = vshrl.u32 %v4491, 16
    %v4772 = vrot.slane %v4770, 4
    %v4773 = vor.u32 %v4772, %v4744
    %v4774 = vrot.slane %v4773, 4
    %v4776 = vshll.u32 %v4641, 16
    %v4778 = vrot.slane %v4776, 5
    %v4779 = vsel %vm4645, %v4774, %v4778
    %v4780 = vshrl.u32 %v4492, 16
    %v4782 = vrot.slane %v4780, 4
    %v4783 = vor.u32 %v4782, %v4758
    %v4784 = vrot.slane %v4783, 4
    %v4786 = vshll.u32 %v4642, 16
    %v4788 = vrot.slane %v4786, 5
    %v4789 = vsel %vm4645, %v4784, %v4788
    %s4790 = scalar_lea.vmem [#allocation9], 1152
    %v4791 = vld [vmem:[%s4790] sm:$0xff]
    %v4792 = vld [vmem:[%s4790 + $0x8] sm:$0xff]
    %v4793 = vld [vmem:[%s4790 + $0x10] sm:$0xff]
    %v4794 = vld [vmem:[%s4790 + $0x18] sm:$0xff]
    %v4795 = vld [vmem:[%s4790 + $0x20] sm:$0xff]
    %v4796 = vld [vmem:[%s4790 + $0x28] sm:$0xff]
    %v4797 = vld [vmem:[%s4790 + $0x30] sm:$0xff]
    %v4798 = vld [vmem:[%s4790 + $0x38] sm:$0xff]
    %v4799 = vld [vmem:[%s4790 + $0x40] sm:$0xff]
    %v4800 = vld [vmem:[%s4790 + $0x48] sm:$0xff]
    %v4801 = vld [vmem:[%s4790 + $0x50] sm:$0xff]
    %v4802 = vld [vmem:[%s4790 + $0x58] sm:$0xff]
    %v4803 = vld [vmem:[%s4790 + $0x60] sm:$0xff]
    %v4804 = vld [vmem:[%s4790 + $0x68] sm:$0xff]
    %v4805 = vld [vmem:[%s4790 + $0x70] sm:$0xff]
    %v4806 = vld [vmem:[%s4790 + $0x78] sm:$0xff]
    %v4807 = vld [vmem:[%s4790 + $0x80] sm:$0xff]
    %v4808 = vld [vmem:[%s4790 + $0x88] sm:$0xff]
    %v4809 = vld [vmem:[%s4790 + $0x90] sm:$0xff]
    %v4810 = vld [vmem:[%s4790 + $0x98] sm:$0xff]
    %v4811 = vld [vmem:[%s4790 + $0xa0] sm:$0xff]
    %v4812 = vld [vmem:[%s4790 + $0xa8] sm:$0xff]
    %v4813 = vld [vmem:[%s4790 + $0xb0] sm:$0xff]
    %v4814 = vld [vmem:[%s4790 + $0xb8] sm:$0xff]
    %v4815 = vld [vmem:[%s4790 + $0xc0] sm:$0xff]
    %v4816 = vld [vmem:[%s4790 + $0xc8] sm:$0xff]
    %v4817 = vld [vmem:[%s4790 + $0xd0] sm:$0xff]
    %v4818 = vld [vmem:[%s4790 + $0xd8] sm:$0xff]
    %v4819 = vld [vmem:[%s4790 + $0xe0] sm:$0xff]
    %v4820 = vld [vmem:[%s4790 + $0xe8] sm:$0xff]
    %v4821 = vld [vmem:[%s4790 + $0xf0] sm:$0xff]
    %v4822 = vld [vmem:[%s4790 + $0xf8] sm:$0xff]
    %v4823 = vld [vmem:[%s4790 + $0x100] sm:$0xff]
    %v4824 = vld [vmem:[%s4790 + $0x108] sm:$0xff]
    %v4825 = vld [vmem:[%s4790 + $0x110] sm:$0xff]
    %v4826 = vld [vmem:[%s4790 + $0x118] sm:$0xff]
    %v4827 = vld [vmem:[%s4790 + $0x120] sm:$0xff]
    %v4828 = vld [vmem:[%s4790 + $0x128] sm:$0xff]
    %v4829 = vld [vmem:[%s4790 + $0x130] sm:$0xff]
    %v4830 = vld [vmem:[%s4790 + $0x138] sm:$0xff]
    %v4831 = vld [vmem:[%s4790 + $0x140] sm:$0xff]
    %v4832 = vld [vmem:[%s4790 + $0x148] sm:$0xff]
    %v4833 = vld [vmem:[%s4790 + $0x150] sm:$0xff]
    %v4834 = vld [vmem:[%s4790 + $0x158] sm:$0xff]
    %v4835 = vld [vmem:[%s4790 + $0x160] sm:$0xff]
    %v4836 = vld [vmem:[%s4790 + $0x168] sm:$0xff]
    %v4837 = vld [vmem:[%s4790 + $0x170] sm:$0xff]
    %v4838 = vld [vmem:[%s4790 + $0x178] sm:$0xff]
    %v4839 = vld [vmem:[%s4790 + $0x180] sm:$0xff]
    %v4840 = vld [vmem:[%s4790 + $0x188] sm:$0xff]
    %v4841 = vld [vmem:[%s4790 + $0x190] sm:$0xff]
    %v4842 = vld [vmem:[%s4790 + $0x198] sm:$0xff]
    %v4843 = vld [vmem:[%s4790 + $0x1a0] sm:$0xff]
    %v4844 = vld [vmem:[%s4790 + $0x1a8] sm:$0xff]
    %v4845 = vld [vmem:[%s4790 + $0x1b0] sm:$0xff]
    %v4846 = vld [vmem:[%s4790 + $0x1b8] sm:$0xff]
    %v4847 = vld [vmem:[%s4790 + $0x1c0] sm:$0xff]
    %v4848 = vld [vmem:[%s4790 + $0x1c8] sm:$0xff]
    %v4849 = vld [vmem:[%s4790 + $0x1d0] sm:$0xff]
    %v4850 = vld [vmem:[%s4790 + $0x1d8] sm:$0xff]
    %v4851 = vld [vmem:[%s4790 + $0x1e0] sm:$0xff]
    %v4852 = vld [vmem:[%s4790 + $0x1e8] sm:$0xff]
    %v4853 = vld [vmem:[%s4790 + $0x1f0] sm:$0xff]
    %v4854 = vld [vmem:[%s4790 + $0x1f8] sm:$0xff]
    %v4855 = vld [vmem:[%s4790 + $0x200] sm:$0xff]
    %v4856 = vld [vmem:[%s4790 + $0x208] sm:$0xff]
    %v4857 = vld [vmem:[%s4790 + $0x210] sm:$0xff]
    %v4858 = vld [vmem:[%s4790 + $0x218] sm:$0xff]
    %v4859 = vld [vmem:[%s4790 + $0x220] sm:$0xff]
    %v4860 = vld [vmem:[%s4790 + $0x228] sm:$0xff]
    %v4861 = vld [vmem:[%s4790 + $0x230] sm:$0xff]
    %v4862 = vld [vmem:[%s4790 + $0x238] sm:$0xff]
    %v4863 = vld [vmem:[%s4790 + $0x240] sm:$0xff]
    %v4864 = vld [vmem:[%s4790 + $0x248] sm:$0xff]
    %v4865 = vld [vmem:[%s4790 + $0x250] sm:$0xff]
    %v4866 = vld [vmem:[%s4790 + $0x258] sm:$0xff]
    %v4867 = vld [vmem:[%s4790 + $0x260] sm:$0xff]
    %v4868 = vld [vmem:[%s4790 + $0x268] sm:$0xff]
    %v4869 = vld [vmem:[%s4790 + $0x270] sm:$0xff]
    %v4870 = vld [vmem:[%s4790 + $0x278] sm:$0xff]
    %v4871 = vld [vmem:[%s4790 + $0x280] sm:$0xff]
    %v4872 = vld [vmem:[%s4790 + $0x288] sm:$0xff]
    %v4873 = vld [vmem:[%s4790 + $0x290] sm:$0xff]
    %v4874 = vld [vmem:[%s4790 + $0x298] sm:$0xff]
    %v4875 = vld [vmem:[%s4790 + $0x2a0] sm:$0xff]
    %v4876 = vld [vmem:[%s4790 + $0x2a8] sm:$0xff]
    %v4877 = vld [vmem:[%s4790 + $0x2b0] sm:$0xff]
    %v4878 = vld [vmem:[%s4790 + $0x2b8] sm:$0xff]
    %v4879 = vld [vmem:[%s4790 + $0x2c0] sm:$0xff]
    %v4880 = vld [vmem:[%s4790 + $0x2c8] sm:$0xff]
    %v4881 = vld [vmem:[%s4790 + $0x2d0] sm:$0xff]
    %v4882 = vld [vmem:[%s4790 + $0x2d8] sm:$0xff]
    %v4883 = vld [vmem:[%s4790 + $0x2e0] sm:$0xff]
    %v4884 = vld [vmem:[%s4790 + $0x2e8] sm:$0xff]
    %v4885 = vld [vmem:[%s4790 + $0x2f0] sm:$0xff]
    %v4886 = vld [vmem:[%s4790 + $0x2f8] sm:$0xff]
    %v4887 = vld [vmem:[%s4790 + $0x300] sm:$0xff]
    %v4888 = vld [vmem:[%s4790 + $0x308] sm:$0xff]
    %v4889 = vld [vmem:[%s4790 + $0x310] sm:$0xff]
    %v4890 = vld [vmem:[%s4790 + $0x318] sm:$0xff]
    %v4891 = vld [vmem:[%s4790 + $0x320] sm:$0xff]
    %v4892 = vld [vmem:[%s4790 + $0x328] sm:$0xff]
    %v4893 = vld [vmem:[%s4790 + $0x330] sm:$0xff]
    %v4894 = vld [vmem:[%s4790 + $0x338] sm:$0xff]
    %v4895 = vld [vmem:[%s4790 + $0x340] sm:$0xff]
    %v4896 = vld [vmem:[%s4790 + $0x348] sm:$0xff]
    %v4897 = vld [vmem:[%s4790 + $0x350] sm:$0xff]
    %v4898 = vld [vmem:[%s4790 + $0x358] sm:$0xff]
    %v4899 = vld [vmem:[%s4790 + $0x360] sm:$0xff]
    %v4900 = vld [vmem:[%s4790 + $0x368] sm:$0xff]
    %v4901 = vld [vmem:[%s4790 + $0x370] sm:$0xff]
    %v4902 = vld [vmem:[%s4790 + $0x378] sm:$0xff]
    %v4903 = vld [vmem:[%s4790 + $0x380] sm:$0xff]
    %v4904 = vld [vmem:[%s4790 + $0x388] sm:$0xff]
    %v4905 = vld [vmem:[%s4790 + $0x390] sm:$0xff]
    %v4906 = vld [vmem:[%s4790 + $0x398] sm:$0xff]
    %v4907 = vld [vmem:[%s4790 + $0x3a0] sm:$0xff]
    %v4908 = vld [vmem:[%s4790 + $0x3a8] sm:$0xff]
    %v4909 = vld [vmem:[%s4790 + $0x3b0] sm:$0xff]
    %v4910 = vld [vmem:[%s4790 + $0x3b8] sm:$0xff]
    %v4911 = vld [vmem:[%s4790 + $0x3c0] sm:$0xff]
    %v4912 = vld [vmem:[%s4790 + $0x3c8] sm:$0xff]
    %v4913 = vld [vmem:[%s4790 + $0x3d0] sm:$0xff]
    %v4914 = vld [vmem:[%s4790 + $0x3d8] sm:$0xff]
    %v4915 = vld [vmem:[%s4790 + $0x3e0] sm:$0xff]
    %v4916 = vld [vmem:[%s4790 + $0x3e8] sm:$0xff]
    %v4917 = vld [vmem:[%s4790 + $0x3f0] sm:$0xff]
    %v4918 = vld [vmem:[%s4790 + $0x3f8] sm:$0xff]
    %v4919 = vld [vmem:[%s4790 + $0x400] sm:$0xff]
    %v4920 = vld [vmem:[%s4790 + $0x408] sm:$0xff]
    %v4921 = vld [vmem:[%s4790 + $0x410] sm:$0xff]
    %v4922 = vld [vmem:[%s4790 + $0x418] sm:$0xff]
    %v4923 = vld [vmem:[%s4790 + $0x420] sm:$0xff]
    %v4924 = vld [vmem:[%s4790 + $0x428] sm:$0xff]
    %v4925 = vld [vmem:[%s4790 + $0x430] sm:$0xff]
    %v4926 = vld [vmem:[%s4790 + $0x438] sm:$0xff]
    %v4927 = vld [vmem:[%s4790 + $0x440] sm:$0xff]
    %v4928 = vld [vmem:[%s4790 + $0x448] sm:$0xff]
    %v4929 = vld [vmem:[%s4790 + $0x450] sm:$0xff]
    %v4930 = vld [vmem:[%s4790 + $0x458] sm:$0xff]
    %v4931 = vld [vmem:[%s4790 + $0x460] sm:$0xff]
    %v4932 = vld [vmem:[%s4790 + $0x468] sm:$0xff]
    %v4933 = vld [vmem:[%s4790 + $0x470] sm:$0xff]
    %v4934 = vld [vmem:[%s4790 + $0x478] sm:$0xff]
    %v4935 = vunpack.c.l.b16 %v4659
    %v4936 = vunpack.c.h.b16 %v4659
    %v4937 = vunpack.c.l.b16 %v4673
    %v4938 = vunpack.c.h.b16 %v4673
    %v4939 = vunpack.c.l.b16 %v4687
    %v4940 = vunpack.c.l.b16 %v4697
    %v4941 = vunpack.c.h.b16 %v4697
    %v4942 = vunpack.c.l.b16 %v4707
    %v4943 = vunpack.c.h.b16 %v4707
    %v4944 = vunpack.c.l.b16 %v4717
    %v4945 = vunpack.c.l.b16 %v4731
    %v4946 = vunpack.c.h.b16 %v4731
    %v4947 = vunpack.c.l.b16 %v4745
    %v4948 = vunpack.c.h.b16 %v4745
    %v4949 = vunpack.c.l.b16 %v4759
    %v4950 = vunpack.c.l.b16 %v4769
    %v4951 = vunpack.c.h.b16 %v4769
    %v4952 = vunpack.c.l.b16 %v4779
    %v4953 = vunpack.c.h.b16 %v4779
    %v4954 = vunpack.c.l.b16 %v4789
    %v4955 = vpack.c.b16 %v4940, %v4935
    %v4956 = vpack.c.b16 %v4941, %v4936
    %v4957 = vpack.c.b16 %v4942, %v4937
    %v4958 = vpack.c.b16 %v4943, %v4938
    %v4959 = vpack.c.b16 %v4944, %v4939
    %v4960 = vpack.c.b16 %v4950, %v4945
    %v4961 = vpack.c.b16 %v4951, %v4946
    %v4962 = vpack.c.b16 %v4952, %v4947
    %v4963 = vpack.c.b16 %v4953, %v4948
    %v4964 = vpack.c.b16 %v4954, %v4949
    %v5117 = vunpack.c.l.b16 %v4791
    %v5118 = vunpack.c.h.b16 %v4791
    %v5119 = vunpack.c.l.b16 %v4792
    %v5120 = vunpack.c.h.b16 %v4792
    %v5121 = vunpack.c.l.b16 %v4793
    %v5122 = vunpack.c.h.b16 %v4793
    %v5123 = vunpack.c.l.b16 %v4794
    %v5124 = vunpack.c.h.b16 %v4794
    %v5125 = vunpack.c.l.b16 %v4795
    %v5126 = vunpack.c.h.b16 %v4795
    %v5127 = vunpack.c.l.b16 %v4796
    %v5128 = vunpack.c.h.b16 %v4796
    %v5129 = vunpack.c.l.b16 %v4797
    %v5130 = vunpack.c.h.b16 %v4797
    %v5131 = vunpack.c.l.b16 %v4798
    %v5132 = vunpack.c.h.b16 %v4798
    %v5133 = vunpack.c.l.b16 %v4799
    %v5134 = vunpack.c.h.b16 %v4799
    %v5135 = vunpack.c.l.b16 %v4800
    %v5136 = vunpack.c.h.b16 %v4800
    %v5137 = vunpack.c.l.b16 %v4801
    %v5138 = vunpack.c.h.b16 %v4801
    %v5139 = vunpack.c.l.b16 %v4802
    %v5140 = vunpack.c.h.b16 %v4802
    %v5141 = vunpack.c.l.b16 %v4803
    %v5142 = vunpack.c.h.b16 %v4803
    %v5143 = vunpack.c.l.b16 %v4804
    %v5144 = vunpack.c.h.b16 %v4804
    %v5145 = vunpack.c.l.b16 %v4805
    %v5146 = vunpack.c.h.b16 %v4805
    %v5147 = vunpack.c.l.b16 %v4806
    %v5148 = vunpack.c.h.b16 %v4806
    %v5149 = vunpack.c.l.b16 %v4807
    %v5150 = vunpack.c.h.b16 %v4807
    %v5151 = vunpack.c.l.b16 %v4808
    %v5152 = vunpack.c.h.b16 %v4808
    %v5153 = vunpack.c.l.b16 %v4809
    %v5154 = vunpack.c.h.b16 %v4809
    %v5155 = vunpack.c.l.b16 %v4810
    %v5156 = vunpack.c.h.b16 %v4810
    %v5157 = vunpack.c.l.b16 %v4811
    %v5158 = vunpack.c.h.b16 %v4811
    %v5159 = vunpack.c.l.b16 %v4812
    %v5160 = vunpack.c.h.b16 %v4812
    %v5161 = vunpack.c.l.b16 %v4813
    %v5162 = vunpack.c.h.b16 %v4813
    %v5163 = vunpack.c.l.b16 %v4814
    %v5164 = vunpack.c.h.b16 %v4814
    %v5165 = vunpack.c.l.b16 %v4815
    %v5166 = vunpack.c.h.b16 %v4815
    %v5167 = vunpack.c.l.b16 %v4816
    %v5168 = vunpack.c.h.b16 %v4816
    %v5169 = vunpack.c.l.b16 %v4817
    %v5170 = vunpack.c.h.b16 %v4817
    %v5171 = vunpack.c.l.b16 %v4818
    %v5172 = vunpack.c.h.b16 %v4818
    %v5173 = vunpack.c.l.b16 %v4819
    %v5174 = vunpack.c.h.b16 %v4819
    %v5175 = vunpack.c.l.b16 %v4820
    %v5176 = vunpack.c.h.b16 %v4820
    %v5177 = vunpack.c.l.b16 %v4821
    %v5178 = vunpack.c.h.b16 %v4821
    %v5179 = vunpack.c.l.b16 %v4822
    %v5180 = vunpack.c.h.b16 %v4822
    %v5181 = vunpack.c.l.b16 %v4823
    %v5182 = vunpack.c.h.b16 %v4823
    %v5183 = vunpack.c.l.b16 %v4824
    %v5184 = vunpack.c.h.b16 %v4824
    %v5185 = vunpack.c.l.b16 %v4825
    %v5186 = vunpack.c.h.b16 %v4825
    %v5187 = vunpack.c.l.b16 %v4826
    %v5188 = vunpack.c.h.b16 %v4826
    %v5189 = vunpack.c.l.b16 %v4827
    %v5190 = vunpack.c.h.b16 %v4827
    %v5191 = vunpack.c.l.b16 %v4828
    %v5192 = vunpack.c.h.b16 %v4828
    %v5193 = vunpack.c.l.b16 %v4829
    %v5194 = vunpack.c.h.b16 %v4829
    %v5195 = vunpack.c.l.b16 %v4830
    %v5196 = vunpack.c.h.b16 %v4830
    %v5197 = vunpack.c.l.b16 %v4831
    %v5198 = vunpack.c.h.b16 %v4831
    %v5199 = vunpack.c.l.b16 %v4832
    %v5200 = vunpack.c.h.b16 %v4832
    %v5201 = vunpack.c.l.b16 %v4833
    %v5202 = vunpack.c.h.b16 %v4833
    %v5203 = vunpack.c.l.b16 %v4834
    %v5204 = vunpack.c.h.b16 %v4834
    %v5205 = vunpack.c.l.b16 %v4835
    %v5206 = vunpack.c.h.b16 %v4835
    %v5207 = vunpack.c.l.b16 %v4836
    %v5208 = vunpack.c.h.b16 %v4836
    %v5209 = vunpack.c.l.b16 %v4837
    %v5210 = vunpack.c.h.b16 %v4837
    %v5211 = vunpack.c.l.b16 %v4838
    %v5212 = vunpack.c.h.b16 %v4838
    %v5213 = vunpack.c.l.b16 %v4839
    %v5214 = vunpack.c.h.b16 %v4839
    %v5215 = vunpack.c.l.b16 %v4840
    %v5216 = vunpack.c.h.b16 %v4840
    %v5217 = vunpack.c.l.b16 %v4841
    %v5218 = vunpack.c.h.b16 %v4841
    %v5219 = vunpack.c.l.b16 %v4842
    %v5220 = vunpack.c.h.b16 %v4842
    %v5221 = vunpack.c.l.b16 %v4843
    %v5222 = vunpack.c.h.b16 %v4843
    %v5223 = vunpack.c.l.b16 %v4844
    %v5224 = vunpack.c.h.b16 %v4844
    %v5225 = vunpack.c.l.b16 %v4845
    %v5226 = vunpack.c.h.b16 %v4845
    %v5227 = vunpack.c.l.b16 %v4846
    %v5228 = vunpack.c.h.b16 %v4846
    %v5229 = vunpack.c.l.b16 %v4847
    %v5230 = vunpack.c.h.b16 %v4847
    %v5231 = vunpack.c.l.b16 %v4848
    %v5232 = vunpack.c.h.b16 %v4848
    %v5233 = vunpack.c.l.b16 %v4849
    %v5234 = vunpack.c.h.b16 %v4849
    %v5235 = vunpack.c.l.b16 %v4850
    %v5236 = vunpack.c.h.b16 %v4850
    %v5237 = vunpack.c.l.b16 %v4851
    %v5238 = vunpack.c.h.b16 %v4851
    %v5239 = vunpack.c.l.b16 %v4852
    %v5240 = vunpack.c.h.b16 %v4852
    %v5241 = vunpack.c.l.b16 %v4853
    %v5242 = vunpack.c.h.b16 %v4853
    %v5243 = vunpack.c.l.b16 %v4854
    %v5244 = vunpack.c.h.b16 %v4854
    %v5245 = vunpack.c.l.b16 %v4855
    %v5246 = vunpack.c.h.b16 %v4855
    %v5247 = vunpack.c.l.b16 %v4856
    %v5248 = vunpack.c.h.b16 %v4856
    %v5249 = vunpack.c.l.b16 %v4857
    %v5250 = vunpack.c.h.b16 %v4857
    %v5251 = vunpack.c.l.b16 %v4858
    %v5252 = vunpack.c.h.b16 %v4858
    %v5253 = vunpack.c.l.b16 %v4859
    %v5254 = vunpack.c.h.b16 %v4859
    %v5255 = vunpack.c.l.b16 %v4860
    %v5256 = vunpack.c.h.b16 %v4860
    %v5257 = vunpack.c.l.b16 %v4861
    %v5258 = vunpack.c.h.b16 %v4861
    %v5259 = vunpack.c.l.b16 %v4862
    %v5260 = vunpack.c.h.b16 %v4862
    %v5261 = vunpack.c.l.b16 %v4863
    %v5262 = vunpack.c.h.b16 %v4863
    %v5263 = vunpack.c.l.b16 %v4864
    %v5264 = vunpack.c.h.b16 %v4864
    %v5265 = vunpack.c.l.b16 %v4865
    %v5266 = vunpack.c.h.b16 %v4865
    %v5267 = vunpack.c.l.b16 %v4866
    %v5268 = vunpack.c.h.b16 %v4866
    %v5269 = vunpack.c.l.b16 %v4867
    %v5270 = vunpack.c.h.b16 %v4867
    %v5271 = vunpack.c.l.b16 %v4868
    %v5272 = vunpack.c.h.b16 %v4868
    %v5273 = vunpack.c.l.b16 %v4869
    %v5274 = vunpack.c.h.b16 %v4869
    %v5275 = vunpack.c.l.b16 %v4870
    %v5276 = vunpack.c.h.b16 %v4870
    %v5277 = vunpack.c.l.b16 %v4871
    %v5278 = vunpack.c.h.b16 %v4871
    %v5279 = vunpack.c.l.b16 %v4872
    %v5280 = vunpack.c.h.b16 %v4872
    %v5281 = vunpack.c.l.b16 %v4873
    %v5282 = vunpack.c.h.b16 %v4873
    %v5283 = vunpack.c.l.b16 %v4874
    %v5284 = vunpack.c.h.b16 %v4874
    %v5285 = vunpack.c.l.b16 %v4875
    %v5286 = vunpack.c.h.b16 %v4875
    %v5287 = vunpack.c.l.b16 %v4876
    %v5288 = vunpack.c.h.b16 %v4876
    %v5289 = vunpack.c.l.b16 %v4877
    %v5290 = vunpack.c.h.b16 %v4877
    %v5291 = vunpack.c.l.b16 %v4878
    %v5292 = vunpack.c.h.b16 %v4878
    %v5293 = vunpack.c.l.b16 %v4879
    %v5294 = vunpack.c.h.b16 %v4879
    %v5295 = vunpack.c.l.b16 %v4880
    %v5296 = vunpack.c.h.b16 %v4880
    %v5297 = vunpack.c.l.b16 %v4881
    %v5298 = vunpack.c.h.b16 %v4881
    %v5299 = vunpack.c.l.b16 %v4882
    %v5300 = vunpack.c.h.b16 %v4882
    %v5301 = vunpack.c.l.b16 %v4883
    %v5302 = vunpack.c.h.b16 %v4883
    %v5303 = vunpack.c.l.b16 %v4884
    %v5304 = vunpack.c.h.b16 %v4884
    %v5305 = vunpack.c.l.b16 %v4885
    %v5306 = vunpack.c.h.b16 %v4885
    %v5307 = vunpack.c.l.b16 %v4886
    %v5308 = vunpack.c.h.b16 %v4886
    %v5309 = vunpack.c.l.b16 %v4887
    %v5310 = vunpack.c.h.b16 %v4887
    %v5311 = vunpack.c.l.b16 %v4888
    %v5312 = vunpack.c.h.b16 %v4888
    %v5313 = vunpack.c.l.b16 %v4889
    %v5314 = vunpack.c.h.b16 %v4889
    %v5315 = vunpack.c.l.b16 %v4890
    %v5316 = vunpack.c.h.b16 %v4890
    %v5317 = vunpack.c.l.b16 %v4891
    %v5318 = vunpack.c.h.b16 %v4891
    %v5319 = vunpack.c.l.b16 %v4892
    %v5320 = vunpack.c.h.b16 %v4892
    %v5321 = vunpack.c.l.b16 %v4893
    %v5322 = vunpack.c.h.b16 %v4893
    %v5323 = vunpack.c.l.b16 %v4894
    %v5324 = vunpack.c.h.b16 %v4894
    %v5325 = vunpack.c.l.b16 %v4895
    %v5326 = vunpack.c.h.b16 %v4895
    %v5327 = vunpack.c.l.b16 %v4896
    %v5328 = vunpack.c.h.b16 %v4896
    %v5329 = vunpack.c.l.b16 %v4897
    %v5330 = vunpack.c.h.b16 %v4897
    %v5331 = vunpack.c.l.b16 %v4898
    %v5332 = vunpack.c.h.b16 %v4898
    %v5333 = vunpack.c.l.b16 %v4899
    %v5334 = vunpack.c.h.b16 %v4899
    %v5335 = vunpack.c.l.b16 %v4900
    %v5336 = vunpack.c.h.b16 %v4900
    %v5337 = vunpack.c.l.b16 %v4901
    %v5338 = vunpack.c.h.b16 %v4901
    %v5339 = vunpack.c.l.b16 %v4902
    %v5340 = vunpack.c.h.b16 %v4902
    %v5341 = vunpack.c.l.b16 %v4903
    %v5342 = vunpack.c.h.b16 %v4903
    %v5343 = vunpack.c.l.b16 %v4904
    %v5344 = vunpack.c.h.b16 %v4904
    %v5345 = vunpack.c.l.b16 %v4905
    %v5346 = vunpack.c.h.b16 %v4905
    %v5347 = vunpack.c.l.b16 %v4906
    %v5348 = vunpack.c.h.b16 %v4906
    %v5349 = vunpack.c.l.b16 %v4907
    %v5350 = vunpack.c.h.b16 %v4907
    %v5351 = vunpack.c.l.b16 %v4908
    %v5352 = vunpack.c.h.b16 %v4908
    %v5353 = vunpack.c.l.b16 %v4909
    %v5354 = vunpack.c.h.b16 %v4909
    %v5355 = vunpack.c.l.b16 %v4910
    %v5356 = vunpack.c.h.b16 %v4910
    %v5357 = vunpack.c.l.b16 %v4911
    %v5358 = vunpack.c.h.b16 %v4911
    %v5359 = vunpack.c.l.b16 %v4912
    %v5360 = vunpack.c.h.b16 %v4912
    %v5361 = vunpack.c.l.b16 %v4913
    %v5362 = vunpack.c.h.b16 %v4913
    %v5363 = vunpack.c.l.b16 %v4914
    %v5364 = vunpack.c.h.b16 %v4914
    %v5365 = vunpack.c.l.b16 %v4915
    %v5366 = vunpack.c.h.b16 %v4915
    %v5367 = vunpack.c.l.b16 %v4916
    %v5368 = vunpack.c.h.b16 %v4916
    %v5369 = vunpack.c.l.b16 %v4917
    %v5370 = vunpack.c.h.b16 %v4917
    %v5371 = vunpack.c.l.b16 %v4918
    %v5372 = vunpack.c.h.b16 %v4918
    %v5373 = vunpack.c.l.b16 %v4919
    %v5374 = vunpack.c.h.b16 %v4919
    %v5375 = vunpack.c.l.b16 %v4920
    %v5376 = vunpack.c.h.b16 %v4920
    %v5377 = vunpack.c.l.b16 %v4921
    %v5378 = vunpack.c.h.b16 %v4921
    %v5379 = vunpack.c.l.b16 %v4922
    %v5380 = vunpack.c.h.b16 %v4922
    %v5381 = vunpack.c.l.b16 %v4923
    %v5382 = vunpack.c.h.b16 %v4923
    %v5383 = vunpack.c.l.b16 %v4924
    %v5384 = vunpack.c.h.b16 %v4924
    %v5385 = vunpack.c.l.b16 %v4925
    %v5386 = vunpack.c.h.b16 %v4925
    %v5387 = vunpack.c.l.b16 %v4926
    %v5388 = vunpack.c.h.b16 %v4926
    %v5389 = vunpack.c.l.b16 %v4927
    %v5390 = vunpack.c.h.b16 %v4927
    %v5391 = vunpack.c.l.b16 %v4928
    %v5392 = vunpack.c.h.b16 %v4928
    %v5393 = vunpack.c.l.b16 %v4929
    %v5394 = vunpack.c.h.b16 %v4929
    %v5395 = vunpack.c.l.b16 %v4930
    %v5396 = vunpack.c.h.b16 %v4930
    %v5397 = vunpack.c.l.b16 %v4931
    %v5398 = vunpack.c.h.b16 %v4931
    %v5399 = vunpack.c.l.b16 %v4932
    %v5400 = vunpack.c.h.b16 %v4932
    %v5401 = vunpack.c.l.b16 %v4933
    %v5402 = vunpack.c.h.b16 %v4933
    %v5403 = vunpack.c.l.b16 %v4934
    %v5404 = vunpack.c.h.b16 %v4934
    %v5405 = vpack.c.b16 %v5121, %v5117
    %v5406 = vpack.c.b16 %v5122, %v5118
    %v5407 = vpack.c.b16 %v5123, %v5119
    %v5408 = vpack.c.b16 %v5124, %v5120
    %v5409 = vpack.c.b16 %v5129, %v5125
    %v5410 = vpack.c.b16 %v5130, %v5126
    %v5411 = vpack.c.b16 %v5131, %v5127
    %v5412 = vpack.c.b16 %v5132, %v5128
    %v5413 = vpack.c.b16 %v5137, %v5133
    %v5414 = vpack.c.b16 %v5138, %v5134
    %v5415 = vpack.c.b16 %v5139, %v5135
    %v5416 = vpack.c.b16 %v5140, %v5136
    %v5417 = vpack.c.b16 %v5145, %v5141
    %v5418 = vpack.c.b16 %v5146, %v5142
    %v5419 = vpack.c.b16 %v5147, %v5143
    %v5420 = vpack.c.b16 %v5148, %v5144
    %v5421 = vpack.c.b16 %v5153, %v5149
    %v5422 = vpack.c.b16 %v5154, %v5150
    %v5423 = vpack.c.b16 %v5155, %v5151
    %v5424 = vpack.c.b16 %v5156, %v5152
    %v5425 = vpack.c.b16 %v5161, %v5157
    %v5426 = vpack.c.b16 %v5162, %v5158
    %v5427 = vpack.c.b16 %v5163, %v5159
    %v5428 = vpack.c.b16 %v5164, %v5160
    %v5429 = vpack.c.b16 %v5169, %v5165
    %v5430 = vpack.c.b16 %v5170, %v5166
    %v5431 = vpack.c.b16 %v5171, %v5167
    %v5432 = vpack.c.b16 %v5172, %v5168
    %v5433 = vpack.c.b16 %v5177, %v5173
    %v5434 = vpack.c.b16 %v5178, %v5174
    %v5435 = vpack.c.b16 %v5179, %v5175
    %v5436 = vpack.c.b16 %v5180, %v5176
    %v5437 = vpack.c.b16 %v5185, %v5181
    %v5438 = vpack.c.b16 %v5186, %v5182
    %v5439 = vpack.c.b16 %v5187, %v5183
    %v5440 = vpack.c.b16 %v5188, %v5184
    %v5441 = vpack.c.b16 %v5193, %v5189
    %v5442 = vpack.c.b16 %v5194, %v5190
    %v5443 = vpack.c.b16 %v5195, %v5191
    %v5444 = vpack.c.b16 %v5196, %v5192
    %v5445 = vpack.c.b16 %v5201, %v5197
    %v5446 = vpack.c.b16 %v5202, %v5198
    %v5447 = vpack.c.b16 %v5203, %v5199
    %v5448 = vpack.c.b16 %v5204, %v5200
    %v5449 = vpack.c.b16 %v5209, %v5205
    %v5450 = vpack.c.b16 %v5210, %v5206
    %v5451 = vpack.c.b16 %v5211, %v5207
    %v5452 = vpack.c.b16 %v5212, %v5208
    %v5453 = vpack.c.b16 %v5217, %v5213
    %v5454 = vpack.c.b16 %v5218, %v5214
    %v5455 = vpack.c.b16 %v5219, %v5215
    %v5456 = vpack.c.b16 %v5220, %v5216
    %v5457 = vpack.c.b16 %v5225, %v5221
    %v5458 = vpack.c.b16 %v5226, %v5222
    %v5459 = vpack.c.b16 %v5227, %v5223
    %v5460 = vpack.c.b16 %v5228, %v5224
    %v5461 = vpack.c.b16 %v5233, %v5229
    %v5462 = vpack.c.b16 %v5234, %v5230
    %v5463 = vpack.c.b16 %v5235, %v5231
    %v5464 = vpack.c.b16 %v5236, %v5232
    %v5465 = vpack.c.b16 %v5241, %v5237
    %v5466 = vpack.c.b16 %v5242, %v5238
    %v5467 = vpack.c.b16 %v5243, %v5239
    %v5468 = vpack.c.b16 %v5244, %v5240
    %v5469 = vpack.c.b16 %v5249, %v5245
    %v5470 = vpack.c.b16 %v5250, %v5246
    %v5471 = vpack.c.b16 %v5251, %v5247
    %v5472 = vpack.c.b16 %v5252, %v5248
    %v5473 = vpack.c.b16 %v5257, %v5253
    %v5474 = vpack.c.b16 %v5258, %v5254
    %v5475 = vpack.c.b16 %v5259, %v5255
    %v5476 = vpack.c.b16 %v5260, %v5256
    %v5477 = vpack.c.b16 %v5265, %v5261
    %v5478 = vpack.c.b16 %v5266, %v5262
    %v5479 = vpack.c.b16 %v5267, %v5263
    %v5480 = vpack.c.b16 %v5268, %v5264
    %v5481 = vpack.c.b16 %v5273, %v5269
    %v5482 = vpack.c.b16 %v5274, %v5270
    %v5483 = vpack.c.b16 %v5275, %v5271
    %v5484 = vpack.c.b16 %v5276, %v5272
    %v5485 = vpack.c.b16 %v5281, %v5277
    %v5486 = vpack.c.b16 %v5282, %v5278
    %v5487 = vpack.c.b16 %v5283, %v5279
    %v5488 = vpack.c.b16 %v5284, %v5280
    %v5489 = vpack.c.b16 %v5289, %v5285
    %v5490 = vpack.c.b16 %v5290, %v5286
    %v5491 = vpack.c.b16 %v5291, %v5287
    %v5492 = vpack.c.b16 %v5292, %v5288
    %v5493 = vpack.c.b16 %v5297, %v5293
    %v5494 = vpack.c.b16 %v5298, %v5294
    %v5495 = vpack.c.b16 %v5299, %v5295
    %v5496 = vpack.c.b16 %v5300, %v5296
    %v5497 = vpack.c.b16 %v5305, %v5301
    %v5498 = vpack.c.b16 %v5306, %v5302
    %v5499 = vpack.c.b16 %v5307, %v5303
    %v5500 = vpack.c.b16 %v5308, %v5304
    %v5501 = vpack.c.b16 %v5313, %v5309
    %v5502 = vpack.c.b16 %v5314, %v5310
    %v5503 = vpack.c.b16 %v5315, %v5311
    %v5504 = vpack.c.b16 %v5316, %v5312
    %v5505 = vpack.c.b16 %v5321, %v5317
    %v5506 = vpack.c.b16 %v5322, %v5318
    %v5507 = vpack.c.b16 %v5323, %v5319
    %v5508 = vpack.c.b16 %v5324, %v5320
    %v5509 = vpack.c.b16 %v5329, %v5325
    %v5510 = vpack.c.b16 %v5330, %v5326
    %v5511 = vpack.c.b16 %v5331, %v5327
    %v5512 = vpack.c.b16 %v5332, %v5328
    %v5513 = vpack.c.b16 %v5337, %v5333
    %v5514 = vpack.c.b16 %v5338, %v5334
    %v5515 = vpack.c.b16 %v5339, %v5335
    %v5516 = vpack.c.b16 %v5340, %v5336
    %v5517 = vpack.c.b16 %v5345, %v5341
    %v5518 = vpack.c.b16 %v5346, %v5342
    %v5519 = vpack.c.b16 %v5347, %v5343
    %v5520 = vpack.c.b16 %v5348, %v5344
    %v5521 = vpack.c.b16 %v5353, %v5349
    %v5522 = vpack.c.b16 %v5354, %v5350
    %v5523 = vpack.c.b16 %v5355, %v5351
    %v5524 = vpack.c.b16 %v5356, %v5352
    %v5525 = vpack.c.b16 %v5361, %v5357
    %v5526 = vpack.c.b16 %v5362, %v5358
    %v5527 = vpack.c.b16 %v5363, %v5359
    %v5528 = vpack.c.b16 %v5364, %v5360
    %v5529 = vpack.c.b16 %v5369, %v5365
    %v5530 = vpack.c.b16 %v5370, %v5366
    %v5531 = vpack.c.b16 %v5371, %v5367
    %v5532 = vpack.c.b16 %v5372, %v5368
    %v5533 = vpack.c.b16 %v5377, %v5373
    %v5534 = vpack.c.b16 %v5378, %v5374
    %v5535 = vpack.c.b16 %v5379, %v5375
    %v5536 = vpack.c.b16 %v5380, %v5376
    %v5537 = vpack.c.b16 %v5385, %v5381
    %v5538 = vpack.c.b16 %v5386, %v5382
    %v5539 = vpack.c.b16 %v5387, %v5383
    %v5540 = vpack.c.b16 %v5388, %v5384
    %v5541 = vpack.c.b16 %v5393, %v5389
    %v5542 = vpack.c.b16 %v5394, %v5390
    %v5543 = vpack.c.b16 %v5395, %v5391
    %v5544 = vpack.c.b16 %v5396, %v5392
    %v5545 = vpack.c.b16 %v5401, %v5397
    %v5546 = vpack.c.b16 %v5402, %v5398
    %v5547 = vpack.c.b16 %v5403, %v5399
    %v5548 = vpack.c.b16 %v5404, %v5400
    %vm5693 = vcmask 523264
    %v5695 = vsel %vm5693, %v4959, 0
    %v5698 = vsel %vm5693, %v4964, 0
    %5700 = vmatprep.subr.bf16.mxu0 %v5434
    %5701 = vmatpush1.bf16.msra.mxu0 %v5433
    %5702 = vmatprep.subr.bf16.mxu0 %v5430
    %5703 = vmatpush1.bf16.msra.mxu0 %v5429
    %5704 = vmatprep.subr.bf16.mxu0 %v5426
    %5705 = vmatpush1.bf16.msra.mxu0 %v5425
    %5706 = vmatprep.subr.bf16.mxu0 %v5422
    %5707 = vmatpush1.bf16.msra.mxu0 %v5421
    %5708 = vmatprep.subr.bf16.mxu0 %v5418
    %5709 = vmatpush1.bf16.msra.mxu0 %v5417
    %5710 = vmatprep.subr.bf16.mxu0 %v5414
    %5711 = vmatpush1.bf16.msra.mxu0 %v5413
    %5712 = vmatprep.subr.bf16.mxu0 %v5410
    %5713 = vmatpush1.bf16.msra.mxu0 %v5409
    %5714 = vmatprep.subr.bf16.mxu0 %v5406
    %5715 = vmatpush1.bf16.msra.mxu0 %v5405
    %5716 = vmatprep.subr.bf16.mxu0 %v5466
    %5717 = vmatpush2.bf16.msra.mxu0 %v5465
    %5718 = vmatprep.subr.bf16.mxu0 %v5462
    %5719 = vmatpush2.bf16.msra.mxu0 %v5461
    %5720 = vmatprep.subr.bf16.mxu0 %v5458
    %5721 = vmatpush2.bf16.msra.mxu0 %v5457
    %5722 = vmatprep.subr.bf16.mxu0 %v5454
    %5723 = vmatpush2.bf16.msra.mxu0 %v5453
    %5724 = vmatprep.subr.bf16.mxu0 %v5450
    %5725 = vmatpush2.bf16.msra.mxu0 %v5449
    %5726 = vmatprep.subr.bf16.mxu0 %v5446
    %5727 = vmatpush2.bf16.msra.mxu0 %v5445
    %5728 = vmatprep.subr.bf16.mxu0 %v5442
    %5729 = vmatpush2.bf16.msra.mxu0 %v5441
    %5730 = vmatprep.subr.bf16.mxu0 %v5438
    %5731 = vmatpush2.bf16.msra.mxu0 %v5437
    %5732 = vmatprep.mubr.bf16.mxu0 %v4956
    %5733 = vmatmul.mubr.bf16.gmra.mxu0 %v4955
    %v5734 = vpop.f32.mrf.mxu0
    %v5735 = vadd.f32 0.0, %v5734
    %v5736 = vpop.f32.mrf.mxu0
    %v5737 = vadd.f32 0.0, %v5736
    %v5738 = vpop.f32.mrf.mxu0
    %v5739 = vadd.f32 0.0, %v5738
    %v5740 = vpop.f32.mrf.mxu0
    %v5741 = vadd.f32 0.0, %v5740
    %5742 = vmatprep.mubr.bf16.mxu0 %v4961
    %5743 = vmatmul.mubr.bf16.gmra.mxu0 %v4960
    %v5744 = vpop.f32.mrf.mxu0
    %v5745 = vadd.f32 0.0, %v5744
    %v5746 = vpop.f32.mrf.mxu0
    %v5747 = vadd.f32 0.0, %v5746
    %v5748 = vpop.f32.mrf.mxu0
    %v5749 = vadd.f32 0.0, %v5748
    %v5750 = vpop.f32.mrf.mxu0
    %v5751 = vadd.f32 0.0, %v5750
    %5752 = vdwg.mxu0
    %5753 = vmatprep.subr.bf16.mxu0 %v5498
    %5754 = vmatpush1.bf16.msra.mxu0 %v5497
    %5755 = vmatprep.subr.bf16.mxu0 %v5494
    %5756 = vmatpush1.bf16.msra.mxu0 %v5493
    %5757 = vmatprep.subr.bf16.mxu0 %v5490
    %5758 = vmatpush1.bf16.msra.mxu0 %v5489
    %5759 = vmatprep.subr.bf16.mxu0 %v5486
    %5760 = vmatpush1.bf16.msra.mxu0 %v5485
    %5761 = vmatprep.subr.bf16.mxu0 %v5482
    %5762 = vmatpush1.bf16.msra.mxu0 %v5481
    %5763 = vmatprep.subr.bf16.mxu0 %v5478
    %5764 = vmatpush1.bf16.msra.mxu0 %v5477
    %5765 = vmatprep.subr.bf16.mxu0 %v5474
    %5766 = vmatpush1.bf16.msra.mxu0 %v5473
    %5767 = vmatprep.subr.bf16.mxu0 %v5470
    %5768 = vmatpush1.bf16.msra.mxu0 %v5469
    %5769 = vmatprep.subr.bf16.mxu0 %v5530
    %5770 = vmatpush2.bf16.msra.mxu0 %v5529
    %5771 = vmatprep.subr.bf16.mxu0 %v5526
    %5772 = vmatpush2.bf16.msra.mxu0 %v5525
    %5773 = vmatprep.subr.bf16.mxu0 %v5522
    %5774 = vmatpush2.bf16.msra.mxu0 %v5521
    %5775 = vmatprep.subr.bf16.mxu0 %v5518
    %5776 = vmatpush2.bf16.msra.mxu0 %v5517
    %5777 = vmatprep.subr.bf16.mxu0 %v5514
    %5778 = vmatpush2.bf16.msra.mxu0 %v5513
    %5779 = vmatprep.subr.bf16.mxu0 %v5510
    %5780 = vmatpush2.bf16.msra.mxu0 %v5509
    %5781 = vmatprep.subr.bf16.mxu0 %v5506
    %5782 = vmatpush2.bf16.msra.mxu0 %v5505
    %5783 = vmatprep.subr.bf16.mxu0 %v5502
    %5784 = vmatpush2.bf16.msra.mxu0 %v5501
    %5785 = vmatprep.mubr.bf16.mxu0 %v4958
    %5786 = vmatmul.mubr.bf16.gmra.mxu0 %v4957
    %v5787 = vpop.f32.mrf.mxu0
    %v5788 = vadd.f32 %v5735, %v5787
    %v5789 = vpop.f32.mrf.mxu0
    %v5790 = vadd.f32 %v5737, %v5789
    %v5791 = vpop.f32.mrf.mxu0
    %v5792 = vadd.f32 %v5739, %v5791
    %v5793 = vpop.f32.mrf.mxu0
    %v5794 = vadd.f32 %v5741, %v5793
    %5795 = vmatprep.mubr.bf16.mxu0 %v4963
    %5796 = vmatmul.mubr.bf16.gmra.mxu0 %v4962
    %v5797 = vpop.f32.mrf.mxu0
    %v5798 = vadd.f32 %v5745, %v5797
    %v5799 = vpop.f32.mrf.mxu0
    %v5800 = vadd.f32 %v5747, %v5799
    %v5801 = vpop.f32.mrf.mxu0
    %v5802 = vadd.f32 %v5749, %v5801
    %v5803 = vpop.f32.mrf.mxu0
    %v5804 = vadd.f32 %v5751, %v5803
    %5805 = vdwg.mxu0
    %5806 = vmatprep.subr.bf16.mxu0 0
    %5807 = vmatpush1.bf16.msra.mxu0 0
    %5808 = vmatprep.subr.bf16.mxu0 0
    %5809 = vmatpush1.bf16.msra.mxu0 0
    %5810 = vmatprep.subr.bf16.mxu0 0
    %5811 = vmatpush1.bf16.msra.mxu0 0
    %5812 = vmatprep.subr.bf16.mxu0 0
    %5813 = vmatpush1.bf16.msra.mxu0 0
    %5814 = vmatprep.subr.bf16.mxu0 %v5546
    %5815 = vmatpush1.bf16.msra.mxu0 %v5545
    %5816 = vmatprep.subr.bf16.mxu0 %v5542
    %5817 = vmatpush1.bf16.msra.mxu0 %v5541
    %5818 = vmatprep.subr.bf16.mxu0 %v5538
    %5819 = vmatpush1.bf16.msra.mxu0 %v5537
    %5820 = vmatprep.subr.bf16.mxu0 %v5534
    %5821 = vmatpush1.bf16.msra.mxu0 %v5533
    %5822 = vmatprep.subr.bf16.mxu0 0
    %5823 = vmatpush2.bf16.msra.mxu0 0
    %5824 = vmatprep.subr.bf16.mxu0 0
    %5825 = vmatpush2.bf16.msra.mxu0 0
    %5826 = vmatprep.subr.bf16.mxu0 0
    %5827 = vmatpush2.bf16.msra.mxu0 0
    %5828 = vmatprep.subr.bf16.mxu0 0
    %5829 = vmatpush2.bf16.msra.mxu0 0
    %5830 = vmatprep.subr.bf16.mxu0 0
    %5831 = vmatpush2.bf16.msra.mxu0 0
    %5832 = vmatprep.subr.bf16.mxu0 0
    %5833 = vmatpush2.bf16.msra.mxu0 0
    %5834 = vmatprep.subr.bf16.mxu0 0
    %5835 = vmatpush2.bf16.msra.mxu0 0
    %5836 = vmatprep.subr.bf16.mxu0 0
    %5837 = vmatpush2.bf16.msra.mxu0 0
    %5838 = vmatprep.mubr.bf16.mxu0 0
    %5839 = vmatmul.mubr.bf16.gmra.mxu0 %v5695
    %v5840 = vpop.f32.mrf.mxu0
    %v5841 = vadd.f32 %v5788, %v5840
    %v5842 = vpop.f32.mrf.mxu0
    %v5843 = vadd.f32 %v5790, %v5842
    %v5844 = vpop.f32.mrf.mxu0
    %v5845 = vadd.f32 %v5792, %v5844
    %v5846 = vpop.f32.mrf.mxu0
    %v5847 = vadd.f32 %v5794, %v5846
    %5848 = vmatprep.mubr.bf16.mxu0 0
    %5849 = vmatmul.mubr.bf16.gmra.mxu0 %v5698
    %v5850 = vpop.f32.mrf.mxu0
    %v5851 = vadd.f32 %v5798, %v5850
    %v5852 = vpop.f32.mrf.mxu0
    %v5853 = vadd.f32 %v5800, %v5852
    %v5854 = vpop.f32.mrf.mxu0
    %v5855 = vadd.f32 %v5802, %v5854
    %v5856 = vpop.f32.mrf.mxu0
    %v5857 = vadd.f32 %v5804, %v5856
    %5858 = vdwg.mxu0
    %5859 = vmatprep.subr.bf16.mxu0 %v5436
    %5860 = vmatpush1.bf16.msra.mxu0 %v5435
    %5861 = vmatprep.subr.bf16.mxu0 %v5432
    %5862 = vmatpush1.bf16.msra.mxu0 %v5431
    %5863 = vmatprep.subr.bf16.mxu0 %v5428
    %5864 = vmatpush1.bf16.msra.mxu0 %v5427
    %5865 = vmatprep.subr.bf16.mxu0 %v5424
    %5866 = vmatpush1.bf16.msra.mxu0 %v5423
    %5867 = vmatprep.subr.bf16.mxu0 %v5420
    %5868 = vmatpush1.bf16.msra.mxu0 %v5419
    %5869 = vmatprep.subr.bf16.mxu0 %v5416
    %5870 = vmatpush1.bf16.msra.mxu0 %v5415
    %5871 = vmatprep.subr.bf16.mxu0 %v5412
    %5872 = vmatpush1.bf16.msra.mxu0 %v5411
    %5873 = vmatprep.subr.bf16.mxu0 %v5408
    %5874 = vmatpush1.bf16.msra.mxu0 %v5407
    %5875 = vmatprep.subr.bf16.mxu0 %v5468
    %5876 = vmatpush2.bf16.msra.mxu0 %v5467
    %5877 = vmatprep.subr.bf16.mxu0 %v5464
    %5878 = vmatpush2.bf16.msra.mxu0 %v5463
    %5879 = vmatprep.subr.bf16.mxu0 %v5460
    %5880 = vmatpush2.bf16.msra.mxu0 %v5459
    %5881 = vmatprep.subr.bf16.mxu0 %v5456
    %5882 = vmatpush2.bf16.msra.mxu0 %v5455
    %5883 = vmatprep.subr.bf16.mxu0 %v5452
    %5884 = vmatpush2.bf16.msra.mxu0 %v5451
    %5885 = vmatprep.subr.bf16.mxu0 %v5448
    %5886 = vmatpush2.bf16.msra.mxu0 %v5447
    %5887 = vmatprep.subr.bf16.mxu0 %v5444
    %5888 = vmatpush2.bf16.msra.mxu0 %v5443
    %5889 = vmatprep.subr.bf16.mxu0 %v5440
    %5890 = vmatpush2.bf16.msra.mxu0 %v5439
    %5891 = vmatprep.mubr.bf16.mxu0 %v4956
    %5892 = vmatmul.mubr.bf16.gmra.mxu0 %v4955
    %v5893 = vpop.f32.mrf.mxu0
    %v5894 = vadd.f32 0.0, %v5893
    %v5895 = vpop.f32.mrf.mxu0
    %v5896 = vadd.f32 0.0, %v5895
    %v5897 = vpop.f32.mrf.mxu0
    %v5898 = vadd.f32 0.0, %v5897
    %v5899 = vpop.f32.mrf.mxu0
    %v5900 = vadd.f32 0.0, %v5899
    %5901 = vmatprep.mubr.bf16.mxu0 %v4961
    %5902 = vmatmul.mubr.bf16.gmra.mxu0 %v4960
    %v5903 = vpop.f32.mrf.mxu0
    %v5904 = vadd.f32 0.0, %v5903
    %v5905 = vpop.f32.mrf.mxu0
    %v5906 = vadd.f32 0.0, %v5905
    %v5907 = vpop.f32.mrf.mxu0
    %v5908 = vadd.f32 0.0, %v5907
    %v5909 = vpop.f32.mrf.mxu0
    %v5910 = vadd.f32 0.0, %v5909
    %5911 = vdwg.mxu0
    %5912 = vmatprep.subr.bf16.mxu0 %v5500
    %5913 = vmatpush1.bf16.msra.mxu0 %v5499
    %5914 = vmatprep.subr.bf16.mxu0 %v5496
    %5915 = vmatpush1.bf16.msra.mxu0 %v5495
    %5916 = vmatprep.subr.bf16.mxu0 %v5492
    %5917 = vmatpush1.bf16.msra.mxu0 %v5491
    %5918 = vmatprep.subr.bf16.mxu0 %v5488
    %5919 = vmatpush1.bf16.msra.mxu0 %v5487
    %5920 = vmatprep.subr.bf16.mxu0 %v5484
    %5921 = vmatpush1.bf16.msra.mxu0 %v5483
    %5922 = vmatprep.subr.bf16.mxu0 %v5480
    %5923 = vmatpush1.bf16.msra.mxu0 %v5479
    %5924 = vmatprep.subr.bf16.mxu0 %v5476
    %5925 = vmatpush1.bf16.msra.mxu0 %v5475
    %5926 = vmatprep.subr.bf16.mxu0 %v5472
    %5927 = vmatpush1.bf16.msra.mxu0 %v5471
    %5928 = vmatprep.subr.bf16.mxu0 %v5532
    %5929 = vmatpush2.bf16.msra.mxu0 %v5531
    %5930 = vmatprep.subr.bf16.mxu0 %v5528
    %5931 = vmatpush2.bf16.msra.mxu0 %v5527
    %5932 = vmatprep.subr.bf16.mxu0 %v5524
    %5933 = vmatpush2.bf16.msra.mxu0 %v5523
    %5934 = vmatprep.subr.bf16.mxu0 %v5520
    %5935 = vmatpush2.bf16.msra.mxu0 %v5519
    %5936 = vmatprep.subr.bf16.mxu0 %v5516
    %5937 = vmatpush2.bf16.msra.mxu0 %v5515
    %5938 = vmatprep.subr.bf16.mxu0 %v5512
    %5939 = vmatpush2.bf16.msra.mxu0 %v5511
    %5940 = vmatprep.subr.bf16.mxu0 %v5508
    %5941 = vmatpush2.bf16.msra.mxu0 %v5507
    %5942 = vmatprep.subr.bf16.mxu0 %v5504
    %5943 = vmatpush2.bf16.msra.mxu0 %v5503
    %5944 = vmatprep.mubr.bf16.mxu0 %v4958
    %5945 = vmatmul.mubr.bf16.gmra.mxu0 %v4957
    %v5946 = vpop.f32.mrf.mxu0
    %v5947 = vadd.f32 %v5894, %v5946
    %v5948 = vpop.f32.mrf.mxu0
    %v5949 = vadd.f32 %v5896, %v5948
    %v5950 = vpop.f32.mrf.mxu0
    %v5951 = vadd.f32 %v5898, %v5950
    %v5952 = vpop.f32.mrf.mxu0
    %v5953 = vadd.f32 %v5900, %v5952
    %5954 = vmatprep.mubr.bf16.mxu0 %v4963
    %5955 = vmatmul.mubr.bf16.gmra.mxu0 %v4962
    %v5956 = vpop.f32.mrf.mxu0
    %v5957 = vadd.f32 %v5904, %v5956
    %v5958 = vpop.f32.mrf.mxu0
    %v5959 = vadd.f32 %v5906, %v5958
    %v5960 = vpop.f32.mrf.mxu0
    %v5961 = vadd.f32 %v5908, %v5960
    %v5962 = vpop.f32.mrf.mxu0
    %v5963 = vadd.f32 %v5910, %v5962
    %5964 = vdwg.mxu0
    %5965 = vmatprep.subr.bf16.mxu0 0
    %5966 = vmatpush1.bf16.msra.mxu0 0
    %5967 = vmatprep.subr.bf16.mxu0 0
    %5968 = vmatpush1.bf16.msra.mxu0 0
    %5969 = vmatprep.subr.bf16.mxu0 0
    %5970 = vmatpush1.bf16.msra.mxu0 0
    %5971 = vmatprep.subr.bf16.mxu0 0
    %5972 = vmatpush1.bf16.msra.mxu0 0
    %5973 = vmatprep.subr.bf16.mxu0 %v5548
    %5974 = vmatpush1.bf16.msra.mxu0 %v5547
    %5975 = vmatprep.subr.bf16.mxu0 %v5544
    %5976 = vmatpush1.bf16.msra.mxu0 %v5543
    %5977 = vmatprep.subr.bf16.mxu0 %v5540
    %5978 = vmatpush1.bf16.msra.mxu0 %v5539
    %5979 = vmatprep.subr.bf16.mxu0 %v5536
    %5980 = vmatpush1.bf16.msra.mxu0 %v5535
    %5981 = vmatprep.subr.bf16.mxu0 0
    %5982 = vmatpush2.bf16.msra.mxu0 0
    %5983 = vmatprep.subr.bf16.mxu0 0
    %5984 = vmatpush2.bf16.msra.mxu0 0
    %5985 = vmatprep.subr.bf16.mxu0 0
    %5986 = vmatpush2.bf16.msra.mxu0 0
    %5987 = vmatprep.subr.bf16.mxu0 0
    %5988 = vmatpush2.bf16.msra.mxu0 0
    %5989 = vmatprep.subr.bf16.mxu0 0
    %5990 = vmatpush2.bf16.msra.mxu0 0
    %5991 = vmatprep.subr.bf16.mxu0 0
    %5992 = vmatpush2.bf16.msra.mxu0 0
    %5993 = vmatprep.subr.bf16.mxu0 0
    %5994 = vmatpush2.bf16.msra.mxu0 0
    %5995 = vmatprep.subr.bf16.mxu0 0
    %5996 = vmatpush2.bf16.msra.mxu0 0
    %5997 = vmatprep.mubr.bf16.mxu0 0
    %5998 = vmatmul.mubr.bf16.gmra.mxu0 %v5695
    %v5999 = vpop.f32.mrf.mxu0
    %v6000 = vadd.f32 %v5947, %v5999
    %v6001 = vpop.f32.mrf.mxu0
    %v6002 = vadd.f32 %v5949, %v6001
    %v6003 = vpop.f32.mrf.mxu0
    %v6004 = vadd.f32 %v5951, %v6003
    %v6005 = vpop.f32.mrf.mxu0
    %v6006 = vadd.f32 %v5953, %v6005
    %6007 = vmatprep.mubr.bf16.mxu0 0
    %6008 = vmatmul.mubr.bf16.gmra.mxu0 %v5698
    %v6009 = vpop.f32.mrf.mxu0
    %v6010 = vadd.f32 %v5957, %v6009
    %v6011 = vpop.f32.mrf.mxu0
    %v6012 = vadd.f32 %v5959, %v6011
    %v6013 = vpop.f32.mrf.mxu0
    %v6014 = vadd.f32 %v5961, %v6013
    %v6015 = vpop.f32.mrf.mxu0
    %v6016 = vadd.f32 %v5963, %v6015
    %6017 = vdwg.mxu0
    %v6030 = vunpack.c.l.b16 %v4481
    %v6031 = vunpack.c.h.b16 %v4481
    %v6032 = vunpack.c.l.b16 %v4482
    %v6033 = vunpack.c.h.b16 %v4482
    %v6034 = vunpack.c.l.b16 %v4483
    %v6035 = vunpack.c.l.b16 %v4484
    %v6036 = vunpack.c.h.b16 %v4484
    %v6037 = vunpack.c.l.b16 %v4485
    %v6038 = vunpack.c.h.b16 %v4485
    %v6039 = vunpack.c.l.b16 %v4486
    %v6040 = vunpack.c.l.b16 %v4487
    %v6041 = vunpack.c.h.b16 %v4487
    %v6042 = vunpack.c.l.b16 %v4488
    %v6043 = vunpack.c.h.b16 %v4488
    %v6044 = vunpack.c.l.b16 %v4489
    %v6045 = vunpack.c.l.b16 %v4490
    %v6046 = vunpack.c.h.b16 %v4490
    %v6047 = vunpack.c.l.b16 %v4491
    %v6048 = vunpack.c.h.b16 %v4491
    %v6049 = vunpack.c.l.b16 %v4492
    %v6050 = vpack.c.b16 %v6035, %v6030
    %v6051 = vpack.c.b16 %v6036, %v6031
    %v6052 = vpack.c.b16 %v6037, %v6032
    %v6053 = vpack.c.b16 %v6038, %v6033
    %v6054 = vpack.c.b16 %v6039, %v6034
    %v6055 = vpack.c.b16 %v6045, %v6040
    %v6056 = vpack.c.b16 %v6046, %v6041
    %v6057 = vpack.c.b16 %v6047, %v6042
    %v6058 = vpack.c.b16 %v6048, %v6043
    %v6059 = vpack.c.b16 %v6049, %v6044
    %v6212 = vunpack.c.l.b16 %v4493
    %v6213 = vunpack.c.h.b16 %v4493
    %v6214 = vunpack.c.l.b16 %v4494
    %v6215 = vunpack.c.h.b16 %v4494
    %v6216 = vunpack.c.l.b16 %v4495
    %v6217 = vunpack.c.h.b16 %v4495
    %v6218 = vunpack.c.l.b16 %v4496
    %v6219 = vunpack.c.h.b16 %v4496
    %v6220 = vunpack.c.l.b16 %v4497
    %v6221 = vunpack.c.h.b16 %v4497
    %v6222 = vunpack.c.l.b16 %v4498
    %v6223 = vunpack.c.h.b16 %v4498
    %v6224 = vunpack.c.l.b16 %v4499
    %v6225 = vunpack.c.h.b16 %v4499
    %v6226 = vunpack.c.l.b16 %v4500
    %v6227 = vunpack.c.h.b16 %v4500
    %v6228 = vunpack.c.l.b16 %v4501
    %v6229 = vunpack.c.h.b16 %v4501
    %v6230 = vunpack.c.l.b16 %v4502
    %v6231 = vunpack.c.h.b16 %v4502
    %v6232 = vunpack.c.l.b16 %v4503
    %v6233 = vunpack.c.h.b16 %v4503
    %v6234 = vunpack.c.l.b16 %v4504
    %v6235 = vunpack.c.h.b16 %v4504
    %v6236 = vunpack.c.l.b16 %v4505
    %v6237 = vunpack.c.h.b16 %v4505
    %v6238 = vunpack.c.l.b16 %v4506
    %v6239 = vunpack.c.h.b16 %v4506
    %v6240 = vunpack.c.l.b16 %v4507
    %v6241 = vunpack.c.h.b16 %v4507
    %v6242 = vunpack.c.l.b16 %v4508
    %v6243 = vunpack.c.h.b16 %v4508
    %v6244 = vunpack.c.l.b16 %v4509
    %v6245 = vunpack.c.h.b16 %v4509
    %v6246 = vunpack.c.l.b16 %v4510
    %v6247 = vunpack.c.h.b16 %v4510
    %v6248 = vunpack.c.l.b16 %v4511
    %v6249 = vunpack.c.h.b16 %v4511
    %v6250 = vunpack.c.l.b16 %v4512
    %v6251 = vunpack.c.h.b16 %v4512
    %v6252 = vunpack.c.l.b16 %v4513
    %v6253 = vunpack.c.h.b16 %v4513
    %v6254 = vunpack.c.l.b16 %v4514
    %v6255 = vunpack.c.h.b16 %v4514
    %v6256 = vunpack.c.l.b16 %v4515
    %v6257 = vunpack.c.h.b16 %v4515
    %v6258 = vunpack.c.l.b16 %v4516
    %v6259 = vunpack.c.h.b16 %v4516
    %v6260 = vunpack.c.l.b16 %v4517
    %v6261 = vunpack.c.h.b16 %v4517
    %v6262 = vunpack.c.l.b16 %v4518
    %v6263 = vunpack.c.h.b16 %v4518
    %v6264 = vunpack.c.l.b16 %v4519
    %v6265 = vunpack.c.h.b16 %v4519
    %v6266 = vunpack.c.l.b16 %v4520
    %v6267 = vunpack.c.h.b16 %v4520
    %v6268 = vunpack.c.l.b16 %v4521
    %v6269 = vunpack.c.h.b16 %v4521
    %v6270 = vunpack.c.l.b16 %v4522
    %v6271 = vunpack.c.h.b16 %v4522
    %v6272 = vunpack.c.l.b16 %v4523
    %v6273 = vunpack.c.h.b16 %v4523
    %v6274 = vunpack.c.l.b16 %v4524
    %v6275 = vunpack.c.h.b16 %v4524
    %v6276 = vunpack.c.l.b16 %v4525
    %v6277 = vunpack.c.h.b16 %v4525
    %v6278 = vunpack.c.l.b16 %v4526
    %v6279 = vunpack.c.h.b16 %v4526
    %v6280 = vunpack.c.l.b16 %v4527
    %v6281 = vunpack.c.h.b16 %v4527
    %v6282 = vunpack.c.l.b16 %v4528
    %v6283 = vunpack.c.h.b16 %v4528
    %v6284 = vunpack.c.l.b16 %v4529
    %v6285 = vunpack.c.h.b16 %v4529
    %v6286 = vunpack.c.l.b16 %v4530
    %v6287 = vunpack.c.h.b16 %v4530
    %v6288 = vunpack.c.l.b16 %v4531
    %v6289 = vunpack.c.h.b16 %v4531
    %v6290 = vunpack.c.l.b16 %v4532
    %v6291 = vunpack.c.h.b16 %v4532
    %v6292 = vunpack.c.l.b16 %v4533
    %v6293 = vunpack.c.h.b16 %v4533
    %v6294 = vunpack.c.l.b16 %v4534
    %v6295 = vunpack.c.h.b16 %v4534
    %v6296 = vunpack.c.l.b16 %v4535
    %v6297 = vunpack.c.h.b16 %v4535
    %v6298 = vunpack.c.l.b16 %v4536
    %v6299 = vunpack.c.h.b16 %v4536
    %v6300 = vunpack.c.l.b16 %v4537
    %v6301 = vunpack.c.h.b16 %v4537
    %v6302 = vunpack.c.l.b16 %v4538
    %v6303 = vunpack.c.h.b16 %v4538
    %v6304 = vunpack.c.l.b16 %v4539
    %v6305 = vunpack.c.h.b16 %v4539
    %v6306 = vunpack.c.l.b16 %v4540
    %v6307 = vunpack.c.h.b16 %v4540
    %v6308 = vunpack.c.l.b16 %v4541
    %v6309 = vunpack.c.h.b16 %v4541
    %v6310 = vunpack.c.l.b16 %v4542
    %v6311 = vunpack.c.h.b16 %v4542
    %v6312 = vunpack.c.l.b16 %v4543
    %v6313 = vunpack.c.h.b16 %v4543
    %v6314 = vunpack.c.l.b16 %v4544
    %v6315 = vunpack.c.h.b16 %v4544
    %v6316 = vunpack.c.l.b16 %v4545
    %v6317 = vunpack.c.h.b16 %v4545
    %v6318 = vunpack.c.l.b16 %v4546
    %v6319 = vunpack.c.h.b16 %v4546
    %v6320 = vunpack.c.l.b16 %v4547
    %v6321 = vunpack.c.h.b16 %v4547
    %v6322 = vunpack.c.l.b16 %v4548
    %v6323 = vunpack.c.h.b16 %v4548
    %v6324 = vunpack.c.l.b16 %v4549
    %v6325 = vunpack.c.h.b16 %v4549
    %v6326 = vunpack.c.l.b16 %v4550
    %v6327 = vunpack.c.h.b16 %v4550
    %v6328 = vunpack.c.l.b16 %v4551
    %v6329 = vunpack.c.h.b16 %v4551
    %v6330 = vunpack.c.l.b16 %v4552
    %v6331 = vunpack.c.h.b16 %v4552
    %v6332 = vunpack.c.l.b16 %v4553
    %v6333 = vunpack.c.h.b16 %v4553
    %v6334 = vunpack.c.l.b16 %v4554
    %v6335 = vunpack.c.h.b16 %v4554
    %v6336 = vunpack.c.l.b16 %v4555
    %v6337 = vunpack.c.h.b16 %v4555
    %v6338 = vunpack.c.l.b16 %v4556
    %v6339 = vunpack.c.h.b16 %v4556
    %v6340 = vunpack.c.l.b16 %v4557
    %v6341 = vunpack.c.h.b16 %v4557
    %v6342 = vunpack.c.l.b16 %v4558
    %v6343 = vunpack.c.h.b16 %v4558
    %v6344 = vunpack.c.l.b16 %v4559
    %v6345 = vunpack.c.h.b16 %v4559
    %v6346 = vunpack.c.l.b16 %v4560
    %v6347 = vunpack.c.h.b16 %v4560
    %v6348 = vunpack.c.l.b16 %v4561
    %v6349 = vunpack.c.h.b16 %v4561
    %v6350 = vunpack.c.l.b16 %v4562
    %v6351 = vunpack.c.h.b16 %v4562
    %v6352 = vunpack.c.l.b16 %v4563
    %v6353 = vunpack.c.h.b16 %v4563
    %v6354 = vunpack.c.l.b16 %v4564
    %v6355 = vunpack.c.h.b16 %v4564
    %v6356 = vunpack.c.l.b16 %v4565
    %v6357 = vunpack.c.h.b16 %v4565
    %v6358 = vunpack.c.l.b16 %v4566
    %v6359 = vunpack.c.h.b16 %v4566
    %v6360 = vunpack.c.l.b16 %v4567
    %v6361 = vunpack.c.h.b16 %v4567
    %v6362 = vunpack.c.l.b16 %v4568
    %v6363 = vunpack.c.h.b16 %v4568
    %v6364 = vunpack.c.l.b16 %v4569
    %v6365 = vunpack.c.h.b16 %v4569
    %v6366 = vunpack.c.l.b16 %v4570
    %v6367 = vunpack.c.h.b16 %v4570
    %v6368 = vunpack.c.l.b16 %v4571
    %v6369 = vunpack.c.h.b16 %v4571
    %v6370 = vunpack.c.l.b16 %v4572
    %v6371 = vunpack.c.h.b16 %v4572
    %v6372 = vunpack.c.l.b16 %v4573
    %v6373 = vunpack.c.h.b16 %v4573
    %v6374 = vunpack.c.l.b16 %v4574
    %v6375 = vunpack.c.h.b16 %v4574
    %v6376 = vunpack.c.l.b16 %v4575
    %v6377 = vunpack.c.h.b16 %v4575
    %v6378 = vunpack.c.l.b16 %v4576
    %v6379 = vunpack.c.h.b16 %v4576
    %v6380 = vunpack.c.l.b16 %v4577
    %v6381 = vunpack.c.h.b16 %v4577
    %v6382 = vunpack.c.l.b16 %v4578
    %v6383 = vunpack.c.h.b16 %v4578
    %v6384 = vunpack.c.l.b16 %v4579
    %v6385 = vunpack.c.h.b16 %v4579
    %v6386 = vunpack.c.l.b16 %v4580
    %v6387 = vunpack.c.h.b16 %v4580
    %v6388 = vunpack.c.l.b16 %v4581
    %v6389 = vunpack.c.h.b16 %v4581
    %v6390 = vunpack.c.l.b16 %v4582
    %v6391 = vunpack.c.h.b16 %v4582
    %v6392 = vunpack.c.l.b16 %v4583
    %v6393 = vunpack.c.h.b16 %v4583
    %v6394 = vunpack.c.l.b16 %v4584
    %v6395 = vunpack.c.h.b16 %v4584
    %v6396 = vunpack.c.l.b16 %v4585
    %v6397 = vunpack.c.h.b16 %v4585
    %v6398 = vunpack.c.l.b16 %v4586
    %v6399 = vunpack.c.h.b16 %v4586
    %v6400 = vunpack.c.l.b16 %v4587
    %v6401 = vunpack.c.h.b16 %v4587
    %v6402 = vunpack.c.l.b16 %v4588
    %v6403 = vunpack.c.h.b16 %v4588
    %v6404 = vunpack.c.l.b16 %v4589
    %v6405 = vunpack.c.h.b16 %v4589
    %v6406 = vunpack.c.l.b16 %v4590
    %v6407 = vunpack.c.h.b16 %v4590
    %v6408 = vunpack.c.l.b16 %v4591
    %v6409 = vunpack.c.h.b16 %v4591
    %v6410 = vunpack.c.l.b16 %v4592
    %v6411 = vunpack.c.h.b16 %v4592
    %v6412 = vunpack.c.l.b16 %v4593
    %v6413 = vunpack.c.h.b16 %v4593
    %v6414 = vunpack.c.l.b16 %v4594
    %v6415 = vunpack.c.h.b16 %v4594
    %v6416 = vunpack.c.l.b16 %v4595
    %v6417 = vunpack.c.h.b16 %v4595
    %v6418 = vunpack.c.l.b16 %v4596
    %v6419 = vunpack.c.h.b16 %v4596
    %v6420 = vunpack.c.l.b16 %v4597
    %v6421 = vunpack.c.h.b16 %v4597
    %v6422 = vunpack.c.l.b16 %v4598
    %v6423 = vunpack.c.h.b16 %v4598
    %v6424 = vunpack.c.l.b16 %v4599
    %v6425 = vunpack.c.h.b16 %v4599
    %v6426 = vunpack.c.l.b16 %v4600
    %v6427 = vunpack.c.h.b16 %v4600
    %v6428 = vunpack.c.l.b16 %v4601
    %v6429 = vunpack.c.h.b16 %v4601
    %v6430 = vunpack.c.l.b16 %v4602
    %v6431 = vunpack.c.h.b16 %v4602
    %v6432 = vunpack.c.l.b16 %v4603
    %v6433 = vunpack.c.h.b16 %v4603
    %v6434 = vunpack.c.l.b16 %v4604
    %v6435 = vunpack.c.h.b16 %v4604
    %v6436 = vunpack.c.l.b16 %v4605
    %v6437 = vunpack.c.h.b16 %v4605
    %v6438 = vunpack.c.l.b16 %v4606
    %v6439 = vunpack.c.h.b16 %v4606
    %v6440 = vunpack.c.l.b16 %v4607
    %v6441 = vunpack.c.h.b16 %v4607
    %v6442 = vunpack.c.l.b16 %v4608
    %v6443 = vunpack.c.h.b16 %v4608
    %v6444 = vunpack.c.l.b16 %v4609
    %v6445 = vunpack.c.h.b16 %v4609
    %v6446 = vunpack.c.l.b16 %v4610
    %v6447 = vunpack.c.h.b16 %v4610
    %v6448 = vunpack.c.l.b16 %v4611
    %v6449 = vunpack.c.h.b16 %v4611
    %v6450 = vunpack.c.l.b16 %v4612
    %v6451 = vunpack.c.h.b16 %v4612
    %v6452 = vunpack.c.l.b16 %v4613
    %v6453 = vunpack.c.h.b16 %v4613
    %v6454 = vunpack.c.l.b16 %v4614
    %v6455 = vunpack.c.h.b16 %v4614
    %v6456 = vunpack.c.l.b16 %v4615
    %v6457 = vunpack.c.h.b16 %v4615
    %v6458 = vunpack.c.l.b16 %v4616
    %v6459 = vunpack.c.h.b16 %v4616
    %v6460 = vunpack.c.l.b16 %v4617
    %v6461 = vunpack.c.h.b16 %v4617
    %v6462 = vunpack.c.l.b16 %v4618
    %v6463 = vunpack.c.h.b16 %v4618
    %v6464 = vunpack.c.l.b16 %v4619
    %v6465 = vunpack.c.h.b16 %v4619
    %v6466 = vunpack.c.l.b16 %v4620
    %v6467 = vunpack.c.h.b16 %v4620
    %v6468 = vunpack.c.l.b16 %v4621
    %v6469 = vunpack.c.h.b16 %v4621
    %v6470 = vunpack.c.l.b16 %v4622
    %v6471 = vunpack.c.h.b16 %v4622
    %v6472 = vunpack.c.l.b16 %v4623
    %v6473 = vunpack.c.h.b16 %v4623
    %v6474 = vunpack.c.l.b16 %v4624
    %v6475 = vunpack.c.h.b16 %v4624
    %v6476 = vunpack.c.l.b16 %v4625
    %v6477 = vunpack.c.h.b16 %v4625
    %v6478 = vunpack.c.l.b16 %v4626
    %v6479 = vunpack.c.h.b16 %v4626
    %v6480 = vunpack.c.l.b16 %v4627
    %v6481 = vunpack.c.h.b16 %v4627
    %v6482 = vunpack.c.l.b16 %v4628
    %v6483 = vunpack.c.h.b16 %v4628
    %v6484 = vunpack.c.l.b16 %v4629
    %v6485 = vunpack.c.h.b16 %v4629
    %v6486 = vunpack.c.l.b16 %v4630
    %v6487 = vunpack.c.h.b16 %v4630
    %v6488 = vunpack.c.l.b16 %v4631
    %v6489 = vunpack.c.h.b16 %v4631
    %v6490 = vunpack.c.l.b16 %v4632
    %v6491 = vunpack.c.h.b16 %v4632
    %v6492 = vunpack.c.l.b16 %v4633
    %v6493 = vunpack.c.h.b16 %v4633
    %v6494 = vunpack.c.l.b16 %v4634
    %v6495 = vunpack.c.h.b16 %v4634
    %v6496 = vunpack.c.l.b16 %v4635
    %v6497 = vunpack.c.h.b16 %v4635
    %v6498 = vunpack.c.l.b16 %v4636
    %v6499 = vunpack.c.h.b16 %v4636
    %v6500 = vpack.c.b16 %v6216, %v6212
    %v6501 = vpack.c.b16 %v6217, %v6213
    %v6502 = vpack.c.b16 %v6218, %v6214
    %v6503 = vpack.c.b16 %v6219, %v6215
    %v6504 = vpack.c.b16 %v6224, %v6220
    %v6505 = vpack.c.b16 %v6225, %v6221
    %v6506 = vpack.c.b16 %v6226, %v6222
    %v6507 = vpack.c.b16 %v6227, %v6223
    %v6508 = vpack.c.b16 %v6232, %v6228
    %v6509 = vpack.c.b16 %v6233, %v6229
    %v6510 = vpack.c.b16 %v6234, %v6230
    %v6511 = vpack.c.b16 %v6235, %v6231
    %v6512 = vpack.c.b16 %v6240, %v6236
    %v6513 = vpack.c.b16 %v6241, %v6237
    %v6514 = vpack.c.b16 %v6242, %v6238
    %v6515 = vpack.c.b16 %v6243, %v6239
    %v6516 = vpack.c.b16 %v6248, %v6244
    %v6517 = vpack.c.b16 %v6249, %v6245
    %v6518 = vpack.c.b16 %v6250, %v6246
    %v6519 = vpack.c.b16 %v6251, %v6247
    %v6520 = vpack.c.b16 %v6256, %v6252
    %v6521 = vpack.c.b16 %v6257, %v6253
    %v6522 = vpack.c.b16 %v6258, %v6254
    %v6523 = vpack.c.b16 %v6259, %v6255
    %v6524 = vpack.c.b16 %v6264, %v6260
    %v6525 = vpack.c.b16 %v6265, %v6261
    %v6526 = vpack.c.b16 %v6266, %v6262
    %v6527 = vpack.c.b16 %v6267, %v6263
    %v6528 = vpack.c.b16 %v6272, %v6268
    %v6529 = vpack.c.b16 %v6273, %v6269
    %v6530 = vpack.c.b16 %v6274, %v6270
    %v6531 = vpack.c.b16 %v6275, %v6271
    %v6532 = vpack.c.b16 %v6280, %v6276
    %v6533 = vpack.c.b16 %v6281, %v6277
    %v6534 = vpack.c.b16 %v6282, %v6278
    %v6535 = vpack.c.b16 %v6283, %v6279
    %v6536 = vpack.c.b16 %v6288, %v6284
    %v6537 = vpack.c.b16 %v6289, %v6285
    %v6538 = vpack.c.b16 %v6290, %v6286
    %v6539 = vpack.c.b16 %v6291, %v6287
    %v6540 = vpack.c.b16 %v6296, %v6292
    %v6541 = vpack.c.b16 %v6297, %v6293
    %v6542 = vpack.c.b16 %v6298, %v6294
    %v6543 = vpack.c.b16 %v6299, %v6295
    %v6544 = vpack.c.b16 %v6304, %v6300
    %v6545 = vpack.c.b16 %v6305, %v6301
    %v6546 = vpack.c.b16 %v6306, %v6302
    %v6547 = vpack.c.b16 %v6307, %v6303
    %v6548 = vpack.c.b16 %v6312, %v6308
    %v6549 = vpack.c.b16 %v6313, %v6309
    %v6550 = vpack.c.b16 %v6314, %v6310
    %v6551 = vpack.c.b16 %v6315, %v6311
    %v6552 = vpack.c.b16 %v6320, %v6316
    %v6553 = vpack.c.b16 %v6321, %v6317
    %v6554 = vpack.c.b16 %v6322, %v6318
    %v6555 = vpack.c.b16 %v6323, %v6319
    %v6556 = vpack.c.b16 %v6328, %v6324
    %v6557 = vpack.c.b16 %v6329, %v6325
    %v6558 = vpack.c.b16 %v6330, %v6326
    %v6559 = vpack.c.b16 %v6331, %v6327
    %v6560 = vpack.c.b16 %v6336, %v6332
    %v6561 = vpack.c.b16 %v6337, %v6333
    %v6562 = vpack.c.b16 %v6338, %v6334
    %v6563 = vpack.c.b16 %v6339, %v6335
    %v6564 = vpack.c.b16 %v6344, %v6340
    %v6565 = vpack.c.b16 %v6345, %v6341
    %v6566 = vpack.c.b16 %v6346, %v6342
    %v6567 = vpack.c.b16 %v6347, %v6343
    %v6568 = vpack.c.b16 %v6352, %v6348
    %v6569 = vpack.c.b16 %v6353, %v6349
    %v6570 = vpack.c.b16 %v6354, %v6350
    %v6571 = vpack.c.b16 %v6355, %v6351
    %v6572 = vpack.c.b16 %v6360, %v6356
    %v6573 = vpack.c.b16 %v6361, %v6357
    %v6574 = vpack.c.b16 %v6362, %v6358
    %v6575 = vpack.c.b16 %v6363, %v6359
    %v6576 = vpack.c.b16 %v6368, %v6364
    %v6577 = vpack.c.b16 %v6369, %v6365
    %v6578 = vpack.c.b16 %v6370, %v6366
    %v6579 = vpack.c.b16 %v6371, %v6367
    %v6580 = vpack.c.b16 %v6376, %v6372
    %v6581 = vpack.c.b16 %v6377, %v6373
    %v6582 = vpack.c.b16 %v6378, %v6374
    %v6583 = vpack.c.b16 %v6379, %v6375
    %v6584 = vpack.c.b16 %v6384, %v6380
    %v6585 = vpack.c.b16 %v6385, %v6381
    %v6586 = vpack.c.b16 %v6386, %v6382
    %v6587 = vpack.c.b16 %v6387, %v6383
    %v6588 = vpack.c.b16 %v6392, %v6388
    %v6589 = vpack.c.b16 %v6393, %v6389
    %v6590 = vpack.c.b16 %v6394, %v6390
    %v6591 = vpack.c.b16 %v6395, %v6391
    %v6592 = vpack.c.b16 %v6400, %v6396
    %v6593 = vpack.c.b16 %v6401, %v6397
    %v6594 = vpack.c.b16 %v6402, %v6398
    %v6595 = vpack.c.b16 %v6403, %v6399
    %v6596 = vpack.c.b16 %v6408, %v6404
    %v6597 = vpack.c.b16 %v6409, %v6405
    %v6598 = vpack.c.b16 %v6410, %v6406
    %v6599 = vpack.c.b16 %v6411, %v6407
    %v6600 = vpack.c.b16 %v6416, %v6412
    %v6601 = vpack.c.b16 %v6417, %v6413
    %v6602 = vpack.c.b16 %v6418, %v6414
    %v6603 = vpack.c.b16 %v6419, %v6415
    %v6604 = vpack.c.b16 %v6424, %v6420
    %v6605 = vpack.c.b16 %v6425, %v6421
    %v6606 = vpack.c.b16 %v6426, %v6422
    %v6607 = vpack.c.b16 %v6427, %v6423
    %v6608 = vpack.c.b16 %v6432, %v6428
    %v6609 = vpack.c.b16 %v6433, %v6429
    %v6610 = vpack.c.b16 %v6434, %v6430
    %v6611 = vpack.c.b16 %v6435, %v6431
    %v6612 = vpack.c.b16 %v6440, %v6436
    %v6613 = vpack.c.b16 %v6441, %v6437
    %v6614 = vpack.c.b16 %v6442, %v6438
    %v6615 = vpack.c.b16 %v6443, %v6439
    %v6616 = vpack.c.b16 %v6448, %v6444
    %v6617 = vpack.c.b16 %v6449, %v6445
    %v6618 = vpack.c.b16 %v6450, %v6446
    %v6619 = vpack.c.b16 %v6451, %v6447
    %v6620 = vpack.c.b16 %v6456, %v6452
    %v6621 = vpack.c.b16 %v6457, %v6453
    %v6622 = vpack.c.b16 %v6458, %v6454
    %v6623 = vpack.c.b16 %v6459, %v6455
    %v6624 = vpack.c.b16 %v6464, %v6460
    %v6625 = vpack.c.b16 %v6465, %v6461
    %v6626 = vpack.c.b16 %v6466, %v6462
    %v6627 = vpack.c.b16 %v6467, %v6463
    %v6628 = vpack.c.b16 %v6472, %v6468
    %v6629 = vpack.c.b16 %v6473, %v6469
    %v6630 = vpack.c.b16 %v6474, %v6470
    %v6631 = vpack.c.b16 %v6475, %v6471
    %v6632 = vpack.c.b16 %v6480, %v6476
    %v6633 = vpack.c.b16 %v6481, %v6477
    %v6634 = vpack.c.b16 %v6482, %v6478
    %v6635 = vpack.c.b16 %v6483, %v6479
    %v6636 = vpack.c.b16 %v6488, %v6484
    %v6637 = vpack.c.b16 %v6489, %v6485
    %v6638 = vpack.c.b16 %v6490, %v6486
    %v6639 = vpack.c.b16 %v6491, %v6487
    %v6640 = vpack.c.b16 %v6496, %v6492
    %v6641 = vpack.c.b16 %v6497, %v6493
    %v6642 = vpack.c.b16 %v6498, %v6494
    %v6643 = vpack.c.b16 %v6499, %v6495
    %v6789 = vsel %vm5693, %v6054, 0
    %v6792 = vsel %vm5693, %v6059, 0
    %6794 = vmatprep.subr.bf16.mxu0 %v6529
    %6795 = vmatpush1.bf16.msra.mxu0 %v6528
    %6796 = vmatprep.subr.bf16.mxu0 %v6525
    %6797 = vmatpush1.bf16.msra.mxu0 %v6524
    %6798 = vmatprep.subr.bf16.mxu0 %v6521
    %6799 = vmatpush1.bf16.msra.mxu0 %v6520
    %6800 = vmatprep.subr.bf16.mxu0 %v6517
    %6801 = vmatpush1.bf16.msra.mxu0 %v6516
    %6802 = vmatprep.subr.bf16.mxu0 %v6513
    %6803 = vmatpush1.bf16.msra.mxu0 %v6512
    %6804 = vmatprep.subr.bf16.mxu0 %v6509
    %6805 = vmatpush1.bf16.msra.mxu0 %v6508
    %6806 = vmatprep.subr.bf16.mxu0 %v6505
    %6807 = vmatpush1.bf16.msra.mxu0 %v6504
    %6808 = vmatprep.subr.bf16.mxu0 %v6501
    %6809 = vmatpush1.bf16.msra.mxu0 %v6500
    %6810 = vmatprep.subr.bf16.mxu0 %v6561
    %6811 = vmatpush2.bf16.msra.mxu0 %v6560
    %6812 = vmatprep.subr.bf16.mxu0 %v6557
    %6813 = vmatpush2.bf16.msra.mxu0 %v6556
    %6814 = vmatprep.subr.bf16.mxu0 %v6553
    %6815 = vmatpush2.bf16.msra.mxu0 %v6552
    %6816 = vmatprep.subr.bf16.mxu0 %v6549
    %6817 = vmatpush2.bf16.msra.mxu0 %v6548
    %6818 = vmatprep.subr.bf16.mxu0 %v6545
    %6819 = vmatpush2.bf16.msra.mxu0 %v6544
    %6820 = vmatprep.subr.bf16.mxu0 %v6541
    %6821 = vmatpush2.bf16.msra.mxu0 %v6540
    %6822 = vmatprep.subr.bf16.mxu0 %v6537
    %6823 = vmatpush2.bf16.msra.mxu0 %v6536
    %6824 = vmatprep.subr.bf16.mxu0 %v6533
    %6825 = vmatpush2.bf16.msra.mxu0 %v6532
    %6826 = vmatprep.mubr.bf16.mxu0 %v6051
    %6827 = vmatmul.mubr.bf16.gmra.mxu0 %v6050
    %v6828 = vpop.f32.mrf.mxu0
    %v6829 = vadd.f32 %v5841, %v6828
    %v6830 = vpop.f32.mrf.mxu0
    %v6831 = vadd.f32 %v5843, %v6830
    %v6832 = vpop.f32.mrf.mxu0
    %v6833 = vadd.f32 %v5845, %v6832
    %v6834 = vpop.f32.mrf.mxu0
    %v6835 = vadd.f32 %v5847, %v6834
    %6836 = vmatprep.mubr.bf16.mxu0 %v6056
    %6837 = vmatmul.mubr.bf16.gmra.mxu0 %v6055
    %v6838 = vpop.f32.mrf.mxu0
    %v6839 = vadd.f32 %v5851, %v6838
    %v6840 = vpop.f32.mrf.mxu0
    %v6841 = vadd.f32 %v5853, %v6840
    %v6842 = vpop.f32.mrf.mxu0
    %v6843 = vadd.f32 %v5855, %v6842
    %v6844 = vpop.f32.mrf.mxu0
    %v6845 = vadd.f32 %v5857, %v6844
    %6846 = vdwg.mxu0
    %6847 = vmatprep.subr.bf16.mxu0 %v6593
    %6848 = vmatpush1.bf16.msra.mxu0 %v6592
    %6849 = vmatprep.subr.bf16.mxu0 %v6589
    %6850 = vmatpush1.bf16.msra.mxu0 %v6588
    %6851 = vmatprep.subr.bf16.mxu0 %v6585
    %6852 = vmatpush1.bf16.msra.mxu0 %v6584
    %6853 = vmatprep.subr.bf16.mxu0 %v6581
    %6854 = vmatpush1.bf16.msra.mxu0 %v6580
    %6855 = vmatprep.subr.bf16.mxu0 %v6577
    %6856 = vmatpush1.bf16.msra.mxu0 %v6576
    %6857 = vmatprep.subr.bf16.mxu0 %v6573
    %6858 = vmatpush1.bf16.msra.mxu0 %v6572
    %6859 = vmatprep.subr.bf16.mxu0 %v6569
    %6860 = vmatpush1.bf16.msra.mxu0 %v6568
    %6861 = vmatprep.subr.bf16.mxu0 %v6565
    %6862 = vmatpush1.bf16.msra.mxu0 %v6564
    %6863 = vmatprep.subr.bf16.mxu0 %v6625
    %6864 = vmatpush2.bf16.msra.mxu0 %v6624
    %6865 = vmatprep.subr.bf16.mxu0 %v6621
    %6866 = vmatpush2.bf16.msra.mxu0 %v6620
    %6867 = vmatprep.subr.bf16.mxu0 %v6617
    %6868 = vmatpush2.bf16.msra.mxu0 %v6616
    %6869 = vmatprep.subr.bf16.mxu0 %v6613
    %6870 = vmatpush2.bf16.msra.mxu0 %v6612
    %6871 = vmatprep.subr.bf16.mxu0 %v6609
    %6872 = vmatpush2.bf16.msra.mxu0 %v6608
    %6873 = vmatprep.subr.bf16.mxu0 %v6605
    %6874 = vmatpush2.bf16.msra.mxu0 %v6604
    %6875 = vmatprep.subr.bf16.mxu0 %v6601
    %6876 = vmatpush2.bf16.msra.mxu0 %v6600
    %6877 = vmatprep.subr.bf16.mxu0 %v6597
    %6878 = vmatpush2.bf16.msra.mxu0 %v6596
    %6879 = vmatprep.mubr.bf16.mxu0 %v6053
    %6880 = vmatmul.mubr.bf16.gmra.mxu0 %v6052
    %v6881 = vpop.f32.mrf.mxu0
    %v6882 = vadd.f32 %v6829, %v6881
    %v6883 = vpop.f32.mrf.mxu0
    %v6884 = vadd.f32 %v6831, %v6883
    %v6885 = vpop.f32.mrf.mxu0
    %v6886 = vadd.f32 %v6833, %v6885
    %v6887 = vpop.f32.mrf.mxu0
    %v6888 = vadd.f32 %v6835, %v6887
    %6889 = vmatprep.mubr.bf16.mxu0 %v6058
    %6890 = vmatmul.mubr.bf16.gmra.mxu0 %v6057
    %v6891 = vpop.f32.mrf.mxu0
    %v6892 = vadd.f32 %v6839, %v6891
    %v6893 = vpop.f32.mrf.mxu0
    %v6894 = vadd.f32 %v6841, %v6893
    %v6895 = vpop.f32.mrf.mxu0
    %v6896 = vadd.f32 %v6843, %v6895
    %v6897 = vpop.f32.mrf.mxu0
    %v6898 = vadd.f32 %v6845, %v6897
    %6899 = vdwg.mxu0
    %6900 = vmatprep.subr.bf16.mxu0 0
    %6901 = vmatpush1.bf16.msra.mxu0 0
    %6902 = vmatprep.subr.bf16.mxu0 0
    %6903 = vmatpush1.bf16.msra.mxu0 0
    %6904 = vmatprep.subr.bf16.mxu0 0
    %6905 = vmatpush1.bf16.msra.mxu0 0
    %6906 = vmatprep.subr.bf16.mxu0 0
    %6907 = vmatpush1.bf16.msra.mxu0 0
    %6908 = vmatprep.subr.bf16.mxu0 %v6641
    %6909 = vmatpush1.bf16.msra.mxu0 %v6640
    %6910 = vmatprep.subr.bf16.mxu0 %v6637
    %6911 = vmatpush1.bf16.msra.mxu0 %v6636
    %6912 = vmatprep.subr.bf16.mxu0 %v6633
    %6913 = vmatpush1.bf16.msra.mxu0 %v6632
    %6914 = vmatprep.subr.bf16.mxu0 %v6629
    %6915 = vmatpush1.bf16.msra.mxu0 %v6628
    %6916 = vmatprep.subr.bf16.mxu0 0
    %6917 = vmatpush2.bf16.msra.mxu0 0
    %6918 = vmatprep.subr.bf16.mxu0 0
    %6919 = vmatpush2.bf16.msra.mxu0 0
    %6920 = vmatprep.subr.bf16.mxu0 0
    %6921 = vmatpush2.bf16.msra.mxu0 0
    %6922 = vmatprep.subr.bf16.mxu0 0
    %6923 = vmatpush2.bf16.msra.mxu0 0
    %6924 = vmatprep.subr.bf16.mxu0 0
    %6925 = vmatpush2.bf16.msra.mxu0 0
    %6926 = vmatprep.subr.bf16.mxu0 0
    %6927 = vmatpush2.bf16.msra.mxu0 0
    %6928 = vmatprep.subr.bf16.mxu0 0
    %6929 = vmatpush2.bf16.msra.mxu0 0
    %6930 = vmatprep.subr.bf16.mxu0 0
    %6931 = vmatpush2.bf16.msra.mxu0 0
    %6932 = vmatprep.mubr.bf16.mxu0 0
    %6933 = vmatmul.mubr.bf16.gmra.mxu0 %v6789
    %v6934 = vpop.f32.mrf.mxu0
    %v6935 = vadd.f32 %v6882, %v6934
    %v6936 = vpop.f32.mrf.mxu0
    %v6937 = vadd.f32 %v6884, %v6936
    %v6938 = vpop.f32.mrf.mxu0
    %v6939 = vadd.f32 %v6886, %v6938
    %v6940 = vpop.f32.mrf.mxu0
    %v6941 = vadd.f32 %v6888, %v6940
    %6942 = vmatprep.mubr.bf16.mxu0 0
    %6943 = vmatmul.mubr.bf16.gmra.mxu0 %v6792
    %v6944 = vpop.f32.mrf.mxu0
    %v6945 = vadd.f32 %v6892, %v6944
    %v6946 = vpop.f32.mrf.mxu0
    %v6947 = vadd.f32 %v6894, %v6946
    %v6948 = vpop.f32.mrf.mxu0
    %v6949 = vadd.f32 %v6896, %v6948
    %v6950 = vpop.f32.mrf.mxu0
    %v6951 = vadd.f32 %v6898, %v6950
    %6952 = vdwg.mxu0
    %6953 = vmatprep.subr.bf16.mxu0 %v6531
    %6954 = vmatpush1.bf16.msra.mxu0 %v6530
    %6955 = vmatprep.subr.bf16.mxu0 %v6527
    %6956 = vmatpush1.bf16.msra.mxu0 %v6526
    %6957 = vmatprep.subr.bf16.mxu0 %v6523
    %6958 = vmatpush1.bf16.msra.mxu0 %v6522
    %6959 = vmatprep.subr.bf16.mxu0 %v6519
    %6960 = vmatpush1.bf16.msra.mxu0 %v6518
    %6961 = vmatprep.subr.bf16.mxu0 %v6515
    %6962 = vmatpush1.bf16.msra.mxu0 %v6514
    %6963 = vmatprep.subr.bf16.mxu0 %v6511
    %6964 = vmatpush1.bf16.msra.mxu0 %v6510
    %6965 = vmatprep.subr.bf16.mxu0 %v6507
    %6966 = vmatpush1.bf16.msra.mxu0 %v6506
    %6967 = vmatprep.subr.bf16.mxu0 %v6503
    %6968 = vmatpush1.bf16.msra.mxu0 %v6502
    %6969 = vmatprep.subr.bf16.mxu0 %v6563
    %6970 = vmatpush2.bf16.msra.mxu0 %v6562
    %6971 = vmatprep.subr.bf16.mxu0 %v6559
    %6972 = vmatpush2.bf16.msra.mxu0 %v6558
    %6973 = vmatprep.subr.bf16.mxu0 %v6555
    %6974 = vmatpush2.bf16.msra.mxu0 %v6554
    %6975 = vmatprep.subr.bf16.mxu0 %v6551
    %6976 = vmatpush2.bf16.msra.mxu0 %v6550
    %6977 = vmatprep.subr.bf16.mxu0 %v6547
    %6978 = vmatpush2.bf16.msra.mxu0 %v6546
    %6979 = vmatprep.subr.bf16.mxu0 %v6543
    %6980 = vmatpush2.bf16.msra.mxu0 %v6542
    %6981 = vmatprep.subr.bf16.mxu0 %v6539
    %6982 = vmatpush2.bf16.msra.mxu0 %v6538
    %6983 = vmatprep.subr.bf16.mxu0 %v6535
    %6984 = vmatpush2.bf16.msra.mxu0 %v6534
    %6985 = vmatprep.mubr.bf16.mxu0 %v6051
    %6986 = vmatmul.mubr.bf16.gmra.mxu0 %v6050
    %v6987 = vpop.f32.mrf.mxu0
    %v6988 = vadd.f32 %v6000, %v6987
    %v6989 = vpop.f32.mrf.mxu0
    %v6990 = vadd.f32 %v6002, %v6989
    %v6991 = vpop.f32.mrf.mxu0
    %v6992 = vadd.f32 %v6004, %v6991
    %v6993 = vpop.f32.mrf.mxu0
    %v6994 = vadd.f32 %v6006, %v6993
    %6995 = vmatprep.mubr.bf16.mxu0 %v6056
    %6996 = vmatmul.mubr.bf16.gmra.mxu0 %v6055
    %v6997 = vpop.f32.mrf.mxu0
    %v6998 = vadd.f32 %v6010, %v6997
    %v6999 = vpop.f32.mrf.mxu0
    %v7000 = vadd.f32 %v6012, %v6999
    %v7001 = vpop.f32.mrf.mxu0
    %v7002 = vadd.f32 %v6014, %v7001
    %v7003 = vpop.f32.mrf.mxu0
    %v7004 = vadd.f32 %v6016, %v7003
    %7005 = vdwg.mxu0
    %7006 = vmatprep.subr.bf16.mxu0 %v6595
    %7007 = vmatpush1.bf16.msra.mxu0 %v6594
    %7008 = vmatprep.subr.bf16.mxu0 %v6591
    %7009 = vmatpush1.bf16.msra.mxu0 %v6590
    %7010 = vmatprep.subr.bf16.mxu0 %v6587
    %7011 = vmatpush1.bf16.msra.mxu0 %v6586
    %7012 = vmatprep.subr.bf16.mxu0 %v6583
    %7013 = vmatpush1.bf16.msra.mxu0 %v6582
    %7014 = vmatprep.subr.bf16.mxu0 %v6579
    %7015 = vmatpush1.bf16.msra.mxu0 %v6578
    %7016 = vmatprep.subr.bf16.mxu0 %v6575
    %7017 = vmatpush1.bf16.msra.mxu0 %v6574
    %7018 = vmatprep.subr.bf16.mxu0 %v6571
    %7019 = vmatpush1.bf16.msra.mxu0 %v6570
    %7020 = vmatprep.subr.bf16.mxu0 %v6567
    %7021 = vmatpush1.bf16.msra.mxu0 %v6566
    %7022 = vmatprep.subr.bf16.mxu0 %v6627
    %7023 = vmatpush2.bf16.msra.mxu0 %v6626
    %7024 = vmatprep.subr.bf16.mxu0 %v6623
    %7025 = vmatpush2.bf16.msra.mxu0 %v6622
    %7026 = vmatprep.subr.bf16.mxu0 %v6619
    %7027 = vmatpush2.bf16.msra.mxu0 %v6618
    %7028 = vmatprep.subr.bf16.mxu0 %v6615
    %7029 = vmatpush2.bf16.msra.mxu0 %v6614
    %7030 = vmatprep.subr.bf16.mxu0 %v6611
    %7031 = vmatpush2.bf16.msra.mxu0 %v6610
    %7032 = vmatprep.subr.bf16.mxu0 %v6607
    %7033 = vmatpush2.bf16.msra.mxu0 %v6606
    %7034 = vmatprep.subr.bf16.mxu0 %v6603
    %7035 = vmatpush2.bf16.msra.mxu0 %v6602
    %7036 = vmatprep.subr.bf16.mxu0 %v6599
    %7037 = vmatpush2.bf16.msra.mxu0 %v6598
    %7038 = vmatprep.mubr.bf16.mxu0 %v6053
    %7039 = vmatmul.mubr.bf16.gmra.mxu0 %v6052
    %v7040 = vpop.f32.mrf.mxu0
    %v7041 = vadd.f32 %v6988, %v7040
    %v7042 = vpop.f32.mrf.mxu0
    %v7043 = vadd.f32 %v6990, %v7042
    %v7044 = vpop.f32.mrf.mxu0
    %v7045 = vadd.f32 %v6992, %v7044
    %v7046 = vpop.f32.mrf.mxu0
    %v7047 = vadd.f32 %v6994, %v7046
    %7048 = vmatprep.mubr.bf16.mxu0 %v6058
    %7049 = vmatmul.mubr.bf16.gmra.mxu0 %v6057
    %v7050 = vpop.f32.mrf.mxu0
    %v7051 = vadd.f32 %v6998, %v7050
    %v7052 = vpop.f32.mrf.mxu0
    %v7053 = vadd.f32 %v7000, %v7052
    %v7054 = vpop.f32.mrf.mxu0
    %v7055 = vadd.f32 %v7002, %v7054
    %v7056 = vpop.f32.mrf.mxu0
    %v7057 = vadd.f32 %v7004, %v7056
    %7058 = vdwg.mxu0
    %7059 = vmatprep.subr.bf16.mxu0 0
    %7060 = vmatpush1.bf16.msra.mxu0 0
    %7061 = vmatprep.subr.bf16.mxu0 0
    %7062 = vmatpush1.bf16.msra.mxu0 0
    %7063 = vmatprep.subr.bf16.mxu0 0
    %7064 = vmatpush1.bf16.msra.mxu0 0
    %7065 = vmatprep.subr.bf16.mxu0 0
    %7066 = vmatpush1.bf16.msra.mxu0 0
    %7067 = vmatprep.subr.bf16.mxu0 %v6643
    %7068 = vmatpush1.bf16.msra.mxu0 %v6642
    %7069 = vmatprep.subr.bf16.mxu0 %v6639
    %7070 = vmatpush1.bf16.msra.mxu0 %v6638
    %7071 = vmatprep.subr.bf16.mxu0 %v6635
    %7072 = vmatpush1.bf16.msra.mxu0 %v6634
    %7073 = vmatprep.subr.bf16.mxu0 %v6631
    %7074 = vmatpush1.bf16.msra.mxu0 %v6630
    %7075 = vmatprep.subr.bf16.mxu0 0
    %7076 = vmatpush2.bf16.msra.mxu0 0
    %7077 = vmatprep.subr.bf16.mxu0 0
    %7078 = vmatpush2.bf16.msra.mxu0 0
    %7079 = vmatprep.subr.bf16.mxu0 0
    %7080 = vmatpush2.bf16.msra.mxu0 0
    %7081 = vmatprep.subr.bf16.mxu0 0
    %7082 = vmatpush2.bf16.msra.mxu0 0
    %7083 = vmatprep.subr.bf16.mxu0 0
    %7084 = vmatpush2.bf16.msra.mxu0 0
    %7085 = vmatprep.subr.bf16.mxu0 0
    %7086 = vmatpush2.bf16.msra.mxu0 0
    %7087 = vmatprep.subr.bf16.mxu0 0
    %7088 = vmatpush2.bf16.msra.mxu0 0
    %7089 = vmatprep.subr.bf16.mxu0 0
    %7090 = vmatpush2.bf16.msra.mxu0 0
    %7091 = vmatprep.mubr.bf16.mxu0 0
    %7092 = vmatmul.mubr.bf16.gmra.mxu0 %v6789
    %v7093 = vpop.f32.mrf.mxu0
    %v7094 = vadd.f32 %v7041, %v7093
    %v7095 = vpop.f32.mrf.mxu0
    %v7096 = vadd.f32 %v7043, %v7095
    %v7097 = vpop.f32.mrf.mxu0
    %v7098 = vadd.f32 %v7045, %v7097
    %v7099 = vpop.f32.mrf.mxu0
    %v7100 = vadd.f32 %v7047, %v7099
    %7101 = vmatprep.mubr.bf16.mxu0 0
    %7102 = vmatmul.mubr.bf16.gmra.mxu0 %v6792
    %v7103 = vpop.f32.mrf.mxu0
    %v7104 = vadd.f32 %v7051, %v7103
    %v7105 = vpop.f32.mrf.mxu0
    %v7106 = vadd.f32 %v7053, %v7105
    %v7107 = vpop.f32.mrf.mxu0
    %v7108 = vadd.f32 %v7055, %v7107
    %v7109 = vpop.f32.mrf.mxu0
    %v7110 = vadd.f32 %v7057, %v7109
    %7111 = vdwg.mxu0
    %v7112 = vld [vmem:[#allocation2] sm:$0xee]
    %v7113 = vld [vmem:[#allocation2 + $0x8] sm:$0xee]
    %v7114 = vld [vmem:[#allocation2 + $0x10] sm:$0xe]
    %v7115 = vld [vmem:[#allocation2 + $0x3c] sm:$0xee]
    %v7116 = vld [vmem:[#allocation2 + $0x44] sm:$0xee]
    %v7117 = vld [vmem:[#allocation2 + $0x4c] sm:$0xe]
    %vm7130 = vcmask 1042432
    %vm7131 = vcmask 1046532
    %vm7132 = vmor %vm7130, %vm7131
    %v7133 = vrot.slane %v7112, 5
    %v7134 = vrot.slane %v7133, 4
    %v7135 = vrot.slane %v4484, 5
    %v7136 = vsel %vm7132, %v7134, %v7135
    %v7137 = vrot.slane %v7113, 5
    %v7138 = vrot.slane %v7137, 4
    %v7139 = vrot.slane %v4485, 5
    %v7140 = vsel %vm7132, %v7138, %v7139
    %v7141 = vrot.slane %v7114, 5
    %v7142 = vrot.slane %v7141, 4
    %v7143 = vrot.slane %v4486, 5
    %v7144 = vsel %vm7132, %v7142, %v7143
    %v7145 = vrot.slane %v7135, 4
    %v7146 = vrot.slane %v4637, 5
    %v7147 = vsel %vm7132, %v7145, %v7146
    %v7148 = vrot.slane %v7139, 4
    %v7149 = vrot.slane %v4638, 5
    %v7150 = vsel %vm7132, %v7148, %v7149
    %v7151 = vrot.slane %v7143, 4
    %v7152 = vrot.slane %v4639, 5
    %v7153 = vsel %vm7132, %v7151, %v7152
    %v7154 = vrot.slane %v7115, 5
    %v7155 = vrot.slane %v7154, 4
    %v7156 = vrot.slane %v4490, 5
    %v7157 = vsel %vm7132, %v7155, %v7156
    %v7158 = vrot.slane %v7116, 5
    %v7159 = vrot.slane %v7158, 4
    %v7160 = vrot.slane %v4491, 5
    %v7161 = vsel %vm7132, %v7159, %v7160
    %v7162 = vrot.slane %v7117, 5
    %v7163 = vrot.slane %v7162, 4
    %v7164 = vrot.slane %v4492, 5
    %v7165 = vsel %vm7132, %v7163, %v7164
    %v7166 = vrot.slane %v7156, 4
    %v7167 = vrot.slane %v4640, 5
    %v7168 = vsel %vm7132, %v7166, %v7167
    %v7169 = vrot.slane %v7160, 4
    %v7170 = vrot.slane %v4641, 5
    %v7171 = vsel %vm7132, %v7169, %v7170
    %v7172 = vrot.slane %v7164, 4
    %v7173 = vrot.slane %v4642, 5
    %v7174 = vsel %vm7132, %v7172, %v7173
    %s7175 = scalar_lea.vmem [#allocation9], 2304
    %v7176 = vld [vmem:[%s7175] sm:$0xff]
    %v7177 = vld [vmem:[%s7175 + $0x8] sm:$0xff]
    %v7178 = vld [vmem:[%s7175 + $0x10] sm:$0xff]
    %v7179 = vld [vmem:[%s7175 + $0x18] sm:$0xff]
    %v7180 = vld [vmem:[%s7175 + $0x20] sm:$0xff]
    %v7181 = vld [vmem:[%s7175 + $0x28] sm:$0xff]
    %v7182 = vld [vmem:[%s7175 + $0x30] sm:$0xff]
    %v7183 = vld [vmem:[%s7175 + $0x38] sm:$0xff]
    %v7184 = vld [vmem:[%s7175 + $0x40] sm:$0xff]
    %v7185 = vld [vmem:[%s7175 + $0x48] sm:$0xff]
    %v7186 = vld [vmem:[%s7175 + $0x50] sm:$0xff]
    %v7187 = vld [vmem:[%s7175 + $0x58] sm:$0xff]
    %v7188 = vld [vmem:[%s7175 + $0x60] sm:$0xff]
    %v7189 = vld [vmem:[%s7175 + $0x68] sm:$0xff]
    %v7190 = vld [vmem:[%s7175 + $0x70] sm:$0xff]
    %v7191 = vld [vmem:[%s7175 + $0x78] sm:$0xff]
    %v7192 = vld [vmem:[%s7175 + $0x80] sm:$0xff]
    %v7193 = vld [vmem:[%s7175 + $0x88] sm:$0xff]
    %v7194 = vld [vmem:[%s7175 + $0x90] sm:$0xff]
    %v7195 = vld [vmem:[%s7175 + $0x98] sm:$0xff]
    %v7196 = vld [vmem:[%s7175 + $0xa0] sm:$0xff]
    %v7197 = vld [vmem:[%s7175 + $0xa8] sm:$0xff]
    %v7198 = vld [vmem:[%s7175 + $0xb0] sm:$0xff]
    %v7199 = vld [vmem:[%s7175 + $0xb8] sm:$0xff]
    %v7200 = vld [vmem:[%s7175 + $0xc0] sm:$0xff]
    %v7201 = vld [vmem:[%s7175 + $0xc8] sm:$0xff]
    %v7202 = vld [vmem:[%s7175 + $0xd0] sm:$0xff]
    %v7203 = vld [vmem:[%s7175 + $0xd8] sm:$0xff]
    %v7204 = vld [vmem:[%s7175 + $0xe0] sm:$0xff]
    %v7205 = vld [vmem:[%s7175 + $0xe8] sm:$0xff]
    %v7206 = vld [vmem:[%s7175 + $0xf0] sm:$0xff]
    %v7207 = vld [vmem:[%s7175 + $0xf8] sm:$0xff]
    %v7208 = vld [vmem:[%s7175 + $0x100] sm:$0xff]
    %v7209 = vld [vmem:[%s7175 + $0x108] sm:$0xff]
    %v7210 = vld [vmem:[%s7175 + $0x110] sm:$0xff]
    %v7211 = vld [vmem:[%s7175 + $0x118] sm:$0xff]
    %v7212 = vld [vmem:[%s7175 + $0x120] sm:$0xff]
    %v7213 = vld [vmem:[%s7175 + $0x128] sm:$0xff]
    %v7214 = vld [vmem:[%s7175 + $0x130] sm:$0xff]
    %v7215 = vld [vmem:[%s7175 + $0x138] sm:$0xff]
    %v7216 = vld [vmem:[%s7175 + $0x140] sm:$0xff]
    %v7217 = vld [vmem:[%s7175 + $0x148] sm:$0xff]
    %v7218 = vld [vmem:[%s7175 + $0x150] sm:$0xff]
    %v7219 = vld [vmem:[%s7175 + $0x158] sm:$0xff]
    %v7220 = vld [vmem:[%s7175 + $0x160] sm:$0xff]
    %v7221 = vld [vmem:[%s7175 + $0x168] sm:$0xff]
    %v7222 = vld [vmem:[%s7175 + $0x170] sm:$0xff]
    %v7223 = vld [vmem:[%s7175 + $0x178] sm:$0xff]
    %v7224 = vld [vmem:[%s7175 + $0x180] sm:$0xff]
    %v7225 = vld [vmem:[%s7175 + $0x188] sm:$0xff]
    %v7226 = vld [vmem:[%s7175 + $0x190] sm:$0xff]
    %v7227 = vld [vmem:[%s7175 + $0x198] sm:$0xff]
    %v7228 = vld [vmem:[%s7175 + $0x1a0] sm:$0xff]
    %v7229 = vld [vmem:[%s7175 + $0x1a8] sm:$0xff]
    %v7230 = vld [vmem:[%s7175 + $0x1b0] sm:$0xff]
    %v7231 = vld [vmem:[%s7175 + $0x1b8] sm:$0xff]
    %v7232 = vld [vmem:[%s7175 + $0x1c0] sm:$0xff]
    %v7233 = vld [vmem:[%s7175 + $0x1c8] sm:$0xff]
    %v7234 = vld [vmem:[%s7175 + $0x1d0] sm:$0xff]
    %v7235 = vld [vmem:[%s7175 + $0x1d8] sm:$0xff]
    %v7236 = vld [vmem:[%s7175 + $0x1e0] sm:$0xff]
    %v7237 = vld [vmem:[%s7175 + $0x1e8] sm:$0xff]
    %v7238 = vld [vmem:[%s7175 + $0x1f0] sm:$0xff]
    %v7239 = vld [vmem:[%s7175 + $0x1f8] sm:$0xff]
    %v7240 = vld [vmem:[%s7175 + $0x200] sm:$0xff]
    %v7241 = vld [vmem:[%s7175 + $0x208] sm:$0xff]
    %v7242 = vld [vmem:[%s7175 + $0x210] sm:$0xff]
    %v7243 = vld [vmem:[%s7175 + $0x218] sm:$0xff]
    %v7244 = vld [vmem:[%s7175 + $0x220] sm:$0xff]
    %v7245 = vld [vmem:[%s7175 + $0x228] sm:$0xff]
    %v7246 = vld [vmem:[%s7175 + $0x230] sm:$0xff]
    %v7247 = vld [vmem:[%s7175 + $0x238] sm:$0xff]
    %v7248 = vld [vmem:[%s7175 + $0x240] sm:$0xff]
    %v7249 = vld [vmem:[%s7175 + $0x248] sm:$0xff]
    %v7250 = vld [vmem:[%s7175 + $0x250] sm:$0xff]
    %v7251 = vld [vmem:[%s7175 + $0x258] sm:$0xff]
    %v7252 = vld [vmem:[%s7175 + $0x260] sm:$0xff]
    %v7253 = vld [vmem:[%s7175 + $0x268] sm:$0xff]
    %v7254 = vld [vmem:[%s7175 + $0x270] sm:$0xff]
    %v7255 = vld [vmem:[%s7175 + $0x278] sm:$0xff]
    %v7256 = vld [vmem:[%s7175 + $0x280] sm:$0xff]
    %v7257 = vld [vmem:[%s7175 + $0x288] sm:$0xff]
    %v7258 = vld [vmem:[%s7175 + $0x290] sm:$0xff]
    %v7259 = vld [vmem:[%s7175 + $0x298] sm:$0xff]
    %v7260 = vld [vmem:[%s7175 + $0x2a0] sm:$0xff]
    %v7261 = vld [vmem:[%s7175 + $0x2a8] sm:$0xff]
    %v7262 = vld [vmem:[%s7175 + $0x2b0] sm:$0xff]
    %v7263 = vld [vmem:[%s7175 + $0x2b8] sm:$0xff]
    %v7264 = vld [vmem:[%s7175 + $0x2c0] sm:$0xff]
    %v7265 = vld [vmem:[%s7175 + $0x2c8] sm:$0xff]
    %v7266 = vld [vmem:[%s7175 + $0x2d0] sm:$0xff]
    %v7267 = vld [vmem:[%s7175 + $0x2d8] sm:$0xff]
    %v7268 = vld [vmem:[%s7175 + $0x2e0] sm:$0xff]
    %v7269 = vld [vmem:[%s7175 + $0x2e8] sm:$0xff]
    %v7270 = vld [vmem:[%s7175 + $0x2f0] sm:$0xff]
    %v7271 = vld [vmem:[%s7175 + $0x2f8] sm:$0xff]
    %v7272 = vld [vmem:[%s7175 + $0x300] sm:$0xff]
    %v7273 = vld [vmem:[%s7175 + $0x308] sm:$0xff]
    %v7274 = vld [vmem:[%s7175 + $0x310] sm:$0xff]
    %v7275 = vld [vmem:[%s7175 + $0x318] sm:$0xff]
    %v7276 = vld [vmem:[%s7175 + $0x320] sm:$0xff]
    %v7277 = vld [vmem:[%s7175 + $0x328] sm:$0xff]
    %v7278 = vld [vmem:[%s7175 + $0x330] sm:$0xff]
    %v7279 = vld [vmem:[%s7175 + $0x338] sm:$0xff]
    %v7280 = vld [vmem:[%s7175 + $0x340] sm:$0xff]
    %v7281 = vld [vmem:[%s7175 + $0x348] sm:$0xff]
    %v7282 = vld [vmem:[%s7175 + $0x350] sm:$0xff]
    %v7283 = vld [vmem:[%s7175 + $0x358] sm:$0xff]
    %v7284 = vld [vmem:[%s7175 + $0x360] sm:$0xff]
    %v7285 = vld [vmem:[%s7175 + $0x368] sm:$0xff]
    %v7286 = vld [vmem:[%s7175 + $0x370] sm:$0xff]
    %v7287 = vld [vmem:[%s7175 + $0x378] sm:$0xff]
    %v7288 = vld [vmem:[%s7175 + $0x380] sm:$0xff]
    %v7289 = vld [vmem:[%s7175 + $0x388] sm:$0xff]
    %v7290 = vld [vmem:[%s7175 + $0x390] sm:$0xff]
    %v7291 = vld [vmem:[%s7175 + $0x398] sm:$0xff]
    %v7292 = vld [vmem:[%s7175 + $0x3a0] sm:$0xff]
    %v7293 = vld [vmem:[%s7175 + $0x3a8] sm:$0xff]
    %v7294 = vld [vmem:[%s7175 + $0x3b0] sm:$0xff]
    %v7295 = vld [vmem:[%s7175 + $0x3b8] sm:$0xff]
    %v7296 = vld [vmem:[%s7175 + $0x3c0] sm:$0xff]
    %v7297 = vld [vmem:[%s7175 + $0x3c8] sm:$0xff]
    %v7298 = vld [vmem:[%s7175 + $0x3d0] sm:$0xff]
    %v7299 = vld [vmem:[%s7175 + $0x3d8] sm:$0xff]
    %v7300 = vld [vmem:[%s7175 + $0x3e0] sm:$0xff]
    %v7301 = vld [vmem:[%s7175 + $0x3e8] sm:$0xff]
    %v7302 = vld [vmem:[%s7175 + $0x3f0] sm:$0xff]
    %v7303 = vld [vmem:[%s7175 + $0x3f8] sm:$0xff]
    %v7304 = vld [vmem:[%s7175 + $0x400] sm:$0xff]
    %v7305 = vld [vmem:[%s7175 + $0x408] sm:$0xff]
    %v7306 = vld [vmem:[%s7175 + $0x410] sm:$0xff]
    %v7307 = vld [vmem:[%s7175 + $0x418] sm:$0xff]
    %v7308 = vld [vmem:[%s7175 + $0x420] sm:$0xff]
    %v7309 = vld [vmem:[%s7175 + $0x428] sm:$0xff]
    %v7310 = vld [vmem:[%s7175 + $0x430] sm:$0xff]
    %v7311 = vld [vmem:[%s7175 + $0x438] sm:$0xff]
    %v7312 = vld [vmem:[%s7175 + $0x440] sm:$0xff]
    %v7313 = vld [vmem:[%s7175 + $0x448] sm:$0xff]
    %v7314 = vld [vmem:[%s7175 + $0x450] sm:$0xff]
    %v7315 = vld [vmem:[%s7175 + $0x458] sm:$0xff]
    %v7316 = vld [vmem:[%s7175 + $0x460] sm:$0xff]
    %v7317 = vld [vmem:[%s7175 + $0x468] sm:$0xff]
    %v7318 = vld [vmem:[%s7175 + $0x470] sm:$0xff]
    %v7319 = vld [vmem:[%s7175 + $0x478] sm:$0xff]
    %v7320 = vunpack.c.l.b16 %v7136
    %v7321 = vunpack.c.h.b16 %v7136
    %v7322 = vunpack.c.l.b16 %v7140
    %v7323 = vunpack.c.h.b16 %v7140
    %v7324 = vunpack.c.l.b16 %v7144
    %v7325 = vunpack.c.l.b16 %v7147
    %v7326 = vunpack.c.h.b16 %v7147
    %v7327 = vunpack.c.l.b16 %v7150
    %v7328 = vunpack.c.h.b16 %v7150
    %v7329 = vunpack.c.l.b16 %v7153
    %v7330 = vunpack.c.l.b16 %v7157
    %v7331 = vunpack.c.h.b16 %v7157
    %v7332 = vunpack.c.l.b16 %v7161
    %v7333 = vunpack.c.h.b16 %v7161
    %v7334 = vunpack.c.l.b16 %v7165
    %v7335 = vunpack.c.l.b16 %v7168
    %v7336 = vunpack.c.h.b16 %v7168
    %v7337 = vunpack.c.l.b16 %v7171
    %v7338 = vunpack.c.h.b16 %v7171
    %v7339 = vunpack.c.l.b16 %v7174
    %v7340 = vpack.c.b16 %v7325, %v7320
    %v7341 = vpack.c.b16 %v7326, %v7321
    %v7342 = vpack.c.b16 %v7327, %v7322
    %v7343 = vpack.c.b16 %v7328, %v7323
    %v7344 = vpack.c.b16 %v7329, %v7324
    %v7345 = vpack.c.b16 %v7335, %v7330
    %v7346 = vpack.c.b16 %v7336, %v7331
    %v7347 = vpack.c.b16 %v7337, %v7332
    %v7348 = vpack.c.b16 %v7338, %v7333
    %v7349 = vpack.c.b16 %v7339, %v7334
    %v7502 = vunpack.c.l.b16 %v7176
    %v7503 = vunpack.c.h.b16 %v7176
    %v7504 = vunpack.c.l.b16 %v7177
    %v7505 = vunpack.c.h.b16 %v7177
    %v7506 = vunpack.c.l.b16 %v7178
    %v7507 = vunpack.c.h.b16 %v7178
    %v7508 = vunpack.c.l.b16 %v7179
    %v7509 = vunpack.c.h.b16 %v7179
    %v7510 = vunpack.c.l.b16 %v7180
    %v7511 = vunpack.c.h.b16 %v7180
    %v7512 = vunpack.c.l.b16 %v7181
    %v7513 = vunpack.c.h.b16 %v7181
    %v7514 = vunpack.c.l.b16 %v7182
    %v7515 = vunpack.c.h.b16 %v7182
    %v7516 = vunpack.c.l.b16 %v7183
    %v7517 = vunpack.c.h.b16 %v7183
    %v7518 = vunpack.c.l.b16 %v7184
    %v7519 = vunpack.c.h.b16 %v7184
    %v7520 = vunpack.c.l.b16 %v7185
    %v7521 = vunpack.c.h.b16 %v7185
    %v7522 = vunpack.c.l.b16 %v7186
    %v7523 = vunpack.c.h.b16 %v7186
    %v7524 = vunpack.c.l.b16 %v7187
    %v7525 = vunpack.c.h.b16 %v7187
    %v7526 = vunpack.c.l.b16 %v7188
    %v7527 = vunpack.c.h.b16 %v7188
    %v7528 = vunpack.c.l.b16 %v7189
    %v7529 = vunpack.c.h.b16 %v7189
    %v7530 = vunpack.c.l.b16 %v7190
    %v7531 = vunpack.c.h.b16 %v7190
    %v7532 = vunpack.c.l.b16 %v7191
    %v7533 = vunpack.c.h.b16 %v7191
    %v7534 = vunpack.c.l.b16 %v7192
    %v7535 = vunpack.c.h.b16 %v7192
    %v7536 = vunpack.c.l.b16 %v7193
    %v7537 = vunpack.c.h.b16 %v7193
    %v7538 = vunpack.c.l.b16 %v7194
    %v7539 = vunpack.c.h.b16 %v7194
    %v7540 = vunpack.c.l.b16 %v7195
    %v7541 = vunpack.c.h.b16 %v7195
    %v7542 = vunpack.c.l.b16 %v7196
    %v7543 = vunpack.c.h.b16 %v7196
    %v7544 = vunpack.c.l.b16 %v7197
    %v7545 = vunpack.c.h.b16 %v7197
    %v7546 = vunpack.c.l.b16 %v7198
    %v7547 = vunpack.c.h.b16 %v7198
    %v7548 = vunpack.c.l.b16 %v7199
    %v7549 = vunpack.c.h.b16 %v7199
    %v7550 = vunpack.c.l.b16 %v7200
    %v7551 = vunpack.c.h.b16 %v7200
    %v7552 = vunpack.c.l.b16 %v7201
    %v7553 = vunpack.c.h.b16 %v7201
    %v7554 = vunpack.c.l.b16 %v7202
    %v7555 = vunpack.c.h.b16 %v7202
    %v7556 = vunpack.c.l.b16 %v7203
    %v7557 = vunpack.c.h.b16 %v7203
    %v7558 = vunpack.c.l.b16 %v7204
    %v7559 = vunpack.c.h.b16 %v7204
    %v7560 = vunpack.c.l.b16 %v7205
    %v7561 = vunpack.c.h.b16 %v7205
    %v7562 = vunpack.c.l.b16 %v7206
    %v7563 = vunpack.c.h.b16 %v7206
    %v7564 = vunpack.c.l.b16 %v7207
    %v7565 = vunpack.c.h.b16 %v7207
    %v7566 = vunpack.c.l.b16 %v7208
    %v7567 = vunpack.c.h.b16 %v7208
    %v7568 = vunpack.c.l.b16 %v7209
    %v7569 = vunpack.c.h.b16 %v7209
    %v7570 = vunpack.c.l.b16 %v7210
    %v7571 = vunpack.c.h.b16 %v7210
    %v7572 = vunpack.c.l.b16 %v7211
    %v7573 = vunpack.c.h.b16 %v7211
    %v7574 = vunpack.c.l.b16 %v7212
    %v7575 = vunpack.c.h.b16 %v7212
    %v7576 = vunpack.c.l.b16 %v7213
    %v7577 = vunpack.c.h.b16 %v7213
    %v7578 = vunpack.c.l.b16 %v7214
    %v7579 = vunpack.c.h.b16 %v7214
    %v7580 = vunpack.c.l.b16 %v7215
    %v7581 = vunpack.c.h.b16 %v7215
    %v7582 = vunpack.c.l.b16 %v7216
    %v7583 = vunpack.c.h.b16 %v7216
    %v7584 = vunpack.c.l.b16 %v7217
    %v7585 = vunpack.c.h.b16 %v7217
    %v7586 = vunpack.c.l.b16 %v7218
    %v7587 = vunpack.c.h.b16 %v7218
    %v7588 = vunpack.c.l.b16 %v7219
    %v7589 = vunpack.c.h.b16 %v7219
    %v7590 = vunpack.c.l.b16 %v7220
    %v7591 = vunpack.c.h.b16 %v7220
    %v7592 = vunpack.c.l.b16 %v7221
    %v7593 = vunpack.c.h.b16 %v7221
    %v7594 = vunpack.c.l.b16 %v7222
    %v7595 = vunpack.c.h.b16 %v7222
    %v7596 = vunpack.c.l.b16 %v7223
    %v7597 = vunpack.c.h.b16 %v7223
    %v7598 = vunpack.c.l.b16 %v7224
    %v7599 = vunpack.c.h.b16 %v7224
    %v7600 = vunpack.c.l.b16 %v7225
    %v7601 = vunpack.c.h.b16 %v7225
    %v7602 = vunpack.c.l.b16 %v7226
    %v7603 = vunpack.c.h.b16 %v7226
    %v7604 = vunpack.c.l.b16 %v7227
    %v7605 = vunpack.c.h.b16 %v7227
    %v7606 = vunpack.c.l.b16 %v7228
    %v7607 = vunpack.c.h.b16 %v7228
    %v7608 = vunpack.c.l.b16 %v7229
    %v7609 = vunpack.c.h.b16 %v7229
    %v7610 = vunpack.c.l.b16 %v7230
    %v7611 = vunpack.c.h.b16 %v7230
    %v7612 = vunpack.c.l.b16 %v7231
    %v7613 = vunpack.c.h.b16 %v7231
    %v7614 = vunpack.c.l.b16 %v7232
    %v7615 = vunpack.c.h.b16 %v7232
    %v7616 = vunpack.c.l.b16 %v7233
    %v7617 = vunpack.c.h.b16 %v7233
    %v7618 = vunpack.c.l.b16 %v7234
    %v7619 = vunpack.c.h.b16 %v7234
    %v7620 = vunpack.c.l.b16 %v7235
    %v7621 = vunpack.c.h.b16 %v7235
    %v7622 = vunpack.c.l.b16 %v7236
    %v7623 = vunpack.c.h.b16 %v7236
    %v7624 = vunpack.c.l.b16 %v7237
    %v7625 = vunpack.c.h.b16 %v7237
    %v7626 = vunpack.c.l.b16 %v7238
    %v7627 = vunpack.c.h.b16 %v7238
    %v7628 = vunpack.c.l.b16 %v7239
    %v7629 = vunpack.c.h.b16 %v7239
    %v7630 = vunpack.c.l.b16 %v7240
    %v7631 = vunpack.c.h.b16 %v7240
    %v7632 = vunpack.c.l.b16 %v7241
    %v7633 = vunpack.c.h.b16 %v7241
    %v7634 = vunpack.c.l.b16 %v7242
    %v7635 = vunpack.c.h.b16 %v7242
    %v7636 = vunpack.c.l.b16 %v7243
    %v7637 = vunpack.c.h.b16 %v7243
    %v7638 = vunpack.c.l.b16 %v7244
    %v7639 = vunpack.c.h.b16 %v7244
    %v7640 = vunpack.c.l.b16 %v7245
    %v7641 = vunpack.c.h.b16 %v7245
    %v7642 = vunpack.c.l.b16 %v7246
    %v7643 = vunpack.c.h.b16 %v7246
    %v7644 = vunpack.c.l.b16 %v7247
    %v7645 = vunpack.c.h.b16 %v7247
    %v7646 = vunpack.c.l.b16 %v7248
    %v7647 = vunpack.c.h.b16 %v7248
    %v7648 = vunpack.c.l.b16 %v7249
    %v7649 = vunpack.c.h.b16 %v7249
    %v7650 = vunpack.c.l.b16 %v7250
    %v7651 = vunpack.c.h.b16 %v7250
    %v7652 = vunpack.c.l.b16 %v7251
    %v7653 = vunpack.c.h.b16 %v7251
    %v7654 = vunpack.c.l.b16 %v7252
    %v7655 = vunpack.c.h.b16 %v7252
    %v7656 = vunpack.c.l.b16 %v7253
    %v7657 = vunpack.c.h.b16 %v7253
    %v7658 = vunpack.c.l.b16 %v7254
    %v7659 = vunpack.c.h.b16 %v7254
    %v7660 = vunpack.c.l.b16 %v7255
    %v7661 = vunpack.c.h.b16 %v7255
    %v7662 = vunpack.c.l.b16 %v7256
    %v7663 = vunpack.c.h.b16 %v7256
    %v7664 = vunpack.c.l.b16 %v7257
    %v7665 = vunpack.c.h.b16 %v7257
    %v7666 = vunpack.c.l.b16 %v7258
    %v7667 = vunpack.c.h.b16 %v7258
    %v7668 = vunpack.c.l.b16 %v7259
    %v7669 = vunpack.c.h.b16 %v7259
    %v7670 = vunpack.c.l.b16 %v7260
    %v7671 = vunpack.c.h.b16 %v7260
    %v7672 = vunpack.c.l.b16 %v7261
    %v7673 = vunpack.c.h.b16 %v7261
    %v7674 = vunpack.c.l.b16 %v7262
    %v7675 = vunpack.c.h.b16 %v7262
    %v7676 = vunpack.c.l.b16 %v7263
    %v7677 = vunpack.c.h.b16 %v7263
    %v7678 = vunpack.c.l.b16 %v7264
    %v7679 = vunpack.c.h.b16 %v7264
    %v7680 = vunpack.c.l.b16 %v7265
    %v7681 = vunpack.c.h.b16 %v7265
    %v7682 = vunpack.c.l.b16 %v7266
    %v7683 = vunpack.c.h.b16 %v7266
    %v7684 = vunpack.c.l.b16 %v7267
    %v7685 = vunpack.c.h.b16 %v7267
    %v7686 = vunpack.c.l.b16 %v7268
    %v7687 = vunpack.c.h.b16 %v7268
    %v7688 = vunpack.c.l.b16 %v7269
    %v7689 = vunpack.c.h.b16 %v7269
    %v7690 = vunpack.c.l.b16 %v7270
    %v7691 = vunpack.c.h.b16 %v7270
    %v7692 = vunpack.c.l.b16 %v7271
    %v7693 = vunpack.c.h.b16 %v7271
    %v7694 = vunpack.c.l.b16 %v7272
    %v7695 = vunpack.c.h.b16 %v7272
    %v7696 = vunpack.c.l.b16 %v7273
    %v7697 = vunpack.c.h.b16 %v7273
    %v7698 = vunpack.c.l.b16 %v7274
    %v7699 = vunpack.c.h.b16 %v7274
    %v7700 = vunpack.c.l.b16 %v7275
    %v7701 = vunpack.c.h.b16 %v7275
    %v7702 = vunpack.c.l.b16 %v7276
    %v7703 = vunpack.c.h.b16 %v7276
    %v7704 = vunpack.c.l.b16 %v7277
    %v7705 = vunpack.c.h.b16 %v7277
    %v7706 = vunpack.c.l.b16 %v7278
    %v7707 = vunpack.c.h.b16 %v7278
    %v7708 = vunpack.c.l.b16 %v7279
    %v7709 = vunpack.c.h.b16 %v7279
    %v7710 = vunpack.c.l.b16 %v7280
    %v7711 = vunpack.c.h.b16 %v7280
    %v7712 = vunpack.c.l.b16 %v7281
    %v7713 = vunpack.c.h.b16 %v7281
    %v7714 = vunpack.c.l.b16 %v7282
    %v7715 = vunpack.c.h.b16 %v7282
    %v7716 = vunpack.c.l.b16 %v7283
    %v7717 = vunpack.c.h.b16 %v7283
    %v7718 = vunpack.c.l.b16 %v7284
    %v7719 = vunpack.c.h.b16 %v7284
    %v7720 = vunpack.c.l.b16 %v7285
    %v7721 = vunpack.c.h.b16 %v7285
    %v7722 = vunpack.c.l.b16 %v7286
    %v7723 = vunpack.c.h.b16 %v7286
    %v7724 = vunpack.c.l.b16 %v7287
    %v7725 = vunpack.c.h.b16 %v7287
    %v7726 = vunpack.c.l.b16 %v7288
    %v7727 = vunpack.c.h.b16 %v7288
    %v7728 = vunpack.c.l.b16 %v7289
    %v7729 = vunpack.c.h.b16 %v7289
    %v7730 = vunpack.c.l.b16 %v7290
    %v7731 = vunpack.c.h.b16 %v7290
    %v7732 = vunpack.c.l.b16 %v7291
    %v7733 = vunpack.c.h.b16 %v7291
    %v7734 = vunpack.c.l.b16 %v7292
    %v7735 = vunpack.c.h.b16 %v7292
    %v7736 = vunpack.c.l.b16 %v7293
    %v7737 = vunpack.c.h.b16 %v7293
    %v7738 = vunpack.c.l.b16 %v7294
    %v7739 = vunpack.c.h.b16 %v7294
    %v7740 = vunpack.c.l.b16 %v7295
    %v7741 = vunpack.c.h.b16 %v7295
    %v7742 = vunpack.c.l.b16 %v7296
    %v7743 = vunpack.c.h.b16 %v7296
    %v7744 = vunpack.c.l.b16 %v7297
    %v7745 = vunpack.c.h.b16 %v7297
    %v7746 = vunpack.c.l.b16 %v7298
    %v7747 = vunpack.c.h.b16 %v7298
    %v7748 = vunpack.c.l.b16 %v7299
    %v7749 = vunpack.c.h.b16 %v7299
    %v7750 = vunpack.c.l.b16 %v7300
    %v7751 = vunpack.c.h.b16 %v7300
    %v7752 = vunpack.c.l.b16 %v7301
    %v7753 = vunpack.c.h.b16 %v7301
    %v7754 = vunpack.c.l.b16 %v7302
    %v7755 = vunpack.c.h.b16 %v7302
    %v7756 = vunpack.c.l.b16 %v7303
    %v7757 = vunpack.c.h.b16 %v7303
    %v7758 = vunpack.c.l.b16 %v7304
    %v7759 = vunpack.c.h.b16 %v7304
    %v7760 = vunpack.c.l.b16 %v7305
    %v7761 = vunpack.c.h.b16 %v7305
    %v7762 = vunpack.c.l.b16 %v7306
    %v7763 = vunpack.c.h.b16 %v7306
    %v7764 = vunpack.c.l.b16 %v7307
    %v7765 = vunpack.c.h.b16 %v7307
    %v7766 = vunpack.c.l.b16 %v7308
    %v7767 = vunpack.c.h.b16 %v7308
    %v7768 = vunpack.c.l.b16 %v7309
    %v7769 = vunpack.c.h.b16 %v7309
    %v7770 = vunpack.c.l.b16 %v7310
    %v7771 = vunpack.c.h.b16 %v7310
    %v7772 = vunpack.c.l.b16 %v7311
    %v7773 = vunpack.c.h.b16 %v7311
    %v7774 = vunpack.c.l.b16 %v7312
    %v7775 = vunpack.c.h.b16 %v7312
    %v7776 = vunpack.c.l.b16 %v7313
    %v7777 = vunpack.c.h.b16 %v7313
    %v7778 = vunpack.c.l.b16 %v7314
    %v7779 = vunpack.c.h.b16 %v7314
    %v7780 = vunpack.c.l.b16 %v7315
    %v7781 = vunpack.c.h.b16 %v7315
    %v7782 = vunpack.c.l.b16 %v7316
    %v7783 = vunpack.c.h.b16 %v7316
    %v7784 = vunpack.c.l.b16 %v7317
    %v7785 = vunpack.c.h.b16 %v7317
    %v7786 = vunpack.c.l.b16 %v7318
    %v7787 = vunpack.c.h.b16 %v7318
    %v7788 = vunpack.c.l.b16 %v7319
    %v7789 = vunpack.c.h.b16 %v7319
    %v7790 = vpack.c.b16 %v7506, %v7502
    %v7791 = vpack.c.b16 %v7507, %v7503
    %v7792 = vpack.c.b16 %v7508, %v7504
    %v7793 = vpack.c.b16 %v7509, %v7505
    %v7794 = vpack.c.b16 %v7514, %v7510
    %v7795 = vpack.c.b16 %v7515, %v7511
    %v7796 = vpack.c.b16 %v7516, %v7512
    %v7797 = vpack.c.b16 %v7517, %v7513
    %v7798 = vpack.c.b16 %v7522, %v7518
    %v7799 = vpack.c.b16 %v7523, %v7519
    %v7800 = vpack.c.b16 %v7524, %v7520
    %v7801 = vpack.c.b16 %v7525, %v7521
    %v7802 = vpack.c.b16 %v7530, %v7526
    %v7803 = vpack.c.b16 %v7531, %v7527
    %v7804 = vpack.c.b16 %v7532, %v7528
    %v7805 = vpack.c.b16 %v7533, %v7529
    %v7806 = vpack.c.b16 %v7538, %v7534
    %v7807 = vpack.c.b16 %v7539, %v7535
    %v7808 = vpack.c.b16 %v7540, %v7536
    %v7809 = vpack.c.b16 %v7541, %v7537
    %v7810 = vpack.c.b16 %v7546, %v7542
    %v7811 = vpack.c.b16 %v7547, %v7543
    %v7812 = vpack.c.b16 %v7548, %v7544
    %v7813 = vpack.c.b16 %v7549, %v7545
    %v7814 = vpack.c.b16 %v7554, %v7550
    %v7815 = vpack.c.b16 %v7555, %v7551
    %v7816 = vpack.c.b16 %v7556, %v7552
    %v7817 = vpack.c.b16 %v7557, %v7553
    %v7818 = vpack.c.b16 %v7562, %v7558
    %v7819 = vpack.c.b16 %v7563, %v7559
    %v7820 = vpack.c.b16 %v7564, %v7560
    %v7821 = vpack.c.b16 %v7565, %v7561
    %v7822 = vpack.c.b16 %v7570, %v7566
    %v7823 = vpack.c.b16 %v7571, %v7567
    %v7824 = vpack.c.b16 %v7572, %v7568
    %v7825 = vpack.c.b16 %v7573, %v7569
    %v7826 = vpack.c.b16 %v7578, %v7574
    %v7827 = vpack.c.b16 %v7579, %v7575
    %v7828 = vpack.c.b16 %v7580, %v7576
    %v7829 = vpack.c.b16 %v7581, %v7577
    %v7830 = vpack.c.b16 %v7586, %v7582
    %v7831 = vpack.c.b16 %v7587, %v7583
    %v7832 = vpack.c.b16 %v7588, %v7584
    %v7833 = vpack.c.b16 %v7589, %v7585
    %v7834 = vpack.c.b16 %v7594, %v7590
    %v7835 = vpack.c.b16 %v7595, %v7591
    %v7836 = vpack.c.b16 %v7596, %v7592
    %v7837 = vpack.c.b16 %v7597, %v7593
    %v7838 = vpack.c.b16 %v7602, %v7598
    %v7839 = vpack.c.b16 %v7603, %v7599
    %v7840 = vpack.c.b16 %v7604, %v7600
    %v7841 = vpack.c.b16 %v7605, %v7601
    %v7842 = vpack.c.b16 %v7610, %v7606
    %v7843 = vpack.c.b16 %v7611, %v7607
    %v7844 = vpack.c.b16 %v7612, %v7608
    %v7845 = vpack.c.b16 %v7613, %v7609
    %v7846 = vpack.c.b16 %v7618, %v7614
    %v7847 = vpack.c.b16 %v7619, %v7615
    %v7848 = vpack.c.b16 %v7620, %v7616
    %v7849 = vpack.c.b16 %v7621, %v7617
    %v7850 = vpack.c.b16 %v7626, %v7622
    %v7851 = vpack.c.b16 %v7627, %v7623
    %v7852 = vpack.c.b16 %v7628, %v7624
    %v7853 = vpack.c.b16 %v7629, %v7625
    %v7854 = vpack.c.b16 %v7634, %v7630
    %v7855 = vpack.c.b16 %v7635, %v7631
    %v7856 = vpack.c.b16 %v7636, %v7632
    %v7857 = vpack.c.b16 %v7637, %v7633
    %v7858 = vpack.c.b16 %v7642, %v7638
    %v7859 = vpack.c.b16 %v7643, %v7639
    %v7860 = vpack.c.b16 %v7644, %v7640
    %v7861 = vpack.c.b16 %v7645, %v7641
    %v7862 = vpack.c.b16 %v7650, %v7646
    %v7863 = vpack.c.b16 %v7651, %v7647
    %v7864 = vpack.c.b16 %v7652, %v7648
    %v7865 = vpack.c.b16 %v7653, %v7649
    %v7866 = vpack.c.b16 %v7658, %v7654
    %v7867 = vpack.c.b16 %v7659, %v7655
    %v7868 = vpack.c.b16 %v7660, %v7656
    %v7869 = vpack.c.b16 %v7661, %v7657
    %v7870 = vpack.c.b16 %v7666, %v7662
    %v7871 = vpack.c.b16 %v7667, %v7663
    %v7872 = vpack.c.b16 %v7668, %v7664
    %v7873 = vpack.c.b16 %v7669, %v7665
    %v7874 = vpack.c.b16 %v7674, %v7670
    %v7875 = vpack.c.b16 %v7675, %v7671
    %v7876 = vpack.c.b16 %v7676, %v7672
    %v7877 = vpack.c.b16 %v7677, %v7673
    %v7878 = vpack.c.b16 %v7682, %v7678
    %v7879 = vpack.c.b16 %v7683, %v7679
    %v7880 = vpack.c.b16 %v7684, %v7680
    %v7881 = vpack.c.b16 %v7685, %v7681
    %v7882 = vpack.c.b16 %v7690, %v7686
    %v7883 = vpack.c.b16 %v7691, %v7687
    %v7884 = vpack.c.b16 %v7692, %v7688
    %v7885 = vpack.c.b16 %v7693, %v7689
    %v7886 = vpack.c.b16 %v7698, %v7694
    %v7887 = vpack.c.b16 %v7699, %v7695
    %v7888 = vpack.c.b16 %v7700, %v7696
    %v7889 = vpack.c.b16 %v7701, %v7697
    %v7890 = vpack.c.b16 %v7706, %v7702
    %v7891 = vpack.c.b16 %v7707, %v7703
    %v7892 = vpack.c.b16 %v7708, %v7704
    %v7893 = vpack.c.b16 %v7709, %v7705
    %v7894 = vpack.c.b16 %v7714, %v7710
    %v7895 = vpack.c.b16 %v7715, %v7711
    %v7896 = vpack.c.b16 %v7716, %v7712
    %v7897 = vpack.c.b16 %v7717, %v7713
    %v7898 = vpack.c.b16 %v7722, %v7718
    %v7899 = vpack.c.b16 %v7723, %v7719
    %v7900 = vpack.c.b16 %v7724, %v7720
    %v7901 = vpack.c.b16 %v7725, %v7721
    %v7902 = vpack.c.b16 %v7730, %v7726
    %v7903 = vpack.c.b16 %v7731, %v7727
    %v7904 = vpack.c.b16 %v7732, %v7728
    %v7905 = vpack.c.b16 %v7733, %v7729
    %v7906 = vpack.c.b16 %v7738, %v7734
    %v7907 = vpack.c.b16 %v7739, %v7735
    %v7908 = vpack.c.b16 %v7740, %v7736
    %v7909 = vpack.c.b16 %v7741, %v7737
    %v7910 = vpack.c.b16 %v7746, %v7742
    %v7911 = vpack.c.b16 %v7747, %v7743
    %v7912 = vpack.c.b16 %v7748, %v7744
    %v7913 = vpack.c.b16 %v7749, %v7745
    %v7914 = vpack.c.b16 %v7754, %v7750
    %v7915 = vpack.c.b16 %v7755, %v7751
    %v7916 = vpack.c.b16 %v7756, %v7752
    %v7917 = vpack.c.b16 %v7757, %v7753
    %v7918 = vpack.c.b16 %v7762, %v7758
    %v7919 = vpack.c.b16 %v7763, %v7759
    %v7920 = vpack.c.b16 %v7764, %v7760
    %v7921 = vpack.c.b16 %v7765, %v7761
    %v7922 = vpack.c.b16 %v7770, %v7766
    %v7923 = vpack.c.b16 %v7771, %v7767
    %v7924 = vpack.c.b16 %v7772, %v7768
    %v7925 = vpack.c.b16 %v7773, %v7769
    %v7926 = vpack.c.b16 %v7778, %v7774
    %v7927 = vpack.c.b16 %v7779, %v7775
    %v7928 = vpack.c.b16 %v7780, %v7776
    %v7929 = vpack.c.b16 %v7781, %v7777
    %v7930 = vpack.c.b16 %v7786, %v7782
    %v7931 = vpack.c.b16 %v7787, %v7783
    %v7932 = vpack.c.b16 %v7788, %v7784
    %v7933 = vpack.c.b16 %v7789, %v7785
    %v8079 = vsel %vm5693, %v7344, 0
    %v8082 = vsel %vm5693, %v7349, 0
    %8084 = vmatprep.subr.bf16.mxu0 %v7819
    %8085 = vmatpush1.bf16.msra.mxu0 %v7818
    %8086 = vmatprep.subr.bf16.mxu0 %v7815
    %8087 = vmatpush1.bf16.msra.mxu0 %v7814
    %8088 = vmatprep.subr.bf16.mxu0 %v7811
    %8089 = vmatpush1.bf16.msra.mxu0 %v7810
    %8090 = vmatprep.subr.bf16.mxu0 %v7807
    %8091 = vmatpush1.bf16.msra.mxu0 %v7806
    %8092 = vmatprep.subr.bf16.mxu0 %v7803
    %8093 = vmatpush1.bf16.msra.mxu0 %v7802
    %8094 = vmatprep.subr.bf16.mxu0 %v7799
    %8095 = vmatpush1.bf16.msra.mxu0 %v7798
    %8096 = vmatprep.subr.bf16.mxu0 %v7795
    %8097 = vmatpush1.bf16.msra.mxu0 %v7794
    %8098 = vmatprep.subr.bf16.mxu0 %v7791
    %8099 = vmatpush1.bf16.msra.mxu0 %v7790
    %8100 = vmatprep.subr.bf16.mxu0 %v7851
    %8101 = vmatpush2.bf16.msra.mxu0 %v7850
    %8102 = vmatprep.subr.bf16.mxu0 %v7847
    %8103 = vmatpush2.bf16.msra.mxu0 %v7846
    %8104 = vmatprep.subr.bf16.mxu0 %v7843
    %8105 = vmatpush2.bf16.msra.mxu0 %v7842
    %8106 = vmatprep.subr.bf16.mxu0 %v7839
    %8107 = vmatpush2.bf16.msra.mxu0 %v7838
    %8108 = vmatprep.subr.bf16.mxu0 %v7835
    %8109 = vmatpush2.bf16.msra.mxu0 %v7834
    %8110 = vmatprep.subr.bf16.mxu0 %v7831
    %8111 = vmatpush2.bf16.msra.mxu0 %v7830
    %8112 = vmatprep.subr.bf16.mxu0 %v7827
    %8113 = vmatpush2.bf16.msra.mxu0 %v7826
    %8114 = vmatprep.subr.bf16.mxu0 %v7823
    %8115 = vmatpush2.bf16.msra.mxu0 %v7822
    %8116 = vmatprep.mubr.bf16.mxu0 %v7341
    %8117 = vmatmul.mubr.bf16.gmra.mxu0 %v7340
    %v8118 = vpop.f32.mrf.mxu0
    %v8119 = vadd.f32 0.0, %v8118
    %v8120 = vpop.f32.mrf.mxu0
    %v8121 = vadd.f32 0.0, %v8120
    %v8122 = vpop.f32.mrf.mxu0
    %v8123 = vadd.f32 0.0, %v8122
    %v8124 = vpop.f32.mrf.mxu0
    %v8125 = vadd.f32 0.0, %v8124
    %8126 = vmatprep.mubr.bf16.mxu0 %v7346
    %8127 = vmatmul.mubr.bf16.gmra.mxu0 %v7345
    %v8128 = vpop.f32.mrf.mxu0
    %v8129 = vadd.f32 0.0, %v8128
    %v8130 = vpop.f32.mrf.mxu0
    %v8131 = vadd.f32 0.0, %v8130
    %v8132 = vpop.f32.mrf.mxu0
    %v8133 = vadd.f32 0.0, %v8132
    %v8134 = vpop.f32.mrf.mxu0
    %v8135 = vadd.f32 0.0, %v8134
    %8136 = vdwg.mxu0
    %8137 = vmatprep.subr.bf16.mxu0 %v7883
    %8138 = vmatpush1.bf16.msra.mxu0 %v7882
    %8139 = vmatprep.subr.bf16.mxu0 %v7879
    %8140 = vmatpush1.bf16.msra.mxu0 %v7878
    %8141 = vmatprep.subr.bf16.mxu0 %v7875
    %8142 = vmatpush1.bf16.msra.mxu0 %v7874
    %8143 = vmatprep.subr.bf16.mxu0 %v7871
    %8144 = vmatpush1.bf16.msra.mxu0 %v7870
    %8145 = vmatprep.subr.bf16.mxu0 %v7867
    %8146 = vmatpush1.bf16.msra.mxu0 %v7866
    %8147 = vmatprep.subr.bf16.mxu0 %v7863
    %8148 = vmatpush1.bf16.msra.mxu0 %v7862
    %8149 = vmatprep.subr.bf16.mxu0 %v7859
    %8150 = vmatpush1.bf16.msra.mxu0 %v7858
    %8151 = vmatprep.subr.bf16.mxu0 %v7855
    %8152 = vmatpush1.bf16.msra.mxu0 %v7854
    %8153 = vmatprep.subr.bf16.mxu0 %v7915
    %8154 = vmatpush2.bf16.msra.mxu0 %v7914
    %8155 = vmatprep.subr.bf16.mxu0 %v7911
    %8156 = vmatpush2.bf16.msra.mxu0 %v7910
    %8157 = vmatprep.subr.bf16.mxu0 %v7907
    %8158 = vmatpush2.bf16.msra.mxu0 %v7906
    %8159 = vmatprep.subr.bf16.mxu0 %v7903
    %8160 = vmatpush2.bf16.msra.mxu0 %v7902
    %8161 = vmatprep.subr.bf16.mxu0 %v7899
    %8162 = vmatpush2.bf16.msra.mxu0 %v7898
    %8163 = vmatprep.subr.bf16.mxu0 %v7895
    %8164 = vmatpush2.bf16.msra.mxu0 %v7894
    %8165 = vmatprep.subr.bf16.mxu0 %v7891
    %8166 = vmatpush2.bf16.msra.mxu0 %v7890
    %8167 = vmatprep.subr.bf16.mxu0 %v7887
    %8168 = vmatpush2.bf16.msra.mxu0 %v7886
    %8169 = vmatprep.mubr.bf16.mxu0 %v7343
    %8170 = vmatmul.mubr.bf16.gmra.mxu0 %v7342
    %v8171 = vpop.f32.mrf.mxu0
    %v8172 = vadd.f32 %v8119, %v8171
    %v8173 = vpop.f32.mrf.mxu0
    %v8174 = vadd.f32 %v8121, %v8173
    %v8175 = vpop.f32.mrf.mxu0
    %v8176 = vadd.f32 %v8123, %v8175
    %v8177 = vpop.f32.mrf.mxu0
    %v8178 = vadd.f32 %v8125, %v8177
    %8179 = vmatprep.mubr.bf16.mxu0 %v7348
    %8180 = vmatmul.mubr.bf16.gmra.mxu0 %v7347
    %v8181 = vpop.f32.mrf.mxu0
    %v8182 = vadd.f32 %v8129, %v8181
    %v8183 = vpop.f32.mrf.mxu0
    %v8184 = vadd.f32 %v8131, %v8183
    %v8185 = vpop.f32.mrf.mxu0
    %v8186 = vadd.f32 %v8133, %v8185
    %v8187 = vpop.f32.mrf.mxu0
    %v8188 = vadd.f32 %v8135, %v8187
    %8189 = vdwg.mxu0
    %8190 = vmatprep.subr.bf16.mxu0 0
    %8191 = vmatpush1.bf16.msra.mxu0 0
    %8192 = vmatprep.subr.bf16.mxu0 0
    %8193 = vmatpush1.bf16.msra.mxu0 0
    %8194 = vmatprep.subr.bf16.mxu0 0
    %8195 = vmatpush1.bf16.msra.mxu0 0
    %8196 = vmatprep.subr.bf16.mxu0 0
    %8197 = vmatpush1.bf16.msra.mxu0 0
    %8198 = vmatprep.subr.bf16.mxu0 %v7931
    %8199 = vmatpush1.bf16.msra.mxu0 %v7930
    %8200 = vmatprep.subr.bf16.mxu0 %v7927
    %8201 = vmatpush1.bf16.msra.mxu0 %v7926
    %8202 = vmatprep.subr.bf16.mxu0 %v7923
    %8203 = vmatpush1.bf16.msra.mxu0 %v7922
    %8204 = vmatprep.subr.bf16.mxu0 %v7919
    %8205 = vmatpush1.bf16.msra.mxu0 %v7918
    %8206 = vmatprep.subr.bf16.mxu0 0
    %8207 = vmatpush2.bf16.msra.mxu0 0
    %8208 = vmatprep.subr.bf16.mxu0 0
    %8209 = vmatpush2.bf16.msra.mxu0 0
    %8210 = vmatprep.subr.bf16.mxu0 0
    %8211 = vmatpush2.bf16.msra.mxu0 0
    %8212 = vmatprep.subr.bf16.mxu0 0
    %8213 = vmatpush2.bf16.msra.mxu0 0
    %8214 = vmatprep.subr.bf16.mxu0 0
    %8215 = vmatpush2.bf16.msra.mxu0 0
    %8216 = vmatprep.subr.bf16.mxu0 0
    %8217 = vmatpush2.bf16.msra.mxu0 0
    %8218 = vmatprep.subr.bf16.mxu0 0
    %8219 = vmatpush2.bf16.msra.mxu0 0
    %8220 = vmatprep.subr.bf16.mxu0 0
    %8221 = vmatpush2.bf16.msra.mxu0 0
    %8222 = vmatprep.mubr.bf16.mxu0 0
    %8223 = vmatmul.mubr.bf16.gmra.mxu0 %v8079
    %v8224 = vpop.f32.mrf.mxu0
    %v8225 = vadd.f32 %v8172, %v8224
    %v8226 = vpop.f32.mrf.mxu0
    %v8227 = vadd.f32 %v8174, %v8226
    %v8228 = vpop.f32.mrf.mxu0
    %v8229 = vadd.f32 %v8176, %v8228
    %v8230 = vpop.f32.mrf.mxu0
    %v8231 = vadd.f32 %v8178, %v8230
    %8232 = vmatprep.mubr.bf16.mxu0 0
    %8233 = vmatmul.mubr.bf16.gmra.mxu0 %v8082
    %v8234 = vpop.f32.mrf.mxu0
    %v8235 = vadd.f32 %v8182, %v8234
    %v8236 = vpop.f32.mrf.mxu0
    %v8237 = vadd.f32 %v8184, %v8236
    %v8238 = vpop.f32.mrf.mxu0
    %v8239 = vadd.f32 %v8186, %v8238
    %v8240 = vpop.f32.mrf.mxu0
    %v8241 = vadd.f32 %v8188, %v8240
    %8242 = vdwg.mxu0
    %8243 = vmatprep.subr.bf16.mxu0 %v7821
    %8244 = vmatpush1.bf16.msra.mxu0 %v7820
    %8245 = vmatprep.subr.bf16.mxu0 %v7817
    %8246 = vmatpush1.bf16.msra.mxu0 %v7816
    %8247 = vmatprep.subr.bf16.mxu0 %v7813
    %8248 = vmatpush1.bf16.msra.mxu0 %v7812
    %8249 = vmatprep.subr.bf16.mxu0 %v7809
    %8250 = vmatpush1.bf16.msra.mxu0 %v7808
    %8251 = vmatprep.subr.bf16.mxu0 %v7805
    %8252 = vmatpush1.bf16.msra.mxu0 %v7804
    %8253 = vmatprep.subr.bf16.mxu0 %v7801
    %8254 = vmatpush1.bf16.msra.mxu0 %v7800
    %8255 = vmatprep.subr.bf16.mxu0 %v7797
    %8256 = vmatpush1.bf16.msra.mxu0 %v7796
    %8257 = vmatprep.subr.bf16.mxu0 %v7793
    %8258 = vmatpush1.bf16.msra.mxu0 %v7792
    %8259 = vmatprep.subr.bf16.mxu0 %v7853
    %8260 = vmatpush2.bf16.msra.mxu0 %v7852
    %8261 = vmatprep.subr.bf16.mxu0 %v7849
    %8262 = vmatpush2.bf16.msra.mxu0 %v7848
    %8263 = vmatprep.subr.bf16.mxu0 %v7845
    %8264 = vmatpush2.bf16.msra.mxu0 %v7844
    %8265 = vmatprep.subr.bf16.mxu0 %v7841
    %8266 = vmatpush2.bf16.msra.mxu0 %v7840
    %8267 = vmatprep.subr.bf16.mxu0 %v7837
    %8268 = vmatpush2.bf16.msra.mxu0 %v7836
    %8269 = vmatprep.subr.bf16.mxu0 %v7833
    %8270 = vmatpush2.bf16.msra.mxu0 %v7832
    %8271 = vmatprep.subr.bf16.mxu0 %v7829
    %8272 = vmatpush2.bf16.msra.mxu0 %v7828
    %8273 = vmatprep.subr.bf16.mxu0 %v7825
    %8274 = vmatpush2.bf16.msra.mxu0 %v7824
    %8275 = vmatprep.mubr.bf16.mxu0 %v7341
    %8276 = vmatmul.mubr.bf16.gmra.mxu0 %v7340
    %v8277 = vpop.f32.mrf.mxu0
    %v8278 = vadd.f32 0.0, %v8277
    %v8279 = vpop.f32.mrf.mxu0
    %v8280 = vadd.f32 0.0, %v8279
    %v8281 = vpop.f32.mrf.mxu0
    %v8282 = vadd.f32 0.0, %v8281
    %v8283 = vpop.f32.mrf.mxu0
    %v8284 = vadd.f32 0.0, %v8283
    %8285 = vmatprep.mubr.bf16.mxu0 %v7346
    %8286 = vmatmul.mubr.bf16.gmra.mxu0 %v7345
    %v8287 = vpop.f32.mrf.mxu0
    %v8288 = vadd.f32 0.0, %v8287
    %v8289 = vpop.f32.mrf.mxu0
    %v8290 = vadd.f32 0.0, %v8289
    %v8291 = vpop.f32.mrf.mxu0
    %v8292 = vadd.f32 0.0, %v8291
    %v8293 = vpop.f32.mrf.mxu0
    %v8294 = vadd.f32 0.0, %v8293
    %8295 = vdwg.mxu0
    %8296 = vmatprep.subr.bf16.mxu0 %v7885
    %8297 = vmatpush1.bf16.msra.mxu0 %v7884
    %8298 = vmatprep.subr.bf16.mxu0 %v7881
    %8299 = vmatpush1.bf16.msra.mxu0 %v7880
    %8300 = vmatprep.subr.bf16.mxu0 %v7877
    %8301 = vmatpush1.bf16.msra.mxu0 %v7876
    %8302 = vmatprep.subr.bf16.mxu0 %v7873
    %8303 = vmatpush1.bf16.msra.mxu0 %v7872
    %8304 = vmatprep.subr.bf16.mxu0 %v7869
    %8305 = vmatpush1.bf16.msra.mxu0 %v7868
    %8306 = vmatprep.subr.bf16.mxu0 %v7865
    %8307 = vmatpush1.bf16.msra.mxu0 %v7864
    %8308 = vmatprep.subr.bf16.mxu0 %v7861
    %8309 = vmatpush1.bf16.msra.mxu0 %v7860
    %8310 = vmatprep.subr.bf16.mxu0 %v7857
    %8311 = vmatpush1.bf16.msra.mxu0 %v7856
    %8312 = vmatprep.subr.bf16.mxu0 %v7917
    %8313 = vmatpush2.bf16.msra.mxu0 %v7916
    %8314 = vmatprep.subr.bf16.mxu0 %v7913
    %8315 = vmatpush2.bf16.msra.mxu0 %v7912
    %8316 = vmatprep.subr.bf16.mxu0 %v7909
    %8317 = vmatpush2.bf16.msra.mxu0 %v7908
    %8318 = vmatprep.subr.bf16.mxu0 %v7905
    %8319 = vmatpush2.bf16.msra.mxu0 %v7904
    %8320 = vmatprep.subr.bf16.mxu0 %v7901
    %8321 = vmatpush2.bf16.msra.mxu0 %v7900
    %8322 = vmatprep.subr.bf16.mxu0 %v7897
    %8323 = vmatpush2.bf16.msra.mxu0 %v7896
    %8324 = vmatprep.subr.bf16.mxu0 %v7893
    %8325 = vmatpush2.bf16.msra.mxu0 %v7892
    %8326 = vmatprep.subr.bf16.mxu0 %v7889
    %8327 = vmatpush2.bf16.msra.mxu0 %v7888
    %8328 = vmatprep.mubr.bf16.mxu0 %v7343
    %8329 = vmatmul.mubr.bf16.gmra.mxu0 %v7342
    %v8330 = vpop.f32.mrf.mxu0
    %v8331 = vadd.f32 %v8278, %v8330
    %v8332 = vpop.f32.mrf.mxu0
    %v8333 = vadd.f32 %v8280, %v8332
    %v8334 = vpop.f32.mrf.mxu0
    %v8335 = vadd.f32 %v8282, %v8334
    %v8336 = vpop.f32.mrf.mxu0
    %v8337 = vadd.f32 %v8284, %v8336
    %8338 = vmatprep.mubr.bf16.mxu0 %v7348
    %8339 = vmatmul.mubr.bf16.gmra.mxu0 %v7347
    %v8340 = vpop.f32.mrf.mxu0
    %v8341 = vadd.f32 %v8288, %v8340
    %v8342 = vpop.f32.mrf.mxu0
    %v8343 = vadd.f32 %v8290, %v8342
    %v8344 = vpop.f32.mrf.mxu0
    %v8345 = vadd.f32 %v8292, %v8344
    %v8346 = vpop.f32.mrf.mxu0
    %v8347 = vadd.f32 %v8294, %v8346
    %8348 = vdwg.mxu0
    %8349 = vmatprep.subr.bf16.mxu0 0
    %8350 = vmatpush1.bf16.msra.mxu0 0
    %8351 = vmatprep.subr.bf16.mxu0 0
    %8352 = vmatpush1.bf16.msra.mxu0 0
    %8353 = vmatprep.subr.bf16.mxu0 0
    %8354 = vmatpush1.bf16.msra.mxu0 0
    %8355 = vmatprep.subr.bf16.mxu0 0
    %8356 = vmatpush1.bf16.msra.mxu0 0
    %8357 = vmatprep.subr.bf16.mxu0 %v7933
    %8358 = vmatpush1.bf16.msra.mxu0 %v7932
    %8359 = vmatprep.subr.bf16.mxu0 %v7929
    %8360 = vmatpush1.bf16.msra.mxu0 %v7928
    %8361 = vmatprep.subr.bf16.mxu0 %v7925
    %8362 = vmatpush1.bf16.msra.mxu0 %v7924
    %8363 = vmatprep.subr.bf16.mxu0 %v7921
    %8364 = vmatpush1.bf16.msra.mxu0 %v7920
    %8365 = vmatprep.subr.bf16.mxu0 0
    %8366 = vmatpush2.bf16.msra.mxu0 0
    %8367 = vmatprep.subr.bf16.mxu0 0
    %8368 = vmatpush2.bf16.msra.mxu0 0
    %8369 = vmatprep.subr.bf16.mxu0 0
    %8370 = vmatpush2.bf16.msra.mxu0 0
    %8371 = vmatprep.subr.bf16.mxu0 0
    %8372 = vmatpush2.bf16.msra.mxu0 0
    %8373 = vmatprep.subr.bf16.mxu0 0
    %8374 = vmatpush2.bf16.msra.mxu0 0
    %8375 = vmatprep.subr.bf16.mxu0 0
    %8376 = vmatpush2.bf16.msra.mxu0 0
    %8377 = vmatprep.subr.bf16.mxu0 0
    %8378 = vmatpush2.bf16.msra.mxu0 0
    %8379 = vmatprep.subr.bf16.mxu0 0
    %8380 = vmatpush2.bf16.msra.mxu0 0
    %8381 = vmatprep.mubr.bf16.mxu0 0
    %8382 = vmatmul.mubr.bf16.gmra.mxu0 %v8079
    %v8383 = vpop.f32.mrf.mxu0
    %v8384 = vadd.f32 %v8331, %v8383
    %v8385 = vpop.f32.mrf.mxu0
    %v8386 = vadd.f32 %v8333, %v8385
    %v8387 = vpop.f32.mrf.mxu0
    %v8388 = vadd.f32 %v8335, %v8387
    %v8389 = vpop.f32.mrf.mxu0
    %v8390 = vadd.f32 %v8337, %v8389
    %8391 = vmatprep.mubr.bf16.mxu0 0
    %8392 = vmatmul.mubr.bf16.gmra.mxu0 %v8082
    %v8393 = vpop.f32.mrf.mxu0
    %v8394 = vadd.f32 %v8341, %v8393
    %v8395 = vpop.f32.mrf.mxu0
    %v8396 = vadd.f32 %v8343, %v8395
    %v8397 = vpop.f32.mrf.mxu0
    %v8398 = vadd.f32 %v8345, %v8397
    %v8399 = vpop.f32.mrf.mxu0
    %v8400 = vadd.f32 %v8347, %v8399
    %8401 = vdwg.mxu0
    %v8402 = vadd.f32 %v6935, %v8225
    %v8403 = vadd.f32 %v6937, %v8227
    %v8404 = vadd.f32 %v7094, %v8384
    %v8405 = vadd.f32 %v7096, %v8386
    %v8406 = vadd.f32 %v6939, %v8229
    %v8407 = vadd.f32 %v6941, %v8231
    %v8408 = vadd.f32 %v7098, %v8388
    %v8409 = vadd.f32 %v7100, %v8390
    %v8410 = vadd.f32 %v6945, %v8235
    %v8411 = vadd.f32 %v6947, %v8237
    %v8412 = vadd.f32 %v7104, %v8394
    %v8413 = vadd.f32 %v7106, %v8396
    %v8414 = vadd.f32 %v6949, %v8239
    %v8415 = vadd.f32 %v6951, %v8241
    %v8416 = vadd.f32 %v7108, %v8398
    %v8417 = vadd.f32 %v7110, %v8400
    %v8418 = vld [vmem:[#allocation11] sm:$0xf]
    %v8420 = vlaneseq
    %v8421 = vshrl.u32 %v8420, 7
    %v8422 = vsub.s32 0, %v8421
    %v8423 = vrot.slane %v8418, %v8422
    %v8424 = vlaneseq
    %v8425 = vshrl.u32 %v8424, 7
    %v8426 = vsub.s32 1, %v8425
    %v8427 = vrot.slane %v8418, %v8426
    %v8428 = vlaneseq
    %v8429 = vshrl.u32 %v8428, 7
    %v8430 = vsub.s32 2, %v8429
    %v8431 = vrot.slane %v8418, %v8430
    %v8432 = vlaneseq
    %v8433 = vshrl.u32 %v8432, 7
    %v8434 = vsub.s32 3, %v8433
    %v8435 = vrot.slane %v8418, %v8434
    %v8440 = vadd.f32 %v8402, %v8423
    %v8441 = vadd.f32 %v8403, %v8427
    %v8442 = vadd.f32 %v8404, %v8431
    %v8443 = vadd.f32 %v8405, %v8435
    %v8444 = vadd.f32 %v8406, %v8423
    %v8445 = vadd.f32 %v8407, %v8427
    %v8446 = vadd.f32 %v8408, %v8431
    %v8447 = vadd.f32 %v8409, %v8435
    %v8448 = vadd.f32 %v8410, %v8423
    %v8449 = vadd.f32 %v8411, %v8427
    %v8450 = vadd.f32 %v8412, %v8431
    %v8451 = vadd.f32 %v8413, %v8435
    %v8452 = vadd.f32 %v8414, %v8423
    %v8453 = vadd.f32 %v8415, %v8427
    %v8454 = vadd.f32 %v8416, %v8431
    %v8455 = vadd.f32 %v8417, %v8435
    %v8456 = vmax.f32 %v8440, 0.0
    %v8457 = vmax.f32 %v8441, 0.0
    %v8458 = vmax.f32 %v8442, 0.0
    %v8459 = vmax.f32 %v8443, 0.0
    %v8460 = vmax.f32 %v8444, 0.0
    %v8461 = vmax.f32 %v8445, 0.0
    %v8462 = vmax.f32 %v8446, 0.0
    %v8463 = vmax.f32 %v8447, 0.0
    %v8464 = vmax.f32 %v8448, 0.0
    %v8465 = vmax.f32 %v8449, 0.0
    %v8466 = vmax.f32 %v8450, 0.0
    %v8467 = vmax.f32 %v8451, 0.0
    %v8468 = vmax.f32 %v8452, 0.0
    %v8469 = vmax.f32 %v8453, 0.0
    %v8470 = vmax.f32 %v8454, 0.0
    %v8471 = vmax.f32 %v8455, 0.0
    %v8472 = vpack.c.bf16 %v8460, %v8456
    %v8473 = vpack.c.bf16 %v8461, %v8457
    %v8474 = vpack.c.bf16 %v8462, %v8458
    %v8475 = vpack.c.bf16 %v8463, %v8459
    %v8476 = vpack.c.bf16 %v8468, %v8464
    %v8477 = vpack.c.bf16 %v8469, %v8465
    %v8478 = vpack.c.bf16 %v8470, %v8466
    %v8479 = vpack.c.bf16 %v8471, %v8467
    %v8480 = vld [vmem:[#allocation12] sm:$0xff]
    %v8481 = vld [vmem:[#allocation12 + $0x8] sm:$0xff]
    %v8482 = vld [vmem:[#allocation12 + $0x10] sm:$0xff]
    %v8483 = vld [vmem:[#allocation12 + $0x18] sm:$0xff]
    %v8484 = vld [vmem:[#allocation12 + $0x20] sm:$0xff]
    %v8485 = vld [vmem:[#allocation12 + $0x28] sm:$0xff]
    %v8486 = vld [vmem:[#allocation12 + $0x30] sm:$0xff]
    %v8487 = vld [vmem:[#allocation12 + $0x38] sm:$0xff]
    %v8488 = vld [vmem:[#allocation12 + $0x40] sm:$0xff]
    %v8489 = vld [vmem:[#allocation12 + $0x48] sm:$0xff]
    %v8490 = vld [vmem:[#allocation12 + $0x50] sm:$0xff]
    %v8491 = vld [vmem:[#allocation12 + $0x58] sm:$0xff]
    %v8492 = vld [vmem:[#allocation12 + $0x60] sm:$0xff]
    %v8493 = vld [vmem:[#allocation12 + $0x68] sm:$0xff]
    %v8494 = vld [vmem:[#allocation12 + $0x70] sm:$0xff]
    %v8495 = vld [vmem:[#allocation12 + $0x78] sm:$0xff]
    %v8496 = vld [vmem:[#allocation12 + $0x80] sm:$0xff]
    %v8497 = vld [vmem:[#allocation12 + $0x88] sm:$0xff]
    %v8498 = vld [vmem:[#allocation12 + $0x90] sm:$0xff]
    %v8499 = vld [vmem:[#allocation12 + $0x98] sm:$0xff]
    %v8500 = vld [vmem:[#allocation12 + $0xa0] sm:$0xff]
    %v8501 = vld [vmem:[#allocation12 + $0xa8] sm:$0xff]
    %v8502 = vld [vmem:[#allocation12 + $0xb0] sm:$0xff]
    %v8503 = vld [vmem:[#allocation12 + $0xb8] sm:$0xff]
    %v8504 = vld [vmem:[#allocation12 + $0xc0] sm:$0xff]
    %v8505 = vld [vmem:[#allocation12 + $0xc8] sm:$0xff]
    %v8506 = vld [vmem:[#allocation12 + $0xd0] sm:$0xff]
    %v8507 = vld [vmem:[#allocation12 + $0xd8] sm:$0xff]
    %v8508 = vld [vmem:[#allocation12 + $0xe0] sm:$0xff]
    %v8509 = vld [vmem:[#allocation12 + $0xe8] sm:$0xff]
    %v8510 = vld [vmem:[#allocation12 + $0xf0] sm:$0xff]
    %v8511 = vld [vmem:[#allocation12 + $0xf8] sm:$0xff]
    %v8512 = vld [vmem:[#allocation12 + $0x100] sm:$0xff]
    %v8513 = vld [vmem:[#allocation12 + $0x108] sm:$0xff]
    %v8514 = vld [vmem:[#allocation12 + $0x110] sm:$0xff]
    %v8515 = vld [vmem:[#allocation12 + $0x118] sm:$0xff]
    %v8516 = vld [vmem:[#allocation12 + $0x120] sm:$0xff]
    %v8517 = vld [vmem:[#allocation12 + $0x128] sm:$0xff]
    %v8518 = vld [vmem:[#allocation12 + $0x130] sm:$0xff]
    %v8519 = vld [vmem:[#allocation12 + $0x138] sm:$0xff]
    %v8520 = vld [vmem:[#allocation12 + $0x140] sm:$0xff]
    %v8521 = vld [vmem:[#allocation12 + $0x148] sm:$0xff]
    %v8522 = vld [vmem:[#allocation12 + $0x150] sm:$0xff]
    %v8523 = vld [vmem:[#allocation12 + $0x158] sm:$0xff]
    %v8524 = vld [vmem:[#allocation12 + $0x160] sm:$0xff]
    %v8525 = vld [vmem:[#allocation12 + $0x168] sm:$0xff]
    %v8526 = vld [vmem:[#allocation12 + $0x170] sm:$0xff]
    %v8527 = vld [vmem:[#allocation12 + $0x178] sm:$0xff]
    %v8528 = vld [vmem:[#allocation12 + $0x180] sm:$0xff]
    %v8529 = vld [vmem:[#allocation12 + $0x188] sm:$0xff]
    %v8530 = vld [vmem:[#allocation12 + $0x190] sm:$0xff]
    %v8531 = vld [vmem:[#allocation12 + $0x198] sm:$0xff]
    %v8532 = vld [vmem:[#allocation12 + $0x1a0] sm:$0xff]
    %v8533 = vld [vmem:[#allocation12 + $0x1a8] sm:$0xff]
    %v8534 = vld [vmem:[#allocation12 + $0x1b0] sm:$0xff]
    %v8535 = vld [vmem:[#allocation12 + $0x1b8] sm:$0xff]
    %v8536 = vld [vmem:[#allocation12 + $0x1c0] sm:$0xff]
    %v8537 = vld [vmem:[#allocation12 + $0x1c8] sm:$0xff]
    %v8538 = vld [vmem:[#allocation12 + $0x1d0] sm:$0xff]
    %v8539 = vld [vmem:[#allocation12 + $0x1d8] sm:$0xff]
    %v8540 = vld [vmem:[#allocation12 + $0x1e0] sm:$0xff]
    %v8541 = vld [vmem:[#allocation12 + $0x1e8] sm:$0xff]
    %v8542 = vld [vmem:[#allocation12 + $0x1f0] sm:$0xff]
    %v8543 = vld [vmem:[#allocation12 + $0x1f8] sm:$0xff]
    %v8544 = vld [vmem:[#allocation12 + $0x200] sm:$0xff]
    %v8545 = vld [vmem:[#allocation12 + $0x208] sm:$0xff]
    %v8546 = vld [vmem:[#allocation12 + $0x210] sm:$0xff]
    %v8547 = vld [vmem:[#allocation12 + $0x218] sm:$0xff]
    %v8548 = vld [vmem:[#allocation12 + $0x220] sm:$0xff]
    %v8549 = vld [vmem:[#allocation12 + $0x228] sm:$0xff]
    %v8550 = vld [vmem:[#allocation12 + $0x230] sm:$0xff]
    %v8551 = vld [vmem:[#allocation12 + $0x238] sm:$0xff]
    %v8552 = vld [vmem:[#allocation12 + $0x240] sm:$0xff]
    %v8553 = vld [vmem:[#allocation12 + $0x248] sm:$0xff]
    %v8554 = vld [vmem:[#allocation12 + $0x250] sm:$0xff]
    %v8555 = vld [vmem:[#allocation12 + $0x258] sm:$0xff]
    %v8556 = vld [vmem:[#allocation12 + $0x260] sm:$0xff]
    %v8557 = vld [vmem:[#allocation12 + $0x268] sm:$0xff]
    %v8558 = vld [vmem:[#allocation12 + $0x270] sm:$0xff]
    %v8559 = vld [vmem:[#allocation12 + $0x278] sm:$0xff]
    %v8560 = vld [vmem:[#allocation12 + $0x280] sm:$0xff]
    %v8561 = vld [vmem:[#allocation12 + $0x288] sm:$0xff]
    %v8562 = vld [vmem:[#allocation12 + $0x290] sm:$0xff]
    %v8563 = vld [vmem:[#allocation12 + $0x298] sm:$0xff]
    %v8564 = vld [vmem:[#allocation12 + $0x2a0] sm:$0xff]
    %v8565 = vld [vmem:[#allocation12 + $0x2a8] sm:$0xff]
    %v8566 = vld [vmem:[#allocation12 + $0x2b0] sm:$0xff]
    %v8567 = vld [vmem:[#allocation12 + $0x2b8] sm:$0xff]
    %v8568 = vld [vmem:[#allocation12 + $0x2c0] sm:$0xff]
    %v8569 = vld [vmem:[#allocation12 + $0x2c8] sm:$0xff]
    %v8570 = vld [vmem:[#allocation12 + $0x2d0] sm:$0xff]
    %v8571 = vld [vmem:[#allocation12 + $0x2d8] sm:$0xff]
    %v8572 = vld [vmem:[#allocation12 + $0x2e0] sm:$0xff]
    %v8573 = vld [vmem:[#allocation12 + $0x2e8] sm:$0xff]
    %v8574 = vld [vmem:[#allocation12 + $0x2f0] sm:$0xff]
    %v8575 = vld [vmem:[#allocation12 + $0x2f8] sm:$0xff]
    %v8576 = vld [vmem:[#allocation12 + $0x300] sm:$0xff]
    %v8577 = vld [vmem:[#allocation12 + $0x308] sm:$0xff]
    %v8578 = vld [vmem:[#allocation12 + $0x310] sm:$0xff]
    %v8579 = vld [vmem:[#allocation12 + $0x318] sm:$0xff]
    %v8580 = vld [vmem:[#allocation12 + $0x320] sm:$0xff]
    %v8581 = vld [vmem:[#allocation12 + $0x328] sm:$0xff]
    %v8582 = vld [vmem:[#allocation12 + $0x330] sm:$0xff]
    %v8583 = vld [vmem:[#allocation12 + $0x338] sm:$0xff]
    %v8584 = vld [vmem:[#allocation12 + $0x340] sm:$0xff]
    %v8585 = vld [vmem:[#allocation12 + $0x348] sm:$0xff]
    %v8586 = vld [vmem:[#allocation12 + $0x350] sm:$0xff]
    %v8587 = vld [vmem:[#allocation12 + $0x358] sm:$0xff]
    %v8588 = vld [vmem:[#allocation12 + $0x360] sm:$0xff]
    %v8589 = vld [vmem:[#allocation12 + $0x368] sm:$0xff]
    %v8590 = vld [vmem:[#allocation12 + $0x370] sm:$0xff]
    %v8591 = vld [vmem:[#allocation12 + $0x378] sm:$0xff]
    %v8592 = vld [vmem:[#allocation12 + $0x380] sm:$0xff]
    %v8593 = vld [vmem:[#allocation12 + $0x388] sm:$0xff]
    %v8594 = vld [vmem:[#allocation12 + $0x390] sm:$0xff]
    %v8595 = vld [vmem:[#allocation12 + $0x398] sm:$0xff]
    %v8596 = vld [vmem:[#allocation12 + $0x3a0] sm:$0xff]
    %v8597 = vld [vmem:[#allocation12 + $0x3a8] sm:$0xff]
    %v8598 = vld [vmem:[#allocation12 + $0x3b0] sm:$0xff]
    %v8599 = vld [vmem:[#allocation12 + $0x3b8] sm:$0xff]
    %v8600 = vld [vmem:[#allocation12 + $0x3c0] sm:$0xff]
    %v8601 = vld [vmem:[#allocation12 + $0x3c8] sm:$0xff]
    %v8602 = vld [vmem:[#allocation12 + $0x3d0] sm:$0xff]
    %v8603 = vld [vmem:[#allocation12 + $0x3d8] sm:$0xff]
    %v8604 = vld [vmem:[#allocation12 + $0x3e0] sm:$0xff]
    %v8605 = vld [vmem:[#allocation12 + $0x3e8] sm:$0xff]
    %v8606 = vld [vmem:[#allocation12 + $0x3f0] sm:$0xff]
    %v8607 = vld [vmem:[#allocation12 + $0x3f8] sm:$0xff]
    %v8608 = vld [vmem:[#allocation12 + $0x400] sm:$0xff]
    %v8609 = vld [vmem:[#allocation12 + $0x408] sm:$0xff]
    %v8610 = vld [vmem:[#allocation12 + $0x410] sm:$0xff]
    %v8611 = vld [vmem:[#allocation12 + $0x418] sm:$0xff]
    %v8612 = vld [vmem:[#allocation12 + $0x420] sm:$0xff]
    %v8613 = vld [vmem:[#allocation12 + $0x428] sm:$0xff]
    %v8614 = vld [vmem:[#allocation12 + $0x430] sm:$0xff]
    %v8615 = vld [vmem:[#allocation12 + $0x438] sm:$0xff]
    %v8616 = vld [vmem:[#allocation12 + $0x440] sm:$0xff]
    %v8617 = vld [vmem:[#allocation12 + $0x448] sm:$0xff]
    %v8618 = vld [vmem:[#allocation12 + $0x450] sm:$0xff]
    %v8619 = vld [vmem:[#allocation12 + $0x458] sm:$0xff]
    %v8620 = vld [vmem:[#allocation12 + $0x460] sm:$0xff]
    %v8621 = vld [vmem:[#allocation12 + $0x468] sm:$0xff]
    %v8622 = vld [vmem:[#allocation12 + $0x470] sm:$0xff]
    %v8623 = vld [vmem:[#allocation12 + $0x478] sm:$0xff]
    %v8624 = vld [vmem:[#allocation12 + $0x480] sm:$0xff]
    %v8625 = vld [vmem:[#allocation12 + $0x488] sm:$0xff]
    %v8626 = vld [vmem:[#allocation12 + $0x490] sm:$0xff]
    %v8627 = vld [vmem:[#allocation12 + $0x498] sm:$0xff]
    %v8628 = vld [vmem:[#allocation12 + $0x4a0] sm:$0xff]
    %v8629 = vld [vmem:[#allocation12 + $0x4a8] sm:$0xff]
    %v8630 = vld [vmem:[#allocation12 + $0x4b0] sm:$0xff]
    %v8631 = vld [vmem:[#allocation12 + $0x4b8] sm:$0xff]
    %v8632 = vld [vmem:[#allocation12 + $0x4c0] sm:$0xff]
    %v8633 = vld [vmem:[#allocation12 + $0x4c8] sm:$0xff]
    %v8634 = vld [vmem:[#allocation12 + $0x4d0] sm:$0xff]
    %v8635 = vld [vmem:[#allocation12 + $0x4d8] sm:$0xff]
    %v8636 = vld [vmem:[#allocation12 + $0x4e0] sm:$0xff]
    %v8637 = vld [vmem:[#allocation12 + $0x4e8] sm:$0xff]
    %v8638 = vld [vmem:[#allocation12 + $0x4f0] sm:$0xff]
    %v8639 = vld [vmem:[#allocation12 + $0x4f8] sm:$0xff]
    %v8640 = vld [vmem:[#allocation12 + $0x500] sm:$0xff]
    %v8641 = vld [vmem:[#allocation12 + $0x508] sm:$0xff]
    %v8642 = vld [vmem:[#allocation12 + $0x510] sm:$0xff]
    %v8643 = vld [vmem:[#allocation12 + $0x518] sm:$0xff]
    %v8644 = vld [vmem:[#allocation12 + $0x520] sm:$0xff]
    %v8645 = vld [vmem:[#allocation12 + $0x528] sm:$0xff]
    %v8646 = vld [vmem:[#allocation12 + $0x530] sm:$0xff]
    %v8647 = vld [vmem:[#allocation12 + $0x538] sm:$0xff]
    %v8648 = vld [vmem:[#allocation12 + $0x540] sm:$0xff]
    %v8649 = vld [vmem:[#allocation12 + $0x548] sm:$0xff]
    %v8650 = vld [vmem:[#allocation12 + $0x550] sm:$0xff]
    %v8651 = vld [vmem:[#allocation12 + $0x558] sm:$0xff]
    %v8652 = vld [vmem:[#allocation12 + $0x560] sm:$0xff]
    %v8653 = vld [vmem:[#allocation12 + $0x568] sm:$0xff]
    %v8654 = vld [vmem:[#allocation12 + $0x570] sm:$0xff]
    %v8655 = vld [vmem:[#allocation12 + $0x578] sm:$0xff]
    %v8656 = vld [vmem:[#allocation12 + $0x580] sm:$0xff]
    %v8657 = vld [vmem:[#allocation12 + $0x588] sm:$0xff]
    %v8658 = vld [vmem:[#allocation12 + $0x590] sm:$0xff]
    %v8659 = vld [vmem:[#allocation12 + $0x598] sm:$0xff]
    %v8660 = vld [vmem:[#allocation12 + $0x5a0] sm:$0xff]
    %v8661 = vld [vmem:[#allocation12 + $0x5a8] sm:$0xff]
    %v8662 = vld [vmem:[#allocation12 + $0x5b0] sm:$0xff]
    %v8663 = vld [vmem:[#allocation12 + $0x5b8] sm:$0xff]
    %v8664 = vld [vmem:[#allocation12 + $0x5c0] sm:$0xff]
    %v8665 = vld [vmem:[#allocation12 + $0x5c8] sm:$0xff]
    %v8666 = vld [vmem:[#allocation12 + $0x5d0] sm:$0xff]
    %v8667 = vld [vmem:[#allocation12 + $0x5d8] sm:$0xff]
    %v8668 = vld [vmem:[#allocation12 + $0x5e0] sm:$0xff]
    %v8669 = vld [vmem:[#allocation12 + $0x5e8] sm:$0xff]
    %v8670 = vld [vmem:[#allocation12 + $0x5f0] sm:$0xff]
    %v8671 = vld [vmem:[#allocation12 + $0x5f8] sm:$0xff]
    %v8672 = vld [vmem:[#allocation12 + $0x600] sm:$0xff]
    %v8673 = vld [vmem:[#allocation12 + $0x608] sm:$0xff]
    %v8674 = vld [vmem:[#allocation12 + $0x610] sm:$0xff]
    %v8675 = vld [vmem:[#allocation12 + $0x618] sm:$0xff]
    %v8676 = vld [vmem:[#allocation12 + $0x620] sm:$0xff]
    %v8677 = vld [vmem:[#allocation12 + $0x628] sm:$0xff]
    %v8678 = vld [vmem:[#allocation12 + $0x630] sm:$0xff]
    %v8679 = vld [vmem:[#allocation12 + $0x638] sm:$0xff]
    %v8680 = vld [vmem:[#allocation12 + $0x640] sm:$0xff]
    %v8681 = vld [vmem:[#allocation12 + $0x648] sm:$0xff]
    %v8682 = vld [vmem:[#allocation12 + $0x650] sm:$0xff]
    %v8683 = vld [vmem:[#allocation12 + $0x658] sm:$0xff]
    %v8684 = vld [vmem:[#allocation12 + $0x660] sm:$0xff]
    %v8685 = vld [vmem:[#allocation12 + $0x668] sm:$0xff]
    %v8686 = vld [vmem:[#allocation12 + $0x670] sm:$0xff]
    %v8687 = vld [vmem:[#allocation12 + $0x678] sm:$0xff]
    %v8688 = vld [vmem:[#allocation12 + $0x680] sm:$0xff]
    %v8689 = vld [vmem:[#allocation12 + $0x688] sm:$0xff]
    %v8690 = vld [vmem:[#allocation12 + $0x690] sm:$0xff]
    %v8691 = vld [vmem:[#allocation12 + $0x698] sm:$0xff]
    %v8692 = vld [vmem:[#allocation12 + $0x6a0] sm:$0xff]
    %v8693 = vld [vmem:[#allocation12 + $0x6a8] sm:$0xff]
    %v8694 = vld [vmem:[#allocation12 + $0x6b0] sm:$0xff]
    %v8695 = vld [vmem:[#allocation12 + $0x6b8] sm:$0xff]
    %v8696 = vld [vmem:[#allocation12 + $0x6c0] sm:$0xff]
    %v8697 = vld [vmem:[#allocation12 + $0x6c8] sm:$0xff]
    %v8698 = vld [vmem:[#allocation12 + $0x6d0] sm:$0xff]
    %v8699 = vld [vmem:[#allocation12 + $0x6d8] sm:$0xff]
    %v8700 = vld [vmem:[#allocation12 + $0x6e0] sm:$0xff]
    %v8701 = vld [vmem:[#allocation12 + $0x6e8] sm:$0xff]
    %v8702 = vld [vmem:[#allocation12 + $0x6f0] sm:$0xff]
    %v8703 = vld [vmem:[#allocation12 + $0x6f8] sm:$0xff]
    %v8704 = vld [vmem:[#allocation12 + $0x700] sm:$0xff]
    %v8705 = vld [vmem:[#allocation12 + $0x708] sm:$0xff]
    %v8706 = vld [vmem:[#allocation12 + $0x710] sm:$0xff]
    %v8707 = vld [vmem:[#allocation12 + $0x718] sm:$0xff]
    %v8708 = vld [vmem:[#allocation12 + $0x720] sm:$0xff]
    %v8709 = vld [vmem:[#allocation12 + $0x728] sm:$0xff]
    %v8710 = vld [vmem:[#allocation12 + $0x730] sm:$0xff]
    %v8711 = vld [vmem:[#allocation12 + $0x738] sm:$0xff]
    %v8712 = vld [vmem:[#allocation12 + $0x740] sm:$0xff]
    %v8713 = vld [vmem:[#allocation12 + $0x748] sm:$0xff]
    %v8714 = vld [vmem:[#allocation12 + $0x750] sm:$0xff]
    %v8715 = vld [vmem:[#allocation12 + $0x758] sm:$0xff]
    %v8716 = vld [vmem:[#allocation12 + $0x760] sm:$0xff]
    %v8717 = vld [vmem:[#allocation12 + $0x768] sm:$0xff]
    %v8718 = vld [vmem:[#allocation12 + $0x770] sm:$0xff]
    %v8719 = vld [vmem:[#allocation12 + $0x778] sm:$0xff]
    %v8720 = vld [vmem:[#allocation12 + $0x780] sm:$0xff]
    %v8721 = vld [vmem:[#allocation12 + $0x788] sm:$0xff]
    %v8722 = vld [vmem:[#allocation12 + $0x790] sm:$0xff]
    %v8723 = vld [vmem:[#allocation12 + $0x798] sm:$0xff]
    %v8724 = vld [vmem:[#allocation12 + $0x7a0] sm:$0xff]
    %v8725 = vld [vmem:[#allocation12 + $0x7a8] sm:$0xff]
    %v8726 = vld [vmem:[#allocation12 + $0x7b0] sm:$0xff]
    %v8727 = vld [vmem:[#allocation12 + $0x7b8] sm:$0xff]
    %v8728 = vld [vmem:[#allocation12 + $0x7c0] sm:$0xff]
    %v8729 = vld [vmem:[#allocation12 + $0x7c8] sm:$0xff]
    %v8730 = vld [vmem:[#allocation12 + $0x7d0] sm:$0xff]
    %v8731 = vld [vmem:[#allocation12 + $0x7d8] sm:$0xff]
    %v8732 = vld [vmem:[#allocation12 + $0x7e0] sm:$0xff]
    %v8733 = vld [vmem:[#allocation12 + $0x7e8] sm:$0xff]
    %v8734 = vld [vmem:[#allocation12 + $0x7f0] sm:$0xff]
    %v8735 = vld [vmem:[#allocation12 + $0x7f8] sm:$0xff]
    %v8736 = vld [vmem:[#allocation12 + $0x800] sm:$0xff]
    %v8737 = vld [vmem:[#allocation12 + $0x808] sm:$0xff]
    %v8738 = vld [vmem:[#allocation12 + $0x810] sm:$0xff]
    %v8739 = vld [vmem:[#allocation12 + $0x818] sm:$0xff]
    %v8740 = vld [vmem:[#allocation12 + $0x820] sm:$0xff]
    %v8741 = vld [vmem:[#allocation12 + $0x828] sm:$0xff]
    %v8742 = vld [vmem:[#allocation12 + $0x830] sm:$0xff]
    %v8743 = vld [vmem:[#allocation12 + $0x838] sm:$0xff]
    %v8744 = vld [vmem:[#allocation12 + $0x840] sm:$0xff]
    %v8745 = vld [vmem:[#allocation12 + $0x848] sm:$0xff]
    %v8746 = vld [vmem:[#allocation12 + $0x850] sm:$0xff]
    %v8747 = vld [vmem:[#allocation12 + $0x858] sm:$0xff]
    %v8748 = vld [vmem:[#allocation12 + $0x860] sm:$0xff]
    %v8749 = vld [vmem:[#allocation12 + $0x868] sm:$0xff]
    %v8750 = vld [vmem:[#allocation12 + $0x870] sm:$0xff]
    %v8751 = vld [vmem:[#allocation12 + $0x878] sm:$0xff]
    %v8752 = vld [vmem:[#allocation12 + $0x880] sm:$0xff]
    %v8753 = vld [vmem:[#allocation12 + $0x888] sm:$0xff]
    %v8754 = vld [vmem:[#allocation12 + $0x890] sm:$0xff]
    %v8755 = vld [vmem:[#allocation12 + $0x898] sm:$0xff]
    %v8756 = vld [vmem:[#allocation12 + $0x8a0] sm:$0xff]
    %v8757 = vld [vmem:[#allocation12 + $0x8a8] sm:$0xff]
    %v8758 = vld [vmem:[#allocation12 + $0x8b0] sm:$0xff]
    %v8759 = vld [vmem:[#allocation12 + $0x8b8] sm:$0xff]
    %v8760 = vld [vmem:[#allocation12 + $0x8c0] sm:$0xff]
    %v8761 = vld [vmem:[#allocation12 + $0x8c8] sm:$0xff]
    %v8762 = vld [vmem:[#allocation12 + $0x8d0] sm:$0xff]
    %v8763 = vld [vmem:[#allocation12 + $0x8d8] sm:$0xff]
    %v8764 = vld [vmem:[#allocation12 + $0x8e0] sm:$0xff]
    %v8765 = vld [vmem:[#allocation12 + $0x8e8] sm:$0xff]
    %v8766 = vld [vmem:[#allocation12 + $0x8f0] sm:$0xff]
    %v8767 = vld [vmem:[#allocation12 + $0x8f8] sm:$0xff]
    %v8768 = vld [vmem:[#allocation12 + $0x900] sm:$0xff]
    %v8769 = vld [vmem:[#allocation12 + $0x908] sm:$0xff]
    %v8770 = vld [vmem:[#allocation12 + $0x910] sm:$0xff]
    %v8771 = vld [vmem:[#allocation12 + $0x918] sm:$0xff]
    %v8772 = vld [vmem:[#allocation12 + $0x920] sm:$0xff]
    %v8773 = vld [vmem:[#allocation12 + $0x928] sm:$0xff]
    %v8774 = vld [vmem:[#allocation12 + $0x930] sm:$0xff]
    %v8775 = vld [vmem:[#allocation12 + $0x938] sm:$0xff]
    %v8776 = vld [vmem:[#allocation12 + $0x940] sm:$0xff]
    %v8777 = vld [vmem:[#allocation12 + $0x948] sm:$0xff]
    %v8778 = vld [vmem:[#allocation12 + $0x950] sm:$0xff]
    %v8779 = vld [vmem:[#allocation12 + $0x958] sm:$0xff]
    %v8780 = vld [vmem:[#allocation12 + $0x960] sm:$0xff]
    %v8781 = vld [vmem:[#allocation12 + $0x968] sm:$0xff]
    %v8782 = vld [vmem:[#allocation12 + $0x970] sm:$0xff]
    %v8783 = vld [vmem:[#allocation12 + $0x978] sm:$0xff]
    %v8784 = vld [vmem:[#allocation12 + $0x980] sm:$0xff]
    %v8785 = vld [vmem:[#allocation12 + $0x988] sm:$0xff]
    %v8786 = vld [vmem:[#allocation12 + $0x990] sm:$0xff]
    %v8787 = vld [vmem:[#allocation12 + $0x998] sm:$0xff]
    %v8788 = vld [vmem:[#allocation12 + $0x9a0] sm:$0xff]
    %v8789 = vld [vmem:[#allocation12 + $0x9a8] sm:$0xff]
    %v8790 = vld [vmem:[#allocation12 + $0x9b0] sm:$0xff]
    %v8791 = vld [vmem:[#allocation12 + $0x9b8] sm:$0xff]
    %v8792 = vld [vmem:[#allocation12 + $0x9c0] sm:$0xff]
    %v8793 = vld [vmem:[#allocation12 + $0x9c8] sm:$0xff]
    %v8794 = vld [vmem:[#allocation12 + $0x9d0] sm:$0xff]
    %v8795 = vld [vmem:[#allocation12 + $0x9d8] sm:$0xff]
    %v8796 = vld [vmem:[#allocation12 + $0x9e0] sm:$0xff]
    %v8797 = vld [vmem:[#allocation12 + $0x9e8] sm:$0xff]
    %v8798 = vld [vmem:[#allocation12 + $0x9f0] sm:$0xff]
    %v8799 = vld [vmem:[#allocation12 + $0x9f8] sm:$0xff]
    %v8800 = vld [vmem:[#allocation12 + $0xa00] sm:$0xff]
    %v8801 = vld [vmem:[#allocation12 + $0xa08] sm:$0xff]
    %v8802 = vld [vmem:[#allocation12 + $0xa10] sm:$0xff]
    %v8803 = vld [vmem:[#allocation12 + $0xa18] sm:$0xff]
    %v8804 = vld [vmem:[#allocation12 + $0xa20] sm:$0xff]
    %v8805 = vld [vmem:[#allocation12 + $0xa28] sm:$0xff]
    %v8806 = vld [vmem:[#allocation12 + $0xa30] sm:$0xff]
    %v8807 = vld [vmem:[#allocation12 + $0xa38] sm:$0xff]
    %v8808 = vld [vmem:[#allocation12 + $0xa40] sm:$0xff]
    %v8809 = vld [vmem:[#allocation12 + $0xa48] sm:$0xff]
    %v8810 = vld [vmem:[#allocation12 + $0xa50] sm:$0xff]
    %v8811 = vld [vmem:[#allocation12 + $0xa58] sm:$0xff]
    %v8812 = vld [vmem:[#allocation12 + $0xa60] sm:$0xff]
    %v8813 = vld [vmem:[#allocation12 + $0xa68] sm:$0xff]
    %v8814 = vld [vmem:[#allocation12 + $0xa70] sm:$0xff]
    %v8815 = vld [vmem:[#allocation12 + $0xa78] sm:$0xff]
    %v8816 = vld [vmem:[#allocation12 + $0xa80] sm:$0xff]
    %v8817 = vld [vmem:[#allocation12 + $0xa88] sm:$0xff]
    %v8818 = vld [vmem:[#allocation12 + $0xa90] sm:$0xff]
    %v8819 = vld [vmem:[#allocation12 + $0xa98] sm:$0xff]
    %v8820 = vld [vmem:[#allocation12 + $0xaa0] sm:$0xff]
    %v8821 = vld [vmem:[#allocation12 + $0xaa8] sm:$0xff]
    %v8822 = vld [vmem:[#allocation12 + $0xab0] sm:$0xff]
    %v8823 = vld [vmem:[#allocation12 + $0xab8] sm:$0xff]
    %v8824 = vld [vmem:[#allocation12 + $0xac0] sm:$0xff]
    %v8825 = vld [vmem:[#allocation12 + $0xac8] sm:$0xff]
    %v8826 = vld [vmem:[#allocation12 + $0xad0] sm:$0xff]
    %v8827 = vld [vmem:[#allocation12 + $0xad8] sm:$0xff]
    %v8828 = vld [vmem:[#allocation12 + $0xae0] sm:$0xff]
    %v8829 = vld [vmem:[#allocation12 + $0xae8] sm:$0xff]
    %v8830 = vld [vmem:[#allocation12 + $0xaf0] sm:$0xff]
    %v8831 = vld [vmem:[#allocation12 + $0xaf8] sm:$0xff]
    %v8832 = vld [vmem:[#allocation12 + $0xb00] sm:$0xff]
    %v8833 = vld [vmem:[#allocation12 + $0xb08] sm:$0xff]
    %v8834 = vld [vmem:[#allocation12 + $0xb10] sm:$0xff]
    %v8835 = vld [vmem:[#allocation12 + $0xb18] sm:$0xff]
    %v8836 = vld [vmem:[#allocation12 + $0xb20] sm:$0xff]
    %v8837 = vld [vmem:[#allocation12 + $0xb28] sm:$0xff]
    %v8838 = vld [vmem:[#allocation12 + $0xb30] sm:$0xff]
    %v8839 = vld [vmem:[#allocation12 + $0xb38] sm:$0xff]
    %v8840 = vld [vmem:[#allocation12 + $0xb40] sm:$0xff]
    %v8841 = vld [vmem:[#allocation12 + $0xb48] sm:$0xff]
    %v8842 = vld [vmem:[#allocation12 + $0xb50] sm:$0xff]
    %v8843 = vld [vmem:[#allocation12 + $0xb58] sm:$0xff]
    %v8844 = vld [vmem:[#allocation12 + $0xb60] sm:$0xff]
    %v8845 = vld [vmem:[#allocation12 + $0xb68] sm:$0xff]
    %v8846 = vld [vmem:[#allocation12 + $0xb70] sm:$0xff]
    %v8847 = vld [vmem:[#allocation12 + $0xb78] sm:$0xff]
    %v8848 = vld [vmem:[#allocation12 + $0xb80] sm:$0xff]
    %v8849 = vld [vmem:[#allocation12 + $0xb88] sm:$0xff]
    %v8850 = vld [vmem:[#allocation12 + $0xb90] sm:$0xff]
    %v8851 = vld [vmem:[#allocation12 + $0xb98] sm:$0xff]
    %v8852 = vld [vmem:[#allocation12 + $0xba0] sm:$0xff]
    %v8853 = vld [vmem:[#allocation12 + $0xba8] sm:$0xff]
    %v8854 = vld [vmem:[#allocation12 + $0xbb0] sm:$0xff]
    %v8855 = vld [vmem:[#allocation12 + $0xbb8] sm:$0xff]
    %v8856 = vld [vmem:[#allocation12 + $0xbc0] sm:$0xff]
    %v8857 = vld [vmem:[#allocation12 + $0xbc8] sm:$0xff]
    %v8858 = vld [vmem:[#allocation12 + $0xbd0] sm:$0xff]
    %v8859 = vld [vmem:[#allocation12 + $0xbd8] sm:$0xff]
    %v8860 = vld [vmem:[#allocation12 + $0xbe0] sm:$0xff]
    %v8861 = vld [vmem:[#allocation12 + $0xbe8] sm:$0xff]
    %v8862 = vld [vmem:[#allocation12 + $0xbf0] sm:$0xff]
    %v8863 = vld [vmem:[#allocation12 + $0xbf8] sm:$0xff]
    %v8864 = vld [vmem:[#allocation12 + $0xc00] sm:$0xff]
    %v8865 = vld [vmem:[#allocation12 + $0xc08] sm:$0xff]
    %v8866 = vld [vmem:[#allocation12 + $0xc10] sm:$0xff]
    %v8867 = vld [vmem:[#allocation12 + $0xc18] sm:$0xff]
    %v8868 = vld [vmem:[#allocation12 + $0xc20] sm:$0xff]
    %v8869 = vld [vmem:[#allocation12 + $0xc28] sm:$0xff]
    %v8870 = vld [vmem:[#allocation12 + $0xc30] sm:$0xff]
    %v8871 = vld [vmem:[#allocation12 + $0xc38] sm:$0xff]
    %v8872 = vld [vmem:[#allocation12 + $0xc40] sm:$0xff]
    %v8873 = vld [vmem:[#allocation12 + $0xc48] sm:$0xff]
    %v8874 = vld [vmem:[#allocation12 + $0xc50] sm:$0xff]
    %v8875 = vld [vmem:[#allocation12 + $0xc58] sm:$0xff]
    %v8876 = vld [vmem:[#allocation12 + $0xc60] sm:$0xff]
    %v8877 = vld [vmem:[#allocation12 + $0xc68] sm:$0xff]
    %v8878 = vld [vmem:[#allocation12 + $0xc70] sm:$0xff]
    %v8879 = vld [vmem:[#allocation12 + $0xc78] sm:$0xff]
    %v8880 = vld [vmem:[#allocation12 + $0xc80] sm:$0xff]
    %v8881 = vld [vmem:[#allocation12 + $0xc88] sm:$0xff]
    %v8882 = vld [vmem:[#allocation12 + $0xc90] sm:$0xff]
    %v8883 = vld [vmem:[#allocation12 + $0xc98] sm:$0xff]
    %v8884 = vld [vmem:[#allocation12 + $0xca0] sm:$0xff]
    %v8885 = vld [vmem:[#allocation12 + $0xca8] sm:$0xff]
    %v8886 = vld [vmem:[#allocation12 + $0xcb0] sm:$0xff]
    %v8887 = vld [vmem:[#allocation12 + $0xcb8] sm:$0xff]
    %v8888 = vld [vmem:[#allocation12 + $0xcc0] sm:$0xff]
    %v8889 = vld [vmem:[#allocation12 + $0xcc8] sm:$0xff]
    %v8890 = vld [vmem:[#allocation12 + $0xcd0] sm:$0xff]
    %v8891 = vld [vmem:[#allocation12 + $0xcd8] sm:$0xff]
    %v8892 = vld [vmem:[#allocation12 + $0xce0] sm:$0xff]
    %v8893 = vld [vmem:[#allocation12 + $0xce8] sm:$0xff]
    %v8894 = vld [vmem:[#allocation12 + $0xcf0] sm:$0xff]
    %v8895 = vld [vmem:[#allocation12 + $0xcf8] sm:$0xff]
    %v8896 = vld [vmem:[#allocation12 + $0xd00] sm:$0xff]
    %v8897 = vld [vmem:[#allocation12 + $0xd08] sm:$0xff]
    %v8898 = vld [vmem:[#allocation12 + $0xd10] sm:$0xff]
    %v8899 = vld [vmem:[#allocation12 + $0xd18] sm:$0xff]
    %v8900 = vld [vmem:[#allocation12 + $0xd20] sm:$0xff]
    %v8901 = vld [vmem:[#allocation12 + $0xd28] sm:$0xff]
    %v8902 = vld [vmem:[#allocation12 + $0xd30] sm:$0xff]
    %v8903 = vld [vmem:[#allocation12 + $0xd38] sm:$0xff]
    %v8904 = vld [vmem:[#allocation12 + $0xd40] sm:$0xff]
    %v8905 = vld [vmem:[#allocation12 + $0xd48] sm:$0xff]
    %v8906 = vld [vmem:[#allocation12 + $0xd50] sm:$0xff]
    %v8907 = vld [vmem:[#allocation12 + $0xd58] sm:$0xff]
    %v8908 = vld [vmem:[#allocation12 + $0xd60] sm:$0xff]
    %v8909 = vld [vmem:[#allocation12 + $0xd68] sm:$0xff]
    %v8910 = vld [vmem:[#allocation12 + $0xd70] sm:$0xff]
    %v8911 = vld [vmem:[#allocation12 + $0xd78] sm:$0xff]
    %v8912 = vld [vmem:[#allocation12 + $0xd80] sm:$0xff]
    %v8913 = vld [vmem:[#allocation12 + $0xd88] sm:$0xff]
    %v8914 = vld [vmem:[#allocation12 + $0xd90] sm:$0xff]
    %v8915 = vld [vmem:[#allocation12 + $0xd98] sm:$0xff]
    %v8916 = vld [vmem:[#allocation12 + $0xda0] sm:$0xff]
    %v8917 = vld [vmem:[#allocation12 + $0xda8] sm:$0xff]
    %v8918 = vld [vmem:[#allocation12 + $0xdb0] sm:$0xff]
    %v8919 = vld [vmem:[#allocation12 + $0xdb8] sm:$0xff]
    %v8920 = vld [vmem:[#allocation12 + $0xdc0] sm:$0xff]
    %v8921 = vld [vmem:[#allocation12 + $0xdc8] sm:$0xff]
    %v8922 = vld [vmem:[#allocation12 + $0xdd0] sm:$0xff]
    %v8923 = vld [vmem:[#allocation12 + $0xdd8] sm:$0xff]
    %v8924 = vld [vmem:[#allocation12 + $0xde0] sm:$0xff]
    %v8925 = vld [vmem:[#allocation12 + $0xde8] sm:$0xff]
    %v8926 = vld [vmem:[#allocation12 + $0xdf0] sm:$0xff]
    %v8927 = vld [vmem:[#allocation12 + $0xdf8] sm:$0xff]
    %v8928 = vld [vmem:[#allocation12 + $0xe00] sm:$0xff]
    %v8929 = vld [vmem:[#allocation12 + $0xe08] sm:$0xff]
    %v8930 = vld [vmem:[#allocation12 + $0xe10] sm:$0xff]
    %v8931 = vld [vmem:[#allocation12 + $0xe18] sm:$0xff]
    %v8932 = vld [vmem:[#allocation12 + $0xe20] sm:$0xff]
    %v8933 = vld [vmem:[#allocation12 + $0xe28] sm:$0xff]
    %v8934 = vld [vmem:[#allocation12 + $0xe30] sm:$0xff]
    %v8935 = vld [vmem:[#allocation12 + $0xe38] sm:$0xff]
    %v8936 = vld [vmem:[#allocation12 + $0xe40] sm:$0xff]
    %v8937 = vld [vmem:[#allocation12 + $0xe48] sm:$0xff]
    %v8938 = vld [vmem:[#allocation12 + $0xe50] sm:$0xff]
    %v8939 = vld [vmem:[#allocation12 + $0xe58] sm:$0xff]
    %v8940 = vld [vmem:[#allocation12 + $0xe60] sm:$0xff]
    %v8941 = vld [vmem:[#allocation12 + $0xe68] sm:$0xff]
    %v8942 = vld [vmem:[#allocation12 + $0xe70] sm:$0xff]
    %v8943 = vld [vmem:[#allocation12 + $0xe78] sm:$0xff]
    %v8944 = vld [vmem:[#allocation12 + $0xe80] sm:$0xff]
    %v8945 = vld [vmem:[#allocation12 + $0xe88] sm:$0xff]
    %v8946 = vld [vmem:[#allocation12 + $0xe90] sm:$0xff]
    %v8947 = vld [vmem:[#allocation12 + $0xe98] sm:$0xff]
    %v8948 = vld [vmem:[#allocation12 + $0xea0] sm:$0xff]
    %v8949 = vld [vmem:[#allocation12 + $0xea8] sm:$0xff]
    %v8950 = vld [vmem:[#allocation12 + $0xeb0] sm:$0xff]
    %v8951 = vld [vmem:[#allocation12 + $0xeb8] sm:$0xff]
    %v8952 = vld [vmem:[#allocation12 + $0xec0] sm:$0xff]
    %v8953 = vld [vmem:[#allocation12 + $0xec8] sm:$0xff]
    %v8954 = vld [vmem:[#allocation12 + $0xed0] sm:$0xff]
    %v8955 = vld [vmem:[#allocation12 + $0xed8] sm:$0xff]
    %v8956 = vld [vmem:[#allocation12 + $0xee0] sm:$0xff]
    %v8957 = vld [vmem:[#allocation12 + $0xee8] sm:$0xff]
    %v8958 = vld [vmem:[#allocation12 + $0xef0] sm:$0xff]
    %v8959 = vld [vmem:[#allocation12 + $0xef8] sm:$0xff]
    %v8960 = vld [vmem:[#allocation12 + $0xf00] sm:$0xff]
    %v8961 = vld [vmem:[#allocation12 + $0xf08] sm:$0xff]
    %v8962 = vld [vmem:[#allocation12 + $0xf10] sm:$0xff]
    %v8963 = vld [vmem:[#allocation12 + $0xf18] sm:$0xff]
    %v8964 = vld [vmem:[#allocation12 + $0xf20] sm:$0xff]
    %v8965 = vld [vmem:[#allocation12 + $0xf28] sm:$0xff]
    %v8966 = vld [vmem:[#allocation12 + $0xf30] sm:$0xff]
    %v8967 = vld [vmem:[#allocation12 + $0xf38] sm:$0xff]
    %v8968 = vld [vmem:[#allocation12 + $0xf40] sm:$0xff]
    %v8969 = vld [vmem:[#allocation12 + $0xf48] sm:$0xff]
    %v8970 = vld [vmem:[#allocation12 + $0xf50] sm:$0xff]
    %v8971 = vld [vmem:[#allocation12 + $0xf58] sm:$0xff]
    %v8972 = vld [vmem:[#allocation12 + $0xf60] sm:$0xff]
    %v8973 = vld [vmem:[#allocation12 + $0xf68] sm:$0xff]
    %v8974 = vld [vmem:[#allocation12 + $0xf70] sm:$0xff]
    %v8975 = vld [vmem:[#allocation12 + $0xf78] sm:$0xff]
    %v8976 = vld [vmem:[#allocation12 + $0xf80] sm:$0xff]
    %v8977 = vld [vmem:[#allocation12 + $0xf88] sm:$0xff]
    %v8978 = vld [vmem:[#allocation12 + $0xf90] sm:$0xff]
    %v8979 = vld [vmem:[#allocation12 + $0xf98] sm:$0xff]
    %v8980 = vld [vmem:[#allocation12 + $0xfa0] sm:$0xff]
    %v8981 = vld [vmem:[#allocation12 + $0xfa8] sm:$0xff]
    %v8982 = vld [vmem:[#allocation12 + $0xfb0] sm:$0xff]
    %v8983 = vld [vmem:[#allocation12 + $0xfb8] sm:$0xff]
    %v8984 = vld [vmem:[#allocation12 + $0xfc0] sm:$0xff]
    %v8985 = vld [vmem:[#allocation12 + $0xfc8] sm:$0xff]
    %v8986 = vld [vmem:[#allocation12 + $0xfd0] sm:$0xff]
    %v8987 = vld [vmem:[#allocation12 + $0xfd8] sm:$0xff]
    %v8988 = vld [vmem:[#allocation12 + $0xfe0] sm:$0xff]
    %v8989 = vld [vmem:[#allocation12 + $0xfe8] sm:$0xff]
    %v8990 = vld [vmem:[#allocation12 + $0xff0] sm:$0xff]
    %v8991 = vld [vmem:[#allocation12 + $0xff8] sm:$0xff]
    %v8992 = vld [vmem:[#allocation14] sm:$0xff]
    %v8993 = vld [vmem:[#allocation14 + $0x8] sm:$0xff]
    %v8996 = vlaneseq
    %v8997 = vshrl.u32 %v8996, 7
    %v8998 = vsub.s32 0, %v8997
    %v8999 = vrot.slane %v8992, %v8998
    %v9000 = vlaneseq
    %v9001 = vshrl.u32 %v9000, 7
    %v9002 = vsub.s32 1, %v9001
    %v9003 = vrot.slane %v8992, %v9002
    %v9004 = vlaneseq
    %v9005 = vshrl.u32 %v9004, 7
    %v9006 = vsub.s32 2, %v9005
    %v9007 = vrot.slane %v8992, %v9006
    %v9008 = vlaneseq
    %v9009 = vshrl.u32 %v9008, 7
    %v9010 = vsub.s32 3, %v9009
    %v9011 = vrot.slane %v8992, %v9010
    %v9012 = vlaneseq
    %v9013 = vshrl.u32 %v9012, 7
    %v9014 = vsub.s32 4, %v9013
    %v9015 = vrot.slane %v8992, %v9014
    %v9016 = vlaneseq
    %v9017 = vshrl.u32 %v9016, 7
    %v9018 = vsub.s32 5, %v9017
    %v9019 = vrot.slane %v8992, %v9018
    %v9020 = vlaneseq
    %v9021 = vshrl.u32 %v9020, 7
    %v9022 = vsub.s32 6, %v9021
    %v9023 = vrot.slane %v8992, %v9022
    %v9024 = vlaneseq
    %v9025 = vshrl.u32 %v9024, 7
    %v9026 = vsub.s32 7, %v9025
    %v9027 = vrot.slane %v8992, %v9026
    %v9028 = vlaneseq
    %v9029 = vshrl.u32 %v9028, 7
    %v9030 = vsub.s32 0, %v9029
    %v9031 = vrot.slane %v8993, %v9030
    %v9032 = vlaneseq
    %v9033 = vshrl.u32 %v9032, 7
    %v9034 = vsub.s32 1, %v9033
    %v9035 = vrot.slane %v8993, %v9034
    %v9036 = vlaneseq
    %v9037 = vshrl.u32 %v9036, 7
    %v9038 = vsub.s32 2, %v9037
    %v9039 = vrot.slane %v8993, %v9038
    %v9040 = vlaneseq
    %v9041 = vshrl.u32 %v9040, 7
    %v9042 = vsub.s32 3, %v9041
    %v9043 = vrot.slane %v8993, %v9042
    %v9044 = vlaneseq
    %v9045 = vshrl.u32 %v9044, 7
    %v9046 = vsub.s32 4, %v9045
    %v9047 = vrot.slane %v8993, %v9046
    %v9048 = vlaneseq
    %v9049 = vshrl.u32 %v9048, 7
    %v9050 = vsub.s32 5, %v9049
    %v9051 = vrot.slane %v8993, %v9050
    %v9052 = vlaneseq
    %v9053 = vshrl.u32 %v9052, 7
    %v9054 = vsub.s32 6, %v9053
    %v9055 = vrot.slane %v8993, %v9054
    %v9056 = vlaneseq
    %v9057 = vshrl.u32 %v9056, 7
    %v9058 = vsub.s32 7, %v9057
    %v9059 = vrot.slane %v8993, %v9058
    %v9588 = vunpack.c.l.b16 %v8480
    %v9589 = vunpack.c.h.b16 %v8480
    %v9590 = vunpack.c.l.b16 %v8481
    %v9591 = vunpack.c.h.b16 %v8481
    %v9592 = vunpack.c.l.b16 %v8482
    %v9593 = vunpack.c.h.b16 %v8482
    %v9594 = vunpack.c.l.b16 %v8483
    %v9595 = vunpack.c.h.b16 %v8483
    %v9596 = vunpack.c.l.b16 %v8484
    %v9597 = vunpack.c.h.b16 %v8484
    %v9598 = vunpack.c.l.b16 %v8485
    %v9599 = vunpack.c.h.b16 %v8485
    %v9600 = vunpack.c.l.b16 %v8486
    %v9601 = vunpack.c.h.b16 %v8486
    %v9602 = vunpack.c.l.b16 %v8487
    %v9603 = vunpack.c.h.b16 %v8487
    %v9604 = vunpack.c.l.b16 %v8488
    %v9605 = vunpack.c.h.b16 %v8488
    %v9606 = vunpack.c.l.b16 %v8489
    %v9607 = vunpack.c.h.b16 %v8489
    %v9608 = vunpack.c.l.b16 %v8490
    %v9609 = vunpack.c.h.b16 %v8490
    %v9610 = vunpack.c.l.b16 %v8491
    %v9611 = vunpack.c.h.b16 %v8491
    %v9612 = vunpack.c.l.b16 %v8492
    %v9613 = vunpack.c.h.b16 %v8492
    %v9614 = vunpack.c.l.b16 %v8493
    %v9615 = vunpack.c.h.b16 %v8493
    %v9616 = vunpack.c.l.b16 %v8494
    %v9617 = vunpack.c.h.b16 %v8494
    %v9618 = vunpack.c.l.b16 %v8495
    %v9619 = vunpack.c.h.b16 %v8495
    %v9620 = vunpack.c.l.b16 %v8496
    %v9621 = vunpack.c.h.b16 %v8496
    %v9622 = vunpack.c.l.b16 %v8497
    %v9623 = vunpack.c.h.b16 %v8497
    %v9624 = vunpack.c.l.b16 %v8498
    %v9625 = vunpack.c.h.b16 %v8498
    %v9626 = vunpack.c.l.b16 %v8499
    %v9627 = vunpack.c.h.b16 %v8499
    %v9628 = vunpack.c.l.b16 %v8500
    %v9629 = vunpack.c.h.b16 %v8500
    %v9630 = vunpack.c.l.b16 %v8501
    %v9631 = vunpack.c.h.b16 %v8501
    %v9632 = vunpack.c.l.b16 %v8502
    %v9633 = vunpack.c.h.b16 %v8502
    %v9634 = vunpack.c.l.b16 %v8503
    %v9635 = vunpack.c.h.b16 %v8503
    %v9636 = vunpack.c.l.b16 %v8504
    %v9637 = vunpack.c.h.b16 %v8504
    %v9638 = vunpack.c.l.b16 %v8505
    %v9639 = vunpack.c.h.b16 %v8505
    %v9640 = vunpack.c.l.b16 %v8506
    %v9641 = vunpack.c.h.b16 %v8506
    %v9642 = vunpack.c.l.b16 %v8507
    %v9643 = vunpack.c.h.b16 %v8507
    %v9644 = vunpack.c.l.b16 %v8508
    %v9645 = vunpack.c.h.b16 %v8508
    %v9646 = vunpack.c.l.b16 %v8509
    %v9647 = vunpack.c.h.b16 %v8509
    %v9648 = vunpack.c.l.b16 %v8510
    %v9649 = vunpack.c.h.b16 %v8510
    %v9650 = vunpack.c.l.b16 %v8511
    %v9651 = vunpack.c.h.b16 %v8511
    %v9652 = vunpack.c.l.b16 %v8512
    %v9653 = vunpack.c.h.b16 %v8512
    %v9654 = vunpack.c.l.b16 %v8513
    %v9655 = vunpack.c.h.b16 %v8513
    %v9656 = vunpack.c.l.b16 %v8514
    %v9657 = vunpack.c.h.b16 %v8514
    %v9658 = vunpack.c.l.b16 %v8515
    %v9659 = vunpack.c.h.b16 %v8515
    %v9660 = vunpack.c.l.b16 %v8516
    %v9661 = vunpack.c.h.b16 %v8516
    %v9662 = vunpack.c.l.b16 %v8517
    %v9663 = vunpack.c.h.b16 %v8517
    %v9664 = vunpack.c.l.b16 %v8518
    %v9665 = vunpack.c.h.b16 %v8518
    %v9666 = vunpack.c.l.b16 %v8519
    %v9667 = vunpack.c.h.b16 %v8519
    %v9668 = vunpack.c.l.b16 %v8520
    %v9669 = vunpack.c.h.b16 %v8520
    %v9670 = vunpack.c.l.b16 %v8521
    %v9671 = vunpack.c.h.b16 %v8521
    %v9672 = vunpack.c.l.b16 %v8522
    %v9673 = vunpack.c.h.b16 %v8522
    %v9674 = vunpack.c.l.b16 %v8523
    %v9675 = vunpack.c.h.b16 %v8523
    %v9676 = vunpack.c.l.b16 %v8524
    %v9677 = vunpack.c.h.b16 %v8524
    %v9678 = vunpack.c.l.b16 %v8525
    %v9679 = vunpack.c.h.b16 %v8525
    %v9680 = vunpack.c.l.b16 %v8526
    %v9681 = vunpack.c.h.b16 %v8526
    %v9682 = vunpack.c.l.b16 %v8527
    %v9683 = vunpack.c.h.b16 %v8527
    %v9684 = vunpack.c.l.b16 %v8528
    %v9685 = vunpack.c.h.b16 %v8528
    %v9686 = vunpack.c.l.b16 %v8529
    %v9687 = vunpack.c.h.b16 %v8529
    %v9688 = vunpack.c.l.b16 %v8530
    %v9689 = vunpack.c.h.b16 %v8530
    %v9690 = vunpack.c.l.b16 %v8531
    %v9691 = vunpack.c.h.b16 %v8531
    %v9692 = vunpack.c.l.b16 %v8532
    %v9693 = vunpack.c.h.b16 %v8532
    %v9694 = vunpack.c.l.b16 %v8533
    %v9695 = vunpack.c.h.b16 %v8533
    %v9696 = vunpack.c.l.b16 %v8534
    %v9697 = vunpack.c.h.b16 %v8534
    %v9698 = vunpack.c.l.b16 %v8535
    %v9699 = vunpack.c.h.b16 %v8535
    %v9700 = vunpack.c.l.b16 %v8536
    %v9701 = vunpack.c.h.b16 %v8536
    %v9702 = vunpack.c.l.b16 %v8537
    %v9703 = vunpack.c.h.b16 %v8537
    %v9704 = vunpack.c.l.b16 %v8538
    %v9705 = vunpack.c.h.b16 %v8538
    %v9706 = vunpack.c.l.b16 %v8539
    %v9707 = vunpack.c.h.b16 %v8539
    %v9708 = vunpack.c.l.b16 %v8540
    %v9709 = vunpack.c.h.b16 %v8540
    %v9710 = vunpack.c.l.b16 %v8541
    %v9711 = vunpack.c.h.b16 %v8541
    %v9712 = vunpack.c.l.b16 %v8542
    %v9713 = vunpack.c.h.b16 %v8542
    %v9714 = vunpack.c.l.b16 %v8543
    %v9715 = vunpack.c.h.b16 %v8543
    %v9716 = vunpack.c.l.b16 %v8544
    %v9717 = vunpack.c.h.b16 %v8544
    %v9718 = vunpack.c.l.b16 %v8545
    %v9719 = vunpack.c.h.b16 %v8545
    %v9720 = vunpack.c.l.b16 %v8546
    %v9721 = vunpack.c.h.b16 %v8546
    %v9722 = vunpack.c.l.b16 %v8547
    %v9723 = vunpack.c.h.b16 %v8547
    %v9724 = vunpack.c.l.b16 %v8548
    %v9725 = vunpack.c.h.b16 %v8548
    %v9726 = vunpack.c.l.b16 %v8549
    %v9727 = vunpack.c.h.b16 %v8549
    %v9728 = vunpack.c.l.b16 %v8550
    %v9729 = vunpack.c.h.b16 %v8550
    %v9730 = vunpack.c.l.b16 %v8551
    %v9731 = vunpack.c.h.b16 %v8551
    %v9732 = vunpack.c.l.b16 %v8552
    %v9733 = vunpack.c.h.b16 %v8552
    %v9734 = vunpack.c.l.b16 %v8553
    %v9735 = vunpack.c.h.b16 %v8553
    %v9736 = vunpack.c.l.b16 %v8554
    %v9737 = vunpack.c.h.b16 %v8554
    %v9738 = vunpack.c.l.b16 %v8555
    %v9739 = vunpack.c.h.b16 %v8555
    %v9740 = vunpack.c.l.b16 %v8556
    %v9741 = vunpack.c.h.b16 %v8556
    %v9742 = vunpack.c.l.b16 %v8557
    %v9743 = vunpack.c.h.b16 %v8557
    %v9744 = vunpack.c.l.b16 %v8558
    %v9745 = vunpack.c.h.b16 %v8558
    %v9746 = vunpack.c.l.b16 %v8559
    %v9747 = vunpack.c.h.b16 %v8559
    %v9748 = vunpack.c.l.b16 %v8560
    %v9749 = vunpack.c.h.b16 %v8560
    %v9750 = vunpack.c.l.b16 %v8561
    %v9751 = vunpack.c.h.b16 %v8561
    %v9752 = vunpack.c.l.b16 %v8562
    %v9753 = vunpack.c.h.b16 %v8562
    %v9754 = vunpack.c.l.b16 %v8563
    %v9755 = vunpack.c.h.b16 %v8563
    %v9756 = vunpack.c.l.b16 %v8564
    %v9757 = vunpack.c.h.b16 %v8564
    %v9758 = vunpack.c.l.b16 %v8565
    %v9759 = vunpack.c.h.b16 %v8565
    %v9760 = vunpack.c.l.b16 %v8566
    %v9761 = vunpack.c.h.b16 %v8566
    %v9762 = vunpack.c.l.b16 %v8567
    %v9763 = vunpack.c.h.b16 %v8567
    %v9764 = vunpack.c.l.b16 %v8568
    %v9765 = vunpack.c.h.b16 %v8568
    %v9766 = vunpack.c.l.b16 %v8569
    %v9767 = vunpack.c.h.b16 %v8569
    %v9768 = vunpack.c.l.b16 %v8570
    %v9769 = vunpack.c.h.b16 %v8570
    %v9770 = vunpack.c.l.b16 %v8571
    %v9771 = vunpack.c.h.b16 %v8571
    %v9772 = vunpack.c.l.b16 %v8572
    %v9773 = vunpack.c.h.b16 %v8572
    %v9774 = vunpack.c.l.b16 %v8573
    %v9775 = vunpack.c.h.b16 %v8573
    %v9776 = vunpack.c.l.b16 %v8574
    %v9777 = vunpack.c.h.b16 %v8574
    %v9778 = vunpack.c.l.b16 %v8575
    %v9779 = vunpack.c.h.b16 %v8575
    %v9780 = vunpack.c.l.b16 %v8576
    %v9781 = vunpack.c.h.b16 %v8576
    %v9782 = vunpack.c.l.b16 %v8577
    %v9783 = vunpack.c.h.b16 %v8577
    %v9784 = vunpack.c.l.b16 %v8578
    %v9785 = vunpack.c.h.b16 %v8578
    %v9786 = vunpack.c.l.b16 %v8579
    %v9787 = vunpack.c.h.b16 %v8579
    %v9788 = vunpack.c.l.b16 %v8580
    %v9789 = vunpack.c.h.b16 %v8580
    %v9790 = vunpack.c.l.b16 %v8581
    %v9791 = vunpack.c.h.b16 %v8581
    %v9792 = vunpack.c.l.b16 %v8582
    %v9793 = vunpack.c.h.b16 %v8582
    %v9794 = vunpack.c.l.b16 %v8583
    %v9795 = vunpack.c.h.b16 %v8583
    %v9796 = vunpack.c.l.b16 %v8584
    %v9797 = vunpack.c.h.b16 %v8584
    %v9798 = vunpack.c.l.b16 %v8585
    %v9799 = vunpack.c.h.b16 %v8585
    %v9800 = vunpack.c.l.b16 %v8586
    %v9801 = vunpack.c.h.b16 %v8586
    %v9802 = vunpack.c.l.b16 %v8587
    %v9803 = vunpack.c.h.b16 %v8587
    %v9804 = vunpack.c.l.b16 %v8588
    %v9805 = vunpack.c.h.b16 %v8588
    %v9806 = vunpack.c.l.b16 %v8589
    %v9807 = vunpack.c.h.b16 %v8589
    %v9808 = vunpack.c.l.b16 %v8590
    %v9809 = vunpack.c.h.b16 %v8590
    %v9810 = vunpack.c.l.b16 %v8591
    %v9811 = vunpack.c.h.b16 %v8591
    %v9812 = vunpack.c.l.b16 %v8592
    %v9813 = vunpack.c.h.b16 %v8592
    %v9814 = vunpack.c.l.b16 %v8593
    %v9815 = vunpack.c.h.b16 %v8593
    %v9816 = vunpack.c.l.b16 %v8594
    %v9817 = vunpack.c.h.b16 %v8594
    %v9818 = vunpack.c.l.b16 %v8595
    %v9819 = vunpack.c.h.b16 %v8595
    %v9820 = vunpack.c.l.b16 %v8596
    %v9821 = vunpack.c.h.b16 %v8596
    %v9822 = vunpack.c.l.b16 %v8597
    %v9823 = vunpack.c.h.b16 %v8597
    %v9824 = vunpack.c.l.b16 %v8598
    %v9825 = vunpack.c.h.b16 %v8598
    %v9826 = vunpack.c.l.b16 %v8599
    %v9827 = vunpack.c.h.b16 %v8599
    %v9828 = vunpack.c.l.b16 %v8600
    %v9829 = vunpack.c.h.b16 %v8600
    %v9830 = vunpack.c.l.b16 %v8601
    %v9831 = vunpack.c.h.b16 %v8601
    %v9832 = vunpack.c.l.b16 %v8602
    %v9833 = vunpack.c.h.b16 %v8602
    %v9834 = vunpack.c.l.b16 %v8603
    %v9835 = vunpack.c.h.b16 %v8603
    %v9836 = vunpack.c.l.b16 %v8604
    %v9837 = vunpack.c.h.b16 %v8604
    %v9838 = vunpack.c.l.b16 %v8605
    %v9839 = vunpack.c.h.b16 %v8605
    %v9840 = vunpack.c.l.b16 %v8606
    %v9841 = vunpack.c.h.b16 %v8606
    %v9842 = vunpack.c.l.b16 %v8607
    %v9843 = vunpack.c.h.b16 %v8607
    %v9844 = vunpack.c.l.b16 %v8608
    %v9845 = vunpack.c.h.b16 %v8608
    %v9846 = vunpack.c.l.b16 %v8609
    %v9847 = vunpack.c.h.b16 %v8609
    %v9848 = vunpack.c.l.b16 %v8610
    %v9849 = vunpack.c.h.b16 %v8610
    %v9850 = vunpack.c.l.b16 %v8611
    %v9851 = vunpack.c.h.b16 %v8611
    %v9852 = vunpack.c.l.b16 %v8612
    %v9853 = vunpack.c.h.b16 %v8612
    %v9854 = vunpack.c.l.b16 %v8613
    %v9855 = vunpack.c.h.b16 %v8613
    %v9856 = vunpack.c.l.b16 %v8614
    %v9857 = vunpack.c.h.b16 %v8614
    %v9858 = vunpack.c.l.b16 %v8615
    %v9859 = vunpack.c.h.b16 %v8615
    %v9860 = vunpack.c.l.b16 %v8616
    %v9861 = vunpack.c.h.b16 %v8616
    %v9862 = vunpack.c.l.b16 %v8617
    %v9863 = vunpack.c.h.b16 %v8617
    %v9864 = vunpack.c.l.b16 %v8618
    %v9865 = vunpack.c.h.b16 %v8618
    %v9866 = vunpack.c.l.b16 %v8619
    %v9867 = vunpack.c.h.b16 %v8619
    %v9868 = vunpack.c.l.b16 %v8620
    %v9869 = vunpack.c.h.b16 %v8620
    %v9870 = vunpack.c.l.b16 %v8621
    %v9871 = vunpack.c.h.b16 %v8621
    %v9872 = vunpack.c.l.b16 %v8622
    %v9873 = vunpack.c.h.b16 %v8622
    %v9874 = vunpack.c.l.b16 %v8623
    %v9875 = vunpack.c.h.b16 %v8623
    %v9876 = vunpack.c.l.b16 %v8624
    %v9877 = vunpack.c.h.b16 %v8624
    %v9878 = vunpack.c.l.b16 %v8625
    %v9879 = vunpack.c.h.b16 %v8625
    %v9880 = vunpack.c.l.b16 %v8626
    %v9881 = vunpack.c.h.b16 %v8626
    %v9882 = vunpack.c.l.b16 %v8627
    %v9883 = vunpack.c.h.b16 %v8627
    %v9884 = vunpack.c.l.b16 %v8628
    %v9885 = vunpack.c.h.b16 %v8628
    %v9886 = vunpack.c.l.b16 %v8629
    %v9887 = vunpack.c.h.b16 %v8629
    %v9888 = vunpack.c.l.b16 %v8630
    %v9889 = vunpack.c.h.b16 %v8630
    %v9890 = vunpack.c.l.b16 %v8631
    %v9891 = vunpack.c.h.b16 %v8631
    %v9892 = vunpack.c.l.b16 %v8632
    %v9893 = vunpack.c.h.b16 %v8632
    %v9894 = vunpack.c.l.b16 %v8633
    %v9895 = vunpack.c.h.b16 %v8633
    %v9896 = vunpack.c.l.b16 %v8634
    %v9897 = vunpack.c.h.b16 %v8634
    %v9898 = vunpack.c.l.b16 %v8635
    %v9899 = vunpack.c.h.b16 %v8635
    %v9900 = vunpack.c.l.b16 %v8636
    %v9901 = vunpack.c.h.b16 %v8636
    %v9902 = vunpack.c.l.b16 %v8637
    %v9903 = vunpack.c.h.b16 %v8637
    %v9904 = vunpack.c.l.b16 %v8638
    %v9905 = vunpack.c.h.b16 %v8638
    %v9906 = vunpack.c.l.b16 %v8639
    %v9907 = vunpack.c.h.b16 %v8639
    %v9908 = vunpack.c.l.b16 %v8640
    %v9909 = vunpack.c.h.b16 %v8640
    %v9910 = vunpack.c.l.b16 %v8641
    %v9911 = vunpack.c.h.b16 %v8641
    %v9912 = vunpack.c.l.b16 %v8642
    %v9913 = vunpack.c.h.b16 %v8642
    %v9914 = vunpack.c.l.b16 %v8643
    %v9915 = vunpack.c.h.b16 %v8643
    %v9916 = vunpack.c.l.b16 %v8644
    %v9917 = vunpack.c.h.b16 %v8644
    %v9918 = vunpack.c.l.b16 %v8645
    %v9919 = vunpack.c.h.b16 %v8645
    %v9920 = vunpack.c.l.b16 %v8646
    %v9921 = vunpack.c.h.b16 %v8646
    %v9922 = vunpack.c.l.b16 %v8647
    %v9923 = vunpack.c.h.b16 %v8647
    %v9924 = vunpack.c.l.b16 %v8648
    %v9925 = vunpack.c.h.b16 %v8648
    %v9926 = vunpack.c.l.b16 %v8649
    %v9927 = vunpack.c.h.b16 %v8649
    %v9928 = vunpack.c.l.b16 %v8650
    %v9929 = vunpack.c.h.b16 %v8650
    %v9930 = vunpack.c.l.b16 %v8651
    %v9931 = vunpack.c.h.b16 %v8651
    %v9932 = vunpack.c.l.b16 %v8652
    %v9933 = vunpack.c.h.b16 %v8652
    %v9934 = vunpack.c.l.b16 %v8653
    %v9935 = vunpack.c.h.b16 %v8653
    %v9936 = vunpack.c.l.b16 %v8654
    %v9937 = vunpack.c.h.b16 %v8654
    %v9938 = vunpack.c.l.b16 %v8655
    %v9939 = vunpack.c.h.b16 %v8655
    %v9940 = vunpack.c.l.b16 %v8656
    %v9941 = vunpack.c.h.b16 %v8656
    %v9942 = vunpack.c.l.b16 %v8657
    %v9943 = vunpack.c.h.b16 %v8657
    %v9944 = vunpack.c.l.b16 %v8658
    %v9945 = vunpack.c.h.b16 %v8658
    %v9946 = vunpack.c.l.b16 %v8659
    %v9947 = vunpack.c.h.b16 %v8659
    %v9948 = vunpack.c.l.b16 %v8660
    %v9949 = vunpack.c.h.b16 %v8660
    %v9950 = vunpack.c.l.b16 %v8661
    %v9951 = vunpack.c.h.b16 %v8661
    %v9952 = vunpack.c.l.b16 %v8662
    %v9953 = vunpack.c.h.b16 %v8662
    %v9954 = vunpack.c.l.b16 %v8663
    %v9955 = vunpack.c.h.b16 %v8663
    %v9956 = vunpack.c.l.b16 %v8664
    %v9957 = vunpack.c.h.b16 %v8664
    %v9958 = vunpack.c.l.b16 %v8665
    %v9959 = vunpack.c.h.b16 %v8665
    %v9960 = vunpack.c.l.b16 %v8666
    %v9961 = vunpack.c.h.b16 %v8666
    %v9962 = vunpack.c.l.b16 %v8667
    %v9963 = vunpack.c.h.b16 %v8667
    %v9964 = vunpack.c.l.b16 %v8668
    %v9965 = vunpack.c.h.b16 %v8668
    %v9966 = vunpack.c.l.b16 %v8669
    %v9967 = vunpack.c.h.b16 %v8669
    %v9968 = vunpack.c.l.b16 %v8670
    %v9969 = vunpack.c.h.b16 %v8670
    %v9970 = vunpack.c.l.b16 %v8671
    %v9971 = vunpack.c.h.b16 %v8671
    %v9972 = vunpack.c.l.b16 %v8672
    %v9973 = vunpack.c.h.b16 %v8672
    %v9974 = vunpack.c.l.b16 %v8673
    %v9975 = vunpack.c.h.b16 %v8673
    %v9976 = vunpack.c.l.b16 %v8674
    %v9977 = vunpack.c.h.b16 %v8674
    %v9978 = vunpack.c.l.b16 %v8675
    %v9979 = vunpack.c.h.b16 %v8675
    %v9980 = vunpack.c.l.b16 %v8676
    %v9981 = vunpack.c.h.b16 %v8676
    %v9982 = vunpack.c.l.b16 %v8677
    %v9983 = vunpack.c.h.b16 %v8677
    %v9984 = vunpack.c.l.b16 %v8678
    %v9985 = vunpack.c.h.b16 %v8678
    %v9986 = vunpack.c.l.b16 %v8679
    %v9987 = vunpack.c.h.b16 %v8679
    %v9988 = vunpack.c.l.b16 %v8680
    %v9989 = vunpack.c.h.b16 %v8680
    %v9990 = vunpack.c.l.b16 %v8681
    %v9991 = vunpack.c.h.b16 %v8681
    %v9992 = vunpack.c.l.b16 %v8682
    %v9993 = vunpack.c.h.b16 %v8682
    %v9994 = vunpack.c.l.b16 %v8683
    %v9995 = vunpack.c.h.b16 %v8683
    %v9996 = vunpack.c.l.b16 %v8684
    %v9997 = vunpack.c.h.b16 %v8684
    %v9998 = vunpack.c.l.b16 %v8685
    %v9999 = vunpack.c.h.b16 %v8685
    %v10000 = vunpack.c.l.b16 %v8686
    %v10001 = vunpack.c.h.b16 %v8686
    %v10002 = vunpack.c.l.b16 %v8687
    %v10003 = vunpack.c.h.b16 %v8687
    %v10004 = vunpack.c.l.b16 %v8688
    %v10005 = vunpack.c.h.b16 %v8688
    %v10006 = vunpack.c.l.b16 %v8689
    %v10007 = vunpack.c.h.b16 %v8689
    %v10008 = vunpack.c.l.b16 %v8690
    %v10009 = vunpack.c.h.b16 %v8690
    %v10010 = vunpack.c.l.b16 %v8691
    %v10011 = vunpack.c.h.b16 %v8691
    %v10012 = vunpack.c.l.b16 %v8692
    %v10013 = vunpack.c.h.b16 %v8692
    %v10014 = vunpack.c.l.b16 %v8693
    %v10015 = vunpack.c.h.b16 %v8693
    %v10016 = vunpack.c.l.b16 %v8694
    %v10017 = vunpack.c.h.b16 %v8694
    %v10018 = vunpack.c.l.b16 %v8695
    %v10019 = vunpack.c.h.b16 %v8695
    %v10020 = vunpack.c.l.b16 %v8696
    %v10021 = vunpack.c.h.b16 %v8696
    %v10022 = vunpack.c.l.b16 %v8697
    %v10023 = vunpack.c.h.b16 %v8697
    %v10024 = vunpack.c.l.b16 %v8698
    %v10025 = vunpack.c.h.b16 %v8698
    %v10026 = vunpack.c.l.b16 %v8699
    %v10027 = vunpack.c.h.b16 %v8699
    %v10028 = vunpack.c.l.b16 %v8700
    %v10029 = vunpack.c.h.b16 %v8700
    %v10030 = vunpack.c.l.b16 %v8701
    %v10031 = vunpack.c.h.b16 %v8701
    %v10032 = vunpack.c.l.b16 %v8702
    %v10033 = vunpack.c.h.b16 %v8702
    %v10034 = vunpack.c.l.b16 %v8703
    %v10035 = vunpack.c.h.b16 %v8703
    %v10036 = vunpack.c.l.b16 %v8704
    %v10037 = vunpack.c.h.b16 %v8704
    %v10038 = vunpack.c.l.b16 %v8705
    %v10039 = vunpack.c.h.b16 %v8705
    %v10040 = vunpack.c.l.b16 %v8706
    %v10041 = vunpack.c.h.b16 %v8706
    %v10042 = vunpack.c.l.b16 %v8707
    %v10043 = vunpack.c.h.b16 %v8707
    %v10044 = vunpack.c.l.b16 %v8708
    %v10045 = vunpack.c.h.b16 %v8708
    %v10046 = vunpack.c.l.b16 %v8709
    %v10047 = vunpack.c.h.b16 %v8709
    %v10048 = vunpack.c.l.b16 %v8710
    %v10049 = vunpack.c.h.b16 %v8710
    %v10050 = vunpack.c.l.b16 %v8711
    %v10051 = vunpack.c.h.b16 %v8711
    %v10052 = vunpack.c.l.b16 %v8712
    %v10053 = vunpack.c.h.b16 %v8712
    %v10054 = vunpack.c.l.b16 %v8713
    %v10055 = vunpack.c.h.b16 %v8713
    %v10056 = vunpack.c.l.b16 %v8714
    %v10057 = vunpack.c.h.b16 %v8714
    %v10058 = vunpack.c.l.b16 %v8715
    %v10059 = vunpack.c.h.b16 %v8715
    %v10060 = vunpack.c.l.b16 %v8716
    %v10061 = vunpack.c.h.b16 %v8716
    %v10062 = vunpack.c.l.b16 %v8717
    %v10063 = vunpack.c.h.b16 %v8717
    %v10064 = vunpack.c.l.b16 %v8718
    %v10065 = vunpack.c.h.b16 %v8718
    %v10066 = vunpack.c.l.b16 %v8719
    %v10067 = vunpack.c.h.b16 %v8719
    %v10068 = vunpack.c.l.b16 %v8720
    %v10069 = vunpack.c.h.b16 %v8720
    %v10070 = vunpack.c.l.b16 %v8721
    %v10071 = vunpack.c.h.b16 %v8721
    %v10072 = vunpack.c.l.b16 %v8722
    %v10073 = vunpack.c.h.b16 %v8722
    %v10074 = vunpack.c.l.b16 %v8723
    %v10075 = vunpack.c.h.b16 %v8723
    %v10076 = vunpack.c.l.b16 %v8724
    %v10077 = vunpack.c.h.b16 %v8724
    %v10078 = vunpack.c.l.b16 %v8725
    %v10079 = vunpack.c.h.b16 %v8725
    %v10080 = vunpack.c.l.b16 %v8726
    %v10081 = vunpack.c.h.b16 %v8726
    %v10082 = vunpack.c.l.b16 %v8727
    %v10083 = vunpack.c.h.b16 %v8727
    %v10084 = vunpack.c.l.b16 %v8728
    %v10085 = vunpack.c.h.b16 %v8728
    %v10086 = vunpack.c.l.b16 %v8729
    %v10087 = vunpack.c.h.b16 %v8729
    %v10088 = vunpack.c.l.b16 %v8730
    %v10089 = vunpack.c.h.b16 %v8730
    %v10090 = vunpack.c.l.b16 %v8731
    %v10091 = vunpack.c.h.b16 %v8731
    %v10092 = vunpack.c.l.b16 %v8732
    %v10093 = vunpack.c.h.b16 %v8732
    %v10094 = vunpack.c.l.b16 %v8733
    %v10095 = vunpack.c.h.b16 %v8733
    %v10096 = vunpack.c.l.b16 %v8734
    %v10097 = vunpack.c.h.b16 %v8734
    %v10098 = vunpack.c.l.b16 %v8735
    %v10099 = vunpack.c.h.b16 %v8735
    %v10100 = vunpack.c.l.b16 %v8736
    %v10101 = vunpack.c.h.b16 %v8736
    %v10102 = vunpack.c.l.b16 %v8737
    %v10103 = vunpack.c.h.b16 %v8737
    %v10104 = vunpack.c.l.b16 %v8738
    %v10105 = vunpack.c.h.b16 %v8738
    %v10106 = vunpack.c.l.b16 %v8739
    %v10107 = vunpack.c.h.b16 %v8739
    %v10108 = vunpack.c.l.b16 %v8740
    %v10109 = vunpack.c.h.b16 %v8740
    %v10110 = vunpack.c.l.b16 %v8741
    %v10111 = vunpack.c.h.b16 %v8741
    %v10112 = vunpack.c.l.b16 %v8742
    %v10113 = vunpack.c.h.b16 %v8742
    %v10114 = vunpack.c.l.b16 %v8743
    %v10115 = vunpack.c.h.b16 %v8743
    %v10116 = vunpack.c.l.b16 %v8744
    %v10117 = vunpack.c.h.b16 %v8744
    %v10118 = vunpack.c.l.b16 %v8745
    %v10119 = vunpack.c.h.b16 %v8745
    %v10120 = vunpack.c.l.b16 %v8746
    %v10121 = vunpack.c.h.b16 %v8746
    %v10122 = vunpack.c.l.b16 %v8747
    %v10123 = vunpack.c.h.b16 %v8747
    %v10124 = vunpack.c.l.b16 %v8748
    %v10125 = vunpack.c.h.b16 %v8748
    %v10126 = vunpack.c.l.b16 %v8749
    %v10127 = vunpack.c.h.b16 %v8749
    %v10128 = vunpack.c.l.b16 %v8750
    %v10129 = vunpack.c.h.b16 %v8750
    %v10130 = vunpack.c.l.b16 %v8751
    %v10131 = vunpack.c.h.b16 %v8751
    %v10132 = vunpack.c.l.b16 %v8752
    %v10133 = vunpack.c.h.b16 %v8752
    %v10134 = vunpack.c.l.b16 %v8753
    %v10135 = vunpack.c.h.b16 %v8753
    %v10136 = vunpack.c.l.b16 %v8754
    %v10137 = vunpack.c.h.b16 %v8754
    %v10138 = vunpack.c.l.b16 %v8755
    %v10139 = vunpack.c.h.b16 %v8755
    %v10140 = vunpack.c.l.b16 %v8756
    %v10141 = vunpack.c.h.b16 %v8756
    %v10142 = vunpack.c.l.b16 %v8757
    %v10143 = vunpack.c.h.b16 %v8757
    %v10144 = vunpack.c.l.b16 %v8758
    %v10145 = vunpack.c.h.b16 %v8758
    %v10146 = vunpack.c.l.b16 %v8759
    %v10147 = vunpack.c.h.b16 %v8759
    %v10148 = vunpack.c.l.b16 %v8760
    %v10149 = vunpack.c.h.b16 %v8760
    %v10150 = vunpack.c.l.b16 %v8761
    %v10151 = vunpack.c.h.b16 %v8761
    %v10152 = vunpack.c.l.b16 %v8762
    %v10153 = vunpack.c.h.b16 %v8762
    %v10154 = vunpack.c.l.b16 %v8763
    %v10155 = vunpack.c.h.b16 %v8763
    %v10156 = vunpack.c.l.b16 %v8764
    %v10157 = vunpack.c.h.b16 %v8764
    %v10158 = vunpack.c.l.b16 %v8765
    %v10159 = vunpack.c.h.b16 %v8765
    %v10160 = vunpack.c.l.b16 %v8766
    %v10161 = vunpack.c.h.b16 %v8766
    %v10162 = vunpack.c.l.b16 %v8767
    %v10163 = vunpack.c.h.b16 %v8767
    %v10164 = vunpack.c.l.b16 %v8768
    %v10165 = vunpack.c.h.b16 %v8768
    %v10166 = vunpack.c.l.b16 %v8769
    %v10167 = vunpack.c.h.b16 %v8769
    %v10168 = vunpack.c.l.b16 %v8770
    %v10169 = vunpack.c.h.b16 %v8770
    %v10170 = vunpack.c.l.b16 %v8771
    %v10171 = vunpack.c.h.b16 %v8771
    %v10172 = vunpack.c.l.b16 %v8772
    %v10173 = vunpack.c.h.b16 %v8772
    %v10174 = vunpack.c.l.b16 %v8773
    %v10175 = vunpack.c.h.b16 %v8773
    %v10176 = vunpack.c.l.b16 %v8774
    %v10177 = vunpack.c.h.b16 %v8774
    %v10178 = vunpack.c.l.b16 %v8775
    %v10179 = vunpack.c.h.b16 %v8775
    %v10180 = vunpack.c.l.b16 %v8776
    %v10181 = vunpack.c.h.b16 %v8776
    %v10182 = vunpack.c.l.b16 %v8777
    %v10183 = vunpack.c.h.b16 %v8777
    %v10184 = vunpack.c.l.b16 %v8778
    %v10185 = vunpack.c.h.b16 %v8778
    %v10186 = vunpack.c.l.b16 %v8779
    %v10187 = vunpack.c.h.b16 %v8779
    %v10188 = vunpack.c.l.b16 %v8780
    %v10189 = vunpack.c.h.b16 %v8780
    %v10190 = vunpack.c.l.b16 %v8781
    %v10191 = vunpack.c.h.b16 %v8781
    %v10192 = vunpack.c.l.b16 %v8782
    %v10193 = vunpack.c.h.b16 %v8782
    %v10194 = vunpack.c.l.b16 %v8783
    %v10195 = vunpack.c.h.b16 %v8783
    %v10196 = vunpack.c.l.b16 %v8784
    %v10197 = vunpack.c.h.b16 %v8784
    %v10198 = vunpack.c.l.b16 %v8785
    %v10199 = vunpack.c.h.b16 %v8785
    %v10200 = vunpack.c.l.b16 %v8786
    %v10201 = vunpack.c.h.b16 %v8786
    %v10202 = vunpack.c.l.b16 %v8787
    %v10203 = vunpack.c.h.b16 %v8787
    %v10204 = vunpack.c.l.b16 %v8788
    %v10205 = vunpack.c.h.b16 %v8788
    %v10206 = vunpack.c.l.b16 %v8789
    %v10207 = vunpack.c.h.b16 %v8789
    %v10208 = vunpack.c.l.b16 %v8790
    %v10209 = vunpack.c.h.b16 %v8790
    %v10210 = vunpack.c.l.b16 %v8791
    %v10211 = vunpack.c.h.b16 %v8791
    %v10212 = vunpack.c.l.b16 %v8792
    %v10213 = vunpack.c.h.b16 %v8792
    %v10214 = vunpack.c.l.b16 %v8793
    %v10215 = vunpack.c.h.b16 %v8793
    %v10216 = vunpack.c.l.b16 %v8794
    %v10217 = vunpack.c.h.b16 %v8794
    %v10218 = vunpack.c.l.b16 %v8795
    %v10219 = vunpack.c.h.b16 %v8795
    %v10220 = vunpack.c.l.b16 %v8796
    %v10221 = vunpack.c.h.b16 %v8796
    %v10222 = vunpack.c.l.b16 %v8797
    %v10223 = vunpack.c.h.b16 %v8797
    %v10224 = vunpack.c.l.b16 %v8798
    %v10225 = vunpack.c.h.b16 %v8798
    %v10226 = vunpack.c.l.b16 %v8799
    %v10227 = vunpack.c.h.b16 %v8799
    %v10228 = vunpack.c.l.b16 %v8800
    %v10229 = vunpack.c.h.b16 %v8800
    %v10230 = vunpack.c.l.b16 %v8801
    %v10231 = vunpack.c.h.b16 %v8801
    %v10232 = vunpack.c.l.b16 %v8802
    %v10233 = vunpack.c.h.b16 %v8802
    %v10234 = vunpack.c.l.b16 %v8803
    %v10235 = vunpack.c.h.b16 %v8803
    %v10236 = vunpack.c.l.b16 %v8804
    %v10237 = vunpack.c.h.b16 %v8804
    %v10238 = vunpack.c.l.b16 %v8805
    %v10239 = vunpack.c.h.b16 %v8805
    %v10240 = vunpack.c.l.b16 %v8806
    %v10241 = vunpack.c.h.b16 %v8806
    %v10242 = vunpack.c.l.b16 %v8807
    %v10243 = vunpack.c.h.b16 %v8807
    %v10244 = vunpack.c.l.b16 %v8808
    %v10245 = vunpack.c.h.b16 %v8808
    %v10246 = vunpack.c.l.b16 %v8809
    %v10247 = vunpack.c.h.b16 %v8809
    %v10248 = vunpack.c.l.b16 %v8810
    %v10249 = vunpack.c.h.b16 %v8810
    %v10250 = vunpack.c.l.b16 %v8811
    %v10251 = vunpack.c.h.b16 %v8811
    %v10252 = vunpack.c.l.b16 %v8812
    %v10253 = vunpack.c.h.b16 %v8812
    %v10254 = vunpack.c.l.b16 %v8813
    %v10255 = vunpack.c.h.b16 %v8813
    %v10256 = vunpack.c.l.b16 %v8814
    %v10257 = vunpack.c.h.b16 %v8814
    %v10258 = vunpack.c.l.b16 %v8815
    %v10259 = vunpack.c.h.b16 %v8815
    %v10260 = vunpack.c.l.b16 %v8816
    %v10261 = vunpack.c.h.b16 %v8816
    %v10262 = vunpack.c.l.b16 %v8817
    %v10263 = vunpack.c.h.b16 %v8817
    %v10264 = vunpack.c.l.b16 %v8818
    %v10265 = vunpack.c.h.b16 %v8818
    %v10266 = vunpack.c.l.b16 %v8819
    %v10267 = vunpack.c.h.b16 %v8819
    %v10268 = vunpack.c.l.b16 %v8820
    %v10269 = vunpack.c.h.b16 %v8820
    %v10270 = vunpack.c.l.b16 %v8821
    %v10271 = vunpack.c.h.b16 %v8821
    %v10272 = vunpack.c.l.b16 %v8822
    %v10273 = vunpack.c.h.b16 %v8822
    %v10274 = vunpack.c.l.b16 %v8823
    %v10275 = vunpack.c.h.b16 %v8823
    %v10276 = vunpack.c.l.b16 %v8824
    %v10277 = vunpack.c.h.b16 %v8824
    %v10278 = vunpack.c.l.b16 %v8825
    %v10279 = vunpack.c.h.b16 %v8825
    %v10280 = vunpack.c.l.b16 %v8826
    %v10281 = vunpack.c.h.b16 %v8826
    %v10282 = vunpack.c.l.b16 %v8827
    %v10283 = vunpack.c.h.b16 %v8827
    %v10284 = vunpack.c.l.b16 %v8828
    %v10285 = vunpack.c.h.b16 %v8828
    %v10286 = vunpack.c.l.b16 %v8829
    %v10287 = vunpack.c.h.b16 %v8829
    %v10288 = vunpack.c.l.b16 %v8830
    %v10289 = vunpack.c.h.b16 %v8830
    %v10290 = vunpack.c.l.b16 %v8831
    %v10291 = vunpack.c.h.b16 %v8831
    %v10292 = vunpack.c.l.b16 %v8832
    %v10293 = vunpack.c.h.b16 %v8832
    %v10294 = vunpack.c.l.b16 %v8833
    %v10295 = vunpack.c.h.b16 %v8833
    %v10296 = vunpack.c.l.b16 %v8834
    %v10297 = vunpack.c.h.b16 %v8834
    %v10298 = vunpack.c.l.b16 %v8835
    %v10299 = vunpack.c.h.b16 %v8835
    %v10300 = vunpack.c.l.b16 %v8836
    %v10301 = vunpack.c.h.b16 %v8836
    %v10302 = vunpack.c.l.b16 %v8837
    %v10303 = vunpack.c.h.b16 %v8837
    %v10304 = vunpack.c.l.b16 %v8838
    %v10305 = vunpack.c.h.b16 %v8838
    %v10306 = vunpack.c.l.b16 %v8839
    %v10307 = vunpack.c.h.b16 %v8839
    %v10308 = vunpack.c.l.b16 %v8840
    %v10309 = vunpack.c.h.b16 %v8840
    %v10310 = vunpack.c.l.b16 %v8841
    %v10311 = vunpack.c.h.b16 %v8841
    %v10312 = vunpack.c.l.b16 %v8842
    %v10313 = vunpack.c.h.b16 %v8842
    %v10314 = vunpack.c.l.b16 %v8843
    %v10315 = vunpack.c.h.b16 %v8843
    %v10316 = vunpack.c.l.b16 %v8844
    %v10317 = vunpack.c.h.b16 %v8844
    %v10318 = vunpack.c.l.b16 %v8845
    %v10319 = vunpack.c.h.b16 %v8845
    %v10320 = vunpack.c.l.b16 %v8846
    %v10321 = vunpack.c.h.b16 %v8846
    %v10322 = vunpack.c.l.b16 %v8847
    %v10323 = vunpack.c.h.b16 %v8847
    %v10324 = vunpack.c.l.b16 %v8848
    %v10325 = vunpack.c.h.b16 %v8848
    %v10326 = vunpack.c.l.b16 %v8849
    %v10327 = vunpack.c.h.b16 %v8849
    %v10328 = vunpack.c.l.b16 %v8850
    %v10329 = vunpack.c.h.b16 %v8850
    %v10330 = vunpack.c.l.b16 %v8851
    %v10331 = vunpack.c.h.b16 %v8851
    %v10332 = vunpack.c.l.b16 %v8852
    %v10333 = vunpack.c.h.b16 %v8852
    %v10334 = vunpack.c.l.b16 %v8853
    %v10335 = vunpack.c.h.b16 %v8853
    %v10336 = vunpack.c.l.b16 %v8854
    %v10337 = vunpack.c.h.b16 %v8854
    %v10338 = vunpack.c.l.b16 %v8855
    %v10339 = vunpack.c.h.b16 %v8855
    %v10340 = vunpack.c.l.b16 %v8856
    %v10341 = vunpack.c.h.b16 %v8856
    %v10342 = vunpack.c.l.b16 %v8857
    %v10343 = vunpack.c.h.b16 %v8857
    %v10344 = vunpack.c.l.b16 %v8858
    %v10345 = vunpack.c.h.b16 %v8858
    %v10346 = vunpack.c.l.b16 %v8859
    %v10347 = vunpack.c.h.b16 %v8859
    %v10348 = vunpack.c.l.b16 %v8860
    %v10349 = vunpack.c.h.b16 %v8860
    %v10350 = vunpack.c.l.b16 %v8861
    %v10351 = vunpack.c.h.b16 %v8861
    %v10352 = vunpack.c.l.b16 %v8862
    %v10353 = vunpack.c.h.b16 %v8862
    %v10354 = vunpack.c.l.b16 %v8863
    %v10355 = vunpack.c.h.b16 %v8863
    %v10356 = vunpack.c.l.b16 %v8864
    %v10357 = vunpack.c.h.b16 %v8864
    %v10358 = vunpack.c.l.b16 %v8865
    %v10359 = vunpack.c.h.b16 %v8865
    %v10360 = vunpack.c.l.b16 %v8866
    %v10361 = vunpack.c.h.b16 %v8866
    %v10362 = vunpack.c.l.b16 %v8867
    %v10363 = vunpack.c.h.b16 %v8867
    %v10364 = vunpack.c.l.b16 %v8868
    %v10365 = vunpack.c.h.b16 %v8868
    %v10366 = vunpack.c.l.b16 %v8869
    %v10367 = vunpack.c.h.b16 %v8869
    %v10368 = vunpack.c.l.b16 %v8870
    %v10369 = vunpack.c.h.b16 %v8870
    %v10370 = vunpack.c.l.b16 %v8871
    %v10371 = vunpack.c.h.b16 %v8871
    %v10372 = vunpack.c.l.b16 %v8872
    %v10373 = vunpack.c.h.b16 %v8872
    %v10374 = vunpack.c.l.b16 %v8873
    %v10375 = vunpack.c.h.b16 %v8873
    %v10376 = vunpack.c.l.b16 %v8874
    %v10377 = vunpack.c.h.b16 %v8874
    %v10378 = vunpack.c.l.b16 %v8875
    %v10379 = vunpack.c.h.b16 %v8875
    %v10380 = vunpack.c.l.b16 %v8876
    %v10381 = vunpack.c.h.b16 %v8876
    %v10382 = vunpack.c.l.b16 %v8877
    %v10383 = vunpack.c.h.b16 %v8877
    %v10384 = vunpack.c.l.b16 %v8878
    %v10385 = vunpack.c.h.b16 %v8878
    %v10386 = vunpack.c.l.b16 %v8879
    %v10387 = vunpack.c.h.b16 %v8879
    %v10388 = vunpack.c.l.b16 %v8880
    %v10389 = vunpack.c.h.b16 %v8880
    %v10390 = vunpack.c.l.b16 %v8881
    %v10391 = vunpack.c.h.b16 %v8881
    %v10392 = vunpack.c.l.b16 %v8882
    %v10393 = vunpack.c.h.b16 %v8882
    %v10394 = vunpack.c.l.b16 %v8883
    %v10395 = vunpack.c.h.b16 %v8883
    %v10396 = vunpack.c.l.b16 %v8884
    %v10397 = vunpack.c.h.b16 %v8884
    %v10398 = vunpack.c.l.b16 %v8885
    %v10399 = vunpack.c.h.b16 %v8885
    %v10400 = vunpack.c.l.b16 %v8886
    %v10401 = vunpack.c.h.b16 %v8886
    %v10402 = vunpack.c.l.b16 %v8887
    %v10403 = vunpack.c.h.b16 %v8887
    %v10404 = vunpack.c.l.b16 %v8888
    %v10405 = vunpack.c.h.b16 %v8888
    %v10406 = vunpack.c.l.b16 %v8889
    %v10407 = vunpack.c.h.b16 %v8889
    %v10408 = vunpack.c.l.b16 %v8890
    %v10409 = vunpack.c.h.b16 %v8890
    %v10410 = vunpack.c.l.b16 %v8891
    %v10411 = vunpack.c.h.b16 %v8891
    %v10412 = vunpack.c.l.b16 %v8892
    %v10413 = vunpack.c.h.b16 %v8892
    %v10414 = vunpack.c.l.b16 %v8893
    %v10415 = vunpack.c.h.b16 %v8893
    %v10416 = vunpack.c.l.b16 %v8894
    %v10417 = vunpack.c.h.b16 %v8894
    %v10418 = vunpack.c.l.b16 %v8895
    %v10419 = vunpack.c.h.b16 %v8895
    %v10420 = vunpack.c.l.b16 %v8896
    %v10421 = vunpack.c.h.b16 %v8896
    %v10422 = vunpack.c.l.b16 %v8897
    %v10423 = vunpack.c.h.b16 %v8897
    %v10424 = vunpack.c.l.b16 %v8898
    %v10425 = vunpack.c.h.b16 %v8898
    %v10426 = vunpack.c.l.b16 %v8899
    %v10427 = vunpack.c.h.b16 %v8899
    %v10428 = vunpack.c.l.b16 %v8900
    %v10429 = vunpack.c.h.b16 %v8900
    %v10430 = vunpack.c.l.b16 %v8901
    %v10431 = vunpack.c.h.b16 %v8901
    %v10432 = vunpack.c.l.b16 %v8902
    %v10433 = vunpack.c.h.b16 %v8902
    %v10434 = vunpack.c.l.b16 %v8903
    %v10435 = vunpack.c.h.b16 %v8903
    %v10436 = vunpack.c.l.b16 %v8904
    %v10437 = vunpack.c.h.b16 %v8904
    %v10438 = vunpack.c.l.b16 %v8905
    %v10439 = vunpack.c.h.b16 %v8905
    %v10440 = vunpack.c.l.b16 %v8906
    %v10441 = vunpack.c.h.b16 %v8906
    %v10442 = vunpack.c.l.b16 %v8907
    %v10443 = vunpack.c.h.b16 %v8907
    %v10444 = vunpack.c.l.b16 %v8908
    %v10445 = vunpack.c.h.b16 %v8908
    %v10446 = vunpack.c.l.b16 %v8909
    %v10447 = vunpack.c.h.b16 %v8909
    %v10448 = vunpack.c.l.b16 %v8910
    %v10449 = vunpack.c.h.b16 %v8910
    %v10450 = vunpack.c.l.b16 %v8911
    %v10451 = vunpack.c.h.b16 %v8911
    %v10452 = vunpack.c.l.b16 %v8912
    %v10453 = vunpack.c.h.b16 %v8912
    %v10454 = vunpack.c.l.b16 %v8913
    %v10455 = vunpack.c.h.b16 %v8913
    %v10456 = vunpack.c.l.b16 %v8914
    %v10457 = vunpack.c.h.b16 %v8914
    %v10458 = vunpack.c.l.b16 %v8915
    %v10459 = vunpack.c.h.b16 %v8915
    %v10460 = vunpack.c.l.b16 %v8916
    %v10461 = vunpack.c.h.b16 %v8916
    %v10462 = vunpack.c.l.b16 %v8917
    %v10463 = vunpack.c.h.b16 %v8917
    %v10464 = vunpack.c.l.b16 %v8918
    %v10465 = vunpack.c.h.b16 %v8918
    %v10466 = vunpack.c.l.b16 %v8919
    %v10467 = vunpack.c.h.b16 %v8919
    %v10468 = vunpack.c.l.b16 %v8920
    %v10469 = vunpack.c.h.b16 %v8920
    %v10470 = vunpack.c.l.b16 %v8921
    %v10471 = vunpack.c.h.b16 %v8921
    %v10472 = vunpack.c.l.b16 %v8922
    %v10473 = vunpack.c.h.b16 %v8922
    %v10474 = vunpack.c.l.b16 %v8923
    %v10475 = vunpack.c.h.b16 %v8923
    %v10476 = vunpack.c.l.b16 %v8924
    %v10477 = vunpack.c.h.b16 %v8924
    %v10478 = vunpack.c.l.b16 %v8925
    %v10479 = vunpack.c.h.b16 %v8925
    %v10480 = vunpack.c.l.b16 %v8926
    %v10481 = vunpack.c.h.b16 %v8926
    %v10482 = vunpack.c.l.b16 %v8927
    %v10483 = vunpack.c.h.b16 %v8927
    %v10484 = vunpack.c.l.b16 %v8928
    %v10485 = vunpack.c.h.b16 %v8928
    %v10486 = vunpack.c.l.b16 %v8929
    %v10487 = vunpack.c.h.b16 %v8929
    %v10488 = vunpack.c.l.b16 %v8930
    %v10489 = vunpack.c.h.b16 %v8930
    %v10490 = vunpack.c.l.b16 %v8931
    %v10491 = vunpack.c.h.b16 %v8931
    %v10492 = vunpack.c.l.b16 %v8932
    %v10493 = vunpack.c.h.b16 %v8932
    %v10494 = vunpack.c.l.b16 %v8933
    %v10495 = vunpack.c.h.b16 %v8933
    %v10496 = vunpack.c.l.b16 %v8934
    %v10497 = vunpack.c.h.b16 %v8934
    %v10498 = vunpack.c.l.b16 %v8935
    %v10499 = vunpack.c.h.b16 %v8935
    %v10500 = vunpack.c.l.b16 %v8936
    %v10501 = vunpack.c.h.b16 %v8936
    %v10502 = vunpack.c.l.b16 %v8937
    %v10503 = vunpack.c.h.b16 %v8937
    %v10504 = vunpack.c.l.b16 %v8938
    %v10505 = vunpack.c.h.b16 %v8938
    %v10506 = vunpack.c.l.b16 %v8939
    %v10507 = vunpack.c.h.b16 %v8939
    %v10508 = vunpack.c.l.b16 %v8940
    %v10509 = vunpack.c.h.b16 %v8940
    %v10510 = vunpack.c.l.b16 %v8941
    %v10511 = vunpack.c.h.b16 %v8941
    %v10512 = vunpack.c.l.b16 %v8942
    %v10513 = vunpack.c.h.b16 %v8942
    %v10514 = vunpack.c.l.b16 %v8943
    %v10515 = vunpack.c.h.b16 %v8943
    %v10516 = vunpack.c.l.b16 %v8944
    %v10517 = vunpack.c.h.b16 %v8944
    %v10518 = vunpack.c.l.b16 %v8945
    %v10519 = vunpack.c.h.b16 %v8945
    %v10520 = vunpack.c.l.b16 %v8946
    %v10521 = vunpack.c.h.b16 %v8946
    %v10522 = vunpack.c.l.b16 %v8947
    %v10523 = vunpack.c.h.b16 %v8947
    %v10524 = vunpack.c.l.b16 %v8948
    %v10525 = vunpack.c.h.b16 %v8948
    %v10526 = vunpack.c.l.b16 %v8949
    %v10527 = vunpack.c.h.b16 %v8949
    %v10528 = vunpack.c.l.b16 %v8950
    %v10529 = vunpack.c.h.b16 %v8950
    %v10530 = vunpack.c.l.b16 %v8951
    %v10531 = vunpack.c.h.b16 %v8951
    %v10532 = vunpack.c.l.b16 %v8952
    %v10533 = vunpack.c.h.b16 %v8952
    %v10534 = vunpack.c.l.b16 %v8953
    %v10535 = vunpack.c.h.b16 %v8953
    %v10536 = vunpack.c.l.b16 %v8954
    %v10537 = vunpack.c.h.b16 %v8954
    %v10538 = vunpack.c.l.b16 %v8955
    %v10539 = vunpack.c.h.b16 %v8955
    %v10540 = vunpack.c.l.b16 %v8956
    %v10541 = vunpack.c.h.b16 %v8956
    %v10542 = vunpack.c.l.b16 %v8957
    %v10543 = vunpack.c.h.b16 %v8957
    %v10544 = vunpack.c.l.b16 %v8958
    %v10545 = vunpack.c.h.b16 %v8958
    %v10546 = vunpack.c.l.b16 %v8959
    %v10547 = vunpack.c.h.b16 %v8959
    %v10548 = vunpack.c.l.b16 %v8960
    %v10549 = vunpack.c.h.b16 %v8960
    %v10550 = vunpack.c.l.b16 %v8961
    %v10551 = vunpack.c.h.b16 %v8961
    %v10552 = vunpack.c.l.b16 %v8962
    %v10553 = vunpack.c.h.b16 %v8962
    %v10554 = vunpack.c.l.b16 %v8963
    %v10555 = vunpack.c.h.b16 %v8963
    %v10556 = vunpack.c.l.b16 %v8964
    %v10557 = vunpack.c.h.b16 %v8964
    %v10558 = vunpack.c.l.b16 %v8965
    %v10559 = vunpack.c.h.b16 %v8965
    %v10560 = vunpack.c.l.b16 %v8966
    %v10561 = vunpack.c.h.b16 %v8966
    %v10562 = vunpack.c.l.b16 %v8967
    %v10563 = vunpack.c.h.b16 %v8967
    %v10564 = vunpack.c.l.b16 %v8968
    %v10565 = vunpack.c.h.b16 %v8968
    %v10566 = vunpack.c.l.b16 %v8969
    %v10567 = vunpack.c.h.b16 %v8969
    %v10568 = vunpack.c.l.b16 %v8970
    %v10569 = vunpack.c.h.b16 %v8970
    %v10570 = vunpack.c.l.b16 %v8971
    %v10571 = vunpack.c.h.b16 %v8971
    %v10572 = vunpack.c.l.b16 %v8972
    %v10573 = vunpack.c.h.b16 %v8972
    %v10574 = vunpack.c.l.b16 %v8973
    %v10575 = vunpack.c.h.b16 %v8973
    %v10576 = vunpack.c.l.b16 %v8974
    %v10577 = vunpack.c.h.b16 %v8974
    %v10578 = vunpack.c.l.b16 %v8975
    %v10579 = vunpack.c.h.b16 %v8975
    %v10580 = vunpack.c.l.b16 %v8976
    %v10581 = vunpack.c.h.b16 %v8976
    %v10582 = vunpack.c.l.b16 %v8977
    %v10583 = vunpack.c.h.b16 %v8977
    %v10584 = vunpack.c.l.b16 %v8978
    %v10585 = vunpack.c.h.b16 %v8978
    %v10586 = vunpack.c.l.b16 %v8979
    %v10587 = vunpack.c.h.b16 %v8979
    %v10588 = vunpack.c.l.b16 %v8980
    %v10589 = vunpack.c.h.b16 %v8980
    %v10590 = vunpack.c.l.b16 %v8981
    %v10591 = vunpack.c.h.b16 %v8981
    %v10592 = vunpack.c.l.b16 %v8982
    %v10593 = vunpack.c.h.b16 %v8982
    %v10594 = vunpack.c.l.b16 %v8983
    %v10595 = vunpack.c.h.b16 %v8983
    %v10596 = vunpack.c.l.b16 %v8984
    %v10597 = vunpack.c.h.b16 %v8984
    %v10598 = vunpack.c.l.b16 %v8985
    %v10599 = vunpack.c.h.b16 %v8985
    %v10600 = vunpack.c.l.b16 %v8986
    %v10601 = vunpack.c.h.b16 %v8986
    %v10602 = vunpack.c.l.b16 %v8987
    %v10603 = vunpack.c.h.b16 %v8987
    %v10604 = vunpack.c.l.b16 %v8988
    %v10605 = vunpack.c.h.b16 %v8988
    %v10606 = vunpack.c.l.b16 %v8989
    %v10607 = vunpack.c.h.b16 %v8989
    %v10608 = vunpack.c.l.b16 %v8990
    %v10609 = vunpack.c.h.b16 %v8990
    %v10610 = vunpack.c.l.b16 %v8991
    %v10611 = vunpack.c.h.b16 %v8991
    %v10612 = vpack.c.b16 %v9604, %v9588
    %v10613 = vpack.c.b16 %v9605, %v9589
    %v10614 = vpack.c.b16 %v9606, %v9590
    %v10615 = vpack.c.b16 %v9607, %v9591
    %v10616 = vpack.c.b16 %v9608, %v9592
    %v10617 = vpack.c.b16 %v9609, %v9593
    %v10618 = vpack.c.b16 %v9610, %v9594
    %v10619 = vpack.c.b16 %v9611, %v9595
    %v10620 = vpack.c.b16 %v9612, %v9596
    %v10621 = vpack.c.b16 %v9613, %v9597
    %v10622 = vpack.c.b16 %v9614, %v9598
    %v10623 = vpack.c.b16 %v9615, %v9599
    %v10624 = vpack.c.b16 %v9616, %v9600
    %v10625 = vpack.c.b16 %v9617, %v9601
    %v10626 = vpack.c.b16 %v9618, %v9602
    %v10627 = vpack.c.b16 %v9619, %v9603
    %v10628 = vpack.c.b16 %v9636, %v9620
    %v10629 = vpack.c.b16 %v9637, %v9621
    %v10630 = vpack.c.b16 %v9638, %v9622
    %v10631 = vpack.c.b16 %v9639, %v9623
    %v10632 = vpack.c.b16 %v9640, %v9624
    %v10633 = vpack.c.b16 %v9641, %v9625
    %v10634 = vpack.c.b16 %v9642, %v9626
    %v10635 = vpack.c.b16 %v9643, %v9627
    %v10636 = vpack.c.b16 %v9644, %v9628
    %v10637 = vpack.c.b16 %v9645, %v9629
    %v10638 = vpack.c.b16 %v9646, %v9630
    %v10639 = vpack.c.b16 %v9647, %v9631
    %v10640 = vpack.c.b16 %v9648, %v9632
    %v10641 = vpack.c.b16 %v9649, %v9633
    %v10642 = vpack.c.b16 %v9650, %v9634
    %v10643 = vpack.c.b16 %v9651, %v9635
    %v10644 = vpack.c.b16 %v9668, %v9652
    %v10645 = vpack.c.b16 %v9669, %v9653
    %v10646 = vpack.c.b16 %v9670, %v9654
    %v10647 = vpack.c.b16 %v9671, %v9655
    %v10648 = vpack.c.b16 %v9672, %v9656
    %v10649 = vpack.c.b16 %v9673, %v9657
    %v10650 = vpack.c.b16 %v9674, %v9658
    %v10651 = vpack.c.b16 %v9675, %v9659
    %v10652 = vpack.c.b16 %v9676, %v9660
    %v10653 = vpack.c.b16 %v9677, %v9661
    %v10654 = vpack.c.b16 %v9678, %v9662
    %v10655 = vpack.c.b16 %v9679, %v9663
    %v10656 = vpack.c.b16 %v9680, %v9664
    %v10657 = vpack.c.b16 %v9681, %v9665
    %v10658 = vpack.c.b16 %v9682, %v9666
    %v10659 = vpack.c.b16 %v9683, %v9667
    %v10660 = vpack.c.b16 %v9700, %v9684
    %v10661 = vpack.c.b16 %v9701, %v9685
    %v10662 = vpack.c.b16 %v9702, %v9686
    %v10663 = vpack.c.b16 %v9703, %v9687
    %v10664 = vpack.c.b16 %v9704, %v9688
    %v10665 = vpack.c.b16 %v9705, %v9689
    %v10666 = vpack.c.b16 %v9706, %v9690
    %v10667 = vpack.c.b16 %v9707, %v9691
    %v10668 = vpack.c.b16 %v9708, %v9692
    %v10669 = vpack.c.b16 %v9709, %v9693
    %v10670 = vpack.c.b16 %v9710, %v9694
    %v10671 = vpack.c.b16 %v9711, %v9695
    %v10672 = vpack.c.b16 %v9712, %v9696
    %v10673 = vpack.c.b16 %v9713, %v9697
    %v10674 = vpack.c.b16 %v9714, %v9698
    %v10675 = vpack.c.b16 %v9715, %v9699
    %v10676 = vpack.c.b16 %v9732, %v9716
    %v10677 = vpack.c.b16 %v9733, %v9717
    %v10678 = vpack.c.b16 %v9734, %v9718
    %v10679 = vpack.c.b16 %v9735, %v9719
    %v10680 = vpack.c.b16 %v9736, %v9720
    %v10681 = vpack.c.b16 %v9737, %v9721
    %v10682 = vpack.c.b16 %v9738, %v9722
    %v10683 = vpack.c.b16 %v9739, %v9723
    %v10684 = vpack.c.b16 %v9740, %v9724
    %v10685 = vpack.c.b16 %v9741, %v9725
    %v10686 = vpack.c.b16 %v9742, %v9726
    %v10687 = vpack.c.b16 %v9743, %v9727
    %v10688 = vpack.c.b16 %v9744, %v9728
    %v10689 = vpack.c.b16 %v9745, %v9729
    %v10690 = vpack.c.b16 %v9746, %v9730
    %v10691 = vpack.c.b16 %v9747, %v9731
    %v10692 = vpack.c.b16 %v9764, %v9748
    %v10693 = vpack.c.b16 %v9765, %v9749
    %v10694 = vpack.c.b16 %v9766, %v9750
    %v10695 = vpack.c.b16 %v9767, %v9751
    %v10696 = vpack.c.b16 %v9768, %v9752
    %v10697 = vpack.c.b16 %v9769, %v9753
    %v10698 = vpack.c.b16 %v9770, %v9754
    %v10699 = vpack.c.b16 %v9771, %v9755
    %v10700 = vpack.c.b16 %v9772, %v9756
    %v10701 = vpack.c.b16 %v9773, %v9757
    %v10702 = vpack.c.b16 %v9774, %v9758
    %v10703 = vpack.c.b16 %v9775, %v9759
    %v10704 = vpack.c.b16 %v9776, %v9760
    %v10705 = vpack.c.b16 %v9777, %v9761
    %v10706 = vpack.c.b16 %v9778, %v9762
    %v10707 = vpack.c.b16 %v9779, %v9763
    %v10708 = vpack.c.b16 %v9796, %v9780
    %v10709 = vpack.c.b16 %v9797, %v9781
    %v10710 = vpack.c.b16 %v9798, %v9782
    %v10711 = vpack.c.b16 %v9799, %v9783
    %v10712 = vpack.c.b16 %v9800, %v9784
    %v10713 = vpack.c.b16 %v9801, %v9785
    %v10714 = vpack.c.b16 %v9802, %v9786
    %v10715 = vpack.c.b16 %v9803, %v9787
    %v10716 = vpack.c.b16 %v9804, %v9788
    %v10717 = vpack.c.b16 %v9805, %v9789
    %v10718 = vpack.c.b16 %v9806, %v9790
    %v10719 = vpack.c.b16 %v9807, %v9791
    %v10720 = vpack.c.b16 %v9808, %v9792
    %v10721 = vpack.c.b16 %v9809, %v9793
    %v10722 = vpack.c.b16 %v9810, %v9794
    %v10723 = vpack.c.b16 %v9811, %v9795
    %v10724 = vpack.c.b16 %v9828, %v9812
    %v10725 = vpack.c.b16 %v9829, %v9813
    %v10726 = vpack.c.b16 %v9830, %v9814
    %v10727 = vpack.c.b16 %v9831, %v9815
    %v10728 = vpack.c.b16 %v9832, %v9816
    %v10729 = vpack.c.b16 %v9833, %v9817
    %v10730 = vpack.c.b16 %v9834, %v9818
    %v10731 = vpack.c.b16 %v9835, %v9819
    %v10732 = vpack.c.b16 %v9836, %v9820
    %v10733 = vpack.c.b16 %v9837, %v9821
    %v10734 = vpack.c.b16 %v9838, %v9822
    %v10735 = vpack.c.b16 %v9839, %v9823
    %v10736 = vpack.c.b16 %v9840, %v9824
    %v10737 = vpack.c.b16 %v9841, %v9825
    %v10738 = vpack.c.b16 %v9842, %v9826
    %v10739 = vpack.c.b16 %v9843, %v9827
    %v10740 = vpack.c.b16 %v9860, %v9844
    %v10741 = vpack.c.b16 %v9861, %v9845
    %v10742 = vpack.c.b16 %v9862, %v9846
    %v10743 = vpack.c.b16 %v9863, %v9847
    %v10744 = vpack.c.b16 %v9864, %v9848
    %v10745 = vpack.c.b16 %v9865, %v9849
    %v10746 = vpack.c.b16 %v9866, %v9850
    %v10747 = vpack.c.b16 %v9867, %v9851
    %v10748 = vpack.c.b16 %v9868, %v9852
    %v10749 = vpack.c.b16 %v9869, %v9853
    %v10750 = vpack.c.b16 %v9870, %v9854
    %v10751 = vpack.c.b16 %v9871, %v9855
    %v10752 = vpack.c.b16 %v9872, %v9856
    %v10753 = vpack.c.b16 %v9873, %v9857
    %v10754 = vpack.c.b16 %v9874, %v9858
    %v10755 = vpack.c.b16 %v9875, %v9859
    %v10756 = vpack.c.b16 %v9892, %v9876
    %v10757 = vpack.c.b16 %v9893, %v9877
    %v10758 = vpack.c.b16 %v9894, %v9878
    %v10759 = vpack.c.b16 %v9895, %v9879
    %v10760 = vpack.c.b16 %v9896, %v9880
    %v10761 = vpack.c.b16 %v9897, %v9881
    %v10762 = vpack.c.b16 %v9898, %v9882
    %v10763 = vpack.c.b16 %v9899, %v9883
    %v10764 = vpack.c.b16 %v9900, %v9884
    %v10765 = vpack.c.b16 %v9901, %v9885
    %v10766 = vpack.c.b16 %v9902, %v9886
    %v10767 = vpack.c.b16 %v9903, %v9887
    %v10768 = vpack.c.b16 %v9904, %v9888
    %v10769 = vpack.c.b16 %v9905, %v9889
    %v10770 = vpack.c.b16 %v9906, %v9890
    %v10771 = vpack.c.b16 %v9907, %v9891
    %v10772 = vpack.c.b16 %v9924, %v9908
    %v10773 = vpack.c.b16 %v9925, %v9909
    %v10774 = vpack.c.b16 %v9926, %v9910
    %v10775 = vpack.c.b16 %v9927, %v9911
    %v10776 = vpack.c.b16 %v9928, %v9912
    %v10777 = vpack.c.b16 %v9929, %v9913
    %v10778 = vpack.c.b16 %v9930, %v9914
    %v10779 = vpack.c.b16 %v9931, %v9915
    %v10780 = vpack.c.b16 %v9932, %v9916
    %v10781 = vpack.c.b16 %v9933, %v9917
    %v10782 = vpack.c.b16 %v9934, %v9918
    %v10783 = vpack.c.b16 %v9935, %v9919
    %v10784 = vpack.c.b16 %v9936, %v9920
    %v10785 = vpack.c.b16 %v9937, %v9921
    %v10786 = vpack.c.b16 %v9938, %v9922
    %v10787 = vpack.c.b16 %v9939, %v9923
    %v10788 = vpack.c.b16 %v9956, %v9940
    %v10789 = vpack.c.b16 %v9957, %v9941
    %v10790 = vpack.c.b16 %v9958, %v9942
    %v10791 = vpack.c.b16 %v9959, %v9943
    %v10792 = vpack.c.b16 %v9960, %v9944
    %v10793 = vpack.c.b16 %v9961, %v9945
    %v10794 = vpack.c.b16 %v9962, %v9946
    %v10795 = vpack.c.b16 %v9963, %v9947
    %v10796 = vpack.c.b16 %v9964, %v9948
    %v10797 = vpack.c.b16 %v9965, %v9949
    %v10798 = vpack.c.b16 %v9966, %v9950
    %v10799 = vpack.c.b16 %v9967, %v9951
    %v10800 = vpack.c.b16 %v9968, %v9952
    %v10801 = vpack.c.b16 %v9969, %v9953
    %v10802 = vpack.c.b16 %v9970, %v9954
    %v10803 = vpack.c.b16 %v9971, %v9955
    %v10804 = vpack.c.b16 %v9988, %v9972
    %v10805 = vpack.c.b16 %v9989, %v9973
    %v10806 = vpack.c.b16 %v9990, %v9974
    %v10807 = vpack.c.b16 %v9991, %v9975
    %v10808 = vpack.c.b16 %v9992, %v9976
    %v10809 = vpack.c.b16 %v9993, %v9977
    %v10810 = vpack.c.b16 %v9994, %v9978
    %v10811 = vpack.c.b16 %v9995, %v9979
    %v10812 = vpack.c.b16 %v9996, %v9980
    %v10813 = vpack.c.b16 %v9997, %v9981
    %v10814 = vpack.c.b16 %v9998, %v9982
    %v10815 = vpack.c.b16 %v9999, %v9983
    %v10816 = vpack.c.b16 %v10000, %v9984
    %v10817 = vpack.c.b16 %v10001, %v9985
    %v10818 = vpack.c.b16 %v10002, %v9986
    %v10819 = vpack.c.b16 %v10003, %v9987
    %v10820 = vpack.c.b16 %v10020, %v10004
    %v10821 = vpack.c.b16 %v10021, %v10005
    %v10822 = vpack.c.b16 %v10022, %v10006
    %v10823 = vpack.c.b16 %v10023, %v10007
    %v10824 = vpack.c.b16 %v10024, %v10008
    %v10825 = vpack.c.b16 %v10025, %v10009
    %v10826 = vpack.c.b16 %v10026, %v10010
    %v10827 = vpack.c.b16 %v10027, %v10011
    %v10828 = vpack.c.b16 %v10028, %v10012
    %v10829 = vpack.c.b16 %v10029, %v10013
    %v10830 = vpack.c.b16 %v10030, %v10014
    %v10831 = vpack.c.b16 %v10031, %v10015
    %v10832 = vpack.c.b16 %v10032, %v10016
    %v10833 = vpack.c.b16 %v10033, %v10017
    %v10834 = vpack.c.b16 %v10034, %v10018
    %v10835 = vpack.c.b16 %v10035, %v10019
    %v10836 = vpack.c.b16 %v10052, %v10036
    %v10837 = vpack.c.b16 %v10053, %v10037
    %v10838 = vpack.c.b16 %v10054, %v10038
    %v10839 = vpack.c.b16 %v10055, %v10039
    %v10840 = vpack.c.b16 %v10056, %v10040
    %v10841 = vpack.c.b16 %v10057, %v10041
    %v10842 = vpack.c.b16 %v10058, %v10042
    %v10843 = vpack.c.b16 %v10059, %v10043
    %v10844 = vpack.c.b16 %v10060, %v10044
    %v10845 = vpack.c.b16 %v10061, %v10045
    %v10846 = vpack.c.b16 %v10062, %v10046
    %v10847 = vpack.c.b16 %v10063, %v10047
    %v10848 = vpack.c.b16 %v10064, %v10048
    %v10849 = vpack.c.b16 %v10065, %v10049
    %v10850 = vpack.c.b16 %v10066, %v10050
    %v10851 = vpack.c.b16 %v10067, %v10051
    %v10852 = vpack.c.b16 %v10084, %v10068
    %v10853 = vpack.c.b16 %v10085, %v10069
    %v10854 = vpack.c.b16 %v10086, %v10070
    %v10855 = vpack.c.b16 %v10087, %v10071
    %v10856 = vpack.c.b16 %v10088, %v10072
    %v10857 = vpack.c.b16 %v10089, %v10073
    %v10858 = vpack.c.b16 %v10090, %v10074
    %v10859 = vpack.c.b16 %v10091, %v10075
    %v10860 = vpack.c.b16 %v10092, %v10076
    %v10861 = vpack.c.b16 %v10093, %v10077
    %v10862 = vpack.c.b16 %v10094, %v10078
    %v10863 = vpack.c.b16 %v10095, %v10079
    %v10864 = vpack.c.b16 %v10096, %v10080
    %v10865 = vpack.c.b16 %v10097, %v10081
    %v10866 = vpack.c.b16 %v10098, %v10082
    %v10867 = vpack.c.b16 %v10099, %v10083
    %v10868 = vpack.c.b16 %v10116, %v10100
    %v10869 = vpack.c.b16 %v10117, %v10101
    %v10870 = vpack.c.b16 %v10118, %v10102
    %v10871 = vpack.c.b16 %v10119, %v10103
    %v10872 = vpack.c.b16 %v10120, %v10104
    %v10873 = vpack.c.b16 %v10121, %v10105
    %v10874 = vpack.c.b16 %v10122, %v10106
    %v10875 = vpack.c.b16 %v10123, %v10107
    %v10876 = vpack.c.b16 %v10124, %v10108
    %v10877 = vpack.c.b16 %v10125, %v10109
    %v10878 = vpack.c.b16 %v10126, %v10110
    %v10879 = vpack.c.b16 %v10127, %v10111
    %v10880 = vpack.c.b16 %v10128, %v10112
    %v10881 = vpack.c.b16 %v10129, %v10113
    %v10882 = vpack.c.b16 %v10130, %v10114
    %v10883 = vpack.c.b16 %v10131, %v10115
    %v10884 = vpack.c.b16 %v10148, %v10132
    %v10885 = vpack.c.b16 %v10149, %v10133
    %v10886 = vpack.c.b16 %v10150, %v10134
    %v10887 = vpack.c.b16 %v10151, %v10135
    %v10888 = vpack.c.b16 %v10152, %v10136
    %v10889 = vpack.c.b16 %v10153, %v10137
    %v10890 = vpack.c.b16 %v10154, %v10138
    %v10891 = vpack.c.b16 %v10155, %v10139
    %v10892 = vpack.c.b16 %v10156, %v10140
    %v10893 = vpack.c.b16 %v10157, %v10141
    %v10894 = vpack.c.b16 %v10158, %v10142
    %v10895 = vpack.c.b16 %v10159, %v10143
    %v10896 = vpack.c.b16 %v10160, %v10144
    %v10897 = vpack.c.b16 %v10161, %v10145
    %v10898 = vpack.c.b16 %v10162, %v10146
    %v10899 = vpack.c.b16 %v10163, %v10147
    %v10900 = vpack.c.b16 %v10180, %v10164
    %v10901 = vpack.c.b16 %v10181, %v10165
    %v10902 = vpack.c.b16 %v10182, %v10166
    %v10903 = vpack.c.b16 %v10183, %v10167
    %v10904 = vpack.c.b16 %v10184, %v10168
    %v10905 = vpack.c.b16 %v10185, %v10169
    %v10906 = vpack.c.b16 %v10186, %v10170
    %v10907 = vpack.c.b16 %v10187, %v10171
    %v10908 = vpack.c.b16 %v10188, %v10172
    %v10909 = vpack.c.b16 %v10189, %v10173
    %v10910 = vpack.c.b16 %v10190, %v10174
    %v10911 = vpack.c.b16 %v10191, %v10175
    %v10912 = vpack.c.b16 %v10192, %v10176
    %v10913 = vpack.c.b16 %v10193, %v10177
    %v10914 = vpack.c.b16 %v10194, %v10178
    %v10915 = vpack.c.b16 %v10195, %v10179
    %v10916 = vpack.c.b16 %v10212, %v10196
    %v10917 = vpack.c.b16 %v10213, %v10197
    %v10918 = vpack.c.b16 %v10214, %v10198
    %v10919 = vpack.c.b16 %v10215, %v10199
    %v10920 = vpack.c.b16 %v10216, %v10200
    %v10921 = vpack.c.b16 %v10217, %v10201
    %v10922 = vpack.c.b16 %v10218, %v10202
    %v10923 = vpack.c.b16 %v10219, %v10203
    %v10924 = vpack.c.b16 %v10220, %v10204
    %v10925 = vpack.c.b16 %v10221, %v10205
    %v10926 = vpack.c.b16 %v10222, %v10206
    %v10927 = vpack.c.b16 %v10223, %v10207
    %v10928 = vpack.c.b16 %v10224, %v10208
    %v10929 = vpack.c.b16 %v10225, %v10209
    %v10930 = vpack.c.b16 %v10226, %v10210
    %v10931 = vpack.c.b16 %v10227, %v10211
    %v10932 = vpack.c.b16 %v10244, %v10228
    %v10933 = vpack.c.b16 %v10245, %v10229
    %v10934 = vpack.c.b16 %v10246, %v10230
    %v10935 = vpack.c.b16 %v10247, %v10231
    %v10936 = vpack.c.b16 %v10248, %v10232
    %v10937 = vpack.c.b16 %v10249, %v10233
    %v10938 = vpack.c.b16 %v10250, %v10234
    %v10939 = vpack.c.b16 %v10251, %v10235
    %v10940 = vpack.c.b16 %v10252, %v10236
    %v10941 = vpack.c.b16 %v10253, %v10237
    %v10942 = vpack.c.b16 %v10254, %v10238
    %v10943 = vpack.c.b16 %v10255, %v10239
    %v10944 = vpack.c.b16 %v10256, %v10240
    %v10945 = vpack.c.b16 %v10257, %v10241
    %v10946 = vpack.c.b16 %v10258, %v10242
    %v10947 = vpack.c.b16 %v10259, %v10243
    %v10948 = vpack.c.b16 %v10276, %v10260
    %v10949 = vpack.c.b16 %v10277, %v10261
    %v10950 = vpack.c.b16 %v10278, %v10262
    %v10951 = vpack.c.b16 %v10279, %v10263
    %v10952 = vpack.c.b16 %v10280, %v10264
    %v10953 = vpack.c.b16 %v10281, %v10265
    %v10954 = vpack.c.b16 %v10282, %v10266
    %v10955 = vpack.c.b16 %v10283, %v10267
    %v10956 = vpack.c.b16 %v10284, %v10268
    %v10957 = vpack.c.b16 %v10285, %v10269
    %v10958 = vpack.c.b16 %v10286, %v10270
    %v10959 = vpack.c.b16 %v10287, %v10271
    %v10960 = vpack.c.b16 %v10288, %v10272
    %v10961 = vpack.c.b16 %v10289, %v10273
    %v10962 = vpack.c.b16 %v10290, %v10274
    %v10963 = vpack.c.b16 %v10291, %v10275
    %v10964 = vpack.c.b16 %v10308, %v10292
    %v10965 = vpack.c.b16 %v10309, %v10293
    %v10966 = vpack.c.b16 %v10310, %v10294
    %v10967 = vpack.c.b16 %v10311, %v10295
    %v10968 = vpack.c.b16 %v10312, %v10296
    %v10969 = vpack.c.b16 %v10313, %v10297
    %v10970 = vpack.c.b16 %v10314, %v10298
    %v10971 = vpack.c.b16 %v10315, %v10299
    %v10972 = vpack.c.b16 %v10316, %v10300
    %v10973 = vpack.c.b16 %v10317, %v10301
    %v10974 = vpack.c.b16 %v10318, %v10302
    %v10975 = vpack.c.b16 %v10319, %v10303
    %v10976 = vpack.c.b16 %v10320, %v10304
    %v10977 = vpack.c.b16 %v10321, %v10305
    %v10978 = vpack.c.b16 %v10322, %v10306
    %v10979 = vpack.c.b16 %v10323, %v10307
    %v10980 = vpack.c.b16 %v10340, %v10324
    %v10981 = vpack.c.b16 %v10341, %v10325
    %v10982 = vpack.c.b16 %v10342, %v10326
    %v10983 = vpack.c.b16 %v10343, %v10327
    %v10984 = vpack.c.b16 %v10344, %v10328
    %v10985 = vpack.c.b16 %v10345, %v10329
    %v10986 = vpack.c.b16 %v10346, %v10330
    %v10987 = vpack.c.b16 %v10347, %v10331
    %v10988 = vpack.c.b16 %v10348, %v10332
    %v10989 = vpack.c.b16 %v10349, %v10333
    %v10990 = vpack.c.b16 %v10350, %v10334
    %v10991 = vpack.c.b16 %v10351, %v10335
    %v10992 = vpack.c.b16 %v10352, %v10336
    %v10993 = vpack.c.b16 %v10353, %v10337
    %v10994 = vpack.c.b16 %v10354, %v10338
    %v10995 = vpack.c.b16 %v10355, %v10339
    %v10996 = vpack.c.b16 %v10372, %v10356
    %v10997 = vpack.c.b16 %v10373, %v10357
    %v10998 = vpack.c.b16 %v10374, %v10358
    %v10999 = vpack.c.b16 %v10375, %v10359
    %v11000 = vpack.c.b16 %v10376, %v10360
    %v11001 = vpack.c.b16 %v10377, %v10361
    %v11002 = vpack.c.b16 %v10378, %v10362
    %v11003 = vpack.c.b16 %v10379, %v10363
    %v11004 = vpack.c.b16 %v10380, %v10364
    %v11005 = vpack.c.b16 %v10381, %v10365
    %v11006 = vpack.c.b16 %v10382, %v10366
    %v11007 = vpack.c.b16 %v10383, %v10367
    %v11008 = vpack.c.b16 %v10384, %v10368
    %v11009 = vpack.c.b16 %v10385, %v10369
    %v11010 = vpack.c.b16 %v10386, %v10370
    %v11011 = vpack.c.b16 %v10387, %v10371
    %v11012 = vpack.c.b16 %v10404, %v10388
    %v11013 = vpack.c.b16 %v10405, %v10389
    %v11014 = vpack.c.b16 %v10406, %v10390
    %v11015 = vpack.c.b16 %v10407, %v10391
    %v11016 = vpack.c.b16 %v10408, %v10392
    %v11017 = vpack.c.b16 %v10409, %v10393
    %v11018 = vpack.c.b16 %v10410, %v10394
    %v11019 = vpack.c.b16 %v10411, %v10395
    %v11020 = vpack.c.b16 %v10412, %v10396
    %v11021 = vpack.c.b16 %v10413, %v10397
    %v11022 = vpack.c.b16 %v10414, %v10398
    %v11023 = vpack.c.b16 %v10415, %v10399
    %v11024 = vpack.c.b16 %v10416, %v10400
    %v11025 = vpack.c.b16 %v10417, %v10401
    %v11026 = vpack.c.b16 %v10418, %v10402
    %v11027 = vpack.c.b16 %v10419, %v10403
    %v11028 = vpack.c.b16 %v10436, %v10420
    %v11029 = vpack.c.b16 %v10437, %v10421
    %v11030 = vpack.c.b16 %v10438, %v10422
    %v11031 = vpack.c.b16 %v10439, %v10423
    %v11032 = vpack.c.b16 %v10440, %v10424
    %v11033 = vpack.c.b16 %v10441, %v10425
    %v11034 = vpack.c.b16 %v10442, %v10426
    %v11035 = vpack.c.b16 %v10443, %v10427
    %v11036 = vpack.c.b16 %v10444, %v10428
    %v11037 = vpack.c.b16 %v10445, %v10429
    %v11038 = vpack.c.b16 %v10446, %v10430
    %v11039 = vpack.c.b16 %v10447, %v10431
    %v11040 = vpack.c.b16 %v10448, %v10432
    %v11041 = vpack.c.b16 %v10449, %v10433
    %v11042 = vpack.c.b16 %v10450, %v10434
    %v11043 = vpack.c.b16 %v10451, %v10435
    %v11044 = vpack.c.b16 %v10468, %v10452
    %v11045 = vpack.c.b16 %v10469, %v10453
    %v11046 = vpack.c.b16 %v10470, %v10454
    %v11047 = vpack.c.b16 %v10471, %v10455
    %v11048 = vpack.c.b16 %v10472, %v10456
    %v11049 = vpack.c.b16 %v10473, %v10457
    %v11050 = vpack.c.b16 %v10474, %v10458
    %v11051 = vpack.c.b16 %v10475, %v10459
    %v11052 = vpack.c.b16 %v10476, %v10460
    %v11053 = vpack.c.b16 %v10477, %v10461
    %v11054 = vpack.c.b16 %v10478, %v10462
    %v11055 = vpack.c.b16 %v10479, %v10463
    %v11056 = vpack.c.b16 %v10480, %v10464
    %v11057 = vpack.c.b16 %v10481, %v10465
    %v11058 = vpack.c.b16 %v10482, %v10466
    %v11059 = vpack.c.b16 %v10483, %v10467
    %v11060 = vpack.c.b16 %v10500, %v10484
    %v11061 = vpack.c.b16 %v10501, %v10485
    %v11062 = vpack.c.b16 %v10502, %v10486
    %v11063 = vpack.c.b16 %v10503, %v10487
    %v11064 = vpack.c.b16 %v10504, %v10488
    %v11065 = vpack.c.b16 %v10505, %v10489
    %v11066 = vpack.c.b16 %v10506, %v10490
    %v11067 = vpack.c.b16 %v10507, %v10491
    %v11068 = vpack.c.b16 %v10508, %v10492
    %v11069 = vpack.c.b16 %v10509, %v10493
    %v11070 = vpack.c.b16 %v10510, %v10494
    %v11071 = vpack.c.b16 %v10511, %v10495
    %v11072 = vpack.c.b16 %v10512, %v10496
    %v11073 = vpack.c.b16 %v10513, %v10497
    %v11074 = vpack.c.b16 %v10514, %v10498
    %v11075 = vpack.c.b16 %v10515, %v10499
    %v11076 = vpack.c.b16 %v10532, %v10516
    %v11077 = vpack.c.b16 %v10533, %v10517
    %v11078 = vpack.c.b16 %v10534, %v10518
    %v11079 = vpack.c.b16 %v10535, %v10519
    %v11080 = vpack.c.b16 %v10536, %v10520
    %v11081 = vpack.c.b16 %v10537, %v10521
    %v11082 = vpack.c.b16 %v10538, %v10522
    %v11083 = vpack.c.b16 %v10539, %v10523
    %v11084 = vpack.c.b16 %v10540, %v10524
    %v11085 = vpack.c.b16 %v10541, %v10525
    %v11086 = vpack.c.b16 %v10542, %v10526
    %v11087 = vpack.c.b16 %v10543, %v10527
    %v11088 = vpack.c.b16 %v10544, %v10528
    %v11089 = vpack.c.b16 %v10545, %v10529
    %v11090 = vpack.c.b16 %v10546, %v10530
    %v11091 = vpack.c.b16 %v10547, %v10531
    %v11092 = vpack.c.b16 %v10564, %v10548
    %v11093 = vpack.c.b16 %v10565, %v10549
    %v11094 = vpack.c.b16 %v10566, %v10550
    %v11095 = vpack.c.b16 %v10567, %v10551
    %v11096 = vpack.c.b16 %v10568, %v10552
    %v11097 = vpack.c.b16 %v10569, %v10553
    %v11098 = vpack.c.b16 %v10570, %v10554
    %v11099 = vpack.c.b16 %v10571, %v10555
    %v11100 = vpack.c.b16 %v10572, %v10556
    %v11101 = vpack.c.b16 %v10573, %v10557
    %v11102 = vpack.c.b16 %v10574, %v10558
    %v11103 = vpack.c.b16 %v10575, %v10559
    %v11104 = vpack.c.b16 %v10576, %v10560
    %v11105 = vpack.c.b16 %v10577, %v10561
    %v11106 = vpack.c.b16 %v10578, %v10562
    %v11107 = vpack.c.b16 %v10579, %v10563
    %v11108 = vpack.c.b16 %v10596, %v10580
    %v11109 = vpack.c.b16 %v10597, %v10581
    %v11110 = vpack.c.b16 %v10598, %v10582
    %v11111 = vpack.c.b16 %v10599, %v10583
    %v11112 = vpack.c.b16 %v10600, %v10584
    %v11113 = vpack.c.b16 %v10601, %v10585
    %v11114 = vpack.c.b16 %v10602, %v10586
    %v11115 = vpack.c.b16 %v10603, %v10587
    %v11116 = vpack.c.b16 %v10604, %v10588
    %v11117 = vpack.c.b16 %v10605, %v10589
    %v11118 = vpack.c.b16 %v10606, %v10590
    %v11119 = vpack.c.b16 %v10607, %v10591
    %v11120 = vpack.c.b16 %v10608, %v10592
    %v11121 = vpack.c.b16 %v10609, %v10593
    %v11122 = vpack.c.b16 %v10610, %v10594
    %v11123 = vpack.c.b16 %v10611, %v10595
    %11636 = vmatprep.subr.bf16.mxu0 %v10725
    %11637 = vmatpush1.bf16.msra.mxu0 %v10724
    %11638 = vmatprep.subr.bf16.mxu0 %v10709
    %11639 = vmatpush1.bf16.msra.mxu0 %v10708
    %11640 = vmatprep.subr.bf16.mxu0 %v10693
    %11641 = vmatpush1.bf16.msra.mxu0 %v10692
    %11642 = vmatprep.subr.bf16.mxu0 %v10677
    %11643 = vmatpush1.bf16.msra.mxu0 %v10676
    %11644 = vmatprep.subr.bf16.mxu0 %v10661
    %11645 = vmatpush1.bf16.msra.mxu0 %v10660
    %11646 = vmatprep.subr.bf16.mxu0 %v10645
    %11647 = vmatpush1.bf16.msra.mxu0 %v10644
    %11648 = vmatprep.subr.bf16.mxu0 %v10629
    %11649 = vmatpush1.bf16.msra.mxu0 %v10628
    %11650 = vmatprep.subr.bf16.mxu0 %v10613
    %11651 = vmatpush1.bf16.msra.mxu0 %v10612
    %11652 = vmatprep.subr.bf16.mxu0 %v10853
    %11653 = vmatpush2.bf16.msra.mxu0 %v10852
    %11654 = vmatprep.subr.bf16.mxu0 %v10837
    %11655 = vmatpush2.bf16.msra.mxu0 %v10836
    %11656 = vmatprep.subr.bf16.mxu0 %v10821
    %11657 = vmatpush2.bf16.msra.mxu0 %v10820
    %11658 = vmatprep.subr.bf16.mxu0 %v10805
    %11659 = vmatpush2.bf16.msra.mxu0 %v10804
    %11660 = vmatprep.subr.bf16.mxu0 %v10789
    %11661 = vmatpush2.bf16.msra.mxu0 %v10788
    %11662 = vmatprep.subr.bf16.mxu0 %v10773
    %11663 = vmatpush2.bf16.msra.mxu0 %v10772
    %11664 = vmatprep.subr.bf16.mxu0 %v10757
    %11665 = vmatpush2.bf16.msra.mxu0 %v10756
    %11666 = vmatprep.subr.bf16.mxu0 %v10741
    %11667 = vmatpush2.bf16.msra.mxu0 %v10740
    %11668 = vmatprep.mubr.bf16.mxu0 %v8473
    %11669 = vmatmul.mubr.bf16.gmra.mxu0 %v8472
    %v11670 = vpop.f32.mrf.mxu0
    %v11671 = vadd.f32 %v8999, %v11670
    %v11672 = vpop.f32.mrf.mxu0
    %v11673 = vadd.f32 %v9003, %v11672
    %v11674 = vpop.f32.mrf.mxu0
    %v11675 = vadd.f32 %v8999, %v11674
    %v11676 = vpop.f32.mrf.mxu0
    %v11677 = vadd.f32 %v9003, %v11676
    %11678 = vmatprep.mubr.bf16.mxu0 %v8477
    %11679 = vmatmul.mubr.bf16.gmra.mxu0 %v8476
    %v11680 = vpop.f32.mrf.mxu0
    %v11681 = vadd.f32 %v8999, %v11680
    %v11682 = vpop.f32.mrf.mxu0
    %v11683 = vadd.f32 %v9003, %v11682
    %v11684 = vpop.f32.mrf.mxu0
    %v11685 = vadd.f32 %v8999, %v11684
    %v11686 = vpop.f32.mrf.mxu0
    %v11687 = vadd.f32 %v9003, %v11686
    %11688 = vdwg.mxu0
    %11689 = vmatprep.subr.bf16.mxu0 %v10981
    %11690 = vmatpush1.bf16.msra.mxu0 %v10980
    %11691 = vmatprep.subr.bf16.mxu0 %v10965
    %11692 = vmatpush1.bf16.msra.mxu0 %v10964
    %11693 = vmatprep.subr.bf16.mxu0 %v10949
    %11694 = vmatpush1.bf16.msra.mxu0 %v10948
    %11695 = vmatprep.subr.bf16.mxu0 %v10933
    %11696 = vmatpush1.bf16.msra.mxu0 %v10932
    %11697 = vmatprep.subr.bf16.mxu0 %v10917
    %11698 = vmatpush1.bf16.msra.mxu0 %v10916
    %11699 = vmatprep.subr.bf16.mxu0 %v10901
    %11700 = vmatpush1.bf16.msra.mxu0 %v10900
    %11701 = vmatprep.subr.bf16.mxu0 %v10885
    %11702 = vmatpush1.bf16.msra.mxu0 %v10884
    %11703 = vmatprep.subr.bf16.mxu0 %v10869
    %11704 = vmatpush1.bf16.msra.mxu0 %v10868
    %11705 = vmatprep.subr.bf16.mxu0 %v11109
    %11706 = vmatpush2.bf16.msra.mxu0 %v11108
    %11707 = vmatprep.subr.bf16.mxu0 %v11093
    %11708 = vmatpush2.bf16.msra.mxu0 %v11092
    %11709 = vmatprep.subr.bf16.mxu0 %v11077
    %11710 = vmatpush2.bf16.msra.mxu0 %v11076
    %11711 = vmatprep.subr.bf16.mxu0 %v11061
    %11712 = vmatpush2.bf16.msra.mxu0 %v11060
    %11713 = vmatprep.subr.bf16.mxu0 %v11045
    %11714 = vmatpush2.bf16.msra.mxu0 %v11044
    %11715 = vmatprep.subr.bf16.mxu0 %v11029
    %11716 = vmatpush2.bf16.msra.mxu0 %v11028
    %11717 = vmatprep.subr.bf16.mxu0 %v11013
    %11718 = vmatpush2.bf16.msra.mxu0 %v11012
    %11719 = vmatprep.subr.bf16.mxu0 %v10997
    %11720 = vmatpush2.bf16.msra.mxu0 %v10996
    %11721 = vmatprep.mubr.bf16.mxu0 %v8475
    %11722 = vmatmul.mubr.bf16.gmra.mxu0 %v8474
    %v11723 = vpop.f32.mrf.mxu0
    %v11724 = vadd.f32 %v11671, %v11723
    %v11725 = vpop.f32.mrf.mxu0
    %v11726 = vadd.f32 %v11673, %v11725
    %v11727 = vpop.f32.mrf.mxu0
    %v11728 = vadd.f32 %v11675, %v11727
    %v11729 = vpop.f32.mrf.mxu0
    %v11730 = vadd.f32 %v11677, %v11729
    %11731 = vmatprep.mubr.bf16.mxu0 %v8479
    %11732 = vmatmul.mubr.bf16.gmra.mxu0 %v8478
    %v11733 = vpop.f32.mrf.mxu0
    %v11734 = vadd.f32 %v11681, %v11733
    %v11735 = vpop.f32.mrf.mxu0
    %v11736 = vadd.f32 %v11683, %v11735
    %v11737 = vpop.f32.mrf.mxu0
    %v11738 = vadd.f32 %v11685, %v11737
    %v11739 = vpop.f32.mrf.mxu0
    %v11740 = vadd.f32 %v11687, %v11739
    %11741 = vdwg.mxu0
    %11742 = vmatprep.subr.bf16.mxu0 %v10727
    %11743 = vmatpush1.bf16.msra.mxu0 %v10726
    %11744 = vmatprep.subr.bf16.mxu0 %v10711
    %11745 = vmatpush1.bf16.msra.mxu0 %v10710
    %11746 = vmatprep.subr.bf16.mxu0 %v10695
    %11747 = vmatpush1.bf16.msra.mxu0 %v10694
    %11748 = vmatprep.subr.bf16.mxu0 %v10679
    %11749 = vmatpush1.bf16.msra.mxu0 %v10678
    %11750 = vmatprep.subr.bf16.mxu0 %v10663
    %11751 = vmatpush1.bf16.msra.mxu0 %v10662
    %11752 = vmatprep.subr.bf16.mxu0 %v10647
    %11753 = vmatpush1.bf16.msra.mxu0 %v10646
    %11754 = vmatprep.subr.bf16.mxu0 %v10631
    %11755 = vmatpush1.bf16.msra.mxu0 %v10630
    %11756 = vmatprep.subr.bf16.mxu0 %v10615
    %11757 = vmatpush1.bf16.msra.mxu0 %v10614
    %11758 = vmatprep.subr.bf16.mxu0 %v10855
    %11759 = vmatpush2.bf16.msra.mxu0 %v10854
    %11760 = vmatprep.subr.bf16.mxu0 %v10839
    %11761 = vmatpush2.bf16.msra.mxu0 %v10838
    %11762 = vmatprep.subr.bf16.mxu0 %v10823
    %11763 = vmatpush2.bf16.msra.mxu0 %v10822
    %11764 = vmatprep.subr.bf16.mxu0 %v10807
    %11765 = vmatpush2.bf16.msra.mxu0 %v10806
    %11766 = vmatprep.subr.bf16.mxu0 %v10791
    %11767 = vmatpush2.bf16.msra.mxu0 %v10790
    %11768 = vmatprep.subr.bf16.mxu0 %v10775
    %11769 = vmatpush2.bf16.msra.mxu0 %v10774
    %11770 = vmatprep.subr.bf16.mxu0 %v10759
    %11771 = vmatpush2.bf16.msra.mxu0 %v10758
    %11772 = vmatprep.subr.bf16.mxu0 %v10743
    %11773 = vmatpush2.bf16.msra.mxu0 %v10742
    %11774 = vmatprep.mubr.bf16.mxu0 %v8473
    %11775 = vmatmul.mubr.bf16.gmra.mxu0 %v8472
    %v11776 = vpop.f32.mrf.mxu0
    %v11777 = vadd.f32 %v9007, %v11776
    %v11778 = vpop.f32.mrf.mxu0
    %v11779 = vadd.f32 %v9011, %v11778
    %v11780 = vpop.f32.mrf.mxu0
    %v11781 = vadd.f32 %v9007, %v11780
    %v11782 = vpop.f32.mrf.mxu0
    %v11783 = vadd.f32 %v9011, %v11782
    %11784 = vmatprep.mubr.bf16.mxu0 %v8477
    %11785 = vmatmul.mubr.bf16.gmra.mxu0 %v8476
    %v11786 = vpop.f32.mrf.mxu0
    %v11787 = vadd.f32 %v9007, %v11786
    %v11788 = vpop.f32.mrf.mxu0
    %v11789 = vadd.f32 %v9011, %v11788
    %v11790 = vpop.f32.mrf.mxu0
    %v11791 = vadd.f32 %v9007, %v11790
    %v11792 = vpop.f32.mrf.mxu0
    %v11793 = vadd.f32 %v9011, %v11792
    %11794 = vdwg.mxu0
    %11795 = vmatprep.subr.bf16.mxu0 %v10983
    %11796 = vmatpush1.bf16.msra.mxu0 %v10982
    %11797 = vmatprep.subr.bf16.mxu0 %v10967
    %11798 = vmatpush1.bf16.msra.mxu0 %v10966
    %11799 = vmatprep.subr.bf16.mxu0 %v10951
    %11800 = vmatpush1.bf16.msra.mxu0 %v10950
    %11801 = vmatprep.subr.bf16.mxu0 %v10935
    %11802 = vmatpush1.bf16.msra.mxu0 %v10934
    %11803 = vmatprep.subr.bf16.mxu0 %v10919
    %11804 = vmatpush1.bf16.msra.mxu0 %v10918
    %11805 = vmatprep.subr.bf16.mxu0 %v10903
    %11806 = vmatpush1.bf16.msra.mxu0 %v10902
    %11807 = vmatprep.subr.bf16.mxu0 %v10887
    %11808 = vmatpush1.bf16.msra.mxu0 %v10886
    %11809 = vmatprep.subr.bf16.mxu0 %v10871
    %11810 = vmatpush1.bf16.msra.mxu0 %v10870
    %11811 = vmatprep.subr.bf16.mxu0 %v11111
    %11812 = vmatpush2.bf16.msra.mxu0 %v11110
    %11813 = vmatprep.subr.bf16.mxu0 %v11095
    %11814 = vmatpush2.bf16.msra.mxu0 %v11094
    %11815 = vmatprep.subr.bf16.mxu0 %v11079
    %11816 = vmatpush2.bf16.msra.mxu0 %v11078
    %11817 = vmatprep.subr.bf16.mxu0 %v11063
    %11818 = vmatpush2.bf16.msra.mxu0 %v11062
    %11819 = vmatprep.subr.bf16.mxu0 %v11047
    %11820 = vmatpush2.bf16.msra.mxu0 %v11046
    %11821 = vmatprep.subr.bf16.mxu0 %v11031
    %11822 = vmatpush2.bf16.msra.mxu0 %v11030
    %11823 = vmatprep.subr.bf16.mxu0 %v11015
    %11824 = vmatpush2.bf16.msra.mxu0 %v11014
    %11825 = vmatprep.subr.bf16.mxu0 %v10999
    %11826 = vmatpush2.bf16.msra.mxu0 %v10998
    %11827 = vmatprep.mubr.bf16.mxu0 %v8475
    %11828 = vmatmul.mubr.bf16.gmra.mxu0 %v8474
    %v11829 = vpop.f32.mrf.mxu0
    %v11830 = vadd.f32 %v11777, %v11829
    %v11831 = vpop.f32.mrf.mxu0
    %v11832 = vadd.f32 %v11779, %v11831
    %v11833 = vpop.f32.mrf.mxu0
    %v11834 = vadd.f32 %v11781, %v11833
    %v11835 = vpop.f32.mrf.mxu0
    %v11836 = vadd.f32 %v11783, %v11835
    %11837 = vmatprep.mubr.bf16.mxu0 %v8479
    %11838 = vmatmul.mubr.bf16.gmra.mxu0 %v8478
    %v11839 = vpop.f32.mrf.mxu0
    %v11840 = vadd.f32 %v11787, %v11839
    %v11841 = vpop.f32.mrf.mxu0
    %v11842 = vadd.f32 %v11789, %v11841
    %v11843 = vpop.f32.mrf.mxu0
    %v11844 = vadd.f32 %v11791, %v11843
    %v11845 = vpop.f32.mrf.mxu0
    %v11846 = vadd.f32 %v11793, %v11845
    %11847 = vdwg.mxu0
    %11848 = vmatprep.subr.bf16.mxu0 %v10729
    %11849 = vmatpush1.bf16.msra.mxu0 %v10728
    %11850 = vmatprep.subr.bf16.mxu0 %v10713
    %11851 = vmatpush1.bf16.msra.mxu0 %v10712
    %11852 = vmatprep.subr.bf16.mxu0 %v10697
    %11853 = vmatpush1.bf16.msra.mxu0 %v10696
    %11854 = vmatprep.subr.bf16.mxu0 %v10681
    %11855 = vmatpush1.bf16.msra.mxu0 %v10680
    %11856 = vmatprep.subr.bf16.mxu0 %v10665
    %11857 = vmatpush1.bf16.msra.mxu0 %v10664
    %11858 = vmatprep.subr.bf16.mxu0 %v10649
    %11859 = vmatpush1.bf16.msra.mxu0 %v10648
    %11860 = vmatprep.subr.bf16.mxu0 %v10633
    %11861 = vmatpush1.bf16.msra.mxu0 %v10632
    %11862 = vmatprep.subr.bf16.mxu0 %v10617
    %11863 = vmatpush1.bf16.msra.mxu0 %v10616
    %11864 = vmatprep.subr.bf16.mxu0 %v10857
    %11865 = vmatpush2.bf16.msra.mxu0 %v10856
    %11866 = vmatprep.subr.bf16.mxu0 %v10841
    %11867 = vmatpush2.bf16.msra.mxu0 %v10840
    %11868 = vmatprep.subr.bf16.mxu0 %v10825
    %11869 = vmatpush2.bf16.msra.mxu0 %v10824
    %11870 = vmatprep.subr.bf16.mxu0 %v10809
    %11871 = vmatpush2.bf16.msra.mxu0 %v10808
    %11872 = vmatprep.subr.bf16.mxu0 %v10793
    %11873 = vmatpush2.bf16.msra.mxu0 %v10792
    %11874 = vmatprep.subr.bf16.mxu0 %v10777
    %11875 = vmatpush2.bf16.msra.mxu0 %v10776
    %11876 = vmatprep.subr.bf16.mxu0 %v10761
    %11877 = vmatpush2.bf16.msra.mxu0 %v10760
    %11878 = vmatprep.subr.bf16.mxu0 %v10745
    %11879 = vmatpush2.bf16.msra.mxu0 %v10744
    %11880 = vmatprep.mubr.bf16.mxu0 %v8473
    %11881 = vmatmul.mubr.bf16.gmra.mxu0 %v8472
    %v11882 = vpop.f32.mrf.mxu0
    %v11883 = vadd.f32 %v9015, %v11882
    %v11884 = vpop.f32.mrf.mxu0
    %v11885 = vadd.f32 %v9019, %v11884
    %v11886 = vpop.f32.mrf.mxu0
    %v11887 = vadd.f32 %v9015, %v11886
    %v11888 = vpop.f32.mrf.mxu0
    %v11889 = vadd.f32 %v9019, %v11888
    %11890 = vmatprep.mubr.bf16.mxu0 %v8477
    %11891 = vmatmul.mubr.bf16.gmra.mxu0 %v8476
    %v11892 = vpop.f32.mrf.mxu0
    %v11893 = vadd.f32 %v9015, %v11892
    %v11894 = vpop.f32.mrf.mxu0
    %v11895 = vadd.f32 %v9019, %v11894
    %v11896 = vpop.f32.mrf.mxu0
    %v11897 = vadd.f32 %v9015, %v11896
    %v11898 = vpop.f32.mrf.mxu0
    %v11899 = vadd.f32 %v9019, %v11898
    %11900 = vdwg.mxu0
    %11901 = vmatprep.subr.bf16.mxu0 %v10985
    %11902 = vmatpush1.bf16.msra.mxu0 %v10984
    %11903 = vmatprep.subr.bf16.mxu0 %v10969
    %11904 = vmatpush1.bf16.msra.mxu0 %v10968
    %11905 = vmatprep.subr.bf16.mxu0 %v10953
    %11906 = vmatpush1.bf16.msra.mxu0 %v10952
    %11907 = vmatprep.subr.bf16.mxu0 %v10937
    %11908 = vmatpush1.bf16.msra.mxu0 %v10936
    %11909 = vmatprep.subr.bf16.mxu0 %v10921
    %11910 = vmatpush1.bf16.msra.mxu0 %v10920
    %11911 = vmatprep.subr.bf16.mxu0 %v10905
    %11912 = vmatpush1.bf16.msra.mxu0 %v10904
    %11913 = vmatprep.subr.bf16.mxu0 %v10889
    %11914 = vmatpush1.bf16.msra.mxu0 %v10888
    %11915 = vmatprep.subr.bf16.mxu0 %v10873
    %11916 = vmatpush1.bf16.msra.mxu0 %v10872
    %11917 = vmatprep.subr.bf16.mxu0 %v11113
    %11918 = vmatpush2.bf16.msra.mxu0 %v11112
    %11919 = vmatprep.subr.bf16.mxu0 %v11097
    %11920 = vmatpush2.bf16.msra.mxu0 %v11096
    %11921 = vmatprep.subr.bf16.mxu0 %v11081
    %11922 = vmatpush2.bf16.msra.mxu0 %v11080
    %11923 = vmatprep.subr.bf16.mxu0 %v11065
    %11924 = vmatpush2.bf16.msra.mxu0 %v11064
    %11925 = vmatprep.subr.bf16.mxu0 %v11049
    %11926 = vmatpush2.bf16.msra.mxu0 %v11048
    %11927 = vmatprep.subr.bf16.mxu0 %v11033
    %11928 = vmatpush2.bf16.msra.mxu0 %v11032
    %11929 = vmatprep.subr.bf16.mxu0 %v11017
    %11930 = vmatpush2.bf16.msra.mxu0 %v11016
    %11931 = vmatprep.subr.bf16.mxu0 %v11001
    %11932 = vmatpush2.bf16.msra.mxu0 %v11000
    %11933 = vmatprep.mubr.bf16.mxu0 %v8475
    %11934 = vmatmul.mubr.bf16.gmra.mxu0 %v8474
    %v11935 = vpop.f32.mrf.mxu0
    %v11936 = vadd.f32 %v11883, %v11935
    %v11937 = vpop.f32.mrf.mxu0
    %v11938 = vadd.f32 %v11885, %v11937
    %v11939 = vpop.f32.mrf.mxu0
    %v11940 = vadd.f32 %v11887, %v11939
    %v11941 = vpop.f32.mrf.mxu0
    %v11942 = vadd.f32 %v11889, %v11941
    %11943 = vmatprep.mubr.bf16.mxu0 %v8479
    %11944 = vmatmul.mubr.bf16.gmra.mxu0 %v8478
    %v11945 = vpop.f32.mrf.mxu0
    %v11946 = vadd.f32 %v11893, %v11945
    %v11947 = vpop.f32.mrf.mxu0
    %v11948 = vadd.f32 %v11895, %v11947
    %v11949 = vpop.f32.mrf.mxu0
    %v11950 = vadd.f32 %v11897, %v11949
    %v11951 = vpop.f32.mrf.mxu0
    %v11952 = vadd.f32 %v11899, %v11951
    %11953 = vdwg.mxu0
    %11954 = vmatprep.subr.bf16.mxu0 %v10731
    %11955 = vmatpush1.bf16.msra.mxu0 %v10730
    %11956 = vmatprep.subr.bf16.mxu0 %v10715
    %11957 = vmatpush1.bf16.msra.mxu0 %v10714
    %11958 = vmatprep.subr.bf16.mxu0 %v10699
    %11959 = vmatpush1.bf16.msra.mxu0 %v10698
    %11960 = vmatprep.subr.bf16.mxu0 %v10683
    %11961 = vmatpush1.bf16.msra.mxu0 %v10682
    %11962 = vmatprep.subr.bf16.mxu0 %v10667
    %11963 = vmatpush1.bf16.msra.mxu0 %v10666
    %11964 = vmatprep.subr.bf16.mxu0 %v10651
    %11965 = vmatpush1.bf16.msra.mxu0 %v10650
    %11966 = vmatprep.subr.bf16.mxu0 %v10635
    %11967 = vmatpush1.bf16.msra.mxu0 %v10634
    %11968 = vmatprep.subr.bf16.mxu0 %v10619
    %11969 = vmatpush1.bf16.msra.mxu0 %v10618
    %11970 = vmatprep.subr.bf16.mxu0 %v10859
    %11971 = vmatpush2.bf16.msra.mxu0 %v10858
    %11972 = vmatprep.subr.bf16.mxu0 %v10843
    %11973 = vmatpush2.bf16.msra.mxu0 %v10842
    %11974 = vmatprep.subr.bf16.mxu0 %v10827
    %11975 = vmatpush2.bf16.msra.mxu0 %v10826
    %11976 = vmatprep.subr.bf16.mxu0 %v10811
    %11977 = vmatpush2.bf16.msra.mxu0 %v10810
    %11978 = vmatprep.subr.bf16.mxu0 %v10795
    %11979 = vmatpush2.bf16.msra.mxu0 %v10794
    %11980 = vmatprep.subr.bf16.mxu0 %v10779
    %11981 = vmatpush2.bf16.msra.mxu0 %v10778
    %11982 = vmatprep.subr.bf16.mxu0 %v10763
    %11983 = vmatpush2.bf16.msra.mxu0 %v10762
    %11984 = vmatprep.subr.bf16.mxu0 %v10747
    %11985 = vmatpush2.bf16.msra.mxu0 %v10746
    %11986 = vmatprep.mubr.bf16.mxu0 %v8473
    %11987 = vmatmul.mubr.bf16.gmra.mxu0 %v8472
    %v11988 = vpop.f32.mrf.mxu0
    %v11989 = vadd.f32 %v9023, %v11988
    %v11990 = vpop.f32.mrf.mxu0
    %v11991 = vadd.f32 %v9027, %v11990
    %v11992 = vpop.f32.mrf.mxu0
    %v11993 = vadd.f32 %v9023, %v11992
    %v11994 = vpop.f32.mrf.mxu0
    %v11995 = vadd.f32 %v9027, %v11994
    %11996 = vmatprep.mubr.bf16.mxu0 %v8477
    %11997 = vmatmul.mubr.bf16.gmra.mxu0 %v8476
    %v11998 = vpop.f32.mrf.mxu0
    %v11999 = vadd.f32 %v9023, %v11998
    %v12000 = vpop.f32.mrf.mxu0
    %v12001 = vadd.f32 %v9027, %v12000
    %v12002 = vpop.f32.mrf.mxu0
    %v12003 = vadd.f32 %v9023, %v12002
    %v12004 = vpop.f32.mrf.mxu0
    %v12005 = vadd.f32 %v9027, %v12004
    %12006 = vdwg.mxu0
    %12007 = vmatprep.subr.bf16.mxu0 %v10987
    %12008 = vmatpush1.bf16.msra.mxu0 %v10986
    %12009 = vmatprep.subr.bf16.mxu0 %v10971
    %12010 = vmatpush1.bf16.msra.mxu0 %v10970
    %12011 = vmatprep.subr.bf16.mxu0 %v10955
    %12012 = vmatpush1.bf16.msra.mxu0 %v10954
    %12013 = vmatprep.subr.bf16.mxu0 %v10939
    %12014 = vmatpush1.bf16.msra.mxu0 %v10938
    %12015 = vmatprep.subr.bf16.mxu0 %v10923
    %12016 = vmatpush1.bf16.msra.mxu0 %v10922
    %12017 = vmatprep.subr.bf16.mxu0 %v10907
    %12018 = vmatpush1.bf16.msra.mxu0 %v10906
    %12019 = vmatprep.subr.bf16.mxu0 %v10891
    %12020 = vmatpush1.bf16.msra.mxu0 %v10890
    %12021 = vmatprep.subr.bf16.mxu0 %v10875
    %12022 = vmatpush1.bf16.msra.mxu0 %v10874
    %12023 = vmatprep.subr.bf16.mxu0 %v11115
    %12024 = vmatpush2.bf16.msra.mxu0 %v11114
    %12025 = vmatprep.subr.bf16.mxu0 %v11099
    %12026 = vmatpush2.bf16.msra.mxu0 %v11098
    %12027 = vmatprep.subr.bf16.mxu0 %v11083
    %12028 = vmatpush2.bf16.msra.mxu0 %v11082
    %12029 = vmatprep.subr.bf16.mxu0 %v11067
    %12030 = vmatpush2.bf16.msra.mxu0 %v11066
    %12031 = vmatprep.subr.bf16.mxu0 %v11051
    %12032 = vmatpush2.bf16.msra.mxu0 %v11050
    %12033 = vmatprep.subr.bf16.mxu0 %v11035
    %12034 = vmatpush2.bf16.msra.mxu0 %v11034
    %12035 = vmatprep.subr.bf16.mxu0 %v11019
    %12036 = vmatpush2.bf16.msra.mxu0 %v11018
    %12037 = vmatprep.subr.bf16.mxu0 %v11003
    %12038 = vmatpush2.bf16.msra.mxu0 %v11002
    %12039 = vmatprep.mubr.bf16.mxu0 %v8475
    %12040 = vmatmul.mubr.bf16.gmra.mxu0 %v8474
    %v12041 = vpop.f32.mrf.mxu0
    %v12042 = vadd.f32 %v11989, %v12041
    %v12043 = vpop.f32.mrf.mxu0
    %v12044 = vadd.f32 %v11991, %v12043
    %v12045 = vpop.f32.mrf.mxu0
    %v12046 = vadd.f32 %v11993, %v12045
    %v12047 = vpop.f32.mrf.mxu0
    %v12048 = vadd.f32 %v11995, %v12047
    %12049 = vmatprep.mubr.bf16.mxu0 %v8479
    %12050 = vmatmul.mubr.bf16.gmra.mxu0 %v8478
    %v12051 = vpop.f32.mrf.mxu0
    %v12052 = vadd.f32 %v11999, %v12051
    %v12053 = vpop.f32.mrf.mxu0
    %v12054 = vadd.f32 %v12001, %v12053
    %v12055 = vpop.f32.mrf.mxu0
    %v12056 = vadd.f32 %v12003, %v12055
    %v12057 = vpop.f32.mrf.mxu0
    %v12058 = vadd.f32 %v12005, %v12057
    %12059 = vdwg.mxu0
    %12060 = vmatprep.subr.bf16.mxu0 %v10733
    %12061 = vmatpush1.bf16.msra.mxu0 %v10732
    %12062 = vmatprep.subr.bf16.mxu0 %v10717
    %12063 = vmatpush1.bf16.msra.mxu0 %v10716
    %12064 = vmatprep.subr.bf16.mxu0 %v10701
    %12065 = vmatpush1.bf16.msra.mxu0 %v10700
    %12066 = vmatprep.subr.bf16.mxu0 %v10685
    %12067 = vmatpush1.bf16.msra.mxu0 %v10684
    %12068 = vmatprep.subr.bf16.mxu0 %v10669
    %12069 = vmatpush1.bf16.msra.mxu0 %v10668
    %12070 = vmatprep.subr.bf16.mxu0 %v10653
    %12071 = vmatpush1.bf16.msra.mxu0 %v10652
    %12072 = vmatprep.subr.bf16.mxu0 %v10637
    %12073 = vmatpush1.bf16.msra.mxu0 %v10636
    %12074 = vmatprep.subr.bf16.mxu0 %v10621
    %12075 = vmatpush1.bf16.msra.mxu0 %v10620
    %12076 = vmatprep.subr.bf16.mxu0 %v10861
    %12077 = vmatpush2.bf16.msra.mxu0 %v10860
    %12078 = vmatprep.subr.bf16.mxu0 %v10845
    %12079 = vmatpush2.bf16.msra.mxu0 %v10844
    %12080 = vmatprep.subr.bf16.mxu0 %v10829
    %12081 = vmatpush2.bf16.msra.mxu0 %v10828
    %12082 = vmatprep.subr.bf16.mxu0 %v10813
    %12083 = vmatpush2.bf16.msra.mxu0 %v10812
    %12084 = vmatprep.subr.bf16.mxu0 %v10797
    %12085 = vmatpush2.bf16.msra.mxu0 %v10796
    %12086 = vmatprep.subr.bf16.mxu0 %v10781
    %12087 = vmatpush2.bf16.msra.mxu0 %v10780
    %12088 = vmatprep.subr.bf16.mxu0 %v10765
    %12089 = vmatpush2.bf16.msra.mxu0 %v10764
    %12090 = vmatprep.subr.bf16.mxu0 %v10749
    %12091 = vmatpush2.bf16.msra.mxu0 %v10748
    %12092 = vmatprep.mubr.bf16.mxu0 %v8473
    %12093 = vmatmul.mubr.bf16.gmra.mxu0 %v8472
    %v12094 = vpop.f32.mrf.mxu0
    %v12095 = vadd.f32 %v9031, %v12094
    %v12096 = vpop.f32.mrf.mxu0
    %v12097 = vadd.f32 %v9035, %v12096
    %v12098 = vpop.f32.mrf.mxu0
    %v12099 = vadd.f32 %v9031, %v12098
    %v12100 = vpop.f32.mrf.mxu0
    %v12101 = vadd.f32 %v9035, %v12100
    %12102 = vmatprep.mubr.bf16.mxu0 %v8477
    %12103 = vmatmul.mubr.bf16.gmra.mxu0 %v8476
    %v12104 = vpop.f32.mrf.mxu0
    %v12105 = vadd.f32 %v9031, %v12104
    %v12106 = vpop.f32.mrf.mxu0
    %v12107 = vadd.f32 %v9035, %v12106
    %v12108 = vpop.f32.mrf.mxu0
    %v12109 = vadd.f32 %v9031, %v12108
    %v12110 = vpop.f32.mrf.mxu0
    %v12111 = vadd.f32 %v9035, %v12110
    %12112 = vdwg.mxu0
    %12113 = vmatprep.subr.bf16.mxu0 %v10989
    %12114 = vmatpush1.bf16.msra.mxu0 %v10988
    %12115 = vmatprep.subr.bf16.mxu0 %v10973
    %12116 = vmatpush1.bf16.msra.mxu0 %v10972
    %12117 = vmatprep.subr.bf16.mxu0 %v10957
    %12118 = vmatpush1.bf16.msra.mxu0 %v10956
    %12119 = vmatprep.subr.bf16.mxu0 %v10941
    %12120 = vmatpush1.bf16.msra.mxu0 %v10940
    %12121 = vmatprep.subr.bf16.mxu0 %v10925
    %12122 = vmatpush1.bf16.msra.mxu0 %v10924
    %12123 = vmatprep.subr.bf16.mxu0 %v10909
    %12124 = vmatpush1.bf16.msra.mxu0 %v10908
    %12125 = vmatprep.subr.bf16.mxu0 %v10893
    %12126 = vmatpush1.bf16.msra.mxu0 %v10892
    %12127 = vmatprep.subr.bf16.mxu0 %v10877
    %12128 = vmatpush1.bf16.msra.mxu0 %v10876
    %12129 = vmatprep.subr.bf16.mxu0 %v11117
    %12130 = vmatpush2.bf16.msra.mxu0 %v11116
    %12131 = vmatprep.subr.bf16.mxu0 %v11101
    %12132 = vmatpush2.bf16.msra.mxu0 %v11100
    %12133 = vmatprep.subr.bf16.mxu0 %v11085
    %12134 = vmatpush2.bf16.msra.mxu0 %v11084
    %12135 = vmatprep.subr.bf16.mxu0 %v11069
    %12136 = vmatpush2.bf16.msra.mxu0 %v11068
    %12137 = vmatprep.subr.bf16.mxu0 %v11053
    %12138 = vmatpush2.bf16.msra.mxu0 %v11052
    %12139 = vmatprep.subr.bf16.mxu0 %v11037
    %12140 = vmatpush2.bf16.msra.mxu0 %v11036
    %12141 = vmatprep.subr.bf16.mxu0 %v11021
    %12142 = vmatpush2.bf16.msra.mxu0 %v11020
    %12143 = vmatprep.subr.bf16.mxu0 %v11005
    %12144 = vmatpush2.bf16.msra.mxu0 %v11004
    %12145 = vmatprep.mubr.bf16.mxu0 %v8475
    %12146 = vmatmul.mubr.bf16.gmra.mxu0 %v8474
    %v12147 = vpop.f32.mrf.mxu0
    %v12148 = vadd.f32 %v12095, %v12147
    %v12149 = vpop.f32.mrf.mxu0
    %v12150 = vadd.f32 %v12097, %v12149
    %v12151 = vpop.f32.mrf.mxu0
    %v12152 = vadd.f32 %v12099, %v12151
    %v12153 = vpop.f32.mrf.mxu0
    %v12154 = vadd.f32 %v12101, %v12153
    %12155 = vmatprep.mubr.bf16.mxu0 %v8479
    %12156 = vmatmul.mubr.bf16.gmra.mxu0 %v8478
    %v12157 = vpop.f32.mrf.mxu0
    %v12158 = vadd.f32 %v12105, %v12157
    %v12159 = vpop.f32.mrf.mxu0
    %v12160 = vadd.f32 %v12107, %v12159
    %v12161 = vpop.f32.mrf.mxu0
    %v12162 = vadd.f32 %v12109, %v12161
    %v12163 = vpop.f32.mrf.mxu0
    %v12164 = vadd.f32 %v12111, %v12163
    %12165 = vdwg.mxu0
    %12166 = vmatprep.subr.bf16.mxu0 %v10735
    %12167 = vmatpush1.bf16.msra.mxu0 %v10734
    %12168 = vmatprep.subr.bf16.mxu0 %v10719
    %12169 = vmatpush1.bf16.msra.mxu0 %v10718
    %12170 = vmatprep.subr.bf16.mxu0 %v10703
    %12171 = vmatpush1.bf16.msra.mxu0 %v10702
    %12172 = vmatprep.subr.bf16.mxu0 %v10687
    %12173 = vmatpush1.bf16.msra.mxu0 %v10686
    %12174 = vmatprep.subr.bf16.mxu0 %v10671
    %12175 = vmatpush1.bf16.msra.mxu0 %v10670
    %12176 = vmatprep.subr.bf16.mxu0 %v10655
    %12177 = vmatpush1.bf16.msra.mxu0 %v10654
    %12178 = vmatprep.subr.bf16.mxu0 %v10639
    %12179 = vmatpush1.bf16.msra.mxu0 %v10638
    %12180 = vmatprep.subr.bf16.mxu0 %v10623
    %12181 = vmatpush1.bf16.msra.mxu0 %v10622
    %12182 = vmatprep.subr.bf16.mxu0 %v10863
    %12183 = vmatpush2.bf16.msra.mxu0 %v10862
    %12184 = vmatprep.subr.bf16.mxu0 %v10847
    %12185 = vmatpush2.bf16.msra.mxu0 %v10846
    %12186 = vmatprep.subr.bf16.mxu0 %v10831
    %12187 = vmatpush2.bf16.msra.mxu0 %v10830
    %12188 = vmatprep.subr.bf16.mxu0 %v10815
    %12189 = vmatpush2.bf16.msra.mxu0 %v10814
    %12190 = vmatprep.subr.bf16.mxu0 %v10799
    %12191 = vmatpush2.bf16.msra.mxu0 %v10798
    %12192 = vmatprep.subr.bf16.mxu0 %v10783
    %12193 = vmatpush2.bf16.msra.mxu0 %v10782
    %12194 = vmatprep.subr.bf16.mxu0 %v10767
    %12195 = vmatpush2.bf16.msra.mxu0 %v10766
    %12196 = vmatprep.subr.bf16.mxu0 %v10751
    %12197 = vmatpush2.bf16.msra.mxu0 %v10750
    %12198 = vmatprep.mubr.bf16.mxu0 %v8473
    %12199 = vmatmul.mubr.bf16.gmra.mxu0 %v8472
    %v12200 = vpop.f32.mrf.mxu0
    %v12201 = vadd.f32 %v9039, %v12200
    %v12202 = vpop.f32.mrf.mxu0
    %v12203 = vadd.f32 %v9043, %v12202
    %v12204 = vpop.f32.mrf.mxu0
    %v12205 = vadd.f32 %v9039, %v12204
    %v12206 = vpop.f32.mrf.mxu0
    %v12207 = vadd.f32 %v9043, %v12206
    %12208 = vmatprep.mubr.bf16.mxu0 %v8477
    %12209 = vmatmul.mubr.bf16.gmra.mxu0 %v8476
    %v12210 = vpop.f32.mrf.mxu0
    %v12211 = vadd.f32 %v9039, %v12210
    %v12212 = vpop.f32.mrf.mxu0
    %v12213 = vadd.f32 %v9043, %v12212
    %v12214 = vpop.f32.mrf.mxu0
    %v12215 = vadd.f32 %v9039, %v12214
    %v12216 = vpop.f32.mrf.mxu0
    %v12217 = vadd.f32 %v9043, %v12216
    %12218 = vdwg.mxu0
    %12219 = vmatprep.subr.bf16.mxu0 %v10991
    %12220 = vmatpush1.bf16.msra.mxu0 %v10990
    %12221 = vmatprep.subr.bf16.mxu0 %v10975
    %12222 = vmatpush1.bf16.msra.mxu0 %v10974
    %12223 = vmatprep.subr.bf16.mxu0 %v10959
    %12224 = vmatpush1.bf16.msra.mxu0 %v10958
    %12225 = vmatprep.subr.bf16.mxu0 %v10943
    %12226 = vmatpush1.bf16.msra.mxu0 %v10942
    %12227 = vmatprep.subr.bf16.mxu0 %v10927
    %12228 = vmatpush1.bf16.msra.mxu0 %v10926
    %12229 = vmatprep.subr.bf16.mxu0 %v10911
    %12230 = vmatpush1.bf16.msra.mxu0 %v10910
    %12231 = vmatprep.subr.bf16.mxu0 %v10895
    %12232 = vmatpush1.bf16.msra.mxu0 %v10894
    %12233 = vmatprep.subr.bf16.mxu0 %v10879
    %12234 = vmatpush1.bf16.msra.mxu0 %v10878
    %12235 = vmatprep.subr.bf16.mxu0 %v11119
    %12236 = vmatpush2.bf16.msra.mxu0 %v11118
    %12237 = vmatprep.subr.bf16.mxu0 %v11103
    %12238 = vmatpush2.bf16.msra.mxu0 %v11102
    %12239 = vmatprep.subr.bf16.mxu0 %v11087
    %12240 = vmatpush2.bf16.msra.mxu0 %v11086
    %12241 = vmatprep.subr.bf16.mxu0 %v11071
    %12242 = vmatpush2.bf16.msra.mxu0 %v11070
    %12243 = vmatprep.subr.bf16.mxu0 %v11055
    %12244 = vmatpush2.bf16.msra.mxu0 %v11054
    %12245 = vmatprep.subr.bf16.mxu0 %v11039
    %12246 = vmatpush2.bf16.msra.mxu0 %v11038
    %12247 = vmatprep.subr.bf16.mxu0 %v11023
    %12248 = vmatpush2.bf16.msra.mxu0 %v11022
    %12249 = vmatprep.subr.bf16.mxu0 %v11007
    %12250 = vmatpush2.bf16.msra.mxu0 %v11006
    %12251 = vmatprep.mubr.bf16.mxu0 %v8475
    %12252 = vmatmul.mubr.bf16.gmra.mxu0 %v8474
    %v12253 = vpop.f32.mrf.mxu0
    %v12254 = vadd.f32 %v12201, %v12253
    %v12255 = vpop.f32.mrf.mxu0
    %v12256 = vadd.f32 %v12203, %v12255
    %v12257 = vpop.f32.mrf.mxu0
    %v12258 = vadd.f32 %v12205, %v12257
    %v12259 = vpop.f32.mrf.mxu0
    %v12260 = vadd.f32 %v12207, %v12259
    %12261 = vmatprep.mubr.bf16.mxu0 %v8479
    %12262 = vmatmul.mubr.bf16.gmra.mxu0 %v8478
    %v12263 = vpop.f32.mrf.mxu0
    %v12264 = vadd.f32 %v12211, %v12263
    %v12265 = vpop.f32.mrf.mxu0
    %v12266 = vadd.f32 %v12213, %v12265
    %v12267 = vpop.f32.mrf.mxu0
    %v12268 = vadd.f32 %v12215, %v12267
    %v12269 = vpop.f32.mrf.mxu0
    %v12270 = vadd.f32 %v12217, %v12269
    %12271 = vdwg.mxu0
    %12272 = vmatprep.subr.bf16.mxu0 %v10737
    %12273 = vmatpush1.bf16.msra.mxu0 %v10736
    %12274 = vmatprep.subr.bf16.mxu0 %v10721
    %12275 = vmatpush1.bf16.msra.mxu0 %v10720
    %12276 = vmatprep.subr.bf16.mxu0 %v10705
    %12277 = vmatpush1.bf16.msra.mxu0 %v10704
    %12278 = vmatprep.subr.bf16.mxu0 %v10689
    %12279 = vmatpush1.bf16.msra.mxu0 %v10688
    %12280 = vmatprep.subr.bf16.mxu0 %v10673
    %12281 = vmatpush1.bf16.msra.mxu0 %v10672
    %12282 = vmatprep.subr.bf16.mxu0 %v10657
    %12283 = vmatpush1.bf16.msra.mxu0 %v10656
    %12284 = vmatprep.subr.bf16.mxu0 %v10641
    %12285 = vmatpush1.bf16.msra.mxu0 %v10640
    %12286 = vmatprep.subr.bf16.mxu0 %v10625
    %12287 = vmatpush1.bf16.msra.mxu0 %v10624
    %12288 = vmatprep.subr.bf16.mxu0 %v10865
    %12289 = vmatpush2.bf16.msra.mxu0 %v10864
    %12290 = vmatprep.subr.bf16.mxu0 %v10849
    %12291 = vmatpush2.bf16.msra.mxu0 %v10848
    %12292 = vmatprep.subr.bf16.mxu0 %v10833
    %12293 = vmatpush2.bf16.msra.mxu0 %v10832
    %12294 = vmatprep.subr.bf16.mxu0 %v10817
    %12295 = vmatpush2.bf16.msra.mxu0 %v10816
    %12296 = vmatprep.subr.bf16.mxu0 %v10801
    %12297 = vmatpush2.bf16.msra.mxu0 %v10800
    %12298 = vmatprep.subr.bf16.mxu0 %v10785
    %12299 = vmatpush2.bf16.msra.mxu0 %v10784
    %12300 = vmatprep.subr.bf16.mxu0 %v10769
    %12301 = vmatpush2.bf16.msra.mxu0 %v10768
    %12302 = vmatprep.subr.bf16.mxu0 %v10753
    %12303 = vmatpush2.bf16.msra.mxu0 %v10752
    %12304 = vmatprep.mubr.bf16.mxu0 %v8473
    %12305 = vmatmul.mubr.bf16.gmra.mxu0 %v8472
    %v12306 = vpop.f32.mrf.mxu0
    %v12307 = vadd.f32 %v9047, %v12306
    %v12308 = vpop.f32.mrf.mxu0
    %v12309 = vadd.f32 %v9051, %v12308
    %v12310 = vpop.f32.mrf.mxu0
    %v12311 = vadd.f32 %v9047, %v12310
    %v12312 = vpop.f32.mrf.mxu0
    %v12313 = vadd.f32 %v9051, %v12312
    %12314 = vmatprep.mubr.bf16.mxu0 %v8477
    %12315 = vmatmul.mubr.bf16.gmra.mxu0 %v8476
    %v12316 = vpop.f32.mrf.mxu0
    %v12317 = vadd.f32 %v9047, %v12316
    %v12318 = vpop.f32.mrf.mxu0
    %v12319 = vadd.f32 %v9051, %v12318
    %v12320 = vpop.f32.mrf.mxu0
    %v12321 = vadd.f32 %v9047, %v12320
    %v12322 = vpop.f32.mrf.mxu0
    %v12323 = vadd.f32 %v9051, %v12322
    %12324 = vdwg.mxu0
    %12325 = vmatprep.subr.bf16.mxu0 %v10993
    %12326 = vmatpush1.bf16.msra.mxu0 %v10992
    %12327 = vmatprep.subr.bf16.mxu0 %v10977
    %12328 = vmatpush1.bf16.msra.mxu0 %v10976
    %12329 = vmatprep.subr.bf16.mxu0 %v10961
    %12330 = vmatpush1.bf16.msra.mxu0 %v10960
    %12331 = vmatprep.subr.bf16.mxu0 %v10945
    %12332 = vmatpush1.bf16.msra.mxu0 %v10944
    %12333 = vmatprep.subr.bf16.mxu0 %v10929
    %12334 = vmatpush1.bf16.msra.mxu0 %v10928
    %12335 = vmatprep.subr.bf16.mxu0 %v10913
    %12336 = vmatpush1.bf16.msra.mxu0 %v10912
    %12337 = vmatprep.subr.bf16.mxu0 %v10897
    %12338 = vmatpush1.bf16.msra.mxu0 %v10896
    %12339 = vmatprep.subr.bf16.mxu0 %v10881
    %12340 = vmatpush1.bf16.msra.mxu0 %v10880
    %12341 = vmatprep.subr.bf16.mxu0 %v11121
    %12342 = vmatpush2.bf16.msra.mxu0 %v11120
    %12343 = vmatprep.subr.bf16.mxu0 %v11105
    %12344 = vmatpush2.bf16.msra.mxu0 %v11104
    %12345 = vmatprep.subr.bf16.mxu0 %v11089
    %12346 = vmatpush2.bf16.msra.mxu0 %v11088
    %12347 = vmatprep.subr.bf16.mxu0 %v11073
    %12348 = vmatpush2.bf16.msra.mxu0 %v11072
    %12349 = vmatprep.subr.bf16.mxu0 %v11057
    %12350 = vmatpush2.bf16.msra.mxu0 %v11056
    %12351 = vmatprep.subr.bf16.mxu0 %v11041
    %12352 = vmatpush2.bf16.msra.mxu0 %v11040
    %12353 = vmatprep.subr.bf16.mxu0 %v11025
    %12354 = vmatpush2.bf16.msra.mxu0 %v11024
    %12355 = vmatprep.subr.bf16.mxu0 %v11009
    %12356 = vmatpush2.bf16.msra.mxu0 %v11008
    %12357 = vmatprep.mubr.bf16.mxu0 %v8475
    %12358 = vmatmul.mubr.bf16.gmra.mxu0 %v8474
    %v12359 = vpop.f32.mrf.mxu0
    %v12360 = vadd.f32 %v12307, %v12359
    %v12361 = vpop.f32.mrf.mxu0
    %v12362 = vadd.f32 %v12309, %v12361
    %v12363 = vpop.f32.mrf.mxu0
    %v12364 = vadd.f32 %v12311, %v12363
    %v12365 = vpop.f32.mrf.mxu0
    %v12366 = vadd.f32 %v12313, %v12365
    %12367 = vmatprep.mubr.bf16.mxu0 %v8479
    %12368 = vmatmul.mubr.bf16.gmra.mxu0 %v8478
    %v12369 = vpop.f32.mrf.mxu0
    %v12370 = vadd.f32 %v12317, %v12369
    %v12371 = vpop.f32.mrf.mxu0
    %v12372 = vadd.f32 %v12319, %v12371
    %v12373 = vpop.f32.mrf.mxu0
    %v12374 = vadd.f32 %v12321, %v12373
    %v12375 = vpop.f32.mrf.mxu0
    %v12376 = vadd.f32 %v12323, %v12375
    %12377 = vdwg.mxu0
    %12378 = vmatprep.subr.bf16.mxu0 %v10739
    %12379 = vmatpush1.bf16.msra.mxu0 %v10738
    %12380 = vmatprep.subr.bf16.mxu0 %v10723
    %12381 = vmatpush1.bf16.msra.mxu0 %v10722
    %12382 = vmatprep.subr.bf16.mxu0 %v10707
    %12383 = vmatpush1.bf16.msra.mxu0 %v10706
    %12384 = vmatprep.subr.bf16.mxu0 %v10691
    %12385 = vmatpush1.bf16.msra.mxu0 %v10690
    %12386 = vmatprep.subr.bf16.mxu0 %v10675
    %12387 = vmatpush1.bf16.msra.mxu0 %v10674
    %12388 = vmatprep.subr.bf16.mxu0 %v10659
    %12389 = vmatpush1.bf16.msra.mxu0 %v10658
    %12390 = vmatprep.subr.bf16.mxu0 %v10643
    %12391 = vmatpush1.bf16.msra.mxu0 %v10642
    %12392 = vmatprep.subr.bf16.mxu0 %v10627
    %12393 = vmatpush1.bf16.msra.mxu0 %v10626
    %12394 = vmatprep.subr.bf16.mxu0 %v10867
    %12395 = vmatpush2.bf16.msra.mxu0 %v10866
    %12396 = vmatprep.subr.bf16.mxu0 %v10851
    %12397 = vmatpush2.bf16.msra.mxu0 %v10850
    %12398 = vmatprep.subr.bf16.mxu0 %v10835
    %12399 = vmatpush2.bf16.msra.mxu0 %v10834
    %12400 = vmatprep.subr.bf16.mxu0 %v10819
    %12401 = vmatpush2.bf16.msra.mxu0 %v10818
    %12402 = vmatprep.subr.bf16.mxu0 %v10803
    %12403 = vmatpush2.bf16.msra.mxu0 %v10802
    %12404 = vmatprep.subr.bf16.mxu0 %v10787
    %12405 = vmatpush2.bf16.msra.mxu0 %v10786
    %12406 = vmatprep.subr.bf16.mxu0 %v10771
    %12407 = vmatpush2.bf16.msra.mxu0 %v10770
    %12408 = vmatprep.subr.bf16.mxu0 %v10755
    %12409 = vmatpush2.bf16.msra.mxu0 %v10754
    %12410 = vmatprep.mubr.bf16.mxu0 %v8473
    %12411 = vmatmul.mubr.bf16.gmra.mxu0 %v8472
    %v12412 = vpop.f32.mrf.mxu0
    %v12413 = vadd.f32 %v9055, %v12412
    %v12414 = vpop.f32.mrf.mxu0
    %v12415 = vadd.f32 %v9059, %v12414
    %v12416 = vpop.f32.mrf.mxu0
    %v12417 = vadd.f32 %v9055, %v12416
    %v12418 = vpop.f32.mrf.mxu0
    %v12419 = vadd.f32 %v9059, %v12418
    %12420 = vmatprep.mubr.bf16.mxu0 %v8477
    %12421 = vmatmul.mubr.bf16.gmra.mxu0 %v8476
    %v12422 = vpop.f32.mrf.mxu0
    %v12423 = vadd.f32 %v9055, %v12422
    %v12424 = vpop.f32.mrf.mxu0
    %v12425 = vadd.f32 %v9059, %v12424
    %v12426 = vpop.f32.mrf.mxu0
    %v12427 = vadd.f32 %v9055, %v12426
    %v12428 = vpop.f32.mrf.mxu0
    %v12429 = vadd.f32 %v9059, %v12428
    %12430 = vdwg.mxu0
    %12431 = vmatprep.subr.bf16.mxu0 %v10995
    %12432 = vmatpush1.bf16.msra.mxu0 %v10994
    %12433 = vmatprep.subr.bf16.mxu0 %v10979
    %12434 = vmatpush1.bf16.msra.mxu0 %v10978
    %12435 = vmatprep.subr.bf16.mxu0 %v10963
    %12436 = vmatpush1.bf16.msra.mxu0 %v10962
    %12437 = vmatprep.subr.bf16.mxu0 %v10947
    %12438 = vmatpush1.bf16.msra.mxu0 %v10946
    %12439 = vmatprep.subr.bf16.mxu0 %v10931
    %12440 = vmatpush1.bf16.msra.mxu0 %v10930
    %12441 = vmatprep.subr.bf16.mxu0 %v10915
    %12442 = vmatpush1.bf16.msra.mxu0 %v10914
    %12443 = vmatprep.subr.bf16.mxu0 %v10899
    %12444 = vmatpush1.bf16.msra.mxu0 %v10898
    %12445 = vmatprep.subr.bf16.mxu0 %v10883
    %12446 = vmatpush1.bf16.msra.mxu0 %v10882
    %12447 = vmatprep.subr.bf16.mxu0 %v11123
    %12448 = vmatpush2.bf16.msra.mxu0 %v11122
    %12449 = vmatprep.subr.bf16.mxu0 %v11107
    %12450 = vmatpush2.bf16.msra.mxu0 %v11106
    %12451 = vmatprep.subr.bf16.mxu0 %v11091
    %12452 = vmatpush2.bf16.msra.mxu0 %v11090
    %12453 = vmatprep.subr.bf16.mxu0 %v11075
    %12454 = vmatpush2.bf16.msra.mxu0 %v11074
    %12455 = vmatprep.subr.bf16.mxu0 %v11059
    %12456 = vmatpush2.bf16.msra.mxu0 %v11058
    %12457 = vmatprep.subr.bf16.mxu0 %v11043
    %12458 = vmatpush2.bf16.msra.mxu0 %v11042
    %12459 = vmatprep.subr.bf16.mxu0 %v11027
    %12460 = vmatpush2.bf16.msra.mxu0 %v11026
    %12461 = vmatprep.subr.bf16.mxu0 %v11011
    %12462 = vmatpush2.bf16.msra.mxu0 %v11010
    %12463 = vmatprep.mubr.bf16.mxu0 %v8475
    %12464 = vmatmul.mubr.bf16.gmra.mxu0 %v8474
    %v12465 = vpop.f32.mrf.mxu0
    %v12466 = vadd.f32 %v12413, %v12465
    %v12467 = vpop.f32.mrf.mxu0
    %v12468 = vadd.f32 %v12415, %v12467
    %v12469 = vpop.f32.mrf.mxu0
    %v12470 = vadd.f32 %v12417, %v12469
    %v12471 = vpop.f32.mrf.mxu0
    %v12472 = vadd.f32 %v12419, %v12471
    %12473 = vmatprep.mubr.bf16.mxu0 %v8479
    %12474 = vmatmul.mubr.bf16.gmra.mxu0 %v8478
    %v12475 = vpop.f32.mrf.mxu0
    %v12476 = vadd.f32 %v12423, %v12475
    %v12477 = vpop.f32.mrf.mxu0
    %v12478 = vadd.f32 %v12425, %v12477
    %v12479 = vpop.f32.mrf.mxu0
    %v12480 = vadd.f32 %v12427, %v12479
    %v12481 = vpop.f32.mrf.mxu0
    %v12482 = vadd.f32 %v12429, %v12481
    %12483 = vdwg.mxu0
    %v12484 = vld [vmem:[#allocation3] sm:$0xff]
    %v12485 = vld [vmem:[#allocation3 + $0x8] sm:$0xff]
    %v12486 = vld [vmem:[#allocation3 + $0x10] sm:$0xff]
    %v12487 = vld [vmem:[#allocation3 + $0x18] sm:$0xff]
    %v12488 = vld [vmem:[#allocation3 + $0x20] sm:$0xff]
    %v12489 = vld [vmem:[#allocation3 + $0x28] sm:$0xff]
    %v12490 = vld [vmem:[#allocation3 + $0x30] sm:$0xff]
    %v12491 = vld [vmem:[#allocation3 + $0x38] sm:$0xff]
    %v12492 = vld [vmem:[#allocation3 + $0x40] sm:$0xff]
    %v12493 = vld [vmem:[#allocation3 + $0x48] sm:$0xff]
    %v12494 = vld [vmem:[#allocation3 + $0x50] sm:$0xff]
    %v12495 = vld [vmem:[#allocation3 + $0x58] sm:$0xff]
    %v12496 = vld [vmem:[#allocation3 + $0x60] sm:$0xff]
    %v12497 = vld [vmem:[#allocation3 + $0x68] sm:$0xff]
    %v12498 = vld [vmem:[#allocation3 + $0x70] sm:$0xff]
    %v12499 = vld [vmem:[#allocation3 + $0x78] sm:$0xff]
    %v12500 = vld [vmem:[#allocation3 + $0x80] sm:$0xff]
    %v12501 = vld [vmem:[#allocation3 + $0x88] sm:$0xff]
    %v12502 = vld [vmem:[#allocation3 + $0x90] sm:$0xff]
    %v12503 = vld [vmem:[#allocation3 + $0x98] sm:$0xff]
    %v12504 = vld [vmem:[#allocation3 + $0xa0] sm:$0xff]
    %v12505 = vld [vmem:[#allocation3 + $0xa8] sm:$0xff]
    %v12506 = vld [vmem:[#allocation3 + $0xb0] sm:$0xff]
    %v12507 = vld [vmem:[#allocation3 + $0xb8] sm:$0xff]
    %v12508 = vld [vmem:[#allocation3 + $0xc0] sm:$0xff]
    %v12509 = vld [vmem:[#allocation3 + $0xc8] sm:$0xff]
    %v12510 = vld [vmem:[#allocation3 + $0xd0] sm:$0xff]
    %v12511 = vld [vmem:[#allocation3 + $0xd8] sm:$0xff]
    %v12512 = vld [vmem:[#allocation3 + $0xe0] sm:$0xff]
    %v12513 = vld [vmem:[#allocation3 + $0xe8] sm:$0xff]
    %v12514 = vld [vmem:[#allocation3 + $0xf0] sm:$0xff]
    %v12515 = vld [vmem:[#allocation3 + $0xf8] sm:$0xff]
    %v12516 = vld [vmem:[#allocation3 + $0x100] sm:$0xff]
    %v12517 = vld [vmem:[#allocation3 + $0x108] sm:$0xff]
    %v12518 = vld [vmem:[#allocation3 + $0x110] sm:$0xff]
    %v12519 = vld [vmem:[#allocation3 + $0x118] sm:$0xff]
    %v12520 = vld [vmem:[#allocation3 + $0x120] sm:$0xff]
    %v12521 = vld [vmem:[#allocation3 + $0x128] sm:$0xff]
    %v12522 = vld [vmem:[#allocation3 + $0x130] sm:$0xff]
    %v12523 = vld [vmem:[#allocation3 + $0x138] sm:$0xff]
    %v12524 = vld [vmem:[#allocation3 + $0x140] sm:$0xff]
    %v12525 = vld [vmem:[#allocation3 + $0x148] sm:$0xff]
    %v12526 = vld [vmem:[#allocation3 + $0x150] sm:$0xff]
    %v12527 = vld [vmem:[#allocation3 + $0x158] sm:$0xff]
    %v12528 = vld [vmem:[#allocation3 + $0x160] sm:$0xff]
    %v12529 = vld [vmem:[#allocation3 + $0x168] sm:$0xff]
    %v12530 = vld [vmem:[#allocation3 + $0x170] sm:$0xff]
    %v12531 = vld [vmem:[#allocation3 + $0x178] sm:$0xff]
    %v12532 = vld [vmem:[#allocation3 + $0x180] sm:$0xff]
    %v12533 = vld [vmem:[#allocation3 + $0x188] sm:$0xff]
    %v12534 = vld [vmem:[#allocation3 + $0x190] sm:$0xff]
    %v12535 = vld [vmem:[#allocation3 + $0x198] sm:$0xff]
    %v12536 = vld [vmem:[#allocation3 + $0x1a0] sm:$0xff]
    %v12537 = vld [vmem:[#allocation3 + $0x1a8] sm:$0xff]
    %v12538 = vld [vmem:[#allocation3 + $0x1b0] sm:$0xff]
    %v12539 = vld [vmem:[#allocation3 + $0x1b8] sm:$0xff]
    %v12540 = vld [vmem:[#allocation3 + $0x1c0] sm:$0xff]
    %v12541 = vld [vmem:[#allocation3 + $0x1c8] sm:$0xff]
    %v12542 = vld [vmem:[#allocation3 + $0x1d0] sm:$0xff]
    %v12543 = vld [vmem:[#allocation3 + $0x1d8] sm:$0xff]
    %v12544 = vld [vmem:[#allocation3 + $0x1e0] sm:$0xff]
    %v12545 = vld [vmem:[#allocation3 + $0x1e8] sm:$0xff]
    %v12546 = vld [vmem:[#allocation3 + $0x1f0] sm:$0xff]
    %v12547 = vld [vmem:[#allocation3 + $0x1f8] sm:$0xff]
    %v12548 = vadd.f32 %v11724, %v12484
    %v12549 = vadd.f32 %v11726, %v12485
    %v12550 = vadd.f32 %v11830, %v12486
    %v12551 = vadd.f32 %v11832, %v12487
    %v12552 = vadd.f32 %v11936, %v12488
    %v12553 = vadd.f32 %v11938, %v12489
    %v12554 = vadd.f32 %v12042, %v12490
    %v12555 = vadd.f32 %v12044, %v12491
    %v12556 = vadd.f32 %v12148, %v12492
    %v12557 = vadd.f32 %v12150, %v12493
    %v12558 = vadd.f32 %v12254, %v12494
    %v12559 = vadd.f32 %v12256, %v12495
    %v12560 = vadd.f32 %v12360, %v12496
    %v12561 = vadd.f32 %v12362, %v12497
    %v12562 = vadd.f32 %v12466, %v12498
    %v12563 = vadd.f32 %v12468, %v12499
    %v12564 = vadd.f32 %v11728, %v12500
    %v12565 = vadd.f32 %v11730, %v12501
    %v12566 = vadd.f32 %v11834, %v12502
    %v12567 = vadd.f32 %v11836, %v12503
    %v12568 = vadd.f32 %v11940, %v12504
    %v12569 = vadd.f32 %v11942, %v12505
    %v12570 = vadd.f32 %v12046, %v12506
    %v12571 = vadd.f32 %v12048, %v12507
    %v12572 = vadd.f32 %v12152, %v12508
    %v12573 = vadd.f32 %v12154, %v12509
    %v12574 = vadd.f32 %v12258, %v12510
    %v12575 = vadd.f32 %v12260, %v12511
    %v12576 = vadd.f32 %v12364, %v12512
    %v12577 = vadd.f32 %v12366, %v12513
    %v12578 = vadd.f32 %v12470, %v12514
    %v12579 = vadd.f32 %v12472, %v12515
    %v12580 = vadd.f32 %v11734, %v12516
    %v12581 = vadd.f32 %v11736, %v12517
    %v12582 = vadd.f32 %v11840, %v12518
    %v12583 = vadd.f32 %v11842, %v12519
    %v12584 = vadd.f32 %v11946, %v12520
    %v12585 = vadd.f32 %v11948, %v12521
    %v12586 = vadd.f32 %v12052, %v12522
    %v12587 = vadd.f32 %v12054, %v12523
    %v12588 = vadd.f32 %v12158, %v12524
    %v12589 = vadd.f32 %v12160, %v12525
    %v12590 = vadd.f32 %v12264, %v12526
    %v12591 = vadd.f32 %v12266, %v12527
    %v12592 = vadd.f32 %v12370, %v12528
    %v12593 = vadd.f32 %v12372, %v12529
    %v12594 = vadd.f32 %v12476, %v12530
    %v12595 = vadd.f32 %v12478, %v12531
    %v12596 = vadd.f32 %v11738, %v12532
    %v12597 = vadd.f32 %v11740, %v12533
    %v12598 = vadd.f32 %v11844, %v12534
    %v12599 = vadd.f32 %v11846, %v12535
    %v12600 = vadd.f32 %v11950, %v12536
    %v12601 = vadd.f32 %v11952, %v12537
    %v12602 = vadd.f32 %v12056, %v12538
    %v12603 = vadd.f32 %v12058, %v12539
    %v12604 = vadd.f32 %v12162, %v12540
    %v12605 = vadd.f32 %v12164, %v12541
    %v12606 = vadd.f32 %v12268, %v12542
    %v12607 = vadd.f32 %v12270, %v12543
    %v12608 = vadd.f32 %v12374, %v12544
    %v12609 = vadd.f32 %v12376, %v12545
    %v12610 = vadd.f32 %v12480, %v12546
    %v12611 = vadd.f32 %v12482, %v12547
    %v12612 = vmax.f32 %v12548, 0.0
    %v12613 = vmax.f32 %v12549, 0.0
    %v12614 = vmax.f32 %v12550, 0.0
    %v12615 = vmax.f32 %v12551, 0.0
    %v12616 = vmax.f32 %v12552, 0.0
    %v12617 = vmax.f32 %v12553, 0.0
    %v12618 = vmax.f32 %v12554, 0.0
    %v12619 = vmax.f32 %v12555, 0.0
    %v12620 = vmax.f32 %v12556, 0.0
    %v12621 = vmax.f32 %v12557, 0.0
    %v12622 = vmax.f32 %v12558, 0.0
    %v12623 = vmax.f32 %v12559, 0.0
    %v12624 = vmax.f32 %v12560, 0.0
    %v12625 = vmax.f32 %v12561, 0.0
    %v12626 = vmax.f32 %v12562, 0.0
    %v12627 = vmax.f32 %v12563, 0.0
    %v12628 = vmax.f32 %v12564, 0.0
    %v12629 = vmax.f32 %v12565, 0.0
    %v12630 = vmax.f32 %v12566, 0.0
    %v12631 = vmax.f32 %v12567, 0.0
    %v12632 = vmax.f32 %v12568, 0.0
    %v12633 = vmax.f32 %v12569, 0.0
    %v12634 = vmax.f32 %v12570, 0.0
    %v12635 = vmax.f32 %v12571, 0.0
    %v12636 = vmax.f32 %v12572, 0.0
    %v12637 = vmax.f32 %v12573, 0.0
    %v12638 = vmax.f32 %v12574, 0.0
    %v12639 = vmax.f32 %v12575, 0.0
    %v12640 = vmax.f32 %v12576, 0.0
    %v12641 = vmax.f32 %v12577, 0.0
    %v12642 = vmax.f32 %v12578, 0.0
    %v12643 = vmax.f32 %v12579, 0.0
    %v12644 = vmax.f32 %v12580, 0.0
    %v12645 = vmax.f32 %v12581, 0.0
    %v12646 = vmax.f32 %v12582, 0.0
    %v12647 = vmax.f32 %v12583, 0.0
    %v12648 = vmax.f32 %v12584, 0.0
    %v12649 = vmax.f32 %v12585, 0.0
    %v12650 = vmax.f32 %v12586, 0.0
    %v12651 = vmax.f32 %v12587, 0.0
    %v12652 = vmax.f32 %v12588, 0.0
    %v12653 = vmax.f32 %v12589, 0.0
    %v12654 = vmax.f32 %v12590, 0.0
    %v12655 = vmax.f32 %v12591, 0.0
    %v12656 = vmax.f32 %v12592, 0.0
    %v12657 = vmax.f32 %v12593, 0.0
    %v12658 = vmax.f32 %v12594, 0.0
    %v12659 = vmax.f32 %v12595, 0.0
    %v12660 = vmax.f32 %v12596, 0.0
    %v12661 = vmax.f32 %v12597, 0.0
    %v12662 = vmax.f32 %v12598, 0.0
    %v12663 = vmax.f32 %v12599, 0.0
    %v12664 = vmax.f32 %v12600, 0.0
    %v12665 = vmax.f32 %v12601, 0.0
    %v12666 = vmax.f32 %v12602, 0.0
    %v12667 = vmax.f32 %v12603, 0.0
    %v12668 = vmax.f32 %v12604, 0.0
    %v12669 = vmax.f32 %v12605, 0.0
    %v12670 = vmax.f32 %v12606, 0.0
    %v12671 = vmax.f32 %v12607, 0.0
    %v12672 = vmax.f32 %v12608, 0.0
    %v12673 = vmax.f32 %v12609, 0.0
    %v12674 = vmax.f32 %v12610, 0.0
    %v12675 = vmax.f32 %v12611, 0.0
    %12676 = vst [vmem:[#allocation15] sm:$0xff] %v12612
    %12677 = vst [vmem:[#allocation15 + $0x8] sm:$0xff] %v12613
    %12678 = vst [vmem:[#allocation15 + $0x10] sm:$0xff] %v12614
    %12679 = vst [vmem:[#allocation15 + $0x18] sm:$0xff] %v12615
    %12680 = vst [vmem:[#allocation15 + $0x20] sm:$0xff] %v12616
    %12681 = vst [vmem:[#allocation15 + $0x28] sm:$0xff] %v12617
    %12682 = vst [vmem:[#allocation15 + $0x30] sm:$0xff] %v12618
    %12683 = vst [vmem:[#allocation15 + $0x38] sm:$0xff] %v12619
    %12684 = vst [vmem:[#allocation15 + $0x40] sm:$0xff] %v12620
    %12685 = vst [vmem:[#allocation15 + $0x48] sm:$0xff] %v12621
    %12686 = vst [vmem:[#allocation15 + $0x50] sm:$0xff] %v12622
    %12687 = vst [vmem:[#allocation15 + $0x58] sm:$0xff] %v12623
    %12688 = vst [vmem:[#allocation15 + $0x60] sm:$0xff] %v12624
    %12689 = vst [vmem:[#allocation15 + $0x68] sm:$0xff] %v12625
    %12690 = vst [vmem:[#allocation15 + $0x70] sm:$0xff] %v12626
    %12691 = vst [vmem:[#allocation15 + $0x78] sm:$0xff] %v12627
    %12692 = vst [vmem:[#allocation15 + $0x80] sm:$0xff] %v12628
    %12693 = vst [vmem:[#allocation15 + $0x88] sm:$0xff] %v12629
    %12694 = vst [vmem:[#allocation15 + $0x90] sm:$0xff] %v12630
    %12695 = vst [vmem:[#allocation15 + $0x98] sm:$0xff] %v12631
    %12696 = vst [vmem:[#allocation15 + $0xa0] sm:$0xff] %v12632
    %12697 = vst [vmem:[#allocation15 + $0xa8] sm:$0xff] %v12633
    %12698 = vst [vmem:[#allocation15 + $0xb0] sm:$0xff] %v12634
    %12699 = vst [vmem:[#allocation15 + $0xb8] sm:$0xff] %v12635
    %12700 = vst [vmem:[#allocation15 + $0xc0] sm:$0xff] %v12636
    %12701 = vst [vmem:[#allocation15 + $0xc8] sm:$0xff] %v12637
    %12702 = vst [vmem:[#allocation15 + $0xd0] sm:$0xff] %v12638
    %12703 = vst [vmem:[#allocation15 + $0xd8] sm:$0xff] %v12639
    %12704 = vst [vmem:[#allocation15 + $0xe0] sm:$0xff] %v12640
    %12705 = vst [vmem:[#allocation15 + $0xe8] sm:$0xff] %v12641
    %12706 = vst [vmem:[#allocation15 + $0xf0] sm:$0xff] %v12642
    %12707 = vst [vmem:[#allocation15 + $0xf8] sm:$0xff] %v12643
    %12708 = vst [vmem:[#allocation15 + $0x100] sm:$0xff] %v12644
    %12709 = vst [vmem:[#allocation15 + $0x108] sm:$0xff] %v12645
    %12710 = vst [vmem:[#allocation15 + $0x110] sm:$0xff] %v12646
    %12711 = vst [vmem:[#allocation15 + $0x118] sm:$0xff] %v12647
    %12712 = vst [vmem:[#allocation15 + $0x120] sm:$0xff] %v12648
    %12713 = vst [vmem:[#allocation15 + $0x128] sm:$0xff] %v12649
    %12714 = vst [vmem:[#allocation15 + $0x130] sm:$0xff] %v12650
    %12715 = vst [vmem:[#allocation15 + $0x138] sm:$0xff] %v12651
    %12716 = vst [vmem:[#allocation15 + $0x140] sm:$0xff] %v12652
    %12717 = vst [vmem:[#allocation15 + $0x148] sm:$0xff] %v12653
    %12718 = vst [vmem:[#allocation15 + $0x150] sm:$0xff] %v12654
    %12719 = vst [vmem:[#allocation15 + $0x158] sm:$0xff] %v12655
    %12720 = vst [vmem:[#allocation15 + $0x160] sm:$0xff] %v12656
    %12721 = vst [vmem:[#allocation15 + $0x168] sm:$0xff] %v12657
    %12722 = vst [vmem:[#allocation15 + $0x170] sm:$0xff] %v12658
    %12723 = vst [vmem:[#allocation15 + $0x178] sm:$0xff] %v12659
    %12724 = vst [vmem:[#allocation15 + $0x180] sm:$0xff] %v12660
    %12725 = vst [vmem:[#allocation15 + $0x188] sm:$0xff] %v12661
    %12726 = vst [vmem:[#allocation15 + $0x190] sm:$0xff] %v12662
    %12727 = vst [vmem:[#allocation15 + $0x198] sm:$0xff] %v12663
    %12728 = vst [vmem:[#allocation15 + $0x1a0] sm:$0xff] %v12664
    %12729 = vst [vmem:[#allocation15 + $0x1a8] sm:$0xff] %v12665
    %12730 = vst [vmem:[#allocation15 + $0x1b0] sm:$0xff] %v12666
    %12731 = vst [vmem:[#allocation15 + $0x1b8] sm:$0xff] %v12667
    %12732 = vst [vmem:[#allocation15 + $0x1c0] sm:$0xff] %v12668
    %12733 = vst [vmem:[#allocation15 + $0x1c8] sm:$0xff] %v12669
    %12734 = vst [vmem:[#allocation15 + $0x1d0] sm:$0xff] %v12670
    %12735 = vst [vmem:[#allocation15 + $0x1d8] sm:$0xff] %v12671
    %12736 = vst [vmem:[#allocation15 + $0x1e0] sm:$0xff] %v12672
    %12737 = vst [vmem:[#allocation15 + $0x1e8] sm:$0xff] %v12673
    %12738 = vst [vmem:[#allocation15 + $0x1f0] sm:$0xff] %v12674
    %12739 = vst [vmem:[#allocation15 + $0x1f8] sm:$0xff] %v12675
    // Predicated region
    $region58: #{tpu_custom_call.1} parent=1 // pred_check
      _
    $region59: #{tpu_custom_call.1} parent=1 // pred_check_branch
      %12741 = sbr.rel (0) target = $region61
    $region60: #{tpu_custom_call.1} parent=1 // pred_region
      %s12743 = ssub.s32 8192, 8192
      %12744 = vsyncadd [#allocation5], %s12743
      %s12745 = sshll.u32 [#allocation15], 4
      %s12746 = int_to_ptr.vmem [resolvable:$true] %s12745
      %12751 = dma.vmem_to_hbm [thread:$0]  %s12746, 8192, %s7, [#allocation5], 2048, 2048, 128
    $region61: #{tpu_custom_call.1} parent=1 // pred_fallthru
      _
    // Predicated region
    $region62: #{tpu_custom_call.1} parent=1 // pred_check
      _
    $region63: #{tpu_custom_call.1} parent=1 // pred_check_branch
      %12753 = sbr.rel (0) target = $region65
    $region64: #{tpu_custom_call.1} parent=1 // pred_region
      %12754 = dma.done [#allocation5], 8192
    $region65: #{tpu_custom_call.1} parent=1 // pred_fallthru
      _
    %12755 = vsyncpa [#allocation4], 1
    %12756 = vsyncpa [#allocation7], 1
    %12757 = vsyncpa [#allocation10], 1
    %12758 = vsyncpa [#allocation13], 1
    %12759 = vsyncpa [#allocation5], 1

</llo_original>
